<compile_context>
chip_gen: v7x
topology: tpu7x:2x2x1
jax: 0.10.0
libtpu: 0.0.40
codegen_flags: <defaults>
</compile_context>

<pallas_src>
import numpy as np

import jax
import jax.numpy as jnp
from jax.experimental import pallas as pl
from jax.experimental.pallas import tpu as pltpu


# ------------------------- host-side geometry helpers -------------------------

def _layer_dims(input_shape):
    """Per-conv-layer geometry for the physically x-padded slab layout."""
    c0, h, w = input_shape
    chans = [c0, 32, 32, 64, 64]
    dims = []
    hh, ww = h, w
    for l in range(4):
        assert hh % 2 == 0 and ww % 2 == 0, "spatial dims must be divisible by 16"
        wp = ww + 2                                   # padded row width
        dims.append(dict(h=hh, w=ww, wp=wp,
                         band=hh * wp,                # conv-output rows computed
                         rows=(hh + 2) * wp + 2,      # slab rows (incl. all pads)
                         cin=chans[l], cout=chans[l + 1]))
        hh //= 2
        ww //= 2
    return dims, (hh, ww)


# ---------------------------------- kernel -----------------------------------

def _make_kernel(dims, n, a, s4):
    n_layers = len(dims)

    def kernel(*refs):
        x_ref = refs[0]                        # (H*W, C0) bf16 current image
        w_refs = refs[1:5]                     # (9, cin, cout) bf16 per layer
        b_refs = refs[5:9]                     # (1, cout) f32 per layer
        fw1_ref, fb1_ref, fw2_ref, fb2_ref = refs[9:13]
        o_ref = refs[13]                       # (n, a) f32 resident output block
        slabs = refs[14:18]                    # padded bf16 activation slabs
        ys = refs[18:22]                       # f32 conv-output scratch per layer
        feats_ref = refs[22]                   # (n*s4, 64) f32 pooled features

        bidx = pl.program_id(0)

        # Zero the padded slabs once; interiors are fully rewritten every step,
        # pads stay zero and provide the conv's zero padding on all 4 sides.
        @pl.when(bidx == 0)
        def _init():
            for s in slabs:
                s[...] = jnp.zeros(s.shape, s.dtype)
            feats_ref[...] = jnp.zeros(feats_ref.shape, feats_ref.dtype)

        # Scatter the current image's rows into layer-0's x-padded slab
        # (bf16 -> bf16, no cast).
        d0 = dims[0]
        for y in range(d0["h"]):
            slabs[0][pl.ds((y + 1) * d0["wp"] + 2, d0["w"]), :] = (
                x_ref[pl.ds(y * d0["w"], d0["w"]), :])

        for l, d in enumerate(dims):
            h, w, wp, band, cout = d["h"], d["w"], d["wp"], d["band"], d["cout"]
            w2 = w // 2

            # conv 3x3 / stride 1 / pad 1: 9 shifted-slab bf16 MXU matmuls,
            # f32 accumulation; accumulator initialized from the first tap.
            acc = None
            t = 0
            for dy in (-1, 0, 1):
                for dx in (-1, 0, 1):
                    tap = slabs[l][pl.ds(wp + 1 + dy * wp + dx, band), :]
                    prod = jnp.dot(tap, w_refs[l][t],
                                   preferred_element_type=jnp.float32)
                    acc = prod if acc is None else acc + prod
                    t += 1
            # bias + ReLU, into the f32 y-scratch (junk x-pad columns included,
            # they are skipped by the pooling slices below).
            ys[l][...] = jnp.maximum(acc + b_refs[l][...], 0.0)

            # maxpool 2x2 on the VPU: stride-2 sublane loads, 3 maxima per row.
            for oy in range(h // 2):
                r0 = 2 * oy * wp
                r1 = r0 + wp
                m = jnp.maximum(
                    jnp.maximum(ys[l][pl.ds(r0 + 1, w2, stride=2), :],
                                ys[l][pl.ds(r0 + 2, w2, stride=2), :]),
                    jnp.maximum(ys[l][pl.ds(r1 + 1, w2, stride=2), :],
                                ys[l][pl.ds(r1 + 2, w2, stride=2), :]))
                if l + 1 < n_layers:
                    nxt = dims[l + 1]
                    slabs[l + 1][pl.ds((oy + 1) * nxt["wp"] + 2, w2), :] = (
                        m.astype(slabs[l + 1].dtype))
                else:
                    # final pooled features for this image (spatial-major rows)
                    feats_ref[pl.ds(bidx * s4 + oy * w2, w2), :] = m

        # Final grid step: batched packed FC1, bias+ReLU, packed FC2,
        # global advantage mean.
        @pl.when(bidx == n - 1)
        def _head():
            hpre = None
            for s in range(s4):
                if s4 == 1:
                    lhs = feats_ref[...]                       # (n, 64)
                else:
                    lhs = feats_ref[pl.ds(s, n, stride=s4), :]  # rows b*s4 + s
                term = jnp.dot(lhs.astype(jnp.bfloat16), fw1_ref[s],
                               preferred_element_type=jnp.float32)
                hpre = term if hpre is None else hpre + term
            hidden = jnp.maximum(hpre + fb1_ref[...], 0.0)       # (n, 1024)
            out = jnp.dot(hidden.astype(jnp.bfloat16), fw2_ref[...],
                          preferred_element_type=jnp.float32) + fb2_ref[...]
            value = out[:, 0:1]                                   # (n, 1)
            adv = out[:, 1:]                                      # (n, a)
            asum = jnp.sum(jnp.sum(adv, axis=1, keepdims=True),
                           axis=0, keepdims=True)                 # (1, 1)
            # result = value + advantage - advantage.mean()  (global mean, per spec)
            o_ref[...] = value + adv - asum * (1.0 / float(n * a))

    return kernel


# ------------------------------- JAX wrapper ----------------------------------

@jax.jit
def model_forward(x_nchw, packed):
    n, c0, h, w = x_nchw.shape
    dims, (hf, wf) = _layer_dims((c0, h, w))
    s4 = hf * wf
    a = packed["fb2"].shape[1] - 1
    r1 = h * w

    # NCHW -> (N, H*W, C) channel-on-lanes slab, bf16 (halves input DMA).
    x2 = jnp.transpose(x_nchw, (0, 2, 3, 1)).reshape(n, r1, c0).astype(jnp.bfloat16)

    in_specs = [pl.BlockSpec((None, r1, c0), lambda b: (b, 0, 0))]
    args = [x2]

    def add_const(arr):
        rank = arr.ndim
        in_specs.append(pl.BlockSpec(arr.shape, lambda b, _r=rank: (0,) * _r))
        args.append(arr)

    for l in range(4):
        add_const(packed[f"w{l}"])
    for l in range(4):
        add_const(packed[f"b{l}"])
    for k in ("fw1", "fb1", "fw2", "fb2"):
        add_const(packed[k])

    scratch = [pltpu.VMEM((d["rows"], d["cin"]), jnp.bfloat16) for d in dims]   # slabs
    scratch += [pltpu.VMEM((d["band"], d["cout"]), jnp.float32) for d in dims]  # y-scratch
    scratch.append(pltpu.VMEM((n * s4, 64), jnp.float32))                       # features

    grid_spec = pltpu.PrefetchScalarGridSpec(
        num_scalar_prefetch=0,
        grid=(n,),
        in_specs=in_specs,
        out_specs=pl.BlockSpec((n, a), lambda b: (0, 0)),
        scratch_shapes=scratch,
    )
    return pl.pallas_call(
        _make_kernel(dims, n, a, s4),
        out_shape=jax.ShapeDtypeStruct((n, a), jnp.float32),
        grid_spec=grid_spec,
        compiler_params=pltpu.CompilerParams(
            # Sequential: features accumulate across steps and the global
            # advantage.mean() is finalized on the last grid step.
            dimension_semantics=("arbitrary",)),
    )(*args)


# --------------------------- parameters & packing ------------------------------

def init_params(key, input_shape, outputs_count):
    cin0, h, w = input_shape
    ratio = 2 ** 4
    fc_inputs = 64 * (w // ratio) * (h // ratio)
    conv_dims = [(cin0, 32), (32, 32), (32, 64), (64, 64)]

    params = {}
    keys = jax.random.split(key, 12)
    ki = 0
    for i, (cin, cout) in enumerate(conv_dims):
        fan_in, fan_out = cin * 9, cout * 9       # Xavier-uniform (torch init)
        bound = (6.0 / (fan_in + fan_out)) ** 0.5
        params[f"conv{i}_w"] = jax.random.uniform(
            keys[ki], (3, 3, cin, cout), jnp.float32, -bound, bound)
        params[f"conv{i}_b"] = jnp.zeros((cout,), jnp.float32)
        ki += 1

    def linear(key_w, fan_in, fan_out):
        bound = (1.0 / fan_in) ** 0.5
        kw, kb = jax.random.split(key_w)
        w_ = jax.random.uniform(kw, (fan_in, fan_out), jnp.float32, -bound, bound)
        b_ = jax.random.uniform(kb, (1, fan_out), jnp.float32, -bound, bound)
        return w_, b_

    params["w1v"], params["b1v"] = linear(keys[ki], fc_inputs, 512); ki += 1
    params["w2v"], params["b2v"] = linear(keys[ki], 512, 1); ki += 1
    params["w1a"], params["b1a"] = linear(keys[ki], fc_inputs, 512); ki += 1
    params["w2a"], params["b2a"] = linear(keys[ki], 512, outputs_count); ki += 1
    return params


def pack_params(params, input_shape):
    """Host-side, one-off packing of weights for the kernel."""
    dims, (hf, wf) = _layer_dims(input_shape)
    s4 = hf * wf
    packed = {}
    for l in range(4):
        wt = params[f"conv{l}_w"]                        # (3, 3, cin, cout)
        cin, cout = wt.shape[2], wt.shape[3]
        packed[f"w{l}"] = wt.reshape(9, cin, cout).astype(jnp.bfloat16)
        packed[f"b{l}"] = params[f"conv{l}_b"].reshape(1, cout).astype(jnp.float32)

    # Packed first FC (value | advantage), regrouped per final spatial position
    # (torch flatten is channel-major: row index = c * s4 + s).
    w1 = jnp.concatenate([params["w1v"], params["w1a"]], axis=1)         # (F, 1024)
    packed["fw1"] = w1.reshape(64, s4, 1024).transpose(1, 0, 2).astype(jnp.bfloat16)
    packed["fb1"] = jnp.concatenate([params["b1v"], params["b1a"]],
                                    axis=1).astype(jnp.float32)          # (1, 1024)

    # Packed second FC as a block-diagonal (1024, 1 + A): col 0 = value, 1: = adv.
    a = params["w2a"].shape[1]
    w2 = jnp.zeros((1024, 1 + a), jnp.float32)
    w2 = w2.at[:512, 0:1].set(params["w2v"])
    w2 = w2.at[512:, 1:].set(params["w2a"])
    packed["fw2"] = w2.astype(jnp.bfloat16)
    packed["fb2"] = jnp.concatenate([params["b2v"], params["b2a"]],
                                    axis=1).astype(jnp.float32)          # (1, 1+A)
    return packed


# ------------------------------ pure-JAX reference -----------------------------

def reference_forward(x_nchw, params):
    x = jnp.transpose(x_nchw, (0, 2, 3, 1))
    for l in range(4):
        x = jax.lax.conv_general_dilated(
            x, params[f"conv{l}_w"], window_strides=(1, 1), padding="SAME",
            dimension_numbers=("NHWC", "HWIO", "NHWC"))
        x = jnp.maximum(x + params[f"conv{l}_b"], 0.0)
        x = jax.lax.reduce_window(x, -jnp.inf, jax.lax.max,
                                  (1, 2, 2, 1), (1, 2, 2, 1), "VALID")
    n = x.shape[0]
    feats = jnp.transpose(x, (0, 3, 1, 2)).reshape(n, -1)     # torch NCHW flatten
    hv = jnp.maximum(feats @ params["w1v"] + params["b1v"], 0.0)
    value = hv @ params["w2v"] + params["b2v"]
    ha = jnp.maximum(feats @ params["w1a"] + params["b1a"], 0.0)
    adv = ha @ params["w2a"] + params["b2a"]
    return value + adv - jnp.mean(adv)                         # global mean (spec)


# ----------------------------------- main --------------------------------------

if __name__ == "__main__":
    key = jax.random.PRNGKey(0)
    k_param, k_input = jax.random.split(key)

    input_shape = (4, 16, 16)   # (C, H, W), H/W divisible by 2**4
    outputs_count = 9
    batch = 2

    params = init_params(k_param, input_shape, outputs_count)
    packed = pack_params(params, input_shape)
    x = jax.random.normal(k_input, (batch,) + input_shape, jnp.float32)

    q = jax.block_until_ready(model_forward(x, packed))

    assert q.shape == (batch, outputs_count), q.shape
    assert bool(jnp.all(jnp.isfinite(q)))

    # Tolerance: kernel uses bf16 matmul operands with f32 accumulation.
    q_ref = reference_forward(x, params)
    rel_err = float(jnp.linalg.norm(q - q_ref) / (jnp.linalg.norm(q_ref) + 1e-6))
    assert rel_err < 5e-2, f"mismatch vs reference: rel_l2={rel_err}"

    print("KERNEL_OK")
</pallas_src>

<mosaic_0001>
module attributes {stable_mosaic.version = 11 : i64} {
  func.func @kernel(%arg0: i32, %arg1: memref<1x256x4xbf16, #tpu.memory_space<vmem>>, %arg2: memref<9x4x32xbf16, #tpu.memory_space<vmem>>, %arg3: memref<9x32x32xbf16, #tpu.memory_space<vmem>>, %arg4: memref<9x32x64xbf16, #tpu.memory_space<vmem>>, %arg5: memref<9x64x64xbf16, #tpu.memory_space<vmem>>, %arg6: memref<1x32xf32, #tpu.memory_space<vmem>>, %arg7: memref<1x32xf32, #tpu.memory_space<vmem>>, %arg8: memref<1x64xf32, #tpu.memory_space<vmem>>, %arg9: memref<1x64xf32, #tpu.memory_space<vmem>>, %arg10: memref<1x64x1024xbf16, #tpu.memory_space<vmem>>, %arg11: memref<1x1024xf32, #tpu.memory_space<vmem>>, %arg12: memref<1024x10xbf16, #tpu.memory_space<vmem>>, %arg13: memref<1x10xf32, #tpu.memory_space<vmem>>, %arg14: memref<2x9xf32, #tpu.memory_space<vmem>>, %arg15: memref<326x4xbf16, #tpu.memory_space<vmem>>, %arg16: memref<102x32xbf16, #tpu.memory_space<vmem>>, %arg17: memref<38x32xbf16, #tpu.memory_space<vmem>>, %arg18: memref<18x64xbf16, #tpu.memory_space<vmem>>, %arg19: memref<288x32xf32, #tpu.memory_space<vmem>>, %arg20: memref<80x32xf32, #tpu.memory_space<vmem>>, %arg21: memref<24x64xf32, #tpu.memory_space<vmem>>, %arg22: memref<8x64xf32, #tpu.memory_space<vmem>>, %arg23: memref<2x64xf32, #tpu.memory_space<vmem>>) attributes {dimension_semantics = [#tpu.dimension_semantics<arbitrary>], iteration_bounds = array<i64: 2>, scalar_prefetch = 0 : i64, scratch_operands = 9 : i64, tpu.core_type = #tpu.core_type<tc>, window_params = [{transform_indices = @transform_0, window_bounds = array<i64: 1, 256, 4>}, {pipeline_mode = #tpu.pipeline_mode<synchronous>, transform_indices = @transform_1, window_bounds = array<i64: 9, 4, 32>}, {pipeline_mode = #tpu.pipeline_mode<synchronous>, transform_indices = @transform_2, window_bounds = array<i64: 9, 32, 32>}, {pipeline_mode = #tpu.pipeline_mode<synchronous>, transform_indices = @transform_3, window_bounds = array<i64: 9, 32, 64>}, {pipeline_mode = #tpu.pipeline_mode<synchronous>, transform_indices = @transform_4, window_bounds = array<i64: 9, 64, 64>}, {pipeline_mode = #tpu.pipeline_mode<synchronous>, transform_indices = @transform_5, window_bounds = array<i64: 1, 32>}, {pipeline_mode = #tpu.pipeline_mode<synchronous>, transform_indices = @transform_6, window_bounds = array<i64: 1, 32>}, {pipeline_mode = #tpu.pipeline_mode<synchronous>, transform_indices = @transform_7, window_bounds = array<i64: 1, 64>}, {pipeline_mode = #tpu.pipeline_mode<synchronous>, transform_indices = @transform_8, window_bounds = array<i64: 1, 64>}, {pipeline_mode = #tpu.pipeline_mode<synchronous>, transform_indices = @transform_9, window_bounds = array<i64: 1, 64, 1024>}, {pipeline_mode = #tpu.pipeline_mode<synchronous>, transform_indices = @transform_10, window_bounds = array<i64: 1, 1024>}, {pipeline_mode = #tpu.pipeline_mode<synchronous>, transform_indices = @transform_11, window_bounds = array<i64: 1024, 10>}, {pipeline_mode = #tpu.pipeline_mode<synchronous>, transform_indices = @transform_12, window_bounds = array<i64: 1, 10>}, {pipeline_mode = #tpu.pipeline_mode<synchronous>, transform_indices = @transform_13, window_bounds = array<i64: 2, 9>}]} {
    %c0_i32 = arith.constant 0 : i32
    %0 = arith.cmpi eq, %arg0, %c0_i32 : i32
    %1 = arith.extui %0 : i1 to i32
    %c0_i32_0 = arith.constant 0 : i32
    %2 = arith.cmpi ne, %1, %c0_i32_0 : i32
    scf.if %2 {
      %cst_393 = arith.constant 0.000000e+00 : bf16
      %391 = vector.broadcast %cst_393 : bf16 to vector<326x4xbf16>
      %c0_394 = arith.constant 0 : index
      %c0_395 = arith.constant 0 : index
      %392 = vector.load %arg15[%c0_394, %c0_395] : memref<326x4xbf16, #tpu.memory_space<vmem>>, vector<326x4xbf16>
      tpu.vector_store %arg15[%c0_394, %c0_395], %391 {strides = array<i32>} : memref<326x4xbf16, #tpu.memory_space<vmem>>, vector<326x4xbf16>,
      %cst_396 = arith.constant 0.000000e+00 : bf16
      %393 = vector.broadcast %cst_396 : bf16 to vector<102x32xbf16>
      %c0_397 = arith.constant 0 : index
      %c0_398 = arith.constant 0 : index
      %394 = vector.load %arg16[%c0_397, %c0_398] : memref<102x32xbf16, #tpu.memory_space<vmem>>, vector<102x32xbf16>
      tpu.vector_store %arg16[%c0_397, %c0_398], %393 {strides = array<i32>} : memref<102x32xbf16, #tpu.memory_space<vmem>>, vector<102x32xbf16>,
      %cst_399 = arith.constant 0.000000e+00 : bf16
      %395 = vector.broadcast %cst_399 : bf16 to vector<38x32xbf16>
      %c0_400 = arith.constant 0 : index
      %c0_401 = arith.constant 0 : index
      %396 = vector.load %arg17[%c0_400, %c0_401] : memref<38x32xbf16, #tpu.memory_space<vmem>>, vector<38x32xbf16>
      tpu.vector_store %arg17[%c0_400, %c0_401], %395 {strides = array<i32>} : memref<38x32xbf16, #tpu.memory_space<vmem>>, vector<38x32xbf16>,
      %cst_402 = arith.constant 0.000000e+00 : bf16
      %397 = vector.broadcast %cst_402 : bf16 to vector<18x64xbf16>
      %c0_403 = arith.constant 0 : index
      %c0_404 = arith.constant 0 : index
      %398 = vector.load %arg18[%c0_403, %c0_404] : memref<18x64xbf16, #tpu.memory_space<vmem>>, vector<18x64xbf16>
      tpu.vector_store %arg18[%c0_403, %c0_404], %397 {strides = array<i32>} : memref<18x64xbf16, #tpu.memory_space<vmem>>, vector<18x64xbf16>,
      %cst_405 = arith.constant 0.000000e+00 : f32
      %399 = vector.broadcast %cst_405 : f32 to vector<2x64xf32>
      %c0_406 = arith.constant 0 : index
      %c0_407 = arith.constant 0 : index
      %400 = vector.load %arg23[%c0_406, %c0_407] : memref<2x64xf32, #tpu.memory_space<vmem>>, vector<2x64xf32>
      tpu.vector_store %arg23[%c0_406, %c0_407], %399 {strides = array<i32>} : memref<2x64xf32, #tpu.memory_space<vmem>>, vector<2x64xf32>,
    } else {
    }
    %c0 = arith.constant 0 : index
    %c0_1 = arith.constant 0 : index
    %c0_2 = arith.constant 0 : index
    %3 = vector.load %arg1[%c0, %c0_1, %c0_2] : memref<1x256x4xbf16, #tpu.memory_space<vmem>>, vector<1x16x4xbf16>
    %4 = vector.shape_cast %3 : vector<1x16x4xbf16> to vector<16x4xbf16>
    %c20 = arith.constant 20 : index
    %c0_3 = arith.constant 0 : index
    %5 = vector.load %arg15[%c20, %c0_3] : memref<326x4xbf16, #tpu.memory_space<vmem>>, vector<16x4xbf16>
    tpu.vector_store %arg15[%c20, %c0_3], %4 {strides = array<i32>} : memref<326x4xbf16, #tpu.memory_space<vmem>>, vector<16x4xbf16>,
    %c0_4 = arith.constant 0 : index
    %c16 = arith.constant 16 : index
    %c0_5 = arith.constant 0 : index
    %6 = vector.load %arg1[%c0_4, %c16, %c0_5] : memref<1x256x4xbf16, #tpu.memory_space<vmem>>, vector<1x16x4xbf16>
    %7 = vector.shape_cast %6 : vector<1x16x4xbf16> to vector<16x4xbf16>
    %c38 = arith.constant 38 : index
    %c0_6 = arith.constant 0 : index
    %8 = vector.load %arg15[%c38, %c0_6] : memref<326x4xbf16, #tpu.memory_space<vmem>>, vector<16x4xbf16>
    tpu.vector_store %arg15[%c38, %c0_6], %7 {strides = array<i32>} : memref<326x4xbf16, #tpu.memory_space<vmem>>, vector<16x4xbf16>,
    %c0_7 = arith.constant 0 : index
    %c32 = arith.constant 32 : index
    %c0_8 = arith.constant 0 : index
    %9 = vector.load %arg1[%c0_7, %c32, %c0_8] : memref<1x256x4xbf16, #tpu.memory_space<vmem>>, vector<1x16x4xbf16>
    %10 = vector.shape_cast %9 : vector<1x16x4xbf16> to vector<16x4xbf16>
    %c56 = arith.constant 56 : index
    %c0_9 = arith.constant 0 : index
    %11 = vector.load %arg15[%c56, %c0_9] : memref<326x4xbf16, #tpu.memory_space<vmem>>, vector<16x4xbf16>
    tpu.vector_store %arg15[%c56, %c0_9], %10 {strides = array<i32>} : memref<326x4xbf16, #tpu.memory_space<vmem>>, vector<16x4xbf16>,
    %c0_10 = arith.constant 0 : index
    %c48 = arith.constant 48 : index
    %c0_11 = arith.constant 0 : index
    %12 = vector.load %arg1[%c0_10, %c48, %c0_11] : memref<1x256x4xbf16, #tpu.memory_space<vmem>>, vector<1x16x4xbf16>
    %13 = vector.shape_cast %12 : vector<1x16x4xbf16> to vector<16x4xbf16>
    %c74 = arith.constant 74 : index
    %c0_12 = arith.constant 0 : index
    %14 = vector.load %arg15[%c74, %c0_12] : memref<326x4xbf16, #tpu.memory_space<vmem>>, vector<16x4xbf16>
    tpu.vector_store %arg15[%c74, %c0_12], %13 {strides = array<i32>} : memref<326x4xbf16, #tpu.memory_space<vmem>>, vector<16x4xbf16>,
    %c0_13 = arith.constant 0 : index
    %c64 = arith.constant 64 : index
    %c0_14 = arith.constant 0 : index
    %15 = vector.load %arg1[%c0_13, %c64, %c0_14] : memref<1x256x4xbf16, #tpu.memory_space<vmem>>, vector<1x16x4xbf16>
    %16 = vector.shape_cast %15 : vector<1x16x4xbf16> to vector<16x4xbf16>
    %c92 = arith.constant 92 : index
    %c0_15 = arith.constant 0 : index
    %17 = vector.load %arg15[%c92, %c0_15] : memref<326x4xbf16, #tpu.memory_space<vmem>>, vector<16x4xbf16>
    tpu.vector_store %arg15[%c92, %c0_15], %16 {strides = array<i32>} : memref<326x4xbf16, #tpu.memory_space<vmem>>, vector<16x4xbf16>,
    %c0_16 = arith.constant 0 : index
    %c80 = arith.constant 80 : index
    %c0_17 = arith.constant 0 : index
    %18 = vector.load %arg1[%c0_16, %c80, %c0_17] : memref<1x256x4xbf16, #tpu.memory_space<vmem>>, vector<1x16x4xbf16>
    %19 = vector.shape_cast %18 : vector<1x16x4xbf16> to vector<16x4xbf16>
    %c110 = arith.constant 110 : index
    %c0_18 = arith.constant 0 : index
    %20 = vector.load %arg15[%c110, %c0_18] : memref<326x4xbf16, #tpu.memory_space<vmem>>, vector<16x4xbf16>
    tpu.vector_store %arg15[%c110, %c0_18], %19 {strides = array<i32>} : memref<326x4xbf16, #tpu.memory_space<vmem>>, vector<16x4xbf16>,
    %c0_19 = arith.constant 0 : index
    %c96 = arith.constant 96 : index
    %c0_20 = arith.constant 0 : index
    %21 = vector.load %arg1[%c0_19, %c96, %c0_20] : memref<1x256x4xbf16, #tpu.memory_space<vmem>>, vector<1x16x4xbf16>
    %22 = vector.shape_cast %21 : vector<1x16x4xbf16> to vector<16x4xbf16>
    %c128 = arith.constant 128 : index
    %c0_21 = arith.constant 0 : index
    %23 = vector.load %arg15[%c128, %c0_21] : memref<326x4xbf16, #tpu.memory_space<vmem>>, vector<16x4xbf16>
    tpu.vector_store %arg15[%c128, %c0_21], %22 {strides = array<i32>} : memref<326x4xbf16, #tpu.memory_space<vmem>>, vector<16x4xbf16>,
    %c0_22 = arith.constant 0 : index
    %c112 = arith.constant 112 : index
    %c0_23 = arith.constant 0 : index
    %24 = vector.load %arg1[%c0_22, %c112, %c0_23] : memref<1x256x4xbf16, #tpu.memory_space<vmem>>, vector<1x16x4xbf16>
    %25 = vector.shape_cast %24 : vector<1x16x4xbf16> to vector<16x4xbf16>
    %c146 = arith.constant 146 : index
    %c0_24 = arith.constant 0 : index
    %26 = vector.load %arg15[%c146, %c0_24] : memref<326x4xbf16, #tpu.memory_space<vmem>>, vector<16x4xbf16>
    tpu.vector_store %arg15[%c146, %c0_24], %25 {strides = array<i32>} : memref<326x4xbf16, #tpu.memory_space<vmem>>, vector<16x4xbf16>,
    %c0_25 = arith.constant 0 : index
    %c128_26 = arith.constant 128 : index
    %c0_27 = arith.constant 0 : index
    %27 = vector.load %arg1[%c0_25, %c128_26, %c0_27] : memref<1x256x4xbf16, #tpu.memory_space<vmem>>, vector<1x16x4xbf16>
    %28 = vector.shape_cast %27 : vector<1x16x4xbf16> to vector<16x4xbf16>
    %c164 = arith.constant 164 : index
    %c0_28 = arith.constant 0 : index
    %29 = vector.load %arg15[%c164, %c0_28] : memref<326x4xbf16, #tpu.memory_space<vmem>>, vector<16x4xbf16>
    tpu.vector_store %arg15[%c164, %c0_28], %28 {strides = array<i32>} : memref<326x4xbf16, #tpu.memory_space<vmem>>, vector<16x4xbf16>,
    %c0_29 = arith.constant 0 : index
    %c144 = arith.constant 144 : index
    %c0_30 = arith.constant 0 : index
    %30 = vector.load %arg1[%c0_29, %c144, %c0_30] : memref<1x256x4xbf16, #tpu.memory_space<vmem>>, vector<1x16x4xbf16>
    %31 = vector.shape_cast %30 : vector<1x16x4xbf16> to vector<16x4xbf16>
    %c182 = arith.constant 182 : index
    %c0_31 = arith.constant 0 : index
    %32 = vector.load %arg15[%c182, %c0_31] : memref<326x4xbf16, #tpu.memory_space<vmem>>, vector<16x4xbf16>
    tpu.vector_store %arg15[%c182, %c0_31], %31 {strides = array<i32>} : memref<326x4xbf16, #tpu.memory_space<vmem>>, vector<16x4xbf16>,
    %c0_32 = arith.constant 0 : index
    %c160 = arith.constant 160 : index
    %c0_33 = arith.constant 0 : index
    %33 = vector.load %arg1[%c0_32, %c160, %c0_33] : memref<1x256x4xbf16, #tpu.memory_space<vmem>>, vector<1x16x4xbf16>
    %34 = vector.shape_cast %33 : vector<1x16x4xbf16> to vector<16x4xbf16>
    %c200 = arith.constant 200 : index
    %c0_34 = arith.constant 0 : index
    %35 = vector.load %arg15[%c200, %c0_34] : memref<326x4xbf16, #tpu.memory_space<vmem>>, vector<16x4xbf16>
    tpu.vector_store %arg15[%c200, %c0_34], %34 {strides = array<i32>} : memref<326x4xbf16, #tpu.memory_space<vmem>>, vector<16x4xbf16>,
    %c0_35 = arith.constant 0 : index
    %c176 = arith.constant 176 : index
    %c0_36 = arith.constant 0 : index
    %36 = vector.load %arg1[%c0_35, %c176, %c0_36] : memref<1x256x4xbf16, #tpu.memory_space<vmem>>, vector<1x16x4xbf16>
    %37 = vector.shape_cast %36 : vector<1x16x4xbf16> to vector<16x4xbf16>
    %c218 = arith.constant 218 : index
    %c0_37 = arith.constant 0 : index
    %38 = vector.load %arg15[%c218, %c0_37] : memref<326x4xbf16, #tpu.memory_space<vmem>>, vector<16x4xbf16>
    tpu.vector_store %arg15[%c218, %c0_37], %37 {strides = array<i32>} : memref<326x4xbf16, #tpu.memory_space<vmem>>, vector<16x4xbf16>,
    %c0_38 = arith.constant 0 : index
    %c192 = arith.constant 192 : index
    %c0_39 = arith.constant 0 : index
    %39 = vector.load %arg1[%c0_38, %c192, %c0_39] : memref<1x256x4xbf16, #tpu.memory_space<vmem>>, vector<1x16x4xbf16>
    %40 = vector.shape_cast %39 : vector<1x16x4xbf16> to vector<16x4xbf16>
    %c236 = arith.constant 236 : index
    %c0_40 = arith.constant 0 : index
    %41 = vector.load %arg15[%c236, %c0_40] : memref<326x4xbf16, #tpu.memory_space<vmem>>, vector<16x4xbf16>
    tpu.vector_store %arg15[%c236, %c0_40], %40 {strides = array<i32>} : memref<326x4xbf16, #tpu.memory_space<vmem>>, vector<16x4xbf16>,
    %c0_41 = arith.constant 0 : index
    %c208 = arith.constant 208 : index
    %c0_42 = arith.constant 0 : index
    %42 = vector.load %arg1[%c0_41, %c208, %c0_42] : memref<1x256x4xbf16, #tpu.memory_space<vmem>>, vector<1x16x4xbf16>
    %43 = vector.shape_cast %42 : vector<1x16x4xbf16> to vector<16x4xbf16>
    %c254 = arith.constant 254 : index
    %c0_43 = arith.constant 0 : index
    %44 = vector.load %arg15[%c254, %c0_43] : memref<326x4xbf16, #tpu.memory_space<vmem>>, vector<16x4xbf16>
    tpu.vector_store %arg15[%c254, %c0_43], %43 {strides = array<i32>} : memref<326x4xbf16, #tpu.memory_space<vmem>>, vector<16x4xbf16>,
    %c0_44 = arith.constant 0 : index
    %c224 = arith.constant 224 : index
    %c0_45 = arith.constant 0 : index
    %45 = vector.load %arg1[%c0_44, %c224, %c0_45] : memref<1x256x4xbf16, #tpu.memory_space<vmem>>, vector<1x16x4xbf16>
    %46 = vector.shape_cast %45 : vector<1x16x4xbf16> to vector<16x4xbf16>
    %c272 = arith.constant 272 : index
    %c0_46 = arith.constant 0 : index
    %47 = vector.load %arg15[%c272, %c0_46] : memref<326x4xbf16, #tpu.memory_space<vmem>>, vector<16x4xbf16>
    tpu.vector_store %arg15[%c272, %c0_46], %46 {strides = array<i32>} : memref<326x4xbf16, #tpu.memory_space<vmem>>, vector<16x4xbf16>,
    %c0_47 = arith.constant 0 : index
    %c240 = arith.constant 240 : index
    %c0_48 = arith.constant 0 : index
    %48 = vector.load %arg1[%c0_47, %c240, %c0_48] : memref<1x256x4xbf16, #tpu.memory_space<vmem>>, vector<1x16x4xbf16>
    %49 = vector.shape_cast %48 : vector<1x16x4xbf16> to vector<16x4xbf16>
    %c290 = arith.constant 290 : index
    %c0_49 = arith.constant 0 : index
    %50 = vector.load %arg15[%c290, %c0_49] : memref<326x4xbf16, #tpu.memory_space<vmem>>, vector<16x4xbf16>
    tpu.vector_store %arg15[%c290, %c0_49], %49 {strides = array<i32>} : memref<326x4xbf16, #tpu.memory_space<vmem>>, vector<16x4xbf16>,
    %c0_50 = arith.constant 0 : index
    %c0_51 = arith.constant 0 : index
    %51 = vector.load %arg15[%c0_50, %c0_51] : memref<326x4xbf16, #tpu.memory_space<vmem>>, vector<288x4xbf16>
    %c0_52 = arith.constant 0 : index
    %c0_53 = arith.constant 0 : index
    %c0_54 = arith.constant 0 : index
    %52 = vector.load %arg2[%c0_52, %c0_53, %c0_54] : memref<9x4x32xbf16, #tpu.memory_space<vmem>>, vector<1x4x32xbf16>
    %53 = vector.shape_cast %52 : vector<1x4x32xbf16> to vector<4x32xbf16>
    %cst = arith.constant dense<0.000000e+00> : vector<288x32xf32>
    %54 = tpu.matmul %51, %53, %cst {dimension_numbers = #tpu.dot_dimension_numbers<[1], [0], [0], [1], [0, 0, 1, 1], [], []>} : vector<288x4xbf16>, vector<4x32xbf16>, vector<288x32xf32> -> vector<288x32xf32>
    %c1 = arith.constant 1 : index
    %c0_55 = arith.constant 0 : index
    %55 = vector.load %arg15[%c1, %c0_55] : memref<326x4xbf16, #tpu.memory_space<vmem>>, vector<288x4xbf16>
    %c1_56 = arith.constant 1 : index
    %c0_57 = arith.constant 0 : index
    %c0_58 = arith.constant 0 : index
    %56 = vector.load %arg2[%c1_56, %c0_57, %c0_58] : memref<9x4x32xbf16, #tpu.memory_space<vmem>>, vector<1x4x32xbf16>
    %57 = vector.shape_cast %56 : vector<1x4x32xbf16> to vector<4x32xbf16>
    %cst_59 = arith.constant dense<0.000000e+00> : vector<288x32xf32>
    %58 = tpu.matmul %55, %57, %cst_59 {dimension_numbers = #tpu.dot_dimension_numbers<[1], [0], [0], [1], [0, 0, 1, 1], [], []>} : vector<288x4xbf16>, vector<4x32xbf16>, vector<288x32xf32> -> vector<288x32xf32>
    %59 = arith.addf %54, %58 : vector<288x32xf32>
    %c2 = arith.constant 2 : index
    %c0_60 = arith.constant 0 : index
    %60 = vector.load %arg15[%c2, %c0_60] : memref<326x4xbf16, #tpu.memory_space<vmem>>, vector<288x4xbf16>
    %c2_61 = arith.constant 2 : index
    %c0_62 = arith.constant 0 : index
    %c0_63 = arith.constant 0 : index
    %61 = vector.load %arg2[%c2_61, %c0_62, %c0_63] : memref<9x4x32xbf16, #tpu.memory_space<vmem>>, vector<1x4x32xbf16>
    %62 = vector.shape_cast %61 : vector<1x4x32xbf16> to vector<4x32xbf16>
    %cst_64 = arith.constant dense<0.000000e+00> : vector<288x32xf32>
    %63 = tpu.matmul %60, %62, %cst_64 {dimension_numbers = #tpu.dot_dimension_numbers<[1], [0], [0], [1], [0, 0, 1, 1], [], []>} : vector<288x4xbf16>, vector<4x32xbf16>, vector<288x32xf32> -> vector<288x32xf32>
    %64 = arith.addf %59, %63 : vector<288x32xf32>
    %c18 = arith.constant 18 : index
    %c0_65 = arith.constant 0 : index
    %65 = vector.load %arg15[%c18, %c0_65] : memref<326x4xbf16, #tpu.memory_space<vmem>>, vector<288x4xbf16>
    %c3 = arith.constant 3 : index
    %c0_66 = arith.constant 0 : index
    %c0_67 = arith.constant 0 : index
    %66 = vector.load %arg2[%c3, %c0_66, %c0_67] : memref<9x4x32xbf16, #tpu.memory_space<vmem>>, vector<1x4x32xbf16>
    %67 = vector.shape_cast %66 : vector<1x4x32xbf16> to vector<4x32xbf16>
    %cst_68 = arith.constant dense<0.000000e+00> : vector<288x32xf32>
    %68 = tpu.matmul %65, %67, %cst_68 {dimension_numbers = #tpu.dot_dimension_numbers<[1], [0], [0], [1], [0, 0, 1, 1], [], []>} : vector<288x4xbf16>, vector<4x32xbf16>, vector<288x32xf32> -> vector<288x32xf32>
    %69 = arith.addf %64, %68 : vector<288x32xf32>
    %c19 = arith.constant 19 : index
    %c0_69 = arith.constant 0 : index
    %70 = vector.load %arg15[%c19, %c0_69] : memref<326x4xbf16, #tpu.memory_space<vmem>>, vector<288x4xbf16>
    %c4 = arith.constant 4 : index
    %c0_70 = arith.constant 0 : index
    %c0_71 = arith.constant 0 : index
    %71 = vector.load %arg2[%c4, %c0_70, %c0_71] : memref<9x4x32xbf16, #tpu.memory_space<vmem>>, vector<1x4x32xbf16>
    %72 = vector.shape_cast %71 : vector<1x4x32xbf16> to vector<4x32xbf16>
    %cst_72 = arith.constant dense<0.000000e+00> : vector<288x32xf32>
    %73 = tpu.matmul %70, %72, %cst_72 {dimension_numbers = #tpu.dot_dimension_numbers<[1], [0], [0], [1], [0, 0, 1, 1], [], []>} : vector<288x4xbf16>, vector<4x32xbf16>, vector<288x32xf32> -> vector<288x32xf32>
    %74 = arith.addf %69, %73 : vector<288x32xf32>
    %c20_73 = arith.constant 20 : index
    %c0_74 = arith.constant 0 : index
    %75 = vector.load %arg15[%c20_73, %c0_74] : memref<326x4xbf16, #tpu.memory_space<vmem>>, vector<288x4xbf16>
    %c5 = arith.constant 5 : index
    %c0_75 = arith.constant 0 : index
    %c0_76 = arith.constant 0 : index
    %76 = vector.load %arg2[%c5, %c0_75, %c0_76] : memref<9x4x32xbf16, #tpu.memory_space<vmem>>, vector<1x4x32xbf16>
    %77 = vector.shape_cast %76 : vector<1x4x32xbf16> to vector<4x32xbf16>
    %cst_77 = arith.constant dense<0.000000e+00> : vector<288x32xf32>
    %78 = tpu.matmul %75, %77, %cst_77 {dimension_numbers = #tpu.dot_dimension_numbers<[1], [0], [0], [1], [0, 0, 1, 1], [], []>} : vector<288x4xbf16>, vector<4x32xbf16>, vector<288x32xf32> -> vector<288x32xf32>
    %79 = arith.addf %74, %78 : vector<288x32xf32>
    %c36 = arith.constant 36 : index
    %c0_78 = arith.constant 0 : index
    %80 = vector.load %arg15[%c36, %c0_78] : memref<326x4xbf16, #tpu.memory_space<vmem>>, vector<288x4xbf16>
    %c6 = arith.constant 6 : index
    %c0_79 = arith.constant 0 : index
    %c0_80 = arith.constant 0 : index
    %81 = vector.load %arg2[%c6, %c0_79, %c0_80] : memref<9x4x32xbf16, #tpu.memory_space<vmem>>, vector<1x4x32xbf16>
    %82 = vector.shape_cast %81 : vector<1x4x32xbf16> to vector<4x32xbf16>
    %cst_81 = arith.constant dense<0.000000e+00> : vector<288x32xf32>
    %83 = tpu.matmul %80, %82, %cst_81 {dimension_numbers = #tpu.dot_dimension_numbers<[1], [0], [0], [1], [0, 0, 1, 1], [], []>} : vector<288x4xbf16>, vector<4x32xbf16>, vector<288x32xf32> -> vector<288x32xf32>
    %84 = arith.addf %79, %83 : vector<288x32xf32>
    %c37 = arith.constant 37 : index
    %c0_82 = arith.constant 0 : index
    %85 = vector.load %arg15[%c37, %c0_82] : memref<326x4xbf16, #tpu.memory_space<vmem>>, vector<288x4xbf16>
    %c7 = arith.constant 7 : index
    %c0_83 = arith.constant 0 : index
    %c0_84 = arith.constant 0 : index
    %86 = vector.load %arg2[%c7, %c0_83, %c0_84] : memref<9x4x32xbf16, #tpu.memory_space<vmem>>, vector<1x4x32xbf16>
    %87 = vector.shape_cast %86 : vector<1x4x32xbf16> to vector<4x32xbf16>
    %cst_85 = arith.constant dense<0.000000e+00> : vector<288x32xf32>
    %88 = tpu.matmul %85, %87, %cst_85 {dimension_numbers = #tpu.dot_dimension_numbers<[1], [0], [0], [1], [0, 0, 1, 1], [], []>} : vector<288x4xbf16>, vector<4x32xbf16>, vector<288x32xf32> -> vector<288x32xf32>
    %89 = arith.addf %84, %88 : vector<288x32xf32>
    %c38_86 = arith.constant 38 : index
    %c0_87 = arith.constant 0 : index
    %90 = vector.load %arg15[%c38_86, %c0_87] : memref<326x4xbf16, #tpu.memory_space<vmem>>, vector<288x4xbf16>
    %c8 = arith.constant 8 : index
    %c0_88 = arith.constant 0 : index
    %c0_89 = arith.constant 0 : index
    %91 = vector.load %arg2[%c8, %c0_88, %c0_89] : memref<9x4x32xbf16, #tpu.memory_space<vmem>>, vector<1x4x32xbf16>
    %92 = vector.shape_cast %91 : vector<1x4x32xbf16> to vector<4x32xbf16>
    %cst_90 = arith.constant dense<0.000000e+00> : vector<288x32xf32>
    %93 = tpu.matmul %90, %92, %cst_90 {dimension_numbers = #tpu.dot_dimension_numbers<[1], [0], [0], [1], [0, 0, 1, 1], [], []>} : vector<288x4xbf16>, vector<4x32xbf16>, vector<288x32xf32> -> vector<288x32xf32>
    %94 = arith.addf %89, %93 : vector<288x32xf32>
    %c0_91 = arith.constant 0 : index
    %c0_92 = arith.constant 0 : index
    %95 = vector.load %arg6[%c0_91, %c0_92] : memref<1x32xf32, #tpu.memory_space<vmem>>, vector<1x32xf32>
    %96 = vector.broadcast %95 : vector<1x32xf32> to vector<288x32xf32>
    %97 = arith.addf %94, %96 : vector<288x32xf32>
    %cst_93 = arith.constant 0.000000e+00 : f32
    %98 = vector.broadcast %cst_93 : f32 to vector<288x32xf32>
    %99 = arith.maximumf %97, %98 : vector<288x32xf32>
    %c0_94 = arith.constant 0 : index
    %c0_95 = arith.constant 0 : index
    %100 = vector.load %arg19[%c0_94, %c0_95] : memref<288x32xf32, #tpu.memory_space<vmem>>, vector<288x32xf32>
    tpu.vector_store %arg19[%c0_94, %c0_95], %99 {strides = array<i32>} : memref<288x32xf32, #tpu.memory_space<vmem>>, vector<288x32xf32>,
    %c1_96 = arith.constant 1 : index
    %c0_97 = arith.constant 0 : index
    %101 = tpu.strided_load %arg19[%c1_96, %c0_97] {strides = array<i32: 2, 1>} : memref<288x32xf32, #tpu.memory_space<vmem>>, vector<8x32xf32>
    %c2_98 = arith.constant 2 : index
    %c0_99 = arith.constant 0 : index
    %102 = tpu.strided_load %arg19[%c2_98, %c0_99] {strides = array<i32: 2, 1>} : memref<288x32xf32, #tpu.memory_space<vmem>>, vector<8x32xf32>
    %103 = arith.maximumf %101, %102 : vector<8x32xf32>
    %c19_100 = arith.constant 19 : index
    %c0_101 = arith.constant 0 : index
    %104 = tpu.strided_load %arg19[%c19_100, %c0_101] {strides = array<i32: 2, 1>} : memref<288x32xf32, #tpu.memory_space<vmem>>, vector<8x32xf32>
    %c20_102 = arith.constant 20 : index
    %c0_103 = arith.constant 0 : index
    %105 = tpu.strided_load %arg19[%c20_102, %c0_103] {strides = array<i32: 2, 1>} : memref<288x32xf32, #tpu.memory_space<vmem>>, vector<8x32xf32>
    %106 = arith.maximumf %104, %105 : vector<8x32xf32>
    %107 = arith.maximumf %103, %106 : vector<8x32xf32>
    %108 = arith.truncf %107 : vector<8x32xf32> to vector<8x32xbf16>
    %c12 = arith.constant 12 : index
    %c0_104 = arith.constant 0 : index
    %109 = vector.load %arg16[%c12, %c0_104] : memref<102x32xbf16, #tpu.memory_space<vmem>>, vector<8x32xbf16>
    tpu.vector_store %arg16[%c12, %c0_104], %108 {strides = array<i32>} : memref<102x32xbf16, #tpu.memory_space<vmem>>, vector<8x32xbf16>,
    %c37_105 = arith.constant 37 : index
    %c0_106 = arith.constant 0 : index
    %110 = tpu.strided_load %arg19[%c37_105, %c0_106] {strides = array<i32: 2, 1>} : memref<288x32xf32, #tpu.memory_space<vmem>>, vector<8x32xf32>
    %c38_107 = arith.constant 38 : index
    %c0_108 = arith.constant 0 : index
    %111 = tpu.strided_load %arg19[%c38_107, %c0_108] {strides = array<i32: 2, 1>} : memref<288x32xf32, #tpu.memory_space<vmem>>, vector<8x32xf32>
    %112 = arith.maximumf %110, %111 : vector<8x32xf32>
    %c55 = arith.constant 55 : index
    %c0_109 = arith.constant 0 : index
    %113 = tpu.strided_load %arg19[%c55, %c0_109] {strides = array<i32: 2, 1>} : memref<288x32xf32, #tpu.memory_space<vmem>>, vector<8x32xf32>
    %c56_110 = arith.constant 56 : index
    %c0_111 = arith.constant 0 : index
    %114 = tpu.strided_load %arg19[%c56_110, %c0_111] {strides = array<i32: 2, 1>} : memref<288x32xf32, #tpu.memory_space<vmem>>, vector<8x32xf32>
    %115 = arith.maximumf %113, %114 : vector<8x32xf32>
    %116 = arith.maximumf %112, %115 : vector<8x32xf32>
    %117 = arith.truncf %116 : vector<8x32xf32> to vector<8x32xbf16>
    %c22 = arith.constant 22 : index
    %c0_112 = arith.constant 0 : index
    %118 = vector.load %arg16[%c22, %c0_112] : memref<102x32xbf16, #tpu.memory_space<vmem>>, vector<8x32xbf16>
    tpu.vector_store %arg16[%c22, %c0_112], %117 {strides = array<i32>} : memref<102x32xbf16, #tpu.memory_space<vmem>>, vector<8x32xbf16>,
    %c73 = arith.constant 73 : index
    %c0_113 = arith.constant 0 : index
    %119 = tpu.strided_load %arg19[%c73, %c0_113] {strides = array<i32: 2, 1>} : memref<288x32xf32, #tpu.memory_space<vmem>>, vector<8x32xf32>
    %c74_114 = arith.constant 74 : index
    %c0_115 = arith.constant 0 : index
    %120 = tpu.strided_load %arg19[%c74_114, %c0_115] {strides = array<i32: 2, 1>} : memref<288x32xf32, #tpu.memory_space<vmem>>, vector<8x32xf32>
    %121 = arith.maximumf %119, %120 : vector<8x32xf32>
    %c91 = arith.constant 91 : index
    %c0_116 = arith.constant 0 : index
    %122 = tpu.strided_load %arg19[%c91, %c0_116] {strides = array<i32: 2, 1>} : memref<288x32xf32, #tpu.memory_space<vmem>>, vector<8x32xf32>
    %c92_117 = arith.constant 92 : index
    %c0_118 = arith.constant 0 : index
    %123 = tpu.strided_load %arg19[%c92_117, %c0_118] {strides = array<i32: 2, 1>} : memref<288x32xf32, #tpu.memory_space<vmem>>, vector<8x32xf32>
    %124 = arith.maximumf %122, %123 : vector<8x32xf32>
    %125 = arith.maximumf %121, %124 : vector<8x32xf32>
    %126 = arith.truncf %125 : vector<8x32xf32> to vector<8x32xbf16>
    %c32_119 = arith.constant 32 : index
    %c0_120 = arith.constant 0 : index
    %127 = vector.load %arg16[%c32_119, %c0_120] : memref<102x32xbf16, #tpu.memory_space<vmem>>, vector<8x32xbf16>
    tpu.vector_store %arg16[%c32_119, %c0_120], %126 {strides = array<i32>} : memref<102x32xbf16, #tpu.memory_space<vmem>>, vector<8x32xbf16>,
    %c109 = arith.constant 109 : index
    %c0_121 = arith.constant 0 : index
    %128 = tpu.strided_load %arg19[%c109, %c0_121] {strides = array<i32: 2, 1>} : memref<288x32xf32, #tpu.memory_space<vmem>>, vector<8x32xf32>
    %c110_122 = arith.constant 110 : index
    %c0_123 = arith.constant 0 : index
    %129 = tpu.strided_load %arg19[%c110_122, %c0_123] {strides = array<i32: 2, 1>} : memref<288x32xf32, #tpu.memory_space<vmem>>, vector<8x32xf32>
    %130 = arith.maximumf %128, %129 : vector<8x32xf32>
    %c127 = arith.constant 127 : index
    %c0_124 = arith.constant 0 : index
    %131 = tpu.strided_load %arg19[%c127, %c0_124] {strides = array<i32: 2, 1>} : memref<288x32xf32, #tpu.memory_space<vmem>>, vector<8x32xf32>
    %c128_125 = arith.constant 128 : index
    %c0_126 = arith.constant 0 : index
    %132 = tpu.strided_load %arg19[%c128_125, %c0_126] {strides = array<i32: 2, 1>} : memref<288x32xf32, #tpu.memory_space<vmem>>, vector<8x32xf32>
    %133 = arith.maximumf %131, %132 : vector<8x32xf32>
    %134 = arith.maximumf %130, %133 : vector<8x32xf32>
    %135 = arith.truncf %134 : vector<8x32xf32> to vector<8x32xbf16>
    %c42 = arith.constant 42 : index
    %c0_127 = arith.constant 0 : index
    %136 = vector.load %arg16[%c42, %c0_127] : memref<102x32xbf16, #tpu.memory_space<vmem>>, vector<8x32xbf16>
    tpu.vector_store %arg16[%c42, %c0_127], %135 {strides = array<i32>} : memref<102x32xbf16, #tpu.memory_space<vmem>>, vector<8x32xbf16>,
    %c145 = arith.constant 145 : index
    %c0_128 = arith.constant 0 : index
    %137 = tpu.strided_load %arg19[%c145, %c0_128] {strides = array<i32: 2, 1>} : memref<288x32xf32, #tpu.memory_space<vmem>>, vector<8x32xf32>
    %c146_129 = arith.constant 146 : index
    %c0_130 = arith.constant 0 : index
    %138 = tpu.strided_load %arg19[%c146_129, %c0_130] {strides = array<i32: 2, 1>} : memref<288x32xf32, #tpu.memory_space<vmem>>, vector<8x32xf32>
    %139 = arith.maximumf %137, %138 : vector<8x32xf32>
    %c163 = arith.constant 163 : index
    %c0_131 = arith.constant 0 : index
    %140 = tpu.strided_load %arg19[%c163, %c0_131] {strides = array<i32: 2, 1>} : memref<288x32xf32, #tpu.memory_space<vmem>>, vector<8x32xf32>
    %c164_132 = arith.constant 164 : index
    %c0_133 = arith.constant 0 : index
    %141 = tpu.strided_load %arg19[%c164_132, %c0_133] {strides = array<i32: 2, 1>} : memref<288x32xf32, #tpu.memory_space<vmem>>, vector<8x32xf32>
    %142 = arith.maximumf %140, %141 : vector<8x32xf32>
    %143 = arith.maximumf %139, %142 : vector<8x32xf32>
    %144 = arith.truncf %143 : vector<8x32xf32> to vector<8x32xbf16>
    %c52 = arith.constant 52 : index
    %c0_134 = arith.constant 0 : index
    %145 = vector.load %arg16[%c52, %c0_134] : memref<102x32xbf16, #tpu.memory_space<vmem>>, vector<8x32xbf16>
    tpu.vector_store %arg16[%c52, %c0_134], %144 {strides = array<i32>} : memref<102x32xbf16, #tpu.memory_space<vmem>>, vector<8x32xbf16>,
    %c181 = arith.constant 181 : index
    %c0_135 = arith.constant 0 : index
    %146 = tpu.strided_load %arg19[%c181, %c0_135] {strides = array<i32: 2, 1>} : memref<288x32xf32, #tpu.memory_space<vmem>>, vector<8x32xf32>
    %c182_136 = arith.constant 182 : index
    %c0_137 = arith.constant 0 : index
    %147 = tpu.strided_load %arg19[%c182_136, %c0_137] {strides = array<i32: 2, 1>} : memref<288x32xf32, #tpu.memory_space<vmem>>, vector<8x32xf32>
    %148 = arith.maximumf %146, %147 : vector<8x32xf32>
    %c199 = arith.constant 199 : index
    %c0_138 = arith.constant 0 : index
    %149 = tpu.strided_load %arg19[%c199, %c0_138] {strides = array<i32: 2, 1>} : memref<288x32xf32, #tpu.memory_space<vmem>>, vector<8x32xf32>
    %c200_139 = arith.constant 200 : index
    %c0_140 = arith.constant 0 : index
    %150 = tpu.strided_load %arg19[%c200_139, %c0_140] {strides = array<i32: 2, 1>} : memref<288x32xf32, #tpu.memory_space<vmem>>, vector<8x32xf32>
    %151 = arith.maximumf %149, %150 : vector<8x32xf32>
    %152 = arith.maximumf %148, %151 : vector<8x32xf32>
    %153 = arith.truncf %152 : vector<8x32xf32> to vector<8x32xbf16>
    %c62 = arith.constant 62 : index
    %c0_141 = arith.constant 0 : index
    %154 = vector.load %arg16[%c62, %c0_141] : memref<102x32xbf16, #tpu.memory_space<vmem>>, vector<8x32xbf16>
    tpu.vector_store %arg16[%c62, %c0_141], %153 {strides = array<i32>} : memref<102x32xbf16, #tpu.memory_space<vmem>>, vector<8x32xbf16>,
    %c217 = arith.constant 217 : index
    %c0_142 = arith.constant 0 : index
    %155 = tpu.strided_load %arg19[%c217, %c0_142] {strides = array<i32: 2, 1>} : memref<288x32xf32, #tpu.memory_space<vmem>>, vector<8x32xf32>
    %c218_143 = arith.constant 218 : index
    %c0_144 = arith.constant 0 : index
    %156 = tpu.strided_load %arg19[%c218_143, %c0_144] {strides = array<i32: 2, 1>} : memref<288x32xf32, #tpu.memory_space<vmem>>, vector<8x32xf32>
    %157 = arith.maximumf %155, %156 : vector<8x32xf32>
    %c235 = arith.constant 235 : index
    %c0_145 = arith.constant 0 : index
    %158 = tpu.strided_load %arg19[%c235, %c0_145] {strides = array<i32: 2, 1>} : memref<288x32xf32, #tpu.memory_space<vmem>>, vector<8x32xf32>
    %c236_146 = arith.constant 236 : index
    %c0_147 = arith.constant 0 : index
    %159 = tpu.strided_load %arg19[%c236_146, %c0_147] {strides = array<i32: 2, 1>} : memref<288x32xf32, #tpu.memory_space<vmem>>, vector<8x32xf32>
    %160 = arith.maximumf %158, %159 : vector<8x32xf32>
    %161 = arith.maximumf %157, %160 : vector<8x32xf32>
    %162 = arith.truncf %161 : vector<8x32xf32> to vector<8x32xbf16>
    %c72 = arith.constant 72 : index
    %c0_148 = arith.constant 0 : index
    %163 = vector.load %arg16[%c72, %c0_148] : memref<102x32xbf16, #tpu.memory_space<vmem>>, vector<8x32xbf16>
    tpu.vector_store %arg16[%c72, %c0_148], %162 {strides = array<i32>} : memref<102x32xbf16, #tpu.memory_space<vmem>>, vector<8x32xbf16>,
    %c253 = arith.constant 253 : index
    %c0_149 = arith.constant 0 : index
    %164 = tpu.strided_load %arg19[%c253, %c0_149] {strides = array<i32: 2, 1>} : memref<288x32xf32, #tpu.memory_space<vmem>>, vector<8x32xf32>
    %c254_150 = arith.constant 254 : index
    %c0_151 = arith.constant 0 : index
    %165 = tpu.strided_load %arg19[%c254_150, %c0_151] {strides = array<i32: 2, 1>} : memref<288x32xf32, #tpu.memory_space<vmem>>, vector<8x32xf32>
    %166 = arith.maximumf %164, %165 : vector<8x32xf32>
    %c271 = arith.constant 271 : index
    %c0_152 = arith.constant 0 : index
    %167 = tpu.strided_load %arg19[%c271, %c0_152] {strides = array<i32: 2, 1>} : memref<288x32xf32, #tpu.memory_space<vmem>>, vector<8x32xf32>
    %c272_153 = arith.constant 272 : index
    %c0_154 = arith.constant 0 : index
    %168 = tpu.strided_load %arg19[%c272_153, %c0_154] {strides = array<i32: 2, 1>} : memref<288x32xf32, #tpu.memory_space<vmem>>, vector<8x32xf32>
    %169 = arith.maximumf %167, %168 : vector<8x32xf32>
    %170 = arith.maximumf %166, %169 : vector<8x32xf32>
    %171 = arith.truncf %170 : vector<8x32xf32> to vector<8x32xbf16>
    %c82 = arith.constant 82 : index
    %c0_155 = arith.constant 0 : index
    %172 = vector.load %arg16[%c82, %c0_155] : memref<102x32xbf16, #tpu.memory_space<vmem>>, vector<8x32xbf16>
    tpu.vector_store %arg16[%c82, %c0_155], %171 {strides = array<i32>} : memref<102x32xbf16, #tpu.memory_space<vmem>>, vector<8x32xbf16>,
    %c0_156 = arith.constant 0 : index
    %c0_157 = arith.constant 0 : index
    %173 = vector.load %arg16[%c0_156, %c0_157] : memref<102x32xbf16, #tpu.memory_space<vmem>>, vector<80x32xbf16>
    %c0_158 = arith.constant 0 : index
    %c0_159 = arith.constant 0 : index
    %c0_160 = arith.constant 0 : index
    %174 = vector.load %arg3[%c0_158, %c0_159, %c0_160] : memref<9x32x32xbf16, #tpu.memory_space<vmem>>, vector<1x32x32xbf16>
    %175 = vector.shape_cast %174 : vector<1x32x32xbf16> to vector<32x32xbf16>
    %cst_161 = arith.constant dense<0.000000e+00> : vector<80x32xf32>
    %176 = tpu.matmul %173, %175, %cst_161 {dimension_numbers = #tpu.dot_dimension_numbers<[1], [0], [0], [1], [0, 0, 1, 1], [], []>} : vector<80x32xbf16>, vector<32x32xbf16>, vector<80x32xf32> -> vector<80x32xf32>
    %c1_162 = arith.constant 1 : index
    %c0_163 = arith.constant 0 : index
    %177 = vector.load %arg16[%c1_162, %c0_163] : memref<102x32xbf16, #tpu.memory_space<vmem>>, vector<80x32xbf16>
    %c1_164 = arith.constant 1 : index
    %c0_165 = arith.constant 0 : index
    %c0_166 = arith.constant 0 : index
    %178 = vector.load %arg3[%c1_164, %c0_165, %c0_166] : memref<9x32x32xbf16, #tpu.memory_space<vmem>>, vector<1x32x32xbf16>
    %179 = vector.shape_cast %178 : vector<1x32x32xbf16> to vector<32x32xbf16>
    %cst_167 = arith.constant dense<0.000000e+00> : vector<80x32xf32>
    %180 = tpu.matmul %177, %179, %cst_167 {dimension_numbers = #tpu.dot_dimension_numbers<[1], [0], [0], [1], [0, 0, 1, 1], [], []>} : vector<80x32xbf16>, vector<32x32xbf16>, vector<80x32xf32> -> vector<80x32xf32>
    %181 = arith.addf %176, %180 : vector<80x32xf32>
    %c2_168 = arith.constant 2 : index
    %c0_169 = arith.constant 0 : index
    %182 = vector.load %arg16[%c2_168, %c0_169] : memref<102x32xbf16, #tpu.memory_space<vmem>>, vector<80x32xbf16>
    %c2_170 = arith.constant 2 : index
    %c0_171 = arith.constant 0 : index
    %c0_172 = arith.constant 0 : index
    %183 = vector.load %arg3[%c2_170, %c0_171, %c0_172] : memref<9x32x32xbf16, #tpu.memory_space<vmem>>, vector<1x32x32xbf16>
    %184 = vector.shape_cast %183 : vector<1x32x32xbf16> to vector<32x32xbf16>
    %cst_173 = arith.constant dense<0.000000e+00> : vector<80x32xf32>
    %185 = tpu.matmul %182, %184, %cst_173 {dimension_numbers = #tpu.dot_dimension_numbers<[1], [0], [0], [1], [0, 0, 1, 1], [], []>} : vector<80x32xbf16>, vector<32x32xbf16>, vector<80x32xf32> -> vector<80x32xf32>
    %186 = arith.addf %181, %185 : vector<80x32xf32>
    %c10 = arith.constant 10 : index
    %c0_174 = arith.constant 0 : index
    %187 = vector.load %arg16[%c10, %c0_174] : memref<102x32xbf16, #tpu.memory_space<vmem>>, vector<80x32xbf16>
    %c3_175 = arith.constant 3 : index
    %c0_176 = arith.constant 0 : index
    %c0_177 = arith.constant 0 : index
    %188 = vector.load %arg3[%c3_175, %c0_176, %c0_177] : memref<9x32x32xbf16, #tpu.memory_space<vmem>>, vector<1x32x32xbf16>
    %189 = vector.shape_cast %188 : vector<1x32x32xbf16> to vector<32x32xbf16>
    %cst_178 = arith.constant dense<0.000000e+00> : vector<80x32xf32>
    %190 = tpu.matmul %187, %189, %cst_178 {dimension_numbers = #tpu.dot_dimension_numbers<[1], [0], [0], [1], [0, 0, 1, 1], [], []>} : vector<80x32xbf16>, vector<32x32xbf16>, vector<80x32xf32> -> vector<80x32xf32>
    %191 = arith.addf %186, %190 : vector<80x32xf32>
    %c11 = arith.constant 11 : index
    %c0_179 = arith.constant 0 : index
    %192 = vector.load %arg16[%c11, %c0_179] : memref<102x32xbf16, #tpu.memory_space<vmem>>, vector<80x32xbf16>
    %c4_180 = arith.constant 4 : index
    %c0_181 = arith.constant 0 : index
    %c0_182 = arith.constant 0 : index
    %193 = vector.load %arg3[%c4_180, %c0_181, %c0_182] : memref<9x32x32xbf16, #tpu.memory_space<vmem>>, vector<1x32x32xbf16>
    %194 = vector.shape_cast %193 : vector<1x32x32xbf16> to vector<32x32xbf16>
    %cst_183 = arith.constant dense<0.000000e+00> : vector<80x32xf32>
    %195 = tpu.matmul %192, %194, %cst_183 {dimension_numbers = #tpu.dot_dimension_numbers<[1], [0], [0], [1], [0, 0, 1, 1], [], []>} : vector<80x32xbf16>, vector<32x32xbf16>, vector<80x32xf32> -> vector<80x32xf32>
    %196 = arith.addf %191, %195 : vector<80x32xf32>
    %c12_184 = arith.constant 12 : index
    %c0_185 = arith.constant 0 : index
    %197 = vector.load %arg16[%c12_184, %c0_185] : memref<102x32xbf16, #tpu.memory_space<vmem>>, vector<80x32xbf16>
    %c5_186 = arith.constant 5 : index
    %c0_187 = arith.constant 0 : index
    %c0_188 = arith.constant 0 : index
    %198 = vector.load %arg3[%c5_186, %c0_187, %c0_188] : memref<9x32x32xbf16, #tpu.memory_space<vmem>>, vector<1x32x32xbf16>
    %199 = vector.shape_cast %198 : vector<1x32x32xbf16> to vector<32x32xbf16>
    %cst_189 = arith.constant dense<0.000000e+00> : vector<80x32xf32>
    %200 = tpu.matmul %197, %199, %cst_189 {dimension_numbers = #tpu.dot_dimension_numbers<[1], [0], [0], [1], [0, 0, 1, 1], [], []>} : vector<80x32xbf16>, vector<32x32xbf16>, vector<80x32xf32> -> vector<80x32xf32>
    %201 = arith.addf %196, %200 : vector<80x32xf32>
    %c20_190 = arith.constant 20 : index
    %c0_191 = arith.constant 0 : index
    %202 = vector.load %arg16[%c20_190, %c0_191] : memref<102x32xbf16, #tpu.memory_space<vmem>>, vector<80x32xbf16>
    %c6_192 = arith.constant 6 : index
    %c0_193 = arith.constant 0 : index
    %c0_194 = arith.constant 0 : index
    %203 = vector.load %arg3[%c6_192, %c0_193, %c0_194] : memref<9x32x32xbf16, #tpu.memory_space<vmem>>, vector<1x32x32xbf16>
    %204 = vector.shape_cast %203 : vector<1x32x32xbf16> to vector<32x32xbf16>
    %cst_195 = arith.constant dense<0.000000e+00> : vector<80x32xf32>
    %205 = tpu.matmul %202, %204, %cst_195 {dimension_numbers = #tpu.dot_dimension_numbers<[1], [0], [0], [1], [0, 0, 1, 1], [], []>} : vector<80x32xbf16>, vector<32x32xbf16>, vector<80x32xf32> -> vector<80x32xf32>
    %206 = arith.addf %201, %205 : vector<80x32xf32>
    %c21 = arith.constant 21 : index
    %c0_196 = arith.constant 0 : index
    %207 = vector.load %arg16[%c21, %c0_196] : memref<102x32xbf16, #tpu.memory_space<vmem>>, vector<80x32xbf16>
    %c7_197 = arith.constant 7 : index
    %c0_198 = arith.constant 0 : index
    %c0_199 = arith.constant 0 : index
    %208 = vector.load %arg3[%c7_197, %c0_198, %c0_199] : memref<9x32x32xbf16, #tpu.memory_space<vmem>>, vector<1x32x32xbf16>
    %209 = vector.shape_cast %208 : vector<1x32x32xbf16> to vector<32x32xbf16>
    %cst_200 = arith.constant dense<0.000000e+00> : vector<80x32xf32>
    %210 = tpu.matmul %207, %209, %cst_200 {dimension_numbers = #tpu.dot_dimension_numbers<[1], [0], [0], [1], [0, 0, 1, 1], [], []>} : vector<80x32xbf16>, vector<32x32xbf16>, vector<80x32xf32> -> vector<80x32xf32>
    %211 = arith.addf %206, %210 : vector<80x32xf32>
    %c22_201 = arith.constant 22 : index
    %c0_202 = arith.constant 0 : index
    %212 = vector.load %arg16[%c22_201, %c0_202] : memref<102x32xbf16, #tpu.memory_space<vmem>>, vector<80x32xbf16>
    %c8_203 = arith.constant 8 : index
    %c0_204 = arith.constant 0 : index
    %c0_205 = arith.constant 0 : index
    %213 = vector.load %arg3[%c8_203, %c0_204, %c0_205] : memref<9x32x32xbf16, #tpu.memory_space<vmem>>, vector<1x32x32xbf16>
    %214 = vector.shape_cast %213 : vector<1x32x32xbf16> to vector<32x32xbf16>
    %cst_206 = arith.constant dense<0.000000e+00> : vector<80x32xf32>
    %215 = tpu.matmul %212, %214, %cst_206 {dimension_numbers = #tpu.dot_dimension_numbers<[1], [0], [0], [1], [0, 0, 1, 1], [], []>} : vector<80x32xbf16>, vector<32x32xbf16>, vector<80x32xf32> -> vector<80x32xf32>
    %216 = arith.addf %211, %215 : vector<80x32xf32>
    %c0_207 = arith.constant 0 : index
    %c0_208 = arith.constant 0 : index
    %217 = vector.load %arg7[%c0_207, %c0_208] : memref<1x32xf32, #tpu.memory_space<vmem>>, vector<1x32xf32>
    %218 = vector.broadcast %217 : vector<1x32xf32> to vector<80x32xf32>
    %219 = arith.addf %216, %218 : vector<80x32xf32>
    %cst_209 = arith.constant 0.000000e+00 : f32
    %220 = vector.broadcast %cst_209 : f32 to vector<80x32xf32>
    %221 = arith.maximumf %219, %220 : vector<80x32xf32>
    %c0_210 = arith.constant 0 : index
    %c0_211 = arith.constant 0 : index
    %222 = vector.load %arg20[%c0_210, %c0_211] : memref<80x32xf32, #tpu.memory_space<vmem>>, vector<80x32xf32>
    tpu.vector_store %arg20[%c0_210, %c0_211], %221 {strides = array<i32>} : memref<80x32xf32, #tpu.memory_space<vmem>>, vector<80x32xf32>,
    %c1_212 = arith.constant 1 : index
    %c0_213 = arith.constant 0 : index
    %223 = tpu.strided_load %arg20[%c1_212, %c0_213] {strides = array<i32: 2, 1>} : memref<80x32xf32, #tpu.memory_space<vmem>>, vector<4x32xf32>
    %c2_214 = arith.constant 2 : index
    %c0_215 = arith.constant 0 : index
    %224 = tpu.strided_load %arg20[%c2_214, %c0_215] {strides = array<i32: 2, 1>} : memref<80x32xf32, #tpu.memory_space<vmem>>, vector<4x32xf32>
    %225 = arith.maximumf %223, %224 : vector<4x32xf32>
    %c11_216 = arith.constant 11 : index
    %c0_217 = arith.constant 0 : index
    %226 = tpu.strided_load %arg20[%c11_216, %c0_217] {strides = array<i32: 2, 1>} : memref<80x32xf32, #tpu.memory_space<vmem>>, vector<4x32xf32>
    %c12_218 = arith.constant 12 : index
    %c0_219 = arith.constant 0 : index
    %227 = tpu.strided_load %arg20[%c12_218, %c0_219] {strides = array<i32: 2, 1>} : memref<80x32xf32, #tpu.memory_space<vmem>>, vector<4x32xf32>
    %228 = arith.maximumf %226, %227 : vector<4x32xf32>
    %229 = arith.maximumf %225, %228 : vector<4x32xf32>
    %230 = arith.truncf %229 : vector<4x32xf32> to vector<4x32xbf16>
    %c8_220 = arith.constant 8 : index
    %c0_221 = arith.constant 0 : index
    %231 = vector.load %arg17[%c8_220, %c0_221] : memref<38x32xbf16, #tpu.memory_space<vmem>>, vector<4x32xbf16>
    tpu.vector_store %arg17[%c8_220, %c0_221], %230 {strides = array<i32>} : memref<38x32xbf16, #tpu.memory_space<vmem>>, vector<4x32xbf16>,
    %c21_222 = arith.constant 21 : index
    %c0_223 = arith.constant 0 : index
    %232 = tpu.strided_load %arg20[%c21_222, %c0_223] {strides = array<i32: 2, 1>} : memref<80x32xf32, #tpu.memory_space<vmem>>, vector<4x32xf32>
    %c22_224 = arith.constant 22 : index
    %c0_225 = arith.constant 0 : index
    %233 = tpu.strided_load %arg20[%c22_224, %c0_225] {strides = array<i32: 2, 1>} : memref<80x32xf32, #tpu.memory_space<vmem>>, vector<4x32xf32>
    %234 = arith.maximumf %232, %233 : vector<4x32xf32>
    %c31 = arith.constant 31 : index
    %c0_226 = arith.constant 0 : index
    %235 = tpu.strided_load %arg20[%c31, %c0_226] {strides = array<i32: 2, 1>} : memref<80x32xf32, #tpu.memory_space<vmem>>, vector<4x32xf32>
    %c32_227 = arith.constant 32 : index
    %c0_228 = arith.constant 0 : index
    %236 = tpu.strided_load %arg20[%c32_227, %c0_228] {strides = array<i32: 2, 1>} : memref<80x32xf32, #tpu.memory_space<vmem>>, vector<4x32xf32>
    %237 = arith.maximumf %235, %236 : vector<4x32xf32>
    %238 = arith.maximumf %234, %237 : vector<4x32xf32>
    %239 = arith.truncf %238 : vector<4x32xf32> to vector<4x32xbf16>
    %c14 = arith.constant 14 : index
    %c0_229 = arith.constant 0 : index
    %240 = vector.load %arg17[%c14, %c0_229] : memref<38x32xbf16, #tpu.memory_space<vmem>>, vector<4x32xbf16>
    tpu.vector_store %arg17[%c14, %c0_229], %239 {strides = array<i32>} : memref<38x32xbf16, #tpu.memory_space<vmem>>, vector<4x32xbf16>,
    %c41 = arith.constant 41 : index
    %c0_230 = arith.constant 0 : index
    %241 = tpu.strided_load %arg20[%c41, %c0_230] {strides = array<i32: 2, 1>} : memref<80x32xf32, #tpu.memory_space<vmem>>, vector<4x32xf32>
    %c42_231 = arith.constant 42 : index
    %c0_232 = arith.constant 0 : index
    %242 = tpu.strided_load %arg20[%c42_231, %c0_232] {strides = array<i32: 2, 1>} : memref<80x32xf32, #tpu.memory_space<vmem>>, vector<4x32xf32>
    %243 = arith.maximumf %241, %242 : vector<4x32xf32>
    %c51 = arith.constant 51 : index
    %c0_233 = arith.constant 0 : index
    %244 = tpu.strided_load %arg20[%c51, %c0_233] {strides = array<i32: 2, 1>} : memref<80x32xf32, #tpu.memory_space<vmem>>, vector<4x32xf32>
    %c52_234 = arith.constant 52 : index
    %c0_235 = arith.constant 0 : index
    %245 = tpu.strided_load %arg20[%c52_234, %c0_235] {strides = array<i32: 2, 1>} : memref<80x32xf32, #tpu.memory_space<vmem>>, vector<4x32xf32>
    %246 = arith.maximumf %244, %245 : vector<4x32xf32>
    %247 = arith.maximumf %243, %246 : vector<4x32xf32>
    %248 = arith.truncf %247 : vector<4x32xf32> to vector<4x32xbf16>
    %c20_236 = arith.constant 20 : index
    %c0_237 = arith.constant 0 : index
    %249 = vector.load %arg17[%c20_236, %c0_237] : memref<38x32xbf16, #tpu.memory_space<vmem>>, vector<4x32xbf16>
    tpu.vector_store %arg17[%c20_236, %c0_237], %248 {strides = array<i32>} : memref<38x32xbf16, #tpu.memory_space<vmem>>, vector<4x32xbf16>,
    %c61 = arith.constant 61 : index
    %c0_238 = arith.constant 0 : index
    %250 = tpu.strided_load %arg20[%c61, %c0_238] {strides = array<i32: 2, 1>} : memref<80x32xf32, #tpu.memory_space<vmem>>, vector<4x32xf32>
    %c62_239 = arith.constant 62 : index
    %c0_240 = arith.constant 0 : index
    %251 = tpu.strided_load %arg20[%c62_239, %c0_240] {strides = array<i32: 2, 1>} : memref<80x32xf32, #tpu.memory_space<vmem>>, vector<4x32xf32>
    %252 = arith.maximumf %250, %251 : vector<4x32xf32>
    %c71 = arith.constant 71 : index
    %c0_241 = arith.constant 0 : index
    %253 = tpu.strided_load %arg20[%c71, %c0_241] {strides = array<i32: 2, 1>} : memref<80x32xf32, #tpu.memory_space<vmem>>, vector<4x32xf32>
    %c72_242 = arith.constant 72 : index
    %c0_243 = arith.constant 0 : index
    %254 = tpu.strided_load %arg20[%c72_242, %c0_243] {strides = array<i32: 2, 1>} : memref<80x32xf32, #tpu.memory_space<vmem>>, vector<4x32xf32>
    %255 = arith.maximumf %253, %254 : vector<4x32xf32>
    %256 = arith.maximumf %252, %255 : vector<4x32xf32>
    %257 = arith.truncf %256 : vector<4x32xf32> to vector<4x32xbf16>
    %c26 = arith.constant 26 : index
    %c0_244 = arith.constant 0 : index
    %258 = vector.load %arg17[%c26, %c0_244] : memref<38x32xbf16, #tpu.memory_space<vmem>>, vector<4x32xbf16>
    tpu.vector_store %arg17[%c26, %c0_244], %257 {strides = array<i32>} : memref<38x32xbf16, #tpu.memory_space<vmem>>, vector<4x32xbf16>,
    %c0_245 = arith.constant 0 : index
    %c0_246 = arith.constant 0 : index
    %259 = vector.load %arg17[%c0_245, %c0_246] : memref<38x32xbf16, #tpu.memory_space<vmem>>, vector<24x32xbf16>
    %c0_247 = arith.constant 0 : index
    %c0_248 = arith.constant 0 : index
    %c0_249 = arith.constant 0 : index
    %260 = vector.load %arg4[%c0_247, %c0_248, %c0_249] : memref<9x32x64xbf16, #tpu.memory_space<vmem>>, vector<1x32x64xbf16>
    %261 = vector.shape_cast %260 : vector<1x32x64xbf16> to vector<32x64xbf16>
    %cst_250 = arith.constant dense<0.000000e+00> : vector<24x64xf32>
    %262 = tpu.matmul %259, %261, %cst_250 {dimension_numbers = #tpu.dot_dimension_numbers<[1], [0], [0], [1], [0, 0, 1, 1], [], []>} : vector<24x32xbf16>, vector<32x64xbf16>, vector<24x64xf32> -> vector<24x64xf32>
    %c1_251 = arith.constant 1 : index
    %c0_252 = arith.constant 0 : index
    %263 = vector.load %arg17[%c1_251, %c0_252] : memref<38x32xbf16, #tpu.memory_space<vmem>>, vector<24x32xbf16>
    %c1_253 = arith.constant 1 : index
    %c0_254 = arith.constant 0 : index
    %c0_255 = arith.constant 0 : index
    %264 = vector.load %arg4[%c1_253, %c0_254, %c0_255] : memref<9x32x64xbf16, #tpu.memory_space<vmem>>, vector<1x32x64xbf16>
    %265 = vector.shape_cast %264 : vector<1x32x64xbf16> to vector<32x64xbf16>
    %cst_256 = arith.constant dense<0.000000e+00> : vector<24x64xf32>
    %266 = tpu.matmul %263, %265, %cst_256 {dimension_numbers = #tpu.dot_dimension_numbers<[1], [0], [0], [1], [0, 0, 1, 1], [], []>} : vector<24x32xbf16>, vector<32x64xbf16>, vector<24x64xf32> -> vector<24x64xf32>
    %267 = arith.addf %262, %266 : vector<24x64xf32>
    %c2_257 = arith.constant 2 : index
    %c0_258 = arith.constant 0 : index
    %268 = vector.load %arg17[%c2_257, %c0_258] : memref<38x32xbf16, #tpu.memory_space<vmem>>, vector<24x32xbf16>
    %c2_259 = arith.constant 2 : index
    %c0_260 = arith.constant 0 : index
    %c0_261 = arith.constant 0 : index
    %269 = vector.load %arg4[%c2_259, %c0_260, %c0_261] : memref<9x32x64xbf16, #tpu.memory_space<vmem>>, vector<1x32x64xbf16>
    %270 = vector.shape_cast %269 : vector<1x32x64xbf16> to vector<32x64xbf16>
    %cst_262 = arith.constant dense<0.000000e+00> : vector<24x64xf32>
    %271 = tpu.matmul %268, %270, %cst_262 {dimension_numbers = #tpu.dot_dimension_numbers<[1], [0], [0], [1], [0, 0, 1, 1], [], []>} : vector<24x32xbf16>, vector<32x64xbf16>, vector<24x64xf32> -> vector<24x64xf32>
    %272 = arith.addf %267, %271 : vector<24x64xf32>
    %c6_263 = arith.constant 6 : index
    %c0_264 = arith.constant 0 : index
    %273 = vector.load %arg17[%c6_263, %c0_264] : memref<38x32xbf16, #tpu.memory_space<vmem>>, vector<24x32xbf16>
    %c3_265 = arith.constant 3 : index
    %c0_266 = arith.constant 0 : index
    %c0_267 = arith.constant 0 : index
    %274 = vector.load %arg4[%c3_265, %c0_266, %c0_267] : memref<9x32x64xbf16, #tpu.memory_space<vmem>>, vector<1x32x64xbf16>
    %275 = vector.shape_cast %274 : vector<1x32x64xbf16> to vector<32x64xbf16>
    %cst_268 = arith.constant dense<0.000000e+00> : vector<24x64xf32>
    %276 = tpu.matmul %273, %275, %cst_268 {dimension_numbers = #tpu.dot_dimension_numbers<[1], [0], [0], [1], [0, 0, 1, 1], [], []>} : vector<24x32xbf16>, vector<32x64xbf16>, vector<24x64xf32> -> vector<24x64xf32>
    %277 = arith.addf %272, %276 : vector<24x64xf32>
    %c7_269 = arith.constant 7 : index
    %c0_270 = arith.constant 0 : index
    %278 = vector.load %arg17[%c7_269, %c0_270] : memref<38x32xbf16, #tpu.memory_space<vmem>>, vector<24x32xbf16>
    %c4_271 = arith.constant 4 : index
    %c0_272 = arith.constant 0 : index
    %c0_273 = arith.constant 0 : index
    %279 = vector.load %arg4[%c4_271, %c0_272, %c0_273] : memref<9x32x64xbf16, #tpu.memory_space<vmem>>, vector<1x32x64xbf16>
    %280 = vector.shape_cast %279 : vector<1x32x64xbf16> to vector<32x64xbf16>
    %cst_274 = arith.constant dense<0.000000e+00> : vector<24x64xf32>
    %281 = tpu.matmul %278, %280, %cst_274 {dimension_numbers = #tpu.dot_dimension_numbers<[1], [0], [0], [1], [0, 0, 1, 1], [], []>} : vector<24x32xbf16>, vector<32x64xbf16>, vector<24x64xf32> -> vector<24x64xf32>
    %282 = arith.addf %277, %281 : vector<24x64xf32>
    %c8_275 = arith.constant 8 : index
    %c0_276 = arith.constant 0 : index
    %283 = vector.load %arg17[%c8_275, %c0_276] : memref<38x32xbf16, #tpu.memory_space<vmem>>, vector<24x32xbf16>
    %c5_277 = arith.constant 5 : index
    %c0_278 = arith.constant 0 : index
    %c0_279 = arith.constant 0 : index
    %284 = vector.load %arg4[%c5_277, %c0_278, %c0_279] : memref<9x32x64xbf16, #tpu.memory_space<vmem>>, vector<1x32x64xbf16>
    %285 = vector.shape_cast %284 : vector<1x32x64xbf16> to vector<32x64xbf16>
    %cst_280 = arith.constant dense<0.000000e+00> : vector<24x64xf32>
    %286 = tpu.matmul %283, %285, %cst_280 {dimension_numbers = #tpu.dot_dimension_numbers<[1], [0], [0], [1], [0, 0, 1, 1], [], []>} : vector<24x32xbf16>, vector<32x64xbf16>, vector<24x64xf32> -> vector<24x64xf32>
    %287 = arith.addf %282, %286 : vector<24x64xf32>
    %c12_281 = arith.constant 12 : index
    %c0_282 = arith.constant 0 : index
    %288 = vector.load %arg17[%c12_281, %c0_282] : memref<38x32xbf16, #tpu.memory_space<vmem>>, vector<24x32xbf16>
    %c6_283 = arith.constant 6 : index
    %c0_284 = arith.constant 0 : index
    %c0_285 = arith.constant 0 : index
    %289 = vector.load %arg4[%c6_283, %c0_284, %c0_285] : memref<9x32x64xbf16, #tpu.memory_space<vmem>>, vector<1x32x64xbf16>
    %290 = vector.shape_cast %289 : vector<1x32x64xbf16> to vector<32x64xbf16>
    %cst_286 = arith.constant dense<0.000000e+00> : vector<24x64xf32>
    %291 = tpu.matmul %288, %290, %cst_286 {dimension_numbers = #tpu.dot_dimension_numbers<[1], [0], [0], [1], [0, 0, 1, 1], [], []>} : vector<24x32xbf16>, vector<32x64xbf16>, vector<24x64xf32> -> vector<24x64xf32>
    %292 = arith.addf %287, %291 : vector<24x64xf32>
    %c13 = arith.constant 13 : index
    %c0_287 = arith.constant 0 : index
    %293 = vector.load %arg17[%c13, %c0_287] : memref<38x32xbf16, #tpu.memory_space<vmem>>, vector<24x32xbf16>
    %c7_288 = arith.constant 7 : index
    %c0_289 = arith.constant 0 : index
    %c0_290 = arith.constant 0 : index
    %294 = vector.load %arg4[%c7_288, %c0_289, %c0_290] : memref<9x32x64xbf16, #tpu.memory_space<vmem>>, vector<1x32x64xbf16>
    %295 = vector.shape_cast %294 : vector<1x32x64xbf16> to vector<32x64xbf16>
    %cst_291 = arith.constant dense<0.000000e+00> : vector<24x64xf32>
    %296 = tpu.matmul %293, %295, %cst_291 {dimension_numbers = #tpu.dot_dimension_numbers<[1], [0], [0], [1], [0, 0, 1, 1], [], []>} : vector<24x32xbf16>, vector<32x64xbf16>, vector<24x64xf32> -> vector<24x64xf32>
    %297 = arith.addf %292, %296 : vector<24x64xf32>
    %c14_292 = arith.constant 14 : index
    %c0_293 = arith.constant 0 : index
    %298 = vector.load %arg17[%c14_292, %c0_293] : memref<38x32xbf16, #tpu.memory_space<vmem>>, vector<24x32xbf16>
    %c8_294 = arith.constant 8 : index
    %c0_295 = arith.constant 0 : index
    %c0_296 = arith.constant 0 : index
    %299 = vector.load %arg4[%c8_294, %c0_295, %c0_296] : memref<9x32x64xbf16, #tpu.memory_space<vmem>>, vector<1x32x64xbf16>
    %300 = vector.shape_cast %299 : vector<1x32x64xbf16> to vector<32x64xbf16>
    %cst_297 = arith.constant dense<0.000000e+00> : vector<24x64xf32>
    %301 = tpu.matmul %298, %300, %cst_297 {dimension_numbers = #tpu.dot_dimension_numbers<[1], [0], [0], [1], [0, 0, 1, 1], [], []>} : vector<24x32xbf16>, vector<32x64xbf16>, vector<24x64xf32> -> vector<24x64xf32>
    %302 = arith.addf %297, %301 : vector<24x64xf32>
    %c0_298 = arith.constant 0 : index
    %c0_299 = arith.constant 0 : index
    %303 = vector.load %arg8[%c0_298, %c0_299] : memref<1x64xf32, #tpu.memory_space<vmem>>, vector<1x64xf32>
    %304 = vector.broadcast %303 : vector<1x64xf32> to vector<24x64xf32>
    %305 = arith.addf %302, %304 : vector<24x64xf32>
    %cst_300 = arith.constant 0.000000e+00 : f32
    %306 = vector.broadcast %cst_300 : f32 to vector<24x64xf32>
    %307 = arith.maximumf %305, %306 : vector<24x64xf32>
    %c0_301 = arith.constant 0 : index
    %c0_302 = arith.constant 0 : index
    %308 = vector.load %arg21[%c0_301, %c0_302] : memref<24x64xf32, #tpu.memory_space<vmem>>, vector<24x64xf32>
    tpu.vector_store %arg21[%c0_301, %c0_302], %307 {strides = array<i32>} : memref<24x64xf32, #tpu.memory_space<vmem>>, vector<24x64xf32>,
    %c1_303 = arith.constant 1 : index
    %c0_304 = arith.constant 0 : index
    %309 = tpu.strided_load %arg21[%c1_303, %c0_304] {strides = array<i32: 2, 1>} : memref<24x64xf32, #tpu.memory_space<vmem>>, vector<2x64xf32>
    %c2_305 = arith.constant 2 : index
    %c0_306 = arith.constant 0 : index
    %310 = tpu.strided_load %arg21[%c2_305, %c0_306] {strides = array<i32: 2, 1>} : memref<24x64xf32, #tpu.memory_space<vmem>>, vector<2x64xf32>
    %311 = arith.maximumf %309, %310 : vector<2x64xf32>
    %c7_307 = arith.constant 7 : index
    %c0_308 = arith.constant 0 : index
    %312 = tpu.strided_load %arg21[%c7_307, %c0_308] {strides = array<i32: 2, 1>} : memref<24x64xf32, #tpu.memory_space<vmem>>, vector<2x64xf32>
    %c8_309 = arith.constant 8 : index
    %c0_310 = arith.constant 0 : index
    %313 = tpu.strided_load %arg21[%c8_309, %c0_310] {strides = array<i32: 2, 1>} : memref<24x64xf32, #tpu.memory_space<vmem>>, vector<2x64xf32>
    %314 = arith.maximumf %312, %313 : vector<2x64xf32>
    %315 = arith.maximumf %311, %314 : vector<2x64xf32>
    %316 = arith.truncf %315 : vector<2x64xf32> to vector<2x64xbf16>
    %c6_311 = arith.constant 6 : index
    %c0_312 = arith.constant 0 : index
    %317 = vector.load %arg18[%c6_311, %c0_312] : memref<18x64xbf16, #tpu.memory_space<vmem>>, vector<2x64xbf16>
    tpu.vector_store %arg18[%c6_311, %c0_312], %316 {strides = array<i32>} : memref<18x64xbf16, #tpu.memory_space<vmem>>, vector<2x64xbf16>,
    %c13_313 = arith.constant 13 : index
    %c0_314 = arith.constant 0 : index
    %318 = tpu.strided_load %arg21[%c13_313, %c0_314] {strides = array<i32: 2, 1>} : memref<24x64xf32, #tpu.memory_space<vmem>>, vector<2x64xf32>
    %c14_315 = arith.constant 14 : index
    %c0_316 = arith.constant 0 : index
    %319 = tpu.strided_load %arg21[%c14_315, %c0_316] {strides = array<i32: 2, 1>} : memref<24x64xf32, #tpu.memory_space<vmem>>, vector<2x64xf32>
    %320 = arith.maximumf %318, %319 : vector<2x64xf32>
    %c19_317 = arith.constant 19 : index
    %c0_318 = arith.constant 0 : index
    %321 = tpu.strided_load %arg21[%c19_317, %c0_318] {strides = array<i32: 2, 1>} : memref<24x64xf32, #tpu.memory_space<vmem>>, vector<2x64xf32>
    %c20_319 = arith.constant 20 : index
    %c0_320 = arith.constant 0 : index
    %322 = tpu.strided_load %arg21[%c20_319, %c0_320] {strides = array<i32: 2, 1>} : memref<24x64xf32, #tpu.memory_space<vmem>>, vector<2x64xf32>
    %323 = arith.maximumf %321, %322 : vector<2x64xf32>
    %324 = arith.maximumf %320, %323 : vector<2x64xf32>
    %325 = arith.truncf %324 : vector<2x64xf32> to vector<2x64xbf16>
    %c10_321 = arith.constant 10 : index
    %c0_322 = arith.constant 0 : index
    %326 = vector.load %arg18[%c10_321, %c0_322] : memref<18x64xbf16, #tpu.memory_space<vmem>>, vector<2x64xbf16>
    tpu.vector_store %arg18[%c10_321, %c0_322], %325 {strides = array<i32>} : memref<18x64xbf16, #tpu.memory_space<vmem>>, vector<2x64xbf16>,
    %c0_323 = arith.constant 0 : index
    %c0_324 = arith.constant 0 : index
    %327 = vector.load %arg18[%c0_323, %c0_324] : memref<18x64xbf16, #tpu.memory_space<vmem>>, vector<8x64xbf16>
    %c0_325 = arith.constant 0 : index
    %c0_326 = arith.constant 0 : index
    %c0_327 = arith.constant 0 : index
    %328 = vector.load %arg5[%c0_325, %c0_326, %c0_327] : memref<9x64x64xbf16, #tpu.memory_space<vmem>>, vector<1x64x64xbf16>
    %329 = vector.shape_cast %328 : vector<1x64x64xbf16> to vector<64x64xbf16>
    %cst_328 = arith.constant dense<0.000000e+00> : vector<8x64xf32>
    %330 = tpu.matmul %327, %329, %cst_328 {dimension_numbers = #tpu.dot_dimension_numbers<[1], [0], [0], [1], [0, 0, 1, 1], [], []>} : vector<8x64xbf16>, vector<64x64xbf16>, vector<8x64xf32> -> vector<8x64xf32>
    %c1_329 = arith.constant 1 : index
    %c0_330 = arith.constant 0 : index
    %331 = vector.load %arg18[%c1_329, %c0_330] : memref<18x64xbf16, #tpu.memory_space<vmem>>, vector<8x64xbf16>
    %c1_331 = arith.constant 1 : index
    %c0_332 = arith.constant 0 : index
    %c0_333 = arith.constant 0 : index
    %332 = vector.load %arg5[%c1_331, %c0_332, %c0_333] : memref<9x64x64xbf16, #tpu.memory_space<vmem>>, vector<1x64x64xbf16>
    %333 = vector.shape_cast %332 : vector<1x64x64xbf16> to vector<64x64xbf16>
    %cst_334 = arith.constant dense<0.000000e+00> : vector<8x64xf32>
    %334 = tpu.matmul %331, %333, %cst_334 {dimension_numbers = #tpu.dot_dimension_numbers<[1], [0], [0], [1], [0, 0, 1, 1], [], []>} : vector<8x64xbf16>, vector<64x64xbf16>, vector<8x64xf32> -> vector<8x64xf32>
    %335 = arith.addf %330, %334 : vector<8x64xf32>
    %c2_335 = arith.constant 2 : index
    %c0_336 = arith.constant 0 : index
    %336 = vector.load %arg18[%c2_335, %c0_336] : memref<18x64xbf16, #tpu.memory_space<vmem>>, vector<8x64xbf16>
    %c2_337 = arith.constant 2 : index
    %c0_338 = arith.constant 0 : index
    %c0_339 = arith.constant 0 : index
    %337 = vector.load %arg5[%c2_337, %c0_338, %c0_339] : memref<9x64x64xbf16, #tpu.memory_space<vmem>>, vector<1x64x64xbf16>
    %338 = vector.shape_cast %337 : vector<1x64x64xbf16> to vector<64x64xbf16>
    %cst_340 = arith.constant dense<0.000000e+00> : vector<8x64xf32>
    %339 = tpu.matmul %336, %338, %cst_340 {dimension_numbers = #tpu.dot_dimension_numbers<[1], [0], [0], [1], [0, 0, 1, 1], [], []>} : vector<8x64xbf16>, vector<64x64xbf16>, vector<8x64xf32> -> vector<8x64xf32>
    %340 = arith.addf %335, %339 : vector<8x64xf32>
    %c4_341 = arith.constant 4 : index
    %c0_342 = arith.constant 0 : index
    %341 = vector.load %arg18[%c4_341, %c0_342] : memref<18x64xbf16, #tpu.memory_space<vmem>>, vector<8x64xbf16>
    %c3_343 = arith.constant 3 : index
    %c0_344 = arith.constant 0 : index
    %c0_345 = arith.constant 0 : index
    %342 = vector.load %arg5[%c3_343, %c0_344, %c0_345] : memref<9x64x64xbf16, #tpu.memory_space<vmem>>, vector<1x64x64xbf16>
    %343 = vector.shape_cast %342 : vector<1x64x64xbf16> to vector<64x64xbf16>
    %cst_346 = arith.constant dense<0.000000e+00> : vector<8x64xf32>
    %344 = tpu.matmul %341, %343, %cst_346 {dimension_numbers = #tpu.dot_dimension_numbers<[1], [0], [0], [1], [0, 0, 1, 1], [], []>} : vector<8x64xbf16>, vector<64x64xbf16>, vector<8x64xf32> -> vector<8x64xf32>
    %345 = arith.addf %340, %344 : vector<8x64xf32>
    %c5_347 = arith.constant 5 : index
    %c0_348 = arith.constant 0 : index
    %346 = vector.load %arg18[%c5_347, %c0_348] : memref<18x64xbf16, #tpu.memory_space<vmem>>, vector<8x64xbf16>
    %c4_349 = arith.constant 4 : index
    %c0_350 = arith.constant 0 : index
    %c0_351 = arith.constant 0 : index
    %347 = vector.load %arg5[%c4_349, %c0_350, %c0_351] : memref<9x64x64xbf16, #tpu.memory_space<vmem>>, vector<1x64x64xbf16>
    %348 = vector.shape_cast %347 : vector<1x64x64xbf16> to vector<64x64xbf16>
    %cst_352 = arith.constant dense<0.000000e+00> : vector<8x64xf32>
    %349 = tpu.matmul %346, %348, %cst_352 {dimension_numbers = #tpu.dot_dimension_numbers<[1], [0], [0], [1], [0, 0, 1, 1], [], []>} : vector<8x64xbf16>, vector<64x64xbf16>, vector<8x64xf32> -> vector<8x64xf32>
    %350 = arith.addf %345, %349 : vector<8x64xf32>
    %c6_353 = arith.constant 6 : index
    %c0_354 = arith.constant 0 : index
    %351 = vector.load %arg18[%c6_353, %c0_354] : memref<18x64xbf16, #tpu.memory_space<vmem>>, vector<8x64xbf16>
    %c5_355 = arith.constant 5 : index
    %c0_356 = arith.constant 0 : index
    %c0_357 = arith.constant 0 : index
    %352 = vector.load %arg5[%c5_355, %c0_356, %c0_357] : memref<9x64x64xbf16, #tpu.memory_space<vmem>>, vector<1x64x64xbf16>
    %353 = vector.shape_cast %352 : vector<1x64x64xbf16> to vector<64x64xbf16>
    %cst_358 = arith.constant dense<0.000000e+00> : vector<8x64xf32>
    %354 = tpu.matmul %351, %353, %cst_358 {dimension_numbers = #tpu.dot_dimension_numbers<[1], [0], [0], [1], [0, 0, 1, 1], [], []>} : vector<8x64xbf16>, vector<64x64xbf16>, vector<8x64xf32> -> vector<8x64xf32>
    %355 = arith.addf %350, %354 : vector<8x64xf32>
    %c8_359 = arith.constant 8 : index
    %c0_360 = arith.constant 0 : index
    %356 = vector.load %arg18[%c8_359, %c0_360] : memref<18x64xbf16, #tpu.memory_space<vmem>>, vector<8x64xbf16>
    %c6_361 = arith.constant 6 : index
    %c0_362 = arith.constant 0 : index
    %c0_363 = arith.constant 0 : index
    %357 = vector.load %arg5[%c6_361, %c0_362, %c0_363] : memref<9x64x64xbf16, #tpu.memory_space<vmem>>, vector<1x64x64xbf16>
    %358 = vector.shape_cast %357 : vector<1x64x64xbf16> to vector<64x64xbf16>
    %cst_364 = arith.constant dense<0.000000e+00> : vector<8x64xf32>
    %359 = tpu.matmul %356, %358, %cst_364 {dimension_numbers = #tpu.dot_dimension_numbers<[1], [0], [0], [1], [0, 0, 1, 1], [], []>} : vector<8x64xbf16>, vector<64x64xbf16>, vector<8x64xf32> -> vector<8x64xf32>
    %360 = arith.addf %355, %359 : vector<8x64xf32>
    %c9 = arith.constant 9 : index
    %c0_365 = arith.constant 0 : index
    %361 = vector.load %arg18[%c9, %c0_365] : memref<18x64xbf16, #tpu.memory_space<vmem>>, vector<8x64xbf16>
    %c7_366 = arith.constant 7 : index
    %c0_367 = arith.constant 0 : index
    %c0_368 = arith.constant 0 : index
    %362 = vector.load %arg5[%c7_366, %c0_367, %c0_368] : memref<9x64x64xbf16, #tpu.memory_space<vmem>>, vector<1x64x64xbf16>
    %363 = vector.shape_cast %362 : vector<1x64x64xbf16> to vector<64x64xbf16>
    %cst_369 = arith.constant dense<0.000000e+00> : vector<8x64xf32>
    %364 = tpu.matmul %361, %363, %cst_369 {dimension_numbers = #tpu.dot_dimension_numbers<[1], [0], [0], [1], [0, 0, 1, 1], [], []>} : vector<8x64xbf16>, vector<64x64xbf16>, vector<8x64xf32> -> vector<8x64xf32>
    %365 = arith.addf %360, %364 : vector<8x64xf32>
    %c10_370 = arith.constant 10 : index
    %c0_371 = arith.constant 0 : index
    %366 = vector.load %arg18[%c10_370, %c0_371] : memref<18x64xbf16, #tpu.memory_space<vmem>>, vector<8x64xbf16>
    %c8_372 = arith.constant 8 : index
    %c0_373 = arith.constant 0 : index
    %c0_374 = arith.constant 0 : index
    %367 = vector.load %arg5[%c8_372, %c0_373, %c0_374] : memref<9x64x64xbf16, #tpu.memory_space<vmem>>, vector<1x64x64xbf16>
    %368 = vector.shape_cast %367 : vector<1x64x64xbf16> to vector<64x64xbf16>
    %cst_375 = arith.constant dense<0.000000e+00> : vector<8x64xf32>
    %369 = tpu.matmul %366, %368, %cst_375 {dimension_numbers = #tpu.dot_dimension_numbers<[1], [0], [0], [1], [0, 0, 1, 1], [], []>} : vector<8x64xbf16>, vector<64x64xbf16>, vector<8x64xf32> -> vector<8x64xf32>
    %370 = arith.addf %365, %369 : vector<8x64xf32>
    %c0_376 = arith.constant 0 : index
    %c0_377 = arith.constant 0 : index
    %371 = vector.load %arg9[%c0_376, %c0_377] : memref<1x64xf32, #tpu.memory_space<vmem>>, vector<1x64xf32>
    %372 = vector.broadcast %371 : vector<1x64xf32> to vector<8x64xf32>
    %373 = arith.addf %370, %372 : vector<8x64xf32>
    %cst_378 = arith.constant 0.000000e+00 : f32
    %374 = vector.broadcast %cst_378 : f32 to vector<8x64xf32>
    %375 = arith.maximumf %373, %374 : vector<8x64xf32>
    %c0_379 = arith.constant 0 : index
    %c0_380 = arith.constant 0 : index
    %376 = vector.load %arg22[%c0_379, %c0_380] : memref<8x64xf32, #tpu.memory_space<vmem>>, vector<8x64xf32>
    tpu.vector_store %arg22[%c0_379, %c0_380], %375 {strides = array<i32>} : memref<8x64xf32, #tpu.memory_space<vmem>>, vector<8x64xf32>,
    %c1_381 = arith.constant 1 : index
    %c0_382 = arith.constant 0 : index
    %377 = tpu.strided_load %arg22[%c1_381, %c0_382] {strides = array<i32: 2, 1>} : memref<8x64xf32, #tpu.memory_space<vmem>>, vector<1x64xf32>
    %c2_383 = arith.constant 2 : index
    %c0_384 = arith.constant 0 : index
    %378 = tpu.strided_load %arg22[%c2_383, %c0_384] {strides = array<i32: 2, 1>} : memref<8x64xf32, #tpu.memory_space<vmem>>, vector<1x64xf32>
    %379 = arith.maximumf %377, %378 : vector<1x64xf32>
    %c5_385 = arith.constant 5 : index
    %c0_386 = arith.constant 0 : index
    %380 = tpu.strided_load %arg22[%c5_385, %c0_386] {strides = array<i32: 2, 1>} : memref<8x64xf32, #tpu.memory_space<vmem>>, vector<1x64xf32>
    %c6_387 = arith.constant 6 : index
    %c0_388 = arith.constant 0 : index
    %381 = tpu.strided_load %arg22[%c6_387, %c0_388] {strides = array<i32: 2, 1>} : memref<8x64xf32, #tpu.memory_space<vmem>>, vector<1x64xf32>
    %382 = arith.maximumf %380, %381 : vector<1x64xf32>
    %383 = arith.maximumf %379, %382 : vector<1x64xf32>
    %c1_i32 = arith.constant 1 : i32
    %384 = arith.muli %arg0, %c1_i32 : i32
    %c0_i32_389 = arith.constant 0 : i32
    %385 = arith.addi %384, %c0_i32_389 : i32
    %386 = arith.index_cast %385 : i32 to index
    %c0_390 = arith.constant 0 : index
    %387 = vector.load %arg23[%386, %c0_390] : memref<2x64xf32, #tpu.memory_space<vmem>>, vector<1x64xf32>
    tpu.vector_store %arg23[%386, %c0_390], %383 {strides = array<i32>} : memref<2x64xf32, #tpu.memory_space<vmem>>, vector<1x64xf32>,
    %c1_i32_391 = arith.constant 1 : i32
    %388 = arith.cmpi eq, %arg0, %c1_i32_391 : i32
    %389 = arith.extui %388 : i1 to i32
    %c0_i32_392 = arith.constant 0 : i32
    %390 = arith.cmpi ne, %389, %c0_i32_392 : i32
    scf.if %390 {
      %c0_393 = arith.constant 0 : index
      %c0_394 = arith.constant 0 : index
      %391 = vector.load %arg23[%c0_393, %c0_394] : memref<2x64xf32, #tpu.memory_space<vmem>>, vector<2x64xf32>
      %392 = arith.truncf %391 : vector<2x64xf32> to vector<2x64xbf16>
      %c0_395 = arith.constant 0 : index
      %c0_396 = arith.constant 0 : index
      %c0_397 = arith.constant 0 : index
      %393 = vector.load %arg10[%c0_395, %c0_396, %c0_397] : memref<1x64x1024xbf16, #tpu.memory_space<vmem>>, vector<1x64x1024xbf16>
      %394 = vector.shape_cast %393 : vector<1x64x1024xbf16> to vector<64x1024xbf16>
      %cst_398 = arith.constant dense<0.000000e+00> : vector<2x1024xf32>
      %395 = tpu.matmul %392, %394, %cst_398 {dimension_numbers = #tpu.dot_dimension_numbers<[1], [0], [0], [1], [0, 0, 1, 1], [], []>} : vector<2x64xbf16>, vector<64x1024xbf16>, vector<2x1024xf32> -> vector<2x1024xf32>
      %c0_399 = arith.constant 0 : index
      %c0_400 = arith.constant 0 : index
      %396 = vector.load %arg11[%c0_399, %c0_400] : memref<1x1024xf32, #tpu.memory_space<vmem>>, vector<1x1024xf32>
      %397 = vector.broadcast %396 : vector<1x1024xf32> to vector<2x1024xf32>
      %398 = arith.addf %395, %397 : vector<2x1024xf32>
      %cst_401 = arith.constant 0.000000e+00 : f32
      %399 = vector.broadcast %cst_401 : f32 to vector<2x1024xf32>
      %400 = arith.maximumf %398, %399 : vector<2x1024xf32>
      %401 = arith.truncf %400 : vector<2x1024xf32> to vector<2x1024xbf16>
      %c0_402 = arith.constant 0 : index
      %c0_403 = arith.constant 0 : index
      %402 = vector.load %arg12[%c0_402, %c0_403] : memref<1024x10xbf16, #tpu.memory_space<vmem>>, vector<1024x10xbf16>
      %cst_404 = arith.constant dense<0.000000e+00> : vector<2x10xf32>
      %403 = tpu.matmul %401, %402, %cst_404 {dimension_numbers = #tpu.dot_dimension_numbers<[1], [0], [0], [1], [0, 0, 1, 1], [], []>} : vector<2x1024xbf16>, vector<1024x10xbf16>, vector<2x10xf32> -> vector<2x10xf32>
      %c0_405 = arith.constant 0 : index
      %c0_406 = arith.constant 0 : index
      %404 = vector.load %arg13[%c0_405, %c0_406] : memref<1x10xf32, #tpu.memory_space<vmem>>, vector<1x10xf32>
      %405 = vector.broadcast %404 : vector<1x10xf32> to vector<2x10xf32>
      %406 = arith.addf %403, %405 : vector<2x10xf32>
      %407 = vector.extract_strided_slice %406 {offsets = [0, 0], sizes = [2, 1], strides = [1, 1]} : vector<2x10xf32> to vector<2x1xf32>
      %408 = vector.extract_strided_slice %406 {offsets = [0, 1], sizes = [2, 9], strides = [1, 1]} : vector<2x10xf32> to vector<2x9xf32>
      %cst_407 = arith.constant dense<0.000000e+00> : vector<2xf32>
      %409 = vector.multi_reduction <add>, %408, %cst_407 [1] : vector<2x9xf32> to vector<2xf32>
      %410 = vector.shape_cast %409 : vector<2xf32> to vector<2x1xf32>
      %cst_408 = arith.constant dense<0.000000e+00> : vector<1xf32>
      %411 = vector.multi_reduction <add>, %410, %cst_408 [0] : vector<2x1xf32> to vector<1xf32>
      %412 = vector.shape_cast %411 : vector<1xf32> to vector<1x1xf32>
      %413 = vector.broadcast %407 : vector<2x1xf32> to vector<2x9xf32>
      %414 = arith.addf %413, %408 : vector<2x9xf32>
      %cst_409 = arith.constant 0.055555556 : f32
      %415 = vector.broadcast %cst_409 : f32 to vector<1x1xf32>
      %416 = arith.mulf %412, %415 : vector<1x1xf32>
      %417 = vector.broadcast %416 : vector<1x1xf32> to vector<2x9xf32>
      %418 = arith.subf %414, %417 : vector<2x9xf32>
      %c0_410 = arith.constant 0 : index
      %c0_411 = arith.constant 0 : index
      %419 = vector.load %arg14[%c0_410, %c0_411] : memref<2x9xf32, #tpu.memory_space<vmem>>, vector<2x9xf32>
      tpu.vector_store %arg14[%c0_410, %c0_411], %418 {strides = array<i32>} : memref<2x9xf32, #tpu.memory_space<vmem>>, vector<2x9xf32>,
    } else {
    }
    return
  }
  func.func @transform_0(%arg0: i32) -> (i32, i32, i32) {
    %c0_i32 = arith.constant 0 : i32
    %c0_i32_0 = arith.constant 0 : i32
    %c0_i32_1 = arith.constant 0 : i32
    return %arg0, %c0_i32, %c0_i32_0 : i32, i32, i32
  }
  func.func @transform_1(%arg0: i32) -> (i32, i32, i32) {
    %c0_i32 = arith.constant 0 : i32
    %c0_i32_0 = arith.constant 0 : i32
    %c0_i32_1 = arith.constant 0 : i32
    %c0_i32_2 = arith.constant 0 : i32
    return %c0_i32, %c0_i32_0, %c0_i32_1 : i32, i32, i32
  }
  func.func @transform_2(%arg0: i32) -> (i32, i32, i32) {
    %c0_i32 = arith.constant 0 : i32
    %c0_i32_0 = arith.constant 0 : i32
    %c0_i32_1 = arith.constant 0 : i32
    %c0_i32_2 = arith.constant 0 : i32
    return %c0_i32, %c0_i32_0, %c0_i32_1 : i32, i32, i32
  }
  func.func @transform_3(%arg0: i32) -> (i32, i32, i32) {
    %c0_i32 = arith.constant 0 : i32
    %c0_i32_0 = arith.constant 0 : i32
    %c0_i32_1 = arith.constant 0 : i32
    %c0_i32_2 = arith.constant 0 : i32
    return %c0_i32, %c0_i32_0, %c0_i32_1 : i32, i32, i32
  }
  func.func @transform_4(%arg0: i32) -> (i32, i32, i32) {
    %c0_i32 = arith.constant 0 : i32
    %c0_i32_0 = arith.constant 0 : i32
    %c0_i32_1 = arith.constant 0 : i32
    %c0_i32_2 = arith.constant 0 : i32
    return %c0_i32, %c0_i32_0, %c0_i32_1 : i32, i32, i32
  }
  func.func @transform_5(%arg0: i32) -> (i32, i32) {
    %c0_i32 = arith.constant 0 : i32
    %c0_i32_0 = arith.constant 0 : i32
    %c0_i32_1 = arith.constant 0 : i32
    return %c0_i32, %c0_i32_0 : i32, i32
  }
  func.func @transform_6(%arg0: i32) -> (i32, i32) {
    %c0_i32 = arith.constant 0 : i32
    %c0_i32_0 = arith.constant 0 : i32
    %c0_i32_1 = arith.constant 0 : i32
    return %c0_i32, %c0_i32_0 : i32, i32
  }
  func.func @transform_7(%arg0: i32) -> (i32, i32) {
    %c0_i32 = arith.constant 0 : i32
    %c0_i32_0 = arith.constant 0 : i32
    %c0_i32_1 = arith.constant 0 : i32
    return %c0_i32, %c0_i32_0 : i32, i32
  }
  func.func @transform_8(%arg0: i32) -> (i32, i32) {
    %c0_i32 = arith.constant 0 : i32
    %c0_i32_0 = arith.constant 0 : i32
    %c0_i32_1 = arith.constant 0 : i32
    return %c0_i32, %c0_i32_0 : i32, i32
  }
  func.func @transform_9(%arg0: i32) -> (i32, i32, i32) {
    %c0_i32 = arith.constant 0 : i32
    %c0_i32_0 = arith.constant 0 : i32
    %c0_i32_1 = arith.constant 0 : i32
    %c0_i32_2 = arith.constant 0 : i32
    return %c0_i32, %c0_i32_0, %c0_i32_1 : i32, i32, i32
  }
  func.func @transform_10(%arg0: i32) -> (i32, i32) {
    %c0_i32 = arith.constant 0 : i32
    %c0_i32_0 = arith.constant 0 : i32
    %c0_i32_1 = arith.constant 0 : i32
    return %c0_i32, %c0_i32_0 : i32, i32
  }
  func.func @transform_11(%arg0: i32) -> (i32, i32) {
    %c0_i32 = arith.constant 0 : i32
    %c0_i32_0 = arith.constant 0 : i32
    %c0_i32_1 = arith.constant 0 : i32
    return %c0_i32, %c0_i32_0 : i32, i32
  }
  func.func @transform_12(%arg0: i32) -> (i32, i32) {
    %c0_i32 = arith.constant 0 : i32
    %c0_i32_0 = arith.constant 0 : i32
    %c0_i32_1 = arith.constant 0 : i32
    return %c0_i32, %c0_i32_0 : i32, i32
  }
  func.func @transform_13(%arg0: i32) -> (i32, i32) {
    %c0_i32 = arith.constant 0 : i32
    %c0_i32_0 = arith.constant 0 : i32
    %c0_i32_1 = arith.constant 0 : i32
    return %c0_i32, %c0_i32_0 : i32, i32
  }
}

</mosaic_0001>

<llo_original>
// kernel: model_forward.1
$region0: #{model_forward.1}
  #allocation0 [shape = 'u32[]', space=smem, size = 0x4, offset = 0x4, fixed_abs, tag = 'smem constant byte address 0x4 - core index']
  #allocation1 [shape = 'u32[144,128]{1,0:T(1,128)}', space=vmem, size = 0x12000, scoped, tag = 'internal scratch']
  #allocation2 [shape = 'bf16[326,4]{1,0:T(8,128)(2,1)}', space=vmem, size = 0x14800, scoped, tag = 'scratch operand']
  #allocation3 [shape = 'bf16[102,32]{1,0:T(8,128)(2,1)}', space=vmem, size = 0x6800, scoped, tag = 'scratch operand']
  #allocation4 [shape = 'bf16[38,32]{1,0:T(8,128)(2,1)}', space=vmem, size = 0x2800, scoped, tag = 'scratch operand']
  #allocation5 [shape = 'bf16[18,64]{1,0:T(8,128)(2,1)}', space=vmem, size = 0x1800, scoped, tag = 'scratch operand']
  #allocation6 [shape = 'f32[288,32]{1,0:T(8,128)}', space=vmem, size = 0x24000, scoped, tag = 'scratch operand']
  #allocation7 [shape = 'f32[80,32]{1,0:T(8,128)}', space=vmem, size = 0xa000, scoped, tag = 'scratch operand']
  #allocation8 [shape = 'f32[24,64]{1,0:T(8,128)}', space=vmem, size = 0x3000, scoped, tag = 'scratch operand']
  #allocation9 [shape = 'f32[8,64]{1,0:T(8,128)}', space=vmem, size = 0x1000, scoped, tag = 'scratch operand']
  #allocation10 [shape = 'f32[2,64]{1,0:T(2,128)}', space=vmem, size = 0x400, scoped, tag = 'scratch operand']
  %s0 = inlined_call_operand.vmem [shape: bf16[2,256,4], index: 0, kind: input, shape index: {}]
  %s1 = inlined_call_operand.vmem [shape: bf16[9,4,32], index: 1, kind: input, shape index: {}]
  %s2 = inlined_call_operand.vmem [shape: bf16[9,32,32], index: 2, kind: input, shape index: {}]
  %s3 = inlined_call_operand.vmem [shape: bf16[9,32,64], index: 3, kind: input, shape index: {}]
  %s4 = inlined_call_operand.vmem [shape: bf16[9,64,64], index: 4, kind: input, shape index: {}]
  %s5 = inlined_call_operand.vmem [shape: f32[1,32], index: 5, kind: input, shape index: {}]
  %s6 = inlined_call_operand.vmem [shape: f32[1,32], index: 6, kind: input, shape index: {}]
  %s7 = inlined_call_operand.vmem [shape: f32[1,64], index: 7, kind: input, shape index: {}]
  %s8 = inlined_call_operand.vmem [shape: f32[1,64], index: 8, kind: input, shape index: {}]
  %s9 = inlined_call_operand.vmem [shape: bf16[1,64,1024], index: 9, kind: input, shape index: {}]
  %s10 = inlined_call_operand.vmem [shape: f32[1,1024], index: 10, kind: input, shape index: {}]
  %s11 = inlined_call_operand.vmem [shape: bf16[1024,10], index: 11, kind: input, shape index: {}]
  %s12 = inlined_call_operand.vmem [shape: f32[1,10], index: 12, kind: input, shape index: {}]
  %s13 = inlined_call_operand.hbm [shape: f32[2,9], index: 13, kind: output, shape index: {}]
  %s14 = sld [smem:[#allocation0]]
  $region93: #{model_forward.1} parent=0
    _
  %s16 = ssub.s32 1, %s14
  %s17 = scalar_select 0, %s16, %s14
  $region1: #{model_forward.1} parent=0
    #allocation11 [shape = 'u8[1024]{0}', space=vmem, size = 0x400, scoped, tag = 'output window, operand 0, single buffered']
    #allocation12 [shape = 's32[2]{0}', space=sflag, size = 0x8, scoped, tag = 'scoped memory for model_forward.1']
    %18 = vsyncpa [#allocation12], 0
    loop: start=0, step=1, limit=4
    $region2: #{model_forward.1} parent=1 // loop_pre_header
      _
    $region3: #{model_forward.1} parent=1 // loop_header
      %s20 = sphi 0, %s24
      %p21 = scmp.ge.s32.totalorder %s20, 4
      %s30 = sphi 0, %s32
      %s33 = sphi 0, %s30
      %s34 = sphi 0, %s33
      %s50 = sphi 0, %s34
      %s54 = sphi 0, %s54
      %s56 = sphi 0, %s54
      %s57 = sphi 0, %s56
      %s71 = sphi 0, %s57
      %s75 = sphi 0, %s75
      %s77 = sphi 0, %s75
      %s78 = sphi 0, %s77
      %s92 = sphi 0, %s78
      %s96 = sphi 0, %s96
      %s98 = sphi 0, %s96
      %s99 = sphi 0, %s98
      %s113 = sphi 0, %s99
      %s117 = sphi 0, %s117
      %s119 = sphi 0, %s117
      %s120 = sphi 0, %s119
      %s134 = sphi 0, %s120
      %s138 = sphi 0, %s138
      %s140 = sphi 0, %s138
      %s141 = sphi 0, %s140
      %s155 = sphi 0, %s141
      %s159 = sphi 0, %s159
      %s161 = sphi 0, %s159
      %s162 = sphi 0, %s161
      %s176 = sphi 0, %s162
      %s180 = sphi 0, %s180
      %s182 = sphi 0, %s180
      %s183 = sphi 0, %s182
      %s197 = sphi 0, %s183
      %s201 = sphi 0, %s201
      %s203 = sphi 0, %s201
      %s204 = sphi 0, %s203
      %s218 = sphi 0, %s204
      %s222 = sphi 0, %s222
      %s224 = sphi 0, %s222
      %s225 = sphi 0, %s224
      %s239 = sphi 0, %s225
      %s243 = sphi 0, %s243
      %s245 = sphi 0, %s243
      %s246 = sphi 0, %s245
      %s260 = sphi 0, %s246
      %s264 = sphi 0, %s264
      %s266 = sphi 0, %s264
      %s267 = sphi 0, %s266
      %s281 = sphi 0, %s267
      %s285 = sphi 0, %s285
      %s287 = sphi 0, %s285
      %s288 = sphi 0, %s287
      %s302 = sphi 0, %s288
      %s306 = sphi 0, %s306
      %s308 = sphi 0, %s306
      %s309 = sphi 0, %s308
      %s323 = sphi 0, %s309
    $region4: #{model_forward.1} parent=1 // loop_header_branch
      %23 = sbr.rel (%p21) target = $region8
    $region5: #{model_forward.1} parent=1 // loop_body
      %s25 = ssub.s32 %s20, 1
      %s26 = ssub.s32 %s20, 2
      %s27 = sadd.s32 %s20, 1
      %s28 = ssub.s32 %s20, %s27
      %p29 = scmp.eq.s32.totalorder %s28, 0
      %s31 = sadd.s32 %s30, 1
      %s32 = scalar_select %p29, %s30, %s31
      %p35 = pneg %p29
      %p36 = scmp.eq.s32.totalorder %s20, 1
      %p37 = por %p35, %p36
      %p38 = scmp.ne.s32.totalorder %s30, %s33
      %p39 = scmp.eq.s32.totalorder %s20, 0
      %p40 = por %p38, %p39
      %p41 = scmp.ne.s32.totalorder %s30, %s33
      %p42 = scmp.eq.s32.totalorder %s25, 1
      %p43 = por %p41, %p42
      %p44 = scmp.ne.s32.totalorder %s33, %s34
      %p45 = scmp.eq.s32.totalorder %s25, 0
      %p46 = por %p44, %p45
      %p47 = scmp.ne.s32.totalorder %s33, %s34
      %p48 = scmp.eq.s32.totalorder %s26, 1
      %p49 = por %p47, %p48
      %p51 = scmp.ne.s32.totalorder %s34, %s50
      %p52 = scmp.eq.s32.totalorder %s26, 0
      %p53 = por %p51, %p52
      %s55 = sadd.s32 %s54, 1
      %p58 = scmp.eq.s32.totalorder %s20, 1
      %p59 = scmp.ne.s32.totalorder %s54, %s56
      %p60 = scmp.eq.s32.totalorder %s20, 0
      %p61 = por %p59, %p60
      %p62 = scmp.ne.s32.totalorder %s54, %s56
      %p63 = scmp.eq.s32.totalorder %s25, 1
      %p64 = por %p62, %p63
      %p65 = scmp.ne.s32.totalorder %s56, %s57
      %p66 = scmp.eq.s32.totalorder %s25, 0
      %p67 = por %p65, %p66
      %p68 = scmp.ne.s32.totalorder %s56, %s57
      %p69 = scmp.eq.s32.totalorder %s26, 1
      %p70 = por %p68, %p69
      %p72 = scmp.ne.s32.totalorder %s57, %s71
      %p73 = scmp.eq.s32.totalorder %s26, 0
      %p74 = por %p72, %p73
      %s76 = sadd.s32 %s75, 1
      %p79 = scmp.eq.s32.totalorder %s20, 1
      %p80 = scmp.ne.s32.totalorder %s75, %s77
      %p81 = scmp.eq.s32.totalorder %s20, 0
      %p82 = por %p80, %p81
      %p83 = scmp.ne.s32.totalorder %s75, %s77
      %p84 = scmp.eq.s32.totalorder %s25, 1
      %p85 = por %p83, %p84
      %p86 = scmp.ne.s32.totalorder %s77, %s78
      %p87 = scmp.eq.s32.totalorder %s25, 0
      %p88 = por %p86, %p87
      %p89 = scmp.ne.s32.totalorder %s77, %s78
      %p90 = scmp.eq.s32.totalorder %s26, 1
      %p91 = por %p89, %p90
      %p93 = scmp.ne.s32.totalorder %s78, %s92
      %p94 = scmp.eq.s32.totalorder %s26, 0
      %p95 = por %p93, %p94
      %s97 = sadd.s32 %s96, 1
      %p100 = scmp.eq.s32.totalorder %s20, 1
      %p101 = scmp.ne.s32.totalorder %s96, %s98
      %p102 = scmp.eq.s32.totalorder %s20, 0
      %p103 = por %p101, %p102
      %p104 = scmp.ne.s32.totalorder %s96, %s98
      %p105 = scmp.eq.s32.totalorder %s25, 1
      %p106 = por %p104, %p105
      %p107 = scmp.ne.s32.totalorder %s98, %s99
      %p108 = scmp.eq.s32.totalorder %s25, 0
      %p109 = por %p107, %p108
      %p110 = scmp.ne.s32.totalorder %s98, %s99
      %p111 = scmp.eq.s32.totalorder %s26, 1
      %p112 = por %p110, %p111
      %p114 = scmp.ne.s32.totalorder %s99, %s113
      %p115 = scmp.eq.s32.totalorder %s26, 0
      %p116 = por %p114, %p115
      %s118 = sadd.s32 %s117, 1
      %p121 = scmp.eq.s32.totalorder %s20, 1
      %p122 = scmp.ne.s32.totalorder %s117, %s119
      %p123 = scmp.eq.s32.totalorder %s20, 0
      %p124 = por %p122, %p123
      %p125 = scmp.ne.s32.totalorder %s117, %s119
      %p126 = scmp.eq.s32.totalorder %s25, 1
      %p127 = por %p125, %p126
      %p128 = scmp.ne.s32.totalorder %s119, %s120
      %p129 = scmp.eq.s32.totalorder %s25, 0
      %p130 = por %p128, %p129
      %p131 = scmp.ne.s32.totalorder %s119, %s120
      %p132 = scmp.eq.s32.totalorder %s26, 1
      %p133 = por %p131, %p132
      %p135 = scmp.ne.s32.totalorder %s120, %s134
      %p136 = scmp.eq.s32.totalorder %s26, 0
      %p137 = por %p135, %p136
      %s139 = sadd.s32 %s138, 1
      %p142 = scmp.eq.s32.totalorder %s20, 1
      %p143 = scmp.ne.s32.totalorder %s138, %s140
      %p144 = scmp.eq.s32.totalorder %s20, 0
      %p145 = por %p143, %p144
      %p146 = scmp.ne.s32.totalorder %s138, %s140
      %p147 = scmp.eq.s32.totalorder %s25, 1
      %p148 = por %p146, %p147
      %p149 = scmp.ne.s32.totalorder %s140, %s141
      %p150 = scmp.eq.s32.totalorder %s25, 0
      %p151 = por %p149, %p150
      %p152 = scmp.ne.s32.totalorder %s140, %s141
      %p153 = scmp.eq.s32.totalorder %s26, 1
      %p154 = por %p152, %p153
      %p156 = scmp.ne.s32.totalorder %s141, %s155
      %p157 = scmp.eq.s32.totalorder %s26, 0
      %p158 = por %p156, %p157
      %s160 = sadd.s32 %s159, 1
      %p163 = scmp.eq.s32.totalorder %s20, 1
      %p164 = scmp.ne.s32.totalorder %s159, %s161
      %p165 = scmp.eq.s32.totalorder %s20, 0
      %p166 = por %p164, %p165
      %p167 = scmp.ne.s32.totalorder %s159, %s161
      %p168 = scmp.eq.s32.totalorder %s25, 1
      %p169 = por %p167, %p168
      %p170 = scmp.ne.s32.totalorder %s161, %s162
      %p171 = scmp.eq.s32.totalorder %s25, 0
      %p172 = por %p170, %p171
      %p173 = scmp.ne.s32.totalorder %s161, %s162
      %p174 = scmp.eq.s32.totalorder %s26, 1
      %p175 = por %p173, %p174
      %p177 = scmp.ne.s32.totalorder %s162, %s176
      %p178 = scmp.eq.s32.totalorder %s26, 0
      %p179 = por %p177, %p178
      %s181 = sadd.s32 %s180, 1
      %p184 = scmp.eq.s32.totalorder %s20, 1
      %p185 = scmp.ne.s32.totalorder %s180, %s182
      %p186 = scmp.eq.s32.totalorder %s20, 0
      %p187 = por %p185, %p186
      %p188 = scmp.ne.s32.totalorder %s180, %s182
      %p189 = scmp.eq.s32.totalorder %s25, 1
      %p190 = por %p188, %p189
      %p191 = scmp.ne.s32.totalorder %s182, %s183
      %p192 = scmp.eq.s32.totalorder %s25, 0
      %p193 = por %p191, %p192
      %p194 = scmp.ne.s32.totalorder %s182, %s183
      %p195 = scmp.eq.s32.totalorder %s26, 1
      %p196 = por %p194, %p195
      %p198 = scmp.ne.s32.totalorder %s183, %s197
      %p199 = scmp.eq.s32.totalorder %s26, 0
      %p200 = por %p198, %p199
      %s202 = sadd.s32 %s201, 1
      %p205 = scmp.eq.s32.totalorder %s20, 1
      %p206 = scmp.ne.s32.totalorder %s201, %s203
      %p207 = scmp.eq.s32.totalorder %s20, 0
      %p208 = por %p206, %p207
      %p209 = scmp.ne.s32.totalorder %s201, %s203
      %p210 = scmp.eq.s32.totalorder %s25, 1
      %p211 = por %p209, %p210
      %p212 = scmp.ne.s32.totalorder %s203, %s204
      %p213 = scmp.eq.s32.totalorder %s25, 0
      %p214 = por %p212, %p213
      %p215 = scmp.ne.s32.totalorder %s203, %s204
      %p216 = scmp.eq.s32.totalorder %s26, 1
      %p217 = por %p215, %p216
      %p219 = scmp.ne.s32.totalorder %s204, %s218
      %p220 = scmp.eq.s32.totalorder %s26, 0
      %p221 = por %p219, %p220
      %s223 = sadd.s32 %s222, 1
      %p226 = scmp.eq.s32.totalorder %s20, 1
      %p227 = scmp.ne.s32.totalorder %s222, %s224
      %p228 = scmp.eq.s32.totalorder %s20, 0
      %p229 = por %p227, %p228
      %p230 = scmp.ne.s32.totalorder %s222, %s224
      %p231 = scmp.eq.s32.totalorder %s25, 1
      %p232 = por %p230, %p231
      %p233 = scmp.ne.s32.totalorder %s224, %s225
      %p234 = scmp.eq.s32.totalorder %s25, 0
      %p235 = por %p233, %p234
      %p236 = scmp.ne.s32.totalorder %s224, %s225
      %p237 = scmp.eq.s32.totalorder %s26, 1
      %p238 = por %p236, %p237
      %p240 = scmp.ne.s32.totalorder %s225, %s239
      %p241 = scmp.eq.s32.totalorder %s26, 0
      %p242 = por %p240, %p241
      %s244 = sadd.s32 %s243, 1
      %p247 = scmp.eq.s32.totalorder %s20, 1
      %p248 = scmp.ne.s32.totalorder %s243, %s245
      %p249 = scmp.eq.s32.totalorder %s20, 0
      %p250 = por %p248, %p249
      %p251 = scmp.ne.s32.totalorder %s243, %s245
      %p252 = scmp.eq.s32.totalorder %s25, 1
      %p253 = por %p251, %p252
      %p254 = scmp.ne.s32.totalorder %s245, %s246
      %p255 = scmp.eq.s32.totalorder %s25, 0
      %p256 = por %p254, %p255
      %p257 = scmp.ne.s32.totalorder %s245, %s246
      %p258 = scmp.eq.s32.totalorder %s26, 1
      %p259 = por %p257, %p258
      %p261 = scmp.ne.s32.totalorder %s246, %s260
      %p262 = scmp.eq.s32.totalorder %s26, 0
      %p263 = por %p261, %p262
      %s265 = sadd.s32 %s264, 1
      %p268 = scmp.eq.s32.totalorder %s20, 1
      %p269 = scmp.ne.s32.totalorder %s264, %s266
      %p270 = scmp.eq.s32.totalorder %s20, 0
      %p271 = por %p269, %p270
      %p272 = scmp.ne.s32.totalorder %s264, %s266
      %p273 = scmp.eq.s32.totalorder %s25, 1
      %p274 = por %p272, %p273
      %p275 = scmp.ne.s32.totalorder %s266, %s267
      %p276 = scmp.eq.s32.totalorder %s25, 0
      %p277 = por %p275, %p276
      %p278 = scmp.ne.s32.totalorder %s266, %s267
      %p279 = scmp.eq.s32.totalorder %s26, 1
      %p280 = por %p278, %p279
      %p282 = scmp.ne.s32.totalorder %s267, %s281
      %p283 = scmp.eq.s32.totalorder %s26, 0
      %p284 = por %p282, %p283
      %s286 = sadd.s32 %s285, 1
      %p289 = scmp.eq.s32.totalorder %s20, 1
      %p290 = scmp.ne.s32.totalorder %s285, %s287
      %p291 = scmp.eq.s32.totalorder %s20, 0
      %p292 = por %p290, %p291
      %p293 = scmp.ne.s32.totalorder %s285, %s287
      %p294 = scmp.eq.s32.totalorder %s25, 1
      %p295 = por %p293, %p294
      %p296 = scmp.ne.s32.totalorder %s287, %s288
      %p297 = scmp.eq.s32.totalorder %s25, 0
      %p298 = por %p296, %p297
      %p299 = scmp.ne.s32.totalorder %s287, %s288
      %p300 = scmp.eq.s32.totalorder %s26, 1
      %p301 = por %p299, %p300
      %p303 = scmp.ne.s32.totalorder %s288, %s302
      %p304 = scmp.eq.s32.totalorder %s26, 0
      %p305 = por %p303, %p304
      %s307 = sadd.s32 %s306, 1
      %p310 = scmp.eq.s32.totalorder %s20, 1
      %p311 = scmp.ne.s32.totalorder %s306, %s308
      %p312 = scmp.eq.s32.totalorder %s20, 0
      %p313 = por %p311, %p312
      %p314 = scmp.ne.s32.totalorder %s306, %s308
      %p315 = scmp.eq.s32.totalorder %s25, 1
      %p316 = por %p314, %p315
      %p317 = scmp.ne.s32.totalorder %s308, %s309
      %p318 = scmp.eq.s32.totalorder %s25, 0
      %p319 = por %p317, %p318
      %p320 = scmp.ne.s32.totalorder %s308, %s309
      %p321 = scmp.eq.s32.totalorder %s26, 1
      %p322 = por %p320, %p321
      %p324 = scmp.ne.s32.totalorder %s309, %s323
      %p325 = scmp.eq.s32.totalorder %s26, 0
      %p326 = por %p324, %p325
      %p327 = scmp.le.s32.totalorder 1, %s20
      %p328 = scmp.lt.s32.totalorder %s20, 3
      %p329 = pnand %p327, %p328
      %p330 = pneg %p329
      // Predicated region
      $region9: #{model_forward.1} parent=5 // pred_check
        _
      $region10: #{model_forward.1} parent=5 // pred_check_branch
        %332 = sbr.rel (%p329) target = $region12
      $region11: #{model_forward.1} parent=5 // pred_region
        %s333 = ssub.s32 %s20, 1
        // Predicated region
        $region13: #{model_forward.1} parent=11 // pred_check
          %p334 = pneg %p67
        $region14: #{model_forward.1} parent=11 // pred_check_branch
          %336 = sbr.rel (%p334) target = $region16
        $region15: #{model_forward.1} parent=11 // pred_region
          _
        $region16: #{model_forward.1} parent=11 // pred_fallthru
          _
        // Predicated region
        $region17: #{model_forward.1} parent=11 // pred_check
          %p337 = pneg %p88
        $region18: #{model_forward.1} parent=11 // pred_check_branch
          %339 = sbr.rel (%p337) target = $region20
        $region19: #{model_forward.1} parent=11 // pred_region
          _
        $region20: #{model_forward.1} parent=11 // pred_fallthru
          _
        // Predicated region
        $region21: #{model_forward.1} parent=11 // pred_check
          %p340 = pneg %p109
        $region22: #{model_forward.1} parent=11 // pred_check_branch
          %342 = sbr.rel (%p340) target = $region24
        $region23: #{model_forward.1} parent=11 // pred_region
          _
        $region24: #{model_forward.1} parent=11 // pred_fallthru
          _
        // Predicated region
        $region25: #{model_forward.1} parent=11 // pred_check
          %p343 = pneg %p130
        $region26: #{model_forward.1} parent=11 // pred_check_branch
          %345 = sbr.rel (%p343) target = $region28
        $region27: #{model_forward.1} parent=11 // pred_region
          _
        $region28: #{model_forward.1} parent=11 // pred_fallthru
          _
        // Predicated region
        $region29: #{model_forward.1} parent=11 // pred_check
          %p346 = pneg %p151
        $region30: #{model_forward.1} parent=11 // pred_check_branch
          %348 = sbr.rel (%p346) target = $region32
        $region31: #{model_forward.1} parent=11 // pred_region
          _
        $region32: #{model_forward.1} parent=11 // pred_fallthru
          _
        // Predicated region
        $region33: #{model_forward.1} parent=11 // pred_check
          %p349 = pneg %p172
        $region34: #{model_forward.1} parent=11 // pred_check_branch
          %351 = sbr.rel (%p349) target = $region36
        $region35: #{model_forward.1} parent=11 // pred_region
          _
        $region36: #{model_forward.1} parent=11 // pred_fallthru
          _
        // Predicated region
        $region37: #{model_forward.1} parent=11 // pred_check
          %p352 = pneg %p193
        $region38: #{model_forward.1} parent=11 // pred_check_branch
          %354 = sbr.rel (%p352) target = $region40
        $region39: #{model_forward.1} parent=11 // pred_region
          _
        $region40: #{model_forward.1} parent=11 // pred_fallthru
          _
        // Predicated region
        $region41: #{model_forward.1} parent=11 // pred_check
          %p355 = pneg %p214
        $region42: #{model_forward.1} parent=11 // pred_check_branch
          %357 = sbr.rel (%p355) target = $region44
        $region43: #{model_forward.1} parent=11 // pred_region
          _
        $region44: #{model_forward.1} parent=11 // pred_fallthru
          _
        // Predicated region
        $region45: #{model_forward.1} parent=11 // pred_check
          %p358 = pneg %p235
        $region46: #{model_forward.1} parent=11 // pred_check_branch
          %360 = sbr.rel (%p358) target = $region48
        $region47: #{model_forward.1} parent=11 // pred_region
          _
        $region48: #{model_forward.1} parent=11 // pred_fallthru
          _
        // Predicated region
        $region49: #{model_forward.1} parent=11 // pred_check
          %p361 = pneg %p256
        $region50: #{model_forward.1} parent=11 // pred_check_branch
          %363 = sbr.rel (%p361) target = $region52
        $region51: #{model_forward.1} parent=11 // pred_region
          _
        $region52: #{model_forward.1} parent=11 // pred_fallthru
          _
        // Predicated region
        $region53: #{model_forward.1} parent=11 // pred_check
          %p364 = pneg %p277
        $region54: #{model_forward.1} parent=11 // pred_check_branch
          %366 = sbr.rel (%p364) target = $region56
        $region55: #{model_forward.1} parent=11 // pred_region
          _
        $region56: #{model_forward.1} parent=11 // pred_fallthru
          _
        // Predicated region
        $region57: #{model_forward.1} parent=11 // pred_check
          %p367 = pneg %p298
        $region58: #{model_forward.1} parent=11 // pred_check_branch
          %369 = sbr.rel (%p367) target = $region60
        $region59: #{model_forward.1} parent=11 // pred_region
          _
        $region60: #{model_forward.1} parent=11 // pred_fallthru
          _
      $region12: #{model_forward.1} parent=5 // pred_fallthru
        _
      %p370 = scmp.lt.s32.totalorder %s20, 2
      // Predicated region
      $region61: #{model_forward.1} parent=5 // pred_check
        %p371 = pneg %p370
      $region62: #{model_forward.1} parent=5 // pred_check_branch
        %373 = sbr.rel (%p371) target = $region64
      $region63: #{model_forward.1} parent=5 // pred_region
        // Predicated region
        $region65: #{model_forward.1} parent=63 // pred_check
          %p374 = pneg %p40
        $region66: #{model_forward.1} parent=63 // pred_check_branch
          %376 = sbr.rel (%p374) target = $region68
        $region67: #{model_forward.1} parent=63 // pred_region
          %p377 = scmp.lt.s32.totalorder %s20, 1
          %s378 = scalar_select %p377, %s20, 1
          %s379 = smul.addr %s378, 32
          %s380 = smul.addr %s379, 4
          %s381 = scalar_lea.vmem %s0, %s380
        $region68: #{model_forward.1} parent=63 // pred_fallthru
          _
      $region64: #{model_forward.1} parent=5 // pred_fallthru
        _
      %p382 = scmp.le.s32.totalorder 1, %s20
      %p383 = scmp.lt.s32.totalorder %s20, 3
      %p384 = pnand %p382, %p383
      %p385 = pneg %p384
      // Predicated region
      $region69: #{model_forward.1} parent=5 // pred_check
        _
      $region70: #{model_forward.1} parent=5 // pred_check_branch
        %387 = sbr.rel (%p384) target = $region72
      $region71: #{model_forward.1} parent=5 // pred_region
        %s388 = ssub.s32 %s20, 1
        %p389 = scmp.lt.s32.totalorder %s25, 1
        %s390 = scalar_select %p389, %s25, 1
        %s391 = smul.addr %s390, 32
        %s392 = smul.addr %s391, 4
        %s393 = scalar_lea.vmem %s0, %s392
        %p394 = pneg %p46
        %p395 = pneg %p43
        %p396 = pneg %p67
        %p397 = pneg %p64
        %p398 = pneg %p88
        %p399 = pneg %p85
        %p400 = pneg %p109
        %p401 = pneg %p106
        %p402 = pneg %p130
        %p403 = pneg %p127
        %p404 = pneg %p151
        %p405 = pneg %p148
        %p406 = pneg %p172
        %p407 = pneg %p169
        %p408 = pneg %p193
        %p409 = pneg %p190
        %p410 = pneg %p214
        %p411 = pneg %p211
        %p412 = pneg %p235
        %p413 = pneg %p232
        %p414 = pneg %p256
        %p415 = pneg %p253
        %p416 = pneg %p277
        %p417 = pneg %p274
        %p418 = pneg %p298
        %p419 = pneg %p295
        %p420 = pneg %p319
        %p421 = pneg %p316
        %p422 = scmp.lt.s32.totalorder %s25, 1
        %s423 = scalar_select %p422, %s25, 1
        %s424 = smul.addr %s423, 32
        %s425 = smul.addr %s424, 4
        %s426 = scalar_lea.vmem %s0, %s425
        %p428 = scmp.eq.s32.totalorder %s25, 0
        // Predicated region
        $region73: #{model_forward.1} parent=71 // pred_check
          %p429 = pneg %p428
        $region74: #{model_forward.1} parent=71 // pred_check_branch
          %431 = sbr.rel (%p429) target = $region76
        $region75: #{model_forward.1} parent=71 // pred_region
          %vm432 = vcmask 27648
          %433 = vst.msk [vmem:[#allocation2] sm:$0xf] %vm432, 0
          %434 = vst.msk [vmem:[#allocation2 + $0x4] sm:$0xf] %vm432, 0
          %435 = vst.msk [vmem:[#allocation2 + $0x8] sm:$0xf] %vm432, 0
          %436 = vst.msk [vmem:[#allocation2 + $0xc] sm:$0xf] %vm432, 0
          %437 = vst.msk [vmem:[#allocation2 + $0x10] sm:$0xf] %vm432, 0
          %438 = vst.msk [vmem:[#allocation2 + $0x14] sm:$0xf] %vm432, 0
          %439 = vst.msk [vmem:[#allocation2 + $0x18] sm:$0xf] %vm432, 0
          %440 = vst.msk [vmem:[#allocation2 + $0x1c] sm:$0xf] %vm432, 0
          %441 = vst.msk [vmem:[#allocation2 + $0x20] sm:$0xf] %vm432, 0
          %442 = vst.msk [vmem:[#allocation2 + $0x24] sm:$0xf] %vm432, 0
          %443 = vst.msk [vmem:[#allocation2 + $0x28] sm:$0xf] %vm432, 0
          %444 = vst.msk [vmem:[#allocation2 + $0x2c] sm:$0xf] %vm432, 0
          %445 = vst.msk [vmem:[#allocation2 + $0x30] sm:$0xf] %vm432, 0
          %446 = vst.msk [vmem:[#allocation2 + $0x34] sm:$0xf] %vm432, 0
          %447 = vst.msk [vmem:[#allocation2 + $0x38] sm:$0xf] %vm432, 0
          %448 = vst.msk [vmem:[#allocation2 + $0x3c] sm:$0xf] %vm432, 0
          %449 = vst.msk [vmem:[#allocation2 + $0x40] sm:$0xf] %vm432, 0
          %450 = vst.msk [vmem:[#allocation2 + $0x44] sm:$0xf] %vm432, 0
          %451 = vst.msk [vmem:[#allocation2 + $0x48] sm:$0xf] %vm432, 0
          %452 = vst.msk [vmem:[#allocation2 + $0x4c] sm:$0xf] %vm432, 0
          %453 = vst.msk [vmem:[#allocation2 + $0x50] sm:$0xf] %vm432, 0
          %454 = vst.msk [vmem:[#allocation2 + $0x54] sm:$0xf] %vm432, 0
          %455 = vst.msk [vmem:[#allocation2 + $0x58] sm:$0xf] %vm432, 0
          %456 = vst.msk [vmem:[#allocation2 + $0x5c] sm:$0xf] %vm432, 0
          %457 = vst.msk [vmem:[#allocation2 + $0x60] sm:$0xf] %vm432, 0
          %458 = vst.msk [vmem:[#allocation2 + $0x64] sm:$0xf] %vm432, 0
          %459 = vst.msk [vmem:[#allocation2 + $0x68] sm:$0xf] %vm432, 0
          %460 = vst.msk [vmem:[#allocation2 + $0x6c] sm:$0xf] %vm432, 0
          %461 = vst.msk [vmem:[#allocation2 + $0x70] sm:$0xf] %vm432, 0
          %462 = vst.msk [vmem:[#allocation2 + $0x74] sm:$0xf] %vm432, 0
          %463 = vst.msk [vmem:[#allocation2 + $0x78] sm:$0xf] %vm432, 0
          %464 = vst.msk [vmem:[#allocation2 + $0x7c] sm:$0xf] %vm432, 0
          %465 = vst.msk [vmem:[#allocation2 + $0x80] sm:$0xf] %vm432, 0
          %466 = vst.msk [vmem:[#allocation2 + $0x84] sm:$0xf] %vm432, 0
          %467 = vst.msk [vmem:[#allocation2 + $0x88] sm:$0xf] %vm432, 0
          %468 = vst.msk [vmem:[#allocation2 + $0x8c] sm:$0xf] %vm432, 0
          %469 = vst.msk [vmem:[#allocation2 + $0x90] sm:$0xf] %vm432, 0
          %470 = vst.msk [vmem:[#allocation2 + $0x94] sm:$0xf] %vm432, 0
          %471 = vst.msk [vmem:[#allocation2 + $0x98] sm:$0xf] %vm432, 0
          %472 = vst.msk [vmem:[#allocation2 + $0x9c] sm:$0xf] %vm432, 0
          %vm473 = vcmask 26624
          %474 = vst.msk [vmem:[#allocation2 + $0xa0] sm:$0x7] %vm473, 0
          %vm475 = vcmask 257024
          %476 = vst.msk [vmem:[#allocation3] sm:$0xf] %vm475, 0
          %477 = vst.msk [vmem:[#allocation3 + $0x4] sm:$0xf] %vm475, 0
          %478 = vst.msk [vmem:[#allocation3 + $0x8] sm:$0xf] %vm475, 0
          %479 = vst.msk [vmem:[#allocation3 + $0xc] sm:$0xf] %vm475, 0
          %480 = vst.msk [vmem:[#allocation3 + $0x10] sm:$0xf] %vm475, 0
          %481 = vst.msk [vmem:[#allocation3 + $0x14] sm:$0xf] %vm475, 0
          %482 = vst.msk [vmem:[#allocation3 + $0x18] sm:$0xf] %vm475, 0
          %483 = vst.msk [vmem:[#allocation3 + $0x1c] sm:$0xf] %vm475, 0
          %484 = vst.msk [vmem:[#allocation3 + $0x20] sm:$0xf] %vm475, 0
          %485 = vst.msk [vmem:[#allocation3 + $0x24] sm:$0xf] %vm475, 0
          %486 = vst.msk [vmem:[#allocation3 + $0x28] sm:$0xf] %vm475, 0
          %487 = vst.msk [vmem:[#allocation3 + $0x2c] sm:$0xf] %vm475, 0
          %vm488 = vcmask 256000
          %489 = vst.msk [vmem:[#allocation3 + $0x30] sm:$0x7] %vm488, 0
          %490 = vst.msk [vmem:[#allocation4] sm:$0xf] %vm475, 0
          %491 = vst.msk [vmem:[#allocation4 + $0x4] sm:$0xf] %vm475, 0
          %492 = vst.msk [vmem:[#allocation4 + $0x8] sm:$0xf] %vm475, 0
          %493 = vst.msk [vmem:[#allocation4 + $0xc] sm:$0xf] %vm475, 0
          %494 = vst.msk [vmem:[#allocation4 + $0x10] sm:$0x7] %vm488, 0
          %vm495 = vcmask 519168
          %496 = vst.msk [vmem:[#allocation5] sm:$0xf] %vm495, 0
          %497 = vst.msk [vmem:[#allocation5 + $0x4] sm:$0xf] %vm495, 0
          %vm498 = vcmask 516096
          %499 = vst.msk [vmem:[#allocation5 + $0x8] sm:$0x1] %vm498, 0
          %vm500 = vcmask 517120
          %501 = vst.msk [vmem:[#allocation10] sm:$0x3] %vm500, 0.0
        $region76: #{model_forward.1} parent=71 // pred_fallthru
          _
        %v502 = vld [vmem:[%s426] sm:$0xf]
        %v503 = vld [vmem:[%s426 + $0x4] sm:$0xf]
        %vm506 = vcmask 1041408
        %vm507 = vcmask 1045508
        %vm508 = vmor %vm506, %vm507
        %v509 = vrot.slane %v502, 6
        %v510 = vrot.slane %v509, 4
        %v511 = vrot.slane %v503, 6
        %v512 = vsel %vm508, %v510, %v511
        %v513 = vrot.slane %v511, 4
        %vm517 = vcmask 27650
        %518 = vst.msk [vmem:[#allocation2 + $0x8] sm:$0xc] %vm517, %v509
        %vm519 = vcmask 27648
        %520 = vst.msk [vmem:[#allocation2 + $0xc] sm:$0xf] %vm519, %v512
        %vm521 = vcmask 25600
        %522 = vst.msk [vmem:[#allocation2 + $0x10] sm:$0x3] %vm521, %v513
        %v523 = vld [vmem:[%s426 + $0x8] sm:$0xf]
        %v524 = vld [vmem:[%s426 + $0xc] sm:$0xf]
        %vm527 = vcmask 1042432
        %vm528 = vcmask 1046532
        %vm529 = vmor %vm527, %vm528
        %v530 = vrot.slane %v523, 5
        %v531 = vrot.slane %v530, 4
        %v532 = vrot.slane %v524, 5
        %v533 = vsel %vm529, %v531, %v532
        %v534 = vrot.slane %v532, 4
        %vm538 = vcmask 27651
        %539 = vst.msk [vmem:[#allocation2 + $0x10] sm:$0x8] %vm538, %v530
        %540 = vst.msk [vmem:[#allocation2 + $0x14] sm:$0xf] %vm519, %v533
        %vm541 = vcmask 26624
        %542 = vst.msk [vmem:[#allocation2 + $0x18] sm:$0x7] %vm541, %v534
        %v543 = vld [vmem:[%s426 + $0x10] sm:$0xf]
        %v544 = vld [vmem:[%s426 + $0x14] sm:$0xf]
        %545 = vst.msk [vmem:[#allocation2 + $0x1c] sm:$0xf] %vm519, %v543
        %546 = vst.msk [vmem:[#allocation2 + $0x20] sm:$0xf] %vm519, %v544
        %v547 = vld [vmem:[%s426 + $0x18] sm:$0xf]
        %v548 = vld [vmem:[%s426 + $0x1c] sm:$0xf]
        %vm551 = vcmask 1040384
        %vm552 = vcmask 1044484
        %vm553 = vmor %vm551, %vm552
        %v554 = vrot.slane %v547, 7
        %v555 = vrot.slane %v554, 4
        %v556 = vrot.slane %v548, 7
        %v557 = vsel %vm553, %v555, %v556
        %v558 = vrot.slane %v556, 4
        %vm562 = vcmask 27649
        %563 = vst.msk [vmem:[#allocation2 + $0x24] sm:$0xe] %vm562, %v554
        %564 = vst.msk [vmem:[#allocation2 + $0x28] sm:$0xf] %vm519, %v557
        %vm565 = vcmask 24576
        %566 = vst.msk [vmem:[#allocation2 + $0x2c] sm:$0x1] %vm565, %v558
        %v567 = vld [vmem:[%s426 + $0x20] sm:$0xf]
        %v568 = vld [vmem:[%s426 + $0x24] sm:$0xf]
        %v571 = vrot.slane %v567, 6
        %v572 = vrot.slane %v571, 4
        %v573 = vrot.slane %v568, 6
        %v574 = vsel %vm508, %v572, %v573
        %v575 = vrot.slane %v573, 4
        %579 = vst.msk [vmem:[#allocation2 + $0x2c] sm:$0xc] %vm517, %v571
        %580 = vst.msk [vmem:[#allocation2 + $0x30] sm:$0xf] %vm519, %v574
        %581 = vst.msk [vmem:[#allocation2 + $0x34] sm:$0x3] %vm521, %v575
        %v582 = vld [vmem:[%s426 + $0x28] sm:$0xf]
        %v583 = vld [vmem:[%s426 + $0x2c] sm:$0xf]
        %v586 = vrot.slane %v582, 5
        %v587 = vrot.slane %v586, 4
        %v588 = vrot.slane %v583, 5
        %v589 = vsel %vm529, %v587, %v588
        %v590 = vrot.slane %v588, 4
        %594 = vst.msk [vmem:[#allocation2 + $0x34] sm:$0x8] %vm538, %v586
        %595 = vst.msk [vmem:[#allocation2 + $0x38] sm:$0xf] %vm519, %v589
        %596 = vst.msk [vmem:[#allocation2 + $0x3c] sm:$0x7] %vm541, %v590
        %v597 = vld [vmem:[%s426 + $0x30] sm:$0xf]
        %v598 = vld [vmem:[%s426 + $0x34] sm:$0xf]
        %599 = vst.msk [vmem:[#allocation2 + $0x40] sm:$0xf] %vm519, %v597
        %600 = vst.msk [vmem:[#allocation2 + $0x44] sm:$0xf] %vm519, %v598
        %v601 = vld [vmem:[%s426 + $0x38] sm:$0xf]
        %v602 = vld [vmem:[%s426 + $0x3c] sm:$0xf]
        %v605 = vrot.slane %v601, 7
        %v606 = vrot.slane %v605, 4
        %v607 = vrot.slane %v602, 7
        %v608 = vsel %vm553, %v606, %v607
        %v609 = vrot.slane %v607, 4
        %613 = vst.msk [vmem:[#allocation2 + $0x48] sm:$0xe] %vm562, %v605
        %614 = vst.msk [vmem:[#allocation2 + $0x4c] sm:$0xf] %vm519, %v608
        %615 = vst.msk [vmem:[#allocation2 + $0x50] sm:$0x1] %vm565, %v609
        %v616 = vld [vmem:[%s426 + $0x40] sm:$0xf]
        %v617 = vld [vmem:[%s426 + $0x44] sm:$0xf]
        %v620 = vrot.slane %v616, 6
        %v621 = vrot.slane %v620, 4
        %v622 = vrot.slane %v617, 6
        %v623 = vsel %vm508, %v621, %v622
        %v624 = vrot.slane %v622, 4
        %628 = vst.msk [vmem:[#allocation2 + $0x50] sm:$0xc] %vm517, %v620
        %629 = vst.msk [vmem:[#allocation2 + $0x54] sm:$0xf] %vm519, %v623
        %630 = vst.msk [vmem:[#allocation2 + $0x58] sm:$0x3] %vm521, %v624
        %v631 = vld [vmem:[%s426 + $0x48] sm:$0xf]
        %v632 = vld [vmem:[%s426 + $0x4c] sm:$0xf]
        %v635 = vrot.slane %v631, 5
        %v636 = vrot.slane %v635, 4
        %v637 = vrot.slane %v632, 5
        %v638 = vsel %vm529, %v636, %v637
        %v639 = vrot.slane %v637, 4
        %643 = vst.msk [vmem:[#allocation2 + $0x58] sm:$0x8] %vm538, %v635
        %644 = vst.msk [vmem:[#allocation2 + $0x5c] sm:$0xf] %vm519, %v638
        %645 = vst.msk [vmem:[#allocation2 + $0x60] sm:$0x7] %vm541, %v639
        %v646 = vld [vmem:[%s426 + $0x50] sm:$0xf]
        %v647 = vld [vmem:[%s426 + $0x54] sm:$0xf]
        %648 = vst.msk [vmem:[#allocation2 + $0x64] sm:$0xf] %vm519, %v646
        %649 = vst.msk [vmem:[#allocation2 + $0x68] sm:$0xf] %vm519, %v647
        %v650 = vld [vmem:[%s426 + $0x58] sm:$0xf]
        %v651 = vld [vmem:[%s426 + $0x5c] sm:$0xf]
        %v654 = vrot.slane %v650, 7
        %v655 = vrot.slane %v654, 4
        %v656 = vrot.slane %v651, 7
        %v657 = vsel %vm553, %v655, %v656
        %v658 = vrot.slane %v656, 4
        %662 = vst.msk [vmem:[#allocation2 + $0x6c] sm:$0xe] %vm562, %v654
        %663 = vst.msk [vmem:[#allocation2 + $0x70] sm:$0xf] %vm519, %v657
        %664 = vst.msk [vmem:[#allocation2 + $0x74] sm:$0x1] %vm565, %v658
        %v665 = vld [vmem:[%s426 + $0x60] sm:$0xf]
        %v666 = vld [vmem:[%s426 + $0x64] sm:$0xf]
        %v669 = vrot.slane %v665, 6
        %v670 = vrot.slane %v669, 4
        %v671 = vrot.slane %v666, 6
        %v672 = vsel %vm508, %v670, %v671
        %v673 = vrot.slane %v671, 4
        %677 = vst.msk [vmem:[#allocation2 + $0x74] sm:$0xc] %vm517, %v669
        %678 = vst.msk [vmem:[#allocation2 + $0x78] sm:$0xf] %vm519, %v672
        %679 = vst.msk [vmem:[#allocation2 + $0x7c] sm:$0x3] %vm521, %v673
        %v680 = vld [vmem:[%s426 + $0x68] sm:$0xf]
        %v681 = vld [vmem:[%s426 + $0x6c] sm:$0xf]
        %v684 = vrot.slane %v680, 5
        %v685 = vrot.slane %v684, 4
        %v686 = vrot.slane %v681, 5
        %v687 = vsel %vm529, %v685, %v686
        %v688 = vrot.slane %v686, 4
        %692 = vst.msk [vmem:[#allocation2 + $0x7c] sm:$0x8] %vm538, %v684
        %693 = vst.msk [vmem:[#allocation2 + $0x80] sm:$0xf] %vm519, %v687
        %694 = vst.msk [vmem:[#allocation2 + $0x84] sm:$0x7] %vm541, %v688
        %v695 = vld [vmem:[%s426 + $0x70] sm:$0xf]
        %v696 = vld [vmem:[%s426 + $0x74] sm:$0xf]
        %697 = vst.msk [vmem:[#allocation2 + $0x88] sm:$0xf] %vm519, %v695
        %698 = vst.msk [vmem:[#allocation2 + $0x8c] sm:$0xf] %vm519, %v696
        %v699 = vld [vmem:[%s426 + $0x78] sm:$0xf]
        %v700 = vld [vmem:[%s426 + $0x7c] sm:$0xf]
        %v703 = vrot.slane %v699, 7
        %v704 = vrot.slane %v703, 4
        %v705 = vrot.slane %v700, 7
        %v706 = vsel %vm553, %v704, %v705
        %v707 = vrot.slane %v705, 4
        %711 = vst.msk [vmem:[#allocation2 + $0x90] sm:$0xe] %vm562, %v703
        %712 = vst.msk [vmem:[#allocation2 + $0x94] sm:$0xf] %vm519, %v706
        %713 = vst.msk [vmem:[#allocation2 + $0x98] sm:$0x1] %vm565, %v707
        %v714 = vld [vmem:[#allocation2] sm:$0xf]
        %v715 = vld [vmem:[#allocation2 + $0x4] sm:$0xf]
        %v716 = vld [vmem:[#allocation2 + $0x8] sm:$0xf]
        %v717 = vld [vmem:[#allocation2 + $0xc] sm:$0xf]
        %v718 = vld [vmem:[#allocation2 + $0x10] sm:$0xf]
        %v719 = vld [vmem:[#allocation2 + $0x14] sm:$0xf]
        %v720 = vld [vmem:[#allocation2 + $0x18] sm:$0xf]
        %v721 = vld [vmem:[#allocation2 + $0x1c] sm:$0xf]
        %v722 = vld [vmem:[#allocation2 + $0x20] sm:$0xf]
        %v723 = vld [vmem:[#allocation2 + $0x24] sm:$0xf]
        %v724 = vld [vmem:[#allocation2 + $0x28] sm:$0xf]
        %v725 = vld [vmem:[#allocation2 + $0x2c] sm:$0xf]
        %v726 = vld [vmem:[#allocation2 + $0x30] sm:$0xf]
        %v727 = vld [vmem:[#allocation2 + $0x34] sm:$0xf]
        %v728 = vld [vmem:[#allocation2 + $0x38] sm:$0xf]
        %v729 = vld [vmem:[#allocation2 + $0x3c] sm:$0xf]
        %v730 = vld [vmem:[#allocation2 + $0x40] sm:$0xf]
        %v731 = vld [vmem:[#allocation2 + $0x44] sm:$0xf]
        %v732 = vld [vmem:[#allocation2 + $0x48] sm:$0xf]
        %v733 = vld [vmem:[#allocation2 + $0x4c] sm:$0xf]
        %v734 = vld [vmem:[#allocation2 + $0x50] sm:$0xf]
        %v735 = vld [vmem:[#allocation2 + $0x54] sm:$0xf]
        %v736 = vld [vmem:[#allocation2 + $0x58] sm:$0xf]
        %v737 = vld [vmem:[#allocation2 + $0x5c] sm:$0xf]
        %v738 = vld [vmem:[#allocation2 + $0x60] sm:$0xf]
        %v739 = vld [vmem:[#allocation2 + $0x64] sm:$0xf]
        %v740 = vld [vmem:[#allocation2 + $0x68] sm:$0xf]
        %v741 = vld [vmem:[#allocation2 + $0x6c] sm:$0xf]
        %v742 = vld [vmem:[#allocation2 + $0x70] sm:$0xf]
        %v743 = vld [vmem:[#allocation2 + $0x74] sm:$0xf]
        %v744 = vld [vmem:[#allocation2 + $0x78] sm:$0xf]
        %v745 = vld [vmem:[#allocation2 + $0x7c] sm:$0xf]
        %v746 = vld [vmem:[#allocation2 + $0x80] sm:$0xf]
        %v747 = vld [vmem:[#allocation2 + $0x84] sm:$0xf]
        %v748 = vld [vmem:[#allocation2 + $0x88] sm:$0xf]
        %v749 = vld [vmem:[#allocation2 + $0x8c] sm:$0xf]
        %v750 = vld [vmem:[%s1] sm:$0x3]
        %v751 = vld [vmem:[#allocation2 + $0x90] sm:$0x1]
        %s752 = scalar_lea.vmem %s1, 2
        %v753 = vld [vmem:[%s752] sm:$0x3]
        %v791 = vunpack.c.l.b16 %v714
        %v792 = vunpack.c.l.b16 %v715
        %v793 = vunpack.c.l.b16 %v716
        %v794 = vunpack.c.l.b16 %v717
        %v795 = vunpack.c.l.b16 %v718
        %v796 = vunpack.c.l.b16 %v719
        %v797 = vunpack.c.l.b16 %v720
        %v798 = vunpack.c.l.b16 %v721
        %v799 = vunpack.c.l.b16 %v722
        %v800 = vunpack.c.l.b16 %v723
        %v801 = vunpack.c.l.b16 %v724
        %v802 = vunpack.c.l.b16 %v725
        %v803 = vunpack.c.l.b16 %v726
        %v804 = vunpack.c.l.b16 %v727
        %v805 = vunpack.c.l.b16 %v728
        %v806 = vunpack.c.l.b16 %v729
        %v807 = vunpack.c.l.b16 %v730
        %v808 = vunpack.c.l.b16 %v731
        %v809 = vunpack.c.l.b16 %v732
        %v810 = vunpack.c.l.b16 %v733
        %v811 = vunpack.c.l.b16 %v734
        %v812 = vunpack.c.l.b16 %v735
        %v813 = vunpack.c.l.b16 %v736
        %v814 = vunpack.c.l.b16 %v737
        %v815 = vunpack.c.l.b16 %v738
        %v816 = vunpack.c.l.b16 %v739
        %v817 = vunpack.c.l.b16 %v740
        %v818 = vunpack.c.l.b16 %v741
        %v819 = vunpack.c.l.b16 %v742
        %v820 = vunpack.c.l.b16 %v743
        %v821 = vunpack.c.l.b16 %v744
        %v822 = vunpack.c.l.b16 %v745
        %v823 = vunpack.c.l.b16 %v746
        %v824 = vunpack.c.l.b16 %v747
        %v825 = vunpack.c.l.b16 %v748
        %v826 = vunpack.c.l.b16 %v749
        %v827 = vunpack.c.l.b16 %v751
        %v828 = vpack.c.b16 %v792, %v791
        %v829 = vpack.c.b16 %v794, %v793
        %v830 = vpack.c.b16 %v796, %v795
        %v831 = vpack.c.b16 %v798, %v797
        %v832 = vpack.c.b16 %v800, %v799
        %v833 = vpack.c.b16 %v802, %v801
        %v834 = vpack.c.b16 %v804, %v803
        %v835 = vpack.c.b16 %v806, %v805
        %v836 = vpack.c.b16 %v808, %v807
        %v837 = vpack.c.b16 %v810, %v809
        %v838 = vpack.c.b16 %v812, %v811
        %v839 = vpack.c.b16 %v814, %v813
        %v840 = vpack.c.b16 %v816, %v815
        %v841 = vpack.c.b16 %v818, %v817
        %v842 = vpack.c.b16 %v820, %v819
        %v843 = vpack.c.b16 %v822, %v821
        %v844 = vpack.c.b16 %v824, %v823
        %v845 = vpack.c.b16 %v826, %v825
        %v846 = vpack.c.b16 %v827, %v827
        %vm847 = vsmask.f32 7424
        %v849 = vshrl.u32 %v828, 16
        %v851 = vshll.u32 %v828, 16
        %v853 = vrot.slane %v851, 1
        %v854 = vor.u32 %v849, %v853
        %v856 = vshll.u32 %v829, 16
        %v858 = vrot.slane %v856, 1
        %v859 = vsel %vm847, %v854, %v858
        %v860 = vshrl.u32 %v829, 16
        %v862 = vor.u32 %v860, %v858
        %v864 = vshll.u32 %v830, 16
        %v866 = vrot.slane %v864, 1
        %v867 = vsel %vm847, %v862, %v866
        %v868 = vshrl.u32 %v830, 16
        %v870 = vor.u32 %v868, %v866
        %v872 = vshll.u32 %v831, 16
        %v874 = vrot.slane %v872, 1
        %v875 = vsel %vm847, %v870, %v874
        %v876 = vshrl.u32 %v831, 16
        %v878 = vor.u32 %v876, %v874
        %v880 = vshll.u32 %v832, 16
        %v882 = vrot.slane %v880, 1
        %v883 = vsel %vm847, %v878, %v882
        %v884 = vshrl.u32 %v832, 16
        %v886 = vor.u32 %v884, %v882
        %v888 = vshll.u32 %v833, 16
        %v890 = vrot.slane %v888, 1
        %v891 = vsel %vm847, %v886, %v890
        %v892 = vshrl.u32 %v833, 16
        %v894 = vor.u32 %v892, %v890
        %v896 = vshll.u32 %v834, 16
        %v898 = vrot.slane %v896, 1
        %v899 = vsel %vm847, %v894, %v898
        %v900 = vshrl.u32 %v834, 16
        %v902 = vor.u32 %v900, %v898
        %v904 = vshll.u32 %v835, 16
        %v906 = vrot.slane %v904, 1
        %v907 = vsel %vm847, %v902, %v906
        %v908 = vshrl.u32 %v835, 16
        %v910 = vor.u32 %v908, %v906
        %v912 = vshll.u32 %v836, 16
        %v914 = vrot.slane %v912, 1
        %v915 = vsel %vm847, %v910, %v914
        %v916 = vshrl.u32 %v836, 16
        %v918 = vor.u32 %v916, %v914
        %v920 = vshll.u32 %v837, 16
        %v922 = vrot.slane %v920, 1
        %v923 = vsel %vm847, %v918, %v922
        %v924 = vshrl.u32 %v837, 16
        %v926 = vor.u32 %v924, %v922
        %v928 = vshll.u32 %v838, 16
        %v930 = vrot.slane %v928, 1
        %v931 = vsel %vm847, %v926, %v930
        %v932 = vshrl.u32 %v838, 16
        %v934 = vor.u32 %v932, %v930
        %v936 = vshll.u32 %v839, 16
        %v938 = vrot.slane %v936, 1
        %v939 = vsel %vm847, %v934, %v938
        %v940 = vshrl.u32 %v839, 16
        %v942 = vor.u32 %v940, %v938
        %v944 = vshll.u32 %v840, 16
        %v946 = vrot.slane %v944, 1
        %v947 = vsel %vm847, %v942, %v946
        %v948 = vshrl.u32 %v840, 16
        %v950 = vor.u32 %v948, %v946
        %v952 = vshll.u32 %v841, 16
        %v954 = vrot.slane %v952, 1
        %v955 = vsel %vm847, %v950, %v954
        %v956 = vshrl.u32 %v841, 16
        %v958 = vor.u32 %v956, %v954
        %v960 = vshll.u32 %v842, 16
        %v962 = vrot.slane %v960, 1
        %v963 = vsel %vm847, %v958, %v962
        %v964 = vshrl.u32 %v842, 16
        %v966 = vor.u32 %v964, %v962
        %v968 = vshll.u32 %v843, 16
        %v970 = vrot.slane %v968, 1
        %v971 = vsel %vm847, %v966, %v970
        %v972 = vshrl.u32 %v843, 16
        %v974 = vor.u32 %v972, %v970
        %v976 = vshll.u32 %v844, 16
        %v978 = vrot.slane %v976, 1
        %v979 = vsel %vm847, %v974, %v978
        %v980 = vshrl.u32 %v844, 16
        %v982 = vor.u32 %v980, %v978
        %v984 = vshll.u32 %v845, 16
        %v986 = vrot.slane %v984, 1
        %v987 = vsel %vm847, %v982, %v986
        %v988 = vshrl.u32 %v845, 16
        %v990 = vor.u32 %v988, %v986
        %v992 = vshll.u32 %v846, 16
        %v994 = vrot.slane %v992, 1
        %v995 = vsel %vm847, %v990, %v994
        %vm996 = vcmask 31744
        %v998 = vsel %vm996, %v859, 0
        %v1001 = vsel %vm996, %v867, 0
        %v1004 = vsel %vm996, %v875, 0
        %v1007 = vsel %vm996, %v883, 0
        %v1010 = vsel %vm996, %v891, 0
        %v1013 = vsel %vm996, %v899, 0
        %v1016 = vsel %vm996, %v907, 0
        %v1019 = vsel %vm996, %v915, 0
        %v1022 = vsel %vm996, %v923, 0
        %v1025 = vsel %vm996, %v931, 0
        %v1028 = vsel %vm996, %v939, 0
        %v1031 = vsel %vm996, %v947, 0
        %v1034 = vsel %vm996, %v955, 0
        %v1037 = vsel %vm996, %v963, 0
        %v1040 = vsel %vm996, %v971, 0
        %v1043 = vsel %vm996, %v979, 0
        %v1046 = vsel %vm996, %v987, 0
        %v1049 = vsel %vm996, %v995, 0
        %vm1051 = vcmask 1041408
        %v1053 = vsel %vm1051, %v753, 0
        %1055 = vmatprep.subr.bf16.mxu0 0
        %1056 = vmatpush1.bf16.msra.mxu0 %v1053
        %1057 = vmatprep.subr.bf16.mxu0 0
        %1058 = vmatpush1.bf16.msra.mxu0 0
        %1059 = vmatprep.subr.bf16.mxu0 0
        %1060 = vmatpush1.bf16.msra.mxu0 0
        %1061 = vmatprep.subr.bf16.mxu0 0
        %1062 = vmatpush1.bf16.msra.mxu0 0
        %1063 = vmatprep.subr.bf16.mxu0 0
        %1064 = vmatpush1.bf16.msra.mxu0 0
        %1065 = vmatprep.subr.bf16.mxu0 0
        %1066 = vmatpush1.bf16.msra.mxu0 0
        %1067 = vmatprep.subr.bf16.mxu0 0
        %1068 = vmatpush1.bf16.msra.mxu0 0
        %1069 = vmatprep.subr.bf16.mxu0 0
        %1070 = vmatpush1.bf16.msra.mxu0 0
        %1071 = vmatprep.subr.bf16.mxu0 0
        %1072 = vmatpush1.bf16.msra.mxu0 0
        %1073 = vmatprep.subr.bf16.mxu0 0
        %1074 = vmatpush1.bf16.msra.mxu0 0
        %1075 = vmatprep.subr.bf16.mxu0 0
        %1076 = vmatpush1.bf16.msra.mxu0 0
        %1077 = vmatprep.subr.bf16.mxu0 0
        %1078 = vmatpush1.bf16.msra.mxu0 0
        %1079 = vmatprep.subr.bf16.mxu0 0
        %1080 = vmatpush1.bf16.msra.mxu0 0
        %1081 = vmatprep.subr.bf16.mxu0 0
        %1082 = vmatpush1.bf16.msra.mxu0 0
        %1083 = vmatprep.subr.bf16.mxu0 0
        %1084 = vmatpush1.bf16.msra.mxu0 0
        %1085 = vmatprep.subr.bf16.mxu0 0
        %1086 = vmatpush1.bf16.msra.mxu0 0
        %1087 = vmatprep.mubr.bf16.mxu0 0
        %1088 = vmatmul.mubr.bf16.gmra.mrb[0].mxu0 %v998
        %v1089 = vpop.f32.mrb[0].mxu0
        %v1090 = vadd.f32 0.0, %v1089
        %v1091 = vpop.f32.mrb[0].mxu0
        %v1092 = vpop.f32.mrb[0].mxu0
        %v1093 = vadd.f32 0.0, %v1092
        %v1094 = vpop.f32.mrb[0].mxu0
        %1095 = vmatprep.mubr.bf16.mxu0 0
        %1096 = vmatmul.mubr.bf16.gmra.mrb[0].mxu0 %v1001
        %v1097 = vpop.f32.mrb[0].mxu0
        %v1098 = vadd.f32 0.0, %v1097
        %v1099 = vpop.f32.mrb[0].mxu0
        %v1100 = vpop.f32.mrb[0].mxu0
        %v1101 = vadd.f32 0.0, %v1100
        %v1102 = vpop.f32.mrb[0].mxu0
        %1103 = vmatprep.mubr.bf16.mxu0 0
        %1104 = vmatmul.mubr.bf16.gmra.mrb[0].mxu0 %v1004
        %v1105 = vpop.f32.mrb[0].mxu0
        %v1106 = vadd.f32 0.0, %v1105
        %v1107 = vpop.f32.mrb[0].mxu0
        %v1108 = vpop.f32.mrb[0].mxu0
        %v1109 = vadd.f32 0.0, %v1108
        %v1110 = vpop.f32.mrb[0].mxu0
        %1111 = vmatprep.mubr.bf16.mxu0 0
        %1112 = vmatmul.mubr.bf16.gmra.mrb[0].mxu0 %v1007
        %v1113 = vpop.f32.mrb[0].mxu0
        %v1114 = vadd.f32 0.0, %v1113
        %v1115 = vpop.f32.mrb[0].mxu0
        %v1116 = vpop.f32.mrb[0].mxu0
        %v1117 = vadd.f32 0.0, %v1116
        %v1118 = vpop.f32.mrb[0].mxu0
        %1119 = vmatprep.mubr.bf16.mxu0 0
        %1120 = vmatmul.mubr.bf16.gmra.mrb[0].mxu0 %v1010
        %v1121 = vpop.f32.mrb[0].mxu0
        %v1122 = vadd.f32 0.0, %v1121
        %v1123 = vpop.f32.mrb[0].mxu0
        %v1124 = vpop.f32.mrb[0].mxu0
        %v1125 = vadd.f32 0.0, %v1124
        %v1126 = vpop.f32.mrb[0].mxu0
        %1127 = vmatprep.mubr.bf16.mxu0 0
        %1128 = vmatmul.mubr.bf16.gmra.mrb[0].mxu0 %v1013
        %v1129 = vpop.f32.mrb[0].mxu0
        %v1130 = vadd.f32 0.0, %v1129
        %v1131 = vpop.f32.mrb[0].mxu0
        %v1132 = vpop.f32.mrb[0].mxu0
        %v1133 = vadd.f32 0.0, %v1132
        %v1134 = vpop.f32.mrb[0].mxu0
        %1135 = vmatprep.mubr.bf16.mxu0 0
        %1136 = vmatmul.mubr.bf16.gmra.mrb[0].mxu0 %v1016
        %v1137 = vpop.f32.mrb[0].mxu0
        %v1138 = vadd.f32 0.0, %v1137
        %v1139 = vpop.f32.mrb[0].mxu0
        %v1140 = vpop.f32.mrb[0].mxu0
        %v1141 = vadd.f32 0.0, %v1140
        %v1142 = vpop.f32.mrb[0].mxu0
        %1143 = vmatprep.mubr.bf16.mxu0 0
        %1144 = vmatmul.mubr.bf16.gmra.mrb[0].mxu0 %v1019
        %v1145 = vpop.f32.mrb[0].mxu0
        %v1146 = vadd.f32 0.0, %v1145
        %v1147 = vpop.f32.mrb[0].mxu0
        %v1148 = vpop.f32.mrb[0].mxu0
        %v1149 = vadd.f32 0.0, %v1148
        %v1150 = vpop.f32.mrb[0].mxu0
        %1151 = vmatprep.mubr.bf16.mxu0 0
        %1152 = vmatmul.mubr.bf16.gmra.mrb[0].mxu0 %v1022
        %v1153 = vpop.f32.mrb[0].mxu0
        %v1154 = vadd.f32 0.0, %v1153
        %v1155 = vpop.f32.mrb[0].mxu0
        %v1156 = vpop.f32.mrb[0].mxu0
        %v1157 = vadd.f32 0.0, %v1156
        %v1158 = vpop.f32.mrb[0].mxu0
        %1159 = vmatprep.mubr.bf16.mxu0 0
        %1160 = vmatmul.mubr.bf16.gmra.mrb[0].mxu0 %v1025
        %v1161 = vpop.f32.mrb[0].mxu0
        %v1162 = vadd.f32 0.0, %v1161
        %v1163 = vpop.f32.mrb[0].mxu0
        %v1164 = vpop.f32.mrb[0].mxu0
        %v1165 = vadd.f32 0.0, %v1164
        %v1166 = vpop.f32.mrb[0].mxu0
        %1167 = vmatprep.mubr.bf16.mxu0 0
        %1168 = vmatmul.mubr.bf16.gmra.mrb[0].mxu0 %v1028
        %v1169 = vpop.f32.mrb[0].mxu0
        %v1170 = vadd.f32 0.0, %v1169
        %v1171 = vpop.f32.mrb[0].mxu0
        %v1172 = vpop.f32.mrb[0].mxu0
        %v1173 = vadd.f32 0.0, %v1172
        %v1174 = vpop.f32.mrb[0].mxu0
        %1175 = vmatprep.mubr.bf16.mxu0 0
        %1176 = vmatmul.mubr.bf16.gmra.mrb[0].mxu0 %v1031
        %v1177 = vpop.f32.mrb[0].mxu0
        %v1178 = vadd.f32 0.0, %v1177
        %v1179 = vpop.f32.mrb[0].mxu0
        %v1180 = vpop.f32.mrb[0].mxu0
        %v1181 = vadd.f32 0.0, %v1180
        %v1182 = vpop.f32.mrb[0].mxu0
        %1183 = vmatprep.mubr.bf16.mxu0 0
        %1184 = vmatmul.mubr.bf16.gmra.mrb[0].mxu0 %v1034
        %v1185 = vpop.f32.mrb[0].mxu0
        %v1186 = vadd.f32 0.0, %v1185
        %v1187 = vpop.f32.mrb[0].mxu0
        %v1188 = vpop.f32.mrb[0].mxu0
        %v1189 = vadd.f32 0.0, %v1188
        %v1190 = vpop.f32.mrb[0].mxu0
        %1191 = vmatprep.mubr.bf16.mxu0 0
        %1192 = vmatmul.mubr.bf16.gmra.mrb[0].mxu0 %v1037
        %v1193 = vpop.f32.mrb[0].mxu0
        %v1194 = vadd.f32 0.0, %v1193
        %v1195 = vpop.f32.mrb[0].mxu0
        %v1196 = vpop.f32.mrb[0].mxu0
        %v1197 = vadd.f32 0.0, %v1196
        %v1198 = vpop.f32.mrb[0].mxu0
        %1199 = vmatprep.mubr.bf16.mxu0 0
        %1200 = vmatmul.mubr.bf16.gmra.mrb[0].mxu0 %v1040
        %v1201 = vpop.f32.mrb[0].mxu0
        %v1202 = vadd.f32 0.0, %v1201
        %v1203 = vpop.f32.mrb[0].mxu0
        %v1204 = vpop.f32.mrb[0].mxu0
        %v1205 = vadd.f32 0.0, %v1204
        %v1206 = vpop.f32.mrb[0].mxu0
        %1207 = vmatprep.mubr.bf16.mxu0 0
        %1208 = vmatmul.mubr.bf16.gmra.mrb[0].mxu0 %v1043
        %v1209 = vpop.f32.mrb[0].mxu0
        %v1210 = vadd.f32 0.0, %v1209
        %v1211 = vpop.f32.mrb[0].mxu0
        %v1212 = vpop.f32.mrb[0].mxu0
        %v1213 = vadd.f32 0.0, %v1212
        %v1214 = vpop.f32.mrb[0].mxu0
        %1215 = vmatprep.mubr.bf16.mxu0 0
        %1216 = vmatmul.mubr.bf16.gmra.mrb[0].mxu0 %v1046
        %v1217 = vpop.f32.mrb[0].mxu0
        %v1218 = vadd.f32 0.0, %v1217
        %v1219 = vpop.f32.mrb[0].mxu0
        %v1220 = vpop.f32.mrb[0].mxu0
        %v1221 = vadd.f32 0.0, %v1220
        %v1222 = vpop.f32.mrb[0].mxu0
        %1223 = vmatprep.mubr.bf16.mxu0 0
        %1224 = vmatmul.mubr.bf16.gmra.mrb[0].mxu0 %v1049
        %v1225 = vpop.f32.mrb[0].mxu0
        %v1226 = vadd.f32 0.0, %v1225
        %v1227 = vpop.f32.mrb[0].mxu0
        %v1228 = vpop.f32.mrb[0].mxu0
        %v1229 = vadd.f32 0.0, %v1228
        %v1230 = vpop.f32.mrb[0].mxu0
        %1231 = vdwg.mxu0
        %v1232 = vsel %vm996, %v828, 0
        %v1234 = vsel %vm996, %v829, 0
        %v1236 = vsel %vm996, %v830, 0
        %v1238 = vsel %vm996, %v831, 0
        %v1240 = vsel %vm996, %v832, 0
        %v1242 = vsel %vm996, %v833, 0
        %v1244 = vsel %vm996, %v834, 0
        %v1246 = vsel %vm996, %v835, 0
        %v1248 = vsel %vm996, %v836, 0
        %v1250 = vsel %vm996, %v837, 0
        %v1252 = vsel %vm996, %v838, 0
        %v1254 = vsel %vm996, %v839, 0
        %v1256 = vsel %vm996, %v840, 0
        %v1258 = vsel %vm996, %v841, 0
        %v1260 = vsel %vm996, %v842, 0
        %v1262 = vsel %vm996, %v843, 0
        %v1264 = vsel %vm996, %v844, 0
        %v1266 = vsel %vm996, %v845, 0
        %v1269 = vsel %vm1051, %v750, 0
        %1271 = vmatprep.subr.bf16.mxu0 0
        %1272 = vmatpush1.bf16.msra.mxu0 %v1269
        %1273 = vmatprep.subr.bf16.mxu0 0
        %1274 = vmatpush1.bf16.msra.mxu0 0
        %1275 = vmatprep.subr.bf16.mxu0 0
        %1276 = vmatpush1.bf16.msra.mxu0 0
        %1277 = vmatprep.subr.bf16.mxu0 0
        %1278 = vmatpush1.bf16.msra.mxu0 0
        %1279 = vmatprep.subr.bf16.mxu0 0
        %1280 = vmatpush1.bf16.msra.mxu0 0
        %1281 = vmatprep.subr.bf16.mxu0 0
        %1282 = vmatpush1.bf16.msra.mxu0 0
        %1283 = vmatprep.subr.bf16.mxu0 0
        %1284 = vmatpush1.bf16.msra.mxu0 0
        %1285 = vmatprep.subr.bf16.mxu0 0
        %1286 = vmatpush1.bf16.msra.mxu0 0
        %1287 = vmatprep.subr.bf16.mxu0 0
        %1288 = vmatpush1.bf16.msra.mxu0 0
        %1289 = vmatprep.subr.bf16.mxu0 0
        %1290 = vmatpush1.bf16.msra.mxu0 0
        %1291 = vmatprep.subr.bf16.mxu0 0
        %1292 = vmatpush1.bf16.msra.mxu0 0
        %1293 = vmatprep.subr.bf16.mxu0 0
        %1294 = vmatpush1.bf16.msra.mxu0 0
        %1295 = vmatprep.subr.bf16.mxu0 0
        %1296 = vmatpush1.bf16.msra.mxu0 0
        %1297 = vmatprep.subr.bf16.mxu0 0
        %1298 = vmatpush1.bf16.msra.mxu0 0
        %1299 = vmatprep.subr.bf16.mxu0 0
        %1300 = vmatpush1.bf16.msra.mxu0 0
        %1301 = vmatprep.subr.bf16.mxu0 0
        %1302 = vmatpush1.bf16.msra.mxu0 0
        %1303 = vmatprep.mubr.bf16.mxu0 0
        %1304 = vmatmul.mubr.bf16.gmra.mrb[0].mxu0 %v1232
        %v1305 = vpop.f32.mrb[0].mxu0
        %v1306 = vadd.f32 %v1090, %v1305
        %v1307 = vpop.f32.mrb[0].mxu0
        %v1308 = vpop.f32.mrb[0].mxu0
        %v1309 = vadd.f32 %v1093, %v1308
        %v1310 = vpop.f32.mrb[0].mxu0
        %1311 = vmatprep.mubr.bf16.mxu0 0
        %1312 = vmatmul.mubr.bf16.gmra.mrb[0].mxu0 %v1234
        %v1313 = vpop.f32.mrb[0].mxu0
        %v1314 = vadd.f32 %v1098, %v1313
        %v1315 = vpop.f32.mrb[0].mxu0
        %v1316 = vpop.f32.mrb[0].mxu0
        %v1317 = vadd.f32 %v1101, %v1316
        %v1318 = vpop.f32.mrb[0].mxu0
        %1319 = vmatprep.mubr.bf16.mxu0 0
        %1320 = vmatmul.mubr.bf16.gmra.mrb[0].mxu0 %v1236
        %v1321 = vpop.f32.mrb[0].mxu0
        %v1322 = vadd.f32 %v1106, %v1321
        %v1323 = vpop.f32.mrb[0].mxu0
        %v1324 = vpop.f32.mrb[0].mxu0
        %v1325 = vadd.f32 %v1109, %v1324
        %v1326 = vpop.f32.mrb[0].mxu0
        %1327 = vmatprep.mubr.bf16.mxu0 0
        %1328 = vmatmul.mubr.bf16.gmra.mrb[0].mxu0 %v1238
        %v1329 = vpop.f32.mrb[0].mxu0
        %v1330 = vadd.f32 %v1114, %v1329
        %v1331 = vpop.f32.mrb[0].mxu0
        %v1332 = vpop.f32.mrb[0].mxu0
        %v1333 = vadd.f32 %v1117, %v1332
        %v1334 = vpop.f32.mrb[0].mxu0
        %1335 = vmatprep.mubr.bf16.mxu0 0
        %1336 = vmatmul.mubr.bf16.gmra.mrb[0].mxu0 %v1240
        %v1337 = vpop.f32.mrb[0].mxu0
        %v1338 = vadd.f32 %v1122, %v1337
        %v1339 = vpop.f32.mrb[0].mxu0
        %v1340 = vpop.f32.mrb[0].mxu0
        %v1341 = vadd.f32 %v1125, %v1340
        %v1342 = vpop.f32.mrb[0].mxu0
        %1343 = vmatprep.mubr.bf16.mxu0 0
        %1344 = vmatmul.mubr.bf16.gmra.mrb[0].mxu0 %v1242
        %v1345 = vpop.f32.mrb[0].mxu0
        %v1346 = vadd.f32 %v1130, %v1345
        %v1347 = vpop.f32.mrb[0].mxu0
        %v1348 = vpop.f32.mrb[0].mxu0
        %v1349 = vadd.f32 %v1133, %v1348
        %v1350 = vpop.f32.mrb[0].mxu0
        %1351 = vmatprep.mubr.bf16.mxu0 0
        %1352 = vmatmul.mubr.bf16.gmra.mrb[0].mxu0 %v1244
        %v1353 = vpop.f32.mrb[0].mxu0
        %v1354 = vadd.f32 %v1138, %v1353
        %v1355 = vpop.f32.mrb[0].mxu0
        %v1356 = vpop.f32.mrb[0].mxu0
        %v1357 = vadd.f32 %v1141, %v1356
        %v1358 = vpop.f32.mrb[0].mxu0
        %1359 = vmatprep.mubr.bf16.mxu0 0
        %1360 = vmatmul.mubr.bf16.gmra.mrb[0].mxu0 %v1246
        %v1361 = vpop.f32.mrb[0].mxu0
        %v1362 = vadd.f32 %v1146, %v1361
        %v1363 = vpop.f32.mrb[0].mxu0
        %v1364 = vpop.f32.mrb[0].mxu0
        %v1365 = vadd.f32 %v1149, %v1364
        %v1366 = vpop.f32.mrb[0].mxu0
        %1367 = vmatprep.mubr.bf16.mxu0 0
        %1368 = vmatmul.mubr.bf16.gmra.mrb[0].mxu0 %v1248
        %v1369 = vpop.f32.mrb[0].mxu0
        %v1370 = vadd.f32 %v1154, %v1369
        %v1371 = vpop.f32.mrb[0].mxu0
        %v1372 = vpop.f32.mrb[0].mxu0
        %v1373 = vadd.f32 %v1157, %v1372
        %v1374 = vpop.f32.mrb[0].mxu0
        %1375 = vmatprep.mubr.bf16.mxu0 0
        %1376 = vmatmul.mubr.bf16.gmra.mrb[0].mxu0 %v1250
        %v1377 = vpop.f32.mrb[0].mxu0
        %v1378 = vadd.f32 %v1162, %v1377
        %v1379 = vpop.f32.mrb[0].mxu0
        %v1380 = vpop.f32.mrb[0].mxu0
        %v1381 = vadd.f32 %v1165, %v1380
        %v1382 = vpop.f32.mrb[0].mxu0
        %1383 = vmatprep.mubr.bf16.mxu0 0
        %1384 = vmatmul.mubr.bf16.gmra.mrb[0].mxu0 %v1252
        %v1385 = vpop.f32.mrb[0].mxu0
        %v1386 = vadd.f32 %v1170, %v1385
        %v1387 = vpop.f32.mrb[0].mxu0
        %v1388 = vpop.f32.mrb[0].mxu0
        %v1389 = vadd.f32 %v1173, %v1388
        %v1390 = vpop.f32.mrb[0].mxu0
        %1391 = vmatprep.mubr.bf16.mxu0 0
        %1392 = vmatmul.mubr.bf16.gmra.mrb[0].mxu0 %v1254
        %v1393 = vpop.f32.mrb[0].mxu0
        %v1394 = vadd.f32 %v1178, %v1393
        %v1395 = vpop.f32.mrb[0].mxu0
        %v1396 = vpop.f32.mrb[0].mxu0
        %v1397 = vadd.f32 %v1181, %v1396
        %v1398 = vpop.f32.mrb[0].mxu0
        %1399 = vmatprep.mubr.bf16.mxu0 0
        %1400 = vmatmul.mubr.bf16.gmra.mrb[0].mxu0 %v1256
        %v1401 = vpop.f32.mrb[0].mxu0
        %v1402 = vadd.f32 %v1186, %v1401
        %v1403 = vpop.f32.mrb[0].mxu0
        %v1404 = vpop.f32.mrb[0].mxu0
        %v1405 = vadd.f32 %v1189, %v1404
        %v1406 = vpop.f32.mrb[0].mxu0
        %1407 = vmatprep.mubr.bf16.mxu0 0
        %1408 = vmatmul.mubr.bf16.gmra.mrb[0].mxu0 %v1258
        %v1409 = vpop.f32.mrb[0].mxu0
        %v1410 = vadd.f32 %v1194, %v1409
        %v1411 = vpop.f32.mrb[0].mxu0
        %v1412 = vpop.f32.mrb[0].mxu0
        %v1413 = vadd.f32 %v1197, %v1412
        %v1414 = vpop.f32.mrb[0].mxu0
        %1415 = vmatprep.mubr.bf16.mxu0 0
        %1416 = vmatmul.mubr.bf16.gmra.mrb[0].mxu0 %v1260
        %v1417 = vpop.f32.mrb[0].mxu0
        %v1418 = vadd.f32 %v1202, %v1417
        %v1419 = vpop.f32.mrb[0].mxu0
        %v1420 = vpop.f32.mrb[0].mxu0
        %v1421 = vadd.f32 %v1205, %v1420
        %v1422 = vpop.f32.mrb[0].mxu0
        %1423 = vmatprep.mubr.bf16.mxu0 0
        %1424 = vmatmul.mubr.bf16.gmra.mrb[0].mxu0 %v1262
        %v1425 = vpop.f32.mrb[0].mxu0
        %v1426 = vadd.f32 %v1210, %v1425
        %v1427 = vpop.f32.mrb[0].mxu0
        %v1428 = vpop.f32.mrb[0].mxu0
        %v1429 = vadd.f32 %v1213, %v1428
        %v1430 = vpop.f32.mrb[0].mxu0
        %1431 = vmatprep.mubr.bf16.mxu0 0
        %1432 = vmatmul.mubr.bf16.gmra.mrb[0].mxu0 %v1264
        %v1433 = vpop.f32.mrb[0].mxu0
        %v1434 = vadd.f32 %v1218, %v1433
        %v1435 = vpop.f32.mrb[0].mxu0
        %v1436 = vpop.f32.mrb[0].mxu0
        %v1437 = vadd.f32 %v1221, %v1436
        %v1438 = vpop.f32.mrb[0].mxu0
        %1439 = vmatprep.mubr.bf16.mxu0 0
        %1440 = vmatmul.mubr.bf16.gmra.mrb[0].mxu0 %v1266
        %v1441 = vpop.f32.mrb[0].mxu0
        %v1442 = vadd.f32 %v1226, %v1441
        %v1443 = vpop.f32.mrb[0].mxu0
        %v1444 = vpop.f32.mrb[0].mxu0
        %v1445 = vadd.f32 %v1229, %v1444
        %v1446 = vpop.f32.mrb[0].mxu0
        %1447 = vdwg.mxu0
        %v1448 = vld [vmem:[#allocation2] sm:$0xe]
        %s1449 = scalar_lea.vmem %s1, 4
        %v1450 = vld [vmem:[%s1449] sm:$0x3]
        %v1452 = vunpack.c.l.b16 %v1448
        %v1453 = vpack.c.b16 %v792, %v1452
        %vm1454 = vcmask 1046528
        %v1455 = vrot.slane %v1453, 1
        %v1456 = vrot.slane %v829, 1
        %v1457 = vsel %vm1454, %v1455, %v1456
        %v1458 = vrot.slane %v830, 1
        %v1459 = vsel %vm1454, %v1456, %v1458
        %v1460 = vrot.slane %v831, 1
        %v1461 = vsel %vm1454, %v1458, %v1460
        %v1462 = vrot.slane %v832, 1
        %v1463 = vsel %vm1454, %v1460, %v1462
        %v1464 = vrot.slane %v833, 1
        %v1465 = vsel %vm1454, %v1462, %v1464
        %v1466 = vrot.slane %v834, 1
        %v1467 = vsel %vm1454, %v1464, %v1466
        %v1468 = vrot.slane %v835, 1
        %v1469 = vsel %vm1454, %v1466, %v1468
        %v1470 = vrot.slane %v836, 1
        %v1471 = vsel %vm1454, %v1468, %v1470
        %v1472 = vrot.slane %v837, 1
        %v1473 = vsel %vm1454, %v1470, %v1472
        %v1474 = vrot.slane %v838, 1
        %v1475 = vsel %vm1454, %v1472, %v1474
        %v1476 = vrot.slane %v839, 1
        %v1477 = vsel %vm1454, %v1474, %v1476
        %v1478 = vrot.slane %v840, 1
        %v1479 = vsel %vm1454, %v1476, %v1478
        %v1480 = vrot.slane %v841, 1
        %v1481 = vsel %vm1454, %v1478, %v1480
        %v1482 = vrot.slane %v842, 1
        %v1483 = vsel %vm1454, %v1480, %v1482
        %v1484 = vrot.slane %v843, 1
        %v1485 = vsel %vm1454, %v1482, %v1484
        %v1486 = vrot.slane %v844, 1
        %v1487 = vsel %vm1454, %v1484, %v1486
        %v1488 = vrot.slane %v845, 1
        %v1489 = vsel %vm1454, %v1486, %v1488
        %v1490 = vrot.slane %v846, 1
        %v1491 = vsel %vm1454, %v1488, %v1490
        %v1493 = vsel %vm996, %v1457, 0
        %v1496 = vsel %vm996, %v1459, 0
        %v1499 = vsel %vm996, %v1461, 0
        %v1502 = vsel %vm996, %v1463, 0
        %v1505 = vsel %vm996, %v1465, 0
        %v1508 = vsel %vm996, %v1467, 0
        %v1511 = vsel %vm996, %v1469, 0
        %v1514 = vsel %vm996, %v1471, 0
        %v1517 = vsel %vm996, %v1473, 0
        %v1520 = vsel %vm996, %v1475, 0
        %v1523 = vsel %vm996, %v1477, 0
        %v1526 = vsel %vm996, %v1479, 0
        %v1529 = vsel %vm996, %v1481, 0
        %v1532 = vsel %vm996, %v1483, 0
        %v1535 = vsel %vm996, %v1485, 0
        %v1538 = vsel %vm996, %v1487, 0
        %v1541 = vsel %vm996, %v1489, 0
        %v1544 = vsel %vm996, %v1491, 0
        %v1547 = vsel %vm1051, %v1450, 0
        %1549 = vmatprep.subr.bf16.mxu0 0
        %1550 = vmatpush1.bf16.msra.mxu0 %v1547
        %1551 = vmatprep.subr.bf16.mxu0 0
        %1552 = vmatpush1.bf16.msra.mxu0 0
        %1553 = vmatprep.subr.bf16.mxu0 0
        %1554 = vmatpush1.bf16.msra.mxu0 0
        %1555 = vmatprep.subr.bf16.mxu0 0
        %1556 = vmatpush1.bf16.msra.mxu0 0
        %1557 = vmatprep.subr.bf16.mxu0 0
        %1558 = vmatpush1.bf16.msra.mxu0 0
        %1559 = vmatprep.subr.bf16.mxu0 0
        %1560 = vmatpush1.bf16.msra.mxu0 0
        %1561 = vmatprep.subr.bf16.mxu0 0
        %1562 = vmatpush1.bf16.msra.mxu0 0
        %1563 = vmatprep.subr.bf16.mxu0 0
        %1564 = vmatpush1.bf16.msra.mxu0 0
        %1565 = vmatprep.subr.bf16.mxu0 0
        %1566 = vmatpush1.bf16.msra.mxu0 0
        %1567 = vmatprep.subr.bf16.mxu0 0
        %1568 = vmatpush1.bf16.msra.mxu0 0
        %1569 = vmatprep.subr.bf16.mxu0 0
        %1570 = vmatpush1.bf16.msra.mxu0 0
        %1571 = vmatprep.subr.bf16.mxu0 0
        %1572 = vmatpush1.bf16.msra.mxu0 0
        %1573 = vmatprep.subr.bf16.mxu0 0
        %1574 = vmatpush1.bf16.msra.mxu0 0
        %1575 = vmatprep.subr.bf16.mxu0 0
        %1576 = vmatpush1.bf16.msra.mxu0 0
        %1577 = vmatprep.subr.bf16.mxu0 0
        %1578 = vmatpush1.bf16.msra.mxu0 0
        %1579 = vmatprep.subr.bf16.mxu0 0
        %1580 = vmatpush1.bf16.msra.mxu0 0
        %1581 = vmatprep.mubr.bf16.mxu0 0
        %1582 = vmatmul.mubr.bf16.gmra.mrb[0].mxu0 %v1493
        %v1583 = vpop.f32.mrb[0].mxu0
        %v1584 = vadd.f32 0.0, %v1583
        %v1585 = vpop.f32.mrb[0].mxu0
        %v1586 = vpop.f32.mrb[0].mxu0
        %v1587 = vadd.f32 0.0, %v1586
        %v1588 = vpop.f32.mrb[0].mxu0
        %1589 = vmatprep.mubr.bf16.mxu0 0
        %1590 = vmatmul.mubr.bf16.gmra.mrb[0].mxu0 %v1496
        %v1591 = vpop.f32.mrb[0].mxu0
        %v1592 = vadd.f32 0.0, %v1591
        %v1593 = vpop.f32.mrb[0].mxu0
        %v1594 = vpop.f32.mrb[0].mxu0
        %v1595 = vadd.f32 0.0, %v1594
        %v1596 = vpop.f32.mrb[0].mxu0
        %1597 = vmatprep.mubr.bf16.mxu0 0
        %1598 = vmatmul.mubr.bf16.gmra.mrb[0].mxu0 %v1499
        %v1599 = vpop.f32.mrb[0].mxu0
        %v1600 = vadd.f32 0.0, %v1599
        %v1601 = vpop.f32.mrb[0].mxu0
        %v1602 = vpop.f32.mrb[0].mxu0
        %v1603 = vadd.f32 0.0, %v1602
        %v1604 = vpop.f32.mrb[0].mxu0
        %1605 = vmatprep.mubr.bf16.mxu0 0
        %1606 = vmatmul.mubr.bf16.gmra.mrb[0].mxu0 %v1502
        %v1607 = vpop.f32.mrb[0].mxu0
        %v1608 = vadd.f32 0.0, %v1607
        %v1609 = vpop.f32.mrb[0].mxu0
        %v1610 = vpop.f32.mrb[0].mxu0
        %v1611 = vadd.f32 0.0, %v1610
        %v1612 = vpop.f32.mrb[0].mxu0
        %1613 = vmatprep.mubr.bf16.mxu0 0
        %1614 = vmatmul.mubr.bf16.gmra.mrb[0].mxu0 %v1505
        %v1615 = vpop.f32.mrb[0].mxu0
        %v1616 = vadd.f32 0.0, %v1615
        %v1617 = vpop.f32.mrb[0].mxu0
        %v1618 = vpop.f32.mrb[0].mxu0
        %v1619 = vadd.f32 0.0, %v1618
        %v1620 = vpop.f32.mrb[0].mxu0
        %1621 = vmatprep.mubr.bf16.mxu0 0
        %1622 = vmatmul.mubr.bf16.gmra.mrb[0].mxu0 %v1508
        %v1623 = vpop.f32.mrb[0].mxu0
        %v1624 = vadd.f32 0.0, %v1623
        %v1625 = vpop.f32.mrb[0].mxu0
        %v1626 = vpop.f32.mrb[0].mxu0
        %v1627 = vadd.f32 0.0, %v1626
        %v1628 = vpop.f32.mrb[0].mxu0
        %1629 = vmatprep.mubr.bf16.mxu0 0
        %1630 = vmatmul.mubr.bf16.gmra.mrb[0].mxu0 %v1511
        %v1631 = vpop.f32.mrb[0].mxu0
        %v1632 = vadd.f32 0.0, %v1631
        %v1633 = vpop.f32.mrb[0].mxu0
        %v1634 = vpop.f32.mrb[0].mxu0
        %v1635 = vadd.f32 0.0, %v1634
        %v1636 = vpop.f32.mrb[0].mxu0
        %1637 = vmatprep.mubr.bf16.mxu0 0
        %1638 = vmatmul.mubr.bf16.gmra.mrb[0].mxu0 %v1514
        %v1639 = vpop.f32.mrb[0].mxu0
        %v1640 = vadd.f32 0.0, %v1639
        %v1641 = vpop.f32.mrb[0].mxu0
        %v1642 = vpop.f32.mrb[0].mxu0
        %v1643 = vadd.f32 0.0, %v1642
        %v1644 = vpop.f32.mrb[0].mxu0
        %1645 = vmatprep.mubr.bf16.mxu0 0
        %1646 = vmatmul.mubr.bf16.gmra.mrb[0].mxu0 %v1517
        %v1647 = vpop.f32.mrb[0].mxu0
        %v1648 = vadd.f32 0.0, %v1647
        %v1649 = vpop.f32.mrb[0].mxu0
        %v1650 = vpop.f32.mrb[0].mxu0
        %v1651 = vadd.f32 0.0, %v1650
        %v1652 = vpop.f32.mrb[0].mxu0
        %1653 = vmatprep.mubr.bf16.mxu0 0
        %1654 = vmatmul.mubr.bf16.gmra.mrb[0].mxu0 %v1520
        %v1655 = vpop.f32.mrb[0].mxu0
        %v1656 = vadd.f32 0.0, %v1655
        %v1657 = vpop.f32.mrb[0].mxu0
        %v1658 = vpop.f32.mrb[0].mxu0
        %v1659 = vadd.f32 0.0, %v1658
        %v1660 = vpop.f32.mrb[0].mxu0
        %1661 = vmatprep.mubr.bf16.mxu0 0
        %1662 = vmatmul.mubr.bf16.gmra.mrb[0].mxu0 %v1523
        %v1663 = vpop.f32.mrb[0].mxu0
        %v1664 = vadd.f32 0.0, %v1663
        %v1665 = vpop.f32.mrb[0].mxu0
        %v1666 = vpop.f32.mrb[0].mxu0
        %v1667 = vadd.f32 0.0, %v1666
        %v1668 = vpop.f32.mrb[0].mxu0
        %1669 = vmatprep.mubr.bf16.mxu0 0
        %1670 = vmatmul.mubr.bf16.gmra.mrb[0].mxu0 %v1526
        %v1671 = vpop.f32.mrb[0].mxu0
        %v1672 = vadd.f32 0.0, %v1671
        %v1673 = vpop.f32.mrb[0].mxu0
        %v1674 = vpop.f32.mrb[0].mxu0
        %v1675 = vadd.f32 0.0, %v1674
        %v1676 = vpop.f32.mrb[0].mxu0
        %1677 = vmatprep.mubr.bf16.mxu0 0
        %1678 = vmatmul.mubr.bf16.gmra.mrb[0].mxu0 %v1529
        %v1679 = vpop.f32.mrb[0].mxu0
        %v1680 = vadd.f32 0.0, %v1679
        %v1681 = vpop.f32.mrb[0].mxu0
        %v1682 = vpop.f32.mrb[0].mxu0
        %v1683 = vadd.f32 0.0, %v1682
        %v1684 = vpop.f32.mrb[0].mxu0
        %1685 = vmatprep.mubr.bf16.mxu0 0
        %1686 = vmatmul.mubr.bf16.gmra.mrb[0].mxu0 %v1532
        %v1687 = vpop.f32.mrb[0].mxu0
        %v1688 = vadd.f32 0.0, %v1687
        %v1689 = vpop.f32.mrb[0].mxu0
        %v1690 = vpop.f32.mrb[0].mxu0
        %v1691 = vadd.f32 0.0, %v1690
        %v1692 = vpop.f32.mrb[0].mxu0
        %1693 = vmatprep.mubr.bf16.mxu0 0
        %1694 = vmatmul.mubr.bf16.gmra.mrb[0].mxu0 %v1535
        %v1695 = vpop.f32.mrb[0].mxu0
        %v1696 = vadd.f32 0.0, %v1695
        %v1697 = vpop.f32.mrb[0].mxu0
        %v1698 = vpop.f32.mrb[0].mxu0
        %v1699 = vadd.f32 0.0, %v1698
        %v1700 = vpop.f32.mrb[0].mxu0
        %1701 = vmatprep.mubr.bf16.mxu0 0
        %1702 = vmatmul.mubr.bf16.gmra.mrb[0].mxu0 %v1538
        %v1703 = vpop.f32.mrb[0].mxu0
        %v1704 = vadd.f32 0.0, %v1703
        %v1705 = vpop.f32.mrb[0].mxu0
        %v1706 = vpop.f32.mrb[0].mxu0
        %v1707 = vadd.f32 0.0, %v1706
        %v1708 = vpop.f32.mrb[0].mxu0
        %1709 = vmatprep.mubr.bf16.mxu0 0
        %1710 = vmatmul.mubr.bf16.gmra.mrb[0].mxu0 %v1541
        %v1711 = vpop.f32.mrb[0].mxu0
        %v1712 = vadd.f32 0.0, %v1711
        %v1713 = vpop.f32.mrb[0].mxu0
        %v1714 = vpop.f32.mrb[0].mxu0
        %v1715 = vadd.f32 0.0, %v1714
        %v1716 = vpop.f32.mrb[0].mxu0
        %1717 = vmatprep.mubr.bf16.mxu0 0
        %1718 = vmatmul.mubr.bf16.gmra.mrb[0].mxu0 %v1544
        %v1719 = vpop.f32.mrb[0].mxu0
        %v1720 = vadd.f32 0.0, %v1719
        %v1721 = vpop.f32.mrb[0].mxu0
        %v1722 = vpop.f32.mrb[0].mxu0
        %v1723 = vadd.f32 0.0, %v1722
        %v1724 = vpop.f32.mrb[0].mxu0
        %1725 = vdwg.mxu0
        %v1726 = vadd.f32 %v1306, %v1584
        %v1727 = vadd.f32 %v1309, %v1587
        %v1728 = vadd.f32 %v1314, %v1592
        %v1729 = vadd.f32 %v1317, %v1595
        %v1730 = vadd.f32 %v1322, %v1600
        %v1731 = vadd.f32 %v1325, %v1603
        %v1732 = vadd.f32 %v1330, %v1608
        %v1733 = vadd.f32 %v1333, %v1611
        %v1734 = vadd.f32 %v1338, %v1616
        %v1735 = vadd.f32 %v1341, %v1619
        %v1736 = vadd.f32 %v1346, %v1624
        %v1737 = vadd.f32 %v1349, %v1627
        %v1738 = vadd.f32 %v1354, %v1632
        %v1739 = vadd.f32 %v1357, %v1635
        %v1740 = vadd.f32 %v1362, %v1640
        %v1741 = vadd.f32 %v1365, %v1643
        %v1742 = vadd.f32 %v1370, %v1648
        %v1743 = vadd.f32 %v1373, %v1651
        %v1744 = vadd.f32 %v1378, %v1656
        %v1745 = vadd.f32 %v1381, %v1659
        %v1746 = vadd.f32 %v1386, %v1664
        %v1747 = vadd.f32 %v1389, %v1667
        %v1748 = vadd.f32 %v1394, %v1672
        %v1749 = vadd.f32 %v1397, %v1675
        %v1750 = vadd.f32 %v1402, %v1680
        %v1751 = vadd.f32 %v1405, %v1683
        %v1752 = vadd.f32 %v1410, %v1688
        %v1753 = vadd.f32 %v1413, %v1691
        %v1754 = vadd.f32 %v1418, %v1696
        %v1755 = vadd.f32 %v1421, %v1699
        %v1756 = vadd.f32 %v1426, %v1704
        %v1757 = vadd.f32 %v1429, %v1707
        %v1758 = vadd.f32 %v1434, %v1712
        %v1759 = vadd.f32 %v1437, %v1715
        %v1760 = vadd.f32 %v1442, %v1720
        %v1761 = vadd.f32 %v1445, %v1723
        %v1762 = vld [vmem:[#allocation2 + $0x8] sm:$0xe]
        %v1763 = vld [vmem:[#allocation2 + $0xc] sm:$0xf]
        %v1764 = vld [vmem:[#allocation2 + $0x10] sm:$0xf]
        %v1765 = vld [vmem:[#allocation2 + $0x14] sm:$0xf]
        %v1766 = vld [vmem:[#allocation2 + $0x18] sm:$0xf]
        %v1767 = vld [vmem:[#allocation2 + $0x1c] sm:$0xf]
        %v1768 = vld [vmem:[#allocation2 + $0x20] sm:$0xf]
        %v1769 = vld [vmem:[#allocation2 + $0x24] sm:$0xf]
        %v1770 = vld [vmem:[#allocation2 + $0x28] sm:$0xf]
        %v1771 = vld [vmem:[#allocation2 + $0x2c] sm:$0xf]
        %v1772 = vld [vmem:[#allocation2 + $0x30] sm:$0xf]
        %v1773 = vld [vmem:[#allocation2 + $0x34] sm:$0xf]
        %v1774 = vld [vmem:[#allocation2 + $0x38] sm:$0xf]
        %v1775 = vld [vmem:[#allocation2 + $0x3c] sm:$0xf]
        %v1776 = vld [vmem:[#allocation2 + $0x40] sm:$0xf]
        %v1777 = vld [vmem:[#allocation2 + $0x44] sm:$0xf]
        %v1778 = vld [vmem:[#allocation2 + $0x48] sm:$0xf]
        %v1779 = vld [vmem:[#allocation2 + $0x4c] sm:$0xf]
        %v1780 = vld [vmem:[#allocation2 + $0x50] sm:$0xf]
        %v1781 = vld [vmem:[#allocation2 + $0x54] sm:$0xf]
        %v1782 = vld [vmem:[#allocation2 + $0x58] sm:$0xf]
        %v1783 = vld [vmem:[#allocation2 + $0x5c] sm:$0xf]
        %v1784 = vld [vmem:[#allocation2 + $0x60] sm:$0xf]
        %v1785 = vld [vmem:[#allocation2 + $0x64] sm:$0xf]
        %v1786 = vld [vmem:[#allocation2 + $0x68] sm:$0xf]
        %v1787 = vld [vmem:[#allocation2 + $0x6c] sm:$0xf]
        %v1788 = vld [vmem:[#allocation2 + $0x70] sm:$0xf]
        %v1789 = vld [vmem:[#allocation2 + $0x74] sm:$0xf]
        %v1790 = vld [vmem:[#allocation2 + $0x78] sm:$0xf]
        %v1791 = vld [vmem:[#allocation2 + $0x7c] sm:$0xf]
        %v1792 = vld [vmem:[#allocation2 + $0x80] sm:$0xf]
        %v1793 = vld [vmem:[#allocation2 + $0x84] sm:$0xf]
        %v1794 = vld [vmem:[#allocation2 + $0x88] sm:$0xf]
        %v1795 = vld [vmem:[#allocation2 + $0x8c] sm:$0xf]
        %v1796 = vld [vmem:[#allocation2 + $0x90] sm:$0xf]
        %v1797 = vld [vmem:[#allocation2 + $0x94] sm:$0xf]
        %v1798 = vld [vmem:[#allocation2 + $0x98] sm:$0x1]
        %s1799 = scalar_lea.vmem %s1, 6
        %v1800 = vld [vmem:[%s1799] sm:$0x3]
        %v1838 = vunpack.c.l.b16 %v1762
        %v1839 = vunpack.c.l.b16 %v1763
        %v1840 = vunpack.c.l.b16 %v1764
        %v1841 = vunpack.c.l.b16 %v1765
        %v1842 = vunpack.c.l.b16 %v1766
        %v1843 = vunpack.c.l.b16 %v1767
        %v1844 = vunpack.c.l.b16 %v1768
        %v1845 = vunpack.c.l.b16 %v1769
        %v1846 = vunpack.c.l.b16 %v1770
        %v1847 = vunpack.c.l.b16 %v1771
        %v1848 = vunpack.c.l.b16 %v1772
        %v1849 = vunpack.c.l.b16 %v1773
        %v1850 = vunpack.c.l.b16 %v1774
        %v1851 = vunpack.c.l.b16 %v1775
        %v1852 = vunpack.c.l.b16 %v1776
        %v1853 = vunpack.c.l.b16 %v1777
        %v1854 = vunpack.c.l.b16 %v1778
        %v1855 = vunpack.c.l.b16 %v1779
        %v1856 = vunpack.c.l.b16 %v1780
        %v1857 = vunpack.c.l.b16 %v1781
        %v1858 = vunpack.c.l.b16 %v1782
        %v1859 = vunpack.c.l.b16 %v1783
        %v1860 = vunpack.c.l.b16 %v1784
        %v1861 = vunpack.c.l.b16 %v1785
        %v1862 = vunpack.c.l.b16 %v1786
        %v1863 = vunpack.c.l.b16 %v1787
        %v1864 = vunpack.c.l.b16 %v1788
        %v1865 = vunpack.c.l.b16 %v1789
        %v1866 = vunpack.c.l.b16 %v1790
        %v1867 = vunpack.c.l.b16 %v1791
        %v1868 = vunpack.c.l.b16 %v1792
        %v1869 = vunpack.c.l.b16 %v1793
        %v1870 = vunpack.c.l.b16 %v1794
        %v1871 = vunpack.c.l.b16 %v1795
        %v1872 = vunpack.c.l.b16 %v1796
        %v1873 = vunpack.c.l.b16 %v1797
        %v1874 = vunpack.c.l.b16 %v1798
        %v1875 = vpack.c.b16 %v1839, %v1838
        %v1876 = vpack.c.b16 %v1841, %v1840
        %v1877 = vpack.c.b16 %v1843, %v1842
        %v1878 = vpack.c.b16 %v1845, %v1844
        %v1879 = vpack.c.b16 %v1847, %v1846
        %v1880 = vpack.c.b16 %v1849, %v1848
        %v1881 = vpack.c.b16 %v1851, %v1850
        %v1882 = vpack.c.b16 %v1853, %v1852
        %v1883 = vpack.c.b16 %v1855, %v1854
        %v1884 = vpack.c.b16 %v1857, %v1856
        %v1885 = vpack.c.b16 %v1859, %v1858
        %v1886 = vpack.c.b16 %v1861, %v1860
        %v1887 = vpack.c.b16 %v1863, %v1862
        %v1888 = vpack.c.b16 %v1865, %v1864
        %v1889 = vpack.c.b16 %v1867, %v1866
        %v1890 = vpack.c.b16 %v1869, %v1868
        %v1891 = vpack.c.b16 %v1871, %v1870
        %v1892 = vpack.c.b16 %v1873, %v1872
        %v1893 = vpack.c.b16 %v1874, %v1874
        %v1894 = vrot.slane %v1875, 1
        %v1895 = vrot.slane %v1876, 1
        %v1896 = vsel %vm1454, %v1894, %v1895
        %v1897 = vrot.slane %v1877, 1
        %v1898 = vsel %vm1454, %v1895, %v1897
        %v1899 = vrot.slane %v1878, 1
        %v1900 = vsel %vm1454, %v1897, %v1899
        %v1901 = vrot.slane %v1879, 1
        %v1902 = vsel %vm1454, %v1899, %v1901
        %v1903 = vrot.slane %v1880, 1
        %v1904 = vsel %vm1454, %v1901, %v1903
        %v1905 = vrot.slane %v1881, 1
        %v1906 = vsel %vm1454, %v1903, %v1905
        %v1907 = vrot.slane %v1882, 1
        %v1908 = vsel %vm1454, %v1905, %v1907
        %v1909 = vrot.slane %v1883, 1
        %v1910 = vsel %vm1454, %v1907, %v1909
        %v1911 = vrot.slane %v1884, 1
        %v1912 = vsel %vm1454, %v1909, %v1911
        %v1913 = vrot.slane %v1885, 1
        %v1914 = vsel %vm1454, %v1911, %v1913
        %v1915 = vrot.slane %v1886, 1
        %v1916 = vsel %vm1454, %v1913, %v1915
        %v1917 = vrot.slane %v1887, 1
        %v1918 = vsel %vm1454, %v1915, %v1917
        %v1919 = vrot.slane %v1888, 1
        %v1920 = vsel %vm1454, %v1917, %v1919
        %v1921 = vrot.slane %v1889, 1
        %v1922 = vsel %vm1454, %v1919, %v1921
        %v1923 = vrot.slane %v1890, 1
        %v1924 = vsel %vm1454, %v1921, %v1923
        %v1925 = vrot.slane %v1891, 1
        %v1926 = vsel %vm1454, %v1923, %v1925
        %v1927 = vrot.slane %v1892, 1
        %v1928 = vsel %vm1454, %v1925, %v1927
        %v1929 = vrot.slane %v1893, 1
        %v1930 = vsel %vm1454, %v1927, %v1929
        %v1932 = vsel %vm996, %v1896, 0
        %v1935 = vsel %vm996, %v1898, 0
        %v1938 = vsel %vm996, %v1900, 0
        %v1941 = vsel %vm996, %v1902, 0
        %v1944 = vsel %vm996, %v1904, 0
        %v1947 = vsel %vm996, %v1906, 0
        %v1950 = vsel %vm996, %v1908, 0
        %v1953 = vsel %vm996, %v1910, 0
        %v1956 = vsel %vm996, %v1912, 0
        %v1959 = vsel %vm996, %v1914, 0
        %v1962 = vsel %vm996, %v1916, 0
        %v1965 = vsel %vm996, %v1918, 0
        %v1968 = vsel %vm996, %v1920, 0
        %v1971 = vsel %vm996, %v1922, 0
        %v1974 = vsel %vm996, %v1924, 0
        %v1977 = vsel %vm996, %v1926, 0
        %v1980 = vsel %vm996, %v1928, 0
        %v1983 = vsel %vm996, %v1930, 0
        %v1986 = vsel %vm1051, %v1800, 0
        %1988 = vmatprep.subr.bf16.mxu0 0
        %1989 = vmatpush1.bf16.msra.mxu0 %v1986
        %1990 = vmatprep.subr.bf16.mxu0 0
        %1991 = vmatpush1.bf16.msra.mxu0 0
        %1992 = vmatprep.subr.bf16.mxu0 0
        %1993 = vmatpush1.bf16.msra.mxu0 0
        %1994 = vmatprep.subr.bf16.mxu0 0
        %1995 = vmatpush1.bf16.msra.mxu0 0
        %1996 = vmatprep.subr.bf16.mxu0 0
        %1997 = vmatpush1.bf16.msra.mxu0 0
        %1998 = vmatprep.subr.bf16.mxu0 0
        %1999 = vmatpush1.bf16.msra.mxu0 0
        %2000 = vmatprep.subr.bf16.mxu0 0
        %2001 = vmatpush1.bf16.msra.mxu0 0
        %2002 = vmatprep.subr.bf16.mxu0 0
        %2003 = vmatpush1.bf16.msra.mxu0 0
        %2004 = vmatprep.subr.bf16.mxu0 0
        %2005 = vmatpush1.bf16.msra.mxu0 0
        %2006 = vmatprep.subr.bf16.mxu0 0
        %2007 = vmatpush1.bf16.msra.mxu0 0
        %2008 = vmatprep.subr.bf16.mxu0 0
        %2009 = vmatpush1.bf16.msra.mxu0 0
        %2010 = vmatprep.subr.bf16.mxu0 0
        %2011 = vmatpush1.bf16.msra.mxu0 0
        %2012 = vmatprep.subr.bf16.mxu0 0
        %2013 = vmatpush1.bf16.msra.mxu0 0
        %2014 = vmatprep.subr.bf16.mxu0 0
        %2015 = vmatpush1.bf16.msra.mxu0 0
        %2016 = vmatprep.subr.bf16.mxu0 0
        %2017 = vmatpush1.bf16.msra.mxu0 0
        %2018 = vmatprep.subr.bf16.mxu0 0
        %2019 = vmatpush1.bf16.msra.mxu0 0
        %2020 = vmatprep.mubr.bf16.mxu0 0
        %2021 = vmatmul.mubr.bf16.gmra.mrb[0].mxu0 %v1932
        %v2022 = vpop.f32.mrb[0].mxu0
        %v2023 = vadd.f32 0.0, %v2022
        %v2024 = vpop.f32.mrb[0].mxu0
        %v2025 = vpop.f32.mrb[0].mxu0
        %v2026 = vadd.f32 0.0, %v2025
        %v2027 = vpop.f32.mrb[0].mxu0
        %2028 = vmatprep.mubr.bf16.mxu0 0
        %2029 = vmatmul.mubr.bf16.gmra.mrb[0].mxu0 %v1935
        %v2030 = vpop.f32.mrb[0].mxu0
        %v2031 = vadd.f32 0.0, %v2030
        %v2032 = vpop.f32.mrb[0].mxu0
        %v2033 = vpop.f32.mrb[0].mxu0
        %v2034 = vadd.f32 0.0, %v2033
        %v2035 = vpop.f32.mrb[0].mxu0
        %2036 = vmatprep.mubr.bf16.mxu0 0
        %2037 = vmatmul.mubr.bf16.gmra.mrb[0].mxu0 %v1938
        %v2038 = vpop.f32.mrb[0].mxu0
        %v2039 = vadd.f32 0.0, %v2038
        %v2040 = vpop.f32.mrb[0].mxu0
        %v2041 = vpop.f32.mrb[0].mxu0
        %v2042 = vadd.f32 0.0, %v2041
        %v2043 = vpop.f32.mrb[0].mxu0
        %2044 = vmatprep.mubr.bf16.mxu0 0
        %2045 = vmatmul.mubr.bf16.gmra.mrb[0].mxu0 %v1941
        %v2046 = vpop.f32.mrb[0].mxu0
        %v2047 = vadd.f32 0.0, %v2046
        %v2048 = vpop.f32.mrb[0].mxu0
        %v2049 = vpop.f32.mrb[0].mxu0
        %v2050 = vadd.f32 0.0, %v2049
        %v2051 = vpop.f32.mrb[0].mxu0
        %2052 = vmatprep.mubr.bf16.mxu0 0
        %2053 = vmatmul.mubr.bf16.gmra.mrb[0].mxu0 %v1944
        %v2054 = vpop.f32.mrb[0].mxu0
        %v2055 = vadd.f32 0.0, %v2054
        %v2056 = vpop.f32.mrb[0].mxu0
        %v2057 = vpop.f32.mrb[0].mxu0
        %v2058 = vadd.f32 0.0, %v2057
        %v2059 = vpop.f32.mrb[0].mxu0
        %2060 = vmatprep.mubr.bf16.mxu0 0
        %2061 = vmatmul.mubr.bf16.gmra.mrb[0].mxu0 %v1947
        %v2062 = vpop.f32.mrb[0].mxu0
        %v2063 = vadd.f32 0.0, %v2062
        %v2064 = vpop.f32.mrb[0].mxu0
        %v2065 = vpop.f32.mrb[0].mxu0
        %v2066 = vadd.f32 0.0, %v2065
        %v2067 = vpop.f32.mrb[0].mxu0
        %2068 = vmatprep.mubr.bf16.mxu0 0
        %2069 = vmatmul.mubr.bf16.gmra.mrb[0].mxu0 %v1950
        %v2070 = vpop.f32.mrb[0].mxu0
        %v2071 = vadd.f32 0.0, %v2070
        %v2072 = vpop.f32.mrb[0].mxu0
        %v2073 = vpop.f32.mrb[0].mxu0
        %v2074 = vadd.f32 0.0, %v2073
        %v2075 = vpop.f32.mrb[0].mxu0
        %2076 = vmatprep.mubr.bf16.mxu0 0
        %2077 = vmatmul.mubr.bf16.gmra.mrb[0].mxu0 %v1953
        %v2078 = vpop.f32.mrb[0].mxu0
        %v2079 = vadd.f32 0.0, %v2078
        %v2080 = vpop.f32.mrb[0].mxu0
        %v2081 = vpop.f32.mrb[0].mxu0
        %v2082 = vadd.f32 0.0, %v2081
        %v2083 = vpop.f32.mrb[0].mxu0
        %2084 = vmatprep.mubr.bf16.mxu0 0
        %2085 = vmatmul.mubr.bf16.gmra.mrb[0].mxu0 %v1956
        %v2086 = vpop.f32.mrb[0].mxu0
        %v2087 = vadd.f32 0.0, %v2086
        %v2088 = vpop.f32.mrb[0].mxu0
        %v2089 = vpop.f32.mrb[0].mxu0
        %v2090 = vadd.f32 0.0, %v2089
        %v2091 = vpop.f32.mrb[0].mxu0
        %2092 = vmatprep.mubr.bf16.mxu0 0
        %2093 = vmatmul.mubr.bf16.gmra.mrb[0].mxu0 %v1959
        %v2094 = vpop.f32.mrb[0].mxu0
        %v2095 = vadd.f32 0.0, %v2094
        %v2096 = vpop.f32.mrb[0].mxu0
        %v2097 = vpop.f32.mrb[0].mxu0
        %v2098 = vadd.f32 0.0, %v2097
        %v2099 = vpop.f32.mrb[0].mxu0
        %2100 = vmatprep.mubr.bf16.mxu0 0
        %2101 = vmatmul.mubr.bf16.gmra.mrb[0].mxu0 %v1962
        %v2102 = vpop.f32.mrb[0].mxu0
        %v2103 = vadd.f32 0.0, %v2102
        %v2104 = vpop.f32.mrb[0].mxu0
        %v2105 = vpop.f32.mrb[0].mxu0
        %v2106 = vadd.f32 0.0, %v2105
        %v2107 = vpop.f32.mrb[0].mxu0
        %2108 = vmatprep.mubr.bf16.mxu0 0
        %2109 = vmatmul.mubr.bf16.gmra.mrb[0].mxu0 %v1965
        %v2110 = vpop.f32.mrb[0].mxu0
        %v2111 = vadd.f32 0.0, %v2110
        %v2112 = vpop.f32.mrb[0].mxu0
        %v2113 = vpop.f32.mrb[0].mxu0
        %v2114 = vadd.f32 0.0, %v2113
        %v2115 = vpop.f32.mrb[0].mxu0
        %2116 = vmatprep.mubr.bf16.mxu0 0
        %2117 = vmatmul.mubr.bf16.gmra.mrb[0].mxu0 %v1968
        %v2118 = vpop.f32.mrb[0].mxu0
        %v2119 = vadd.f32 0.0, %v2118
        %v2120 = vpop.f32.mrb[0].mxu0
        %v2121 = vpop.f32.mrb[0].mxu0
        %v2122 = vadd.f32 0.0, %v2121
        %v2123 = vpop.f32.mrb[0].mxu0
        %2124 = vmatprep.mubr.bf16.mxu0 0
        %2125 = vmatmul.mubr.bf16.gmra.mrb[0].mxu0 %v1971
        %v2126 = vpop.f32.mrb[0].mxu0
        %v2127 = vadd.f32 0.0, %v2126
        %v2128 = vpop.f32.mrb[0].mxu0
        %v2129 = vpop.f32.mrb[0].mxu0
        %v2130 = vadd.f32 0.0, %v2129
        %v2131 = vpop.f32.mrb[0].mxu0
        %2132 = vmatprep.mubr.bf16.mxu0 0
        %2133 = vmatmul.mubr.bf16.gmra.mrb[0].mxu0 %v1974
        %v2134 = vpop.f32.mrb[0].mxu0
        %v2135 = vadd.f32 0.0, %v2134
        %v2136 = vpop.f32.mrb[0].mxu0
        %v2137 = vpop.f32.mrb[0].mxu0
        %v2138 = vadd.f32 0.0, %v2137
        %v2139 = vpop.f32.mrb[0].mxu0
        %2140 = vmatprep.mubr.bf16.mxu0 0
        %2141 = vmatmul.mubr.bf16.gmra.mrb[0].mxu0 %v1977
        %v2142 = vpop.f32.mrb[0].mxu0
        %v2143 = vadd.f32 0.0, %v2142
        %v2144 = vpop.f32.mrb[0].mxu0
        %v2145 = vpop.f32.mrb[0].mxu0
        %v2146 = vadd.f32 0.0, %v2145
        %v2147 = vpop.f32.mrb[0].mxu0
        %2148 = vmatprep.mubr.bf16.mxu0 0
        %2149 = vmatmul.mubr.bf16.gmra.mrb[0].mxu0 %v1980
        %v2150 = vpop.f32.mrb[0].mxu0
        %v2151 = vadd.f32 0.0, %v2150
        %v2152 = vpop.f32.mrb[0].mxu0
        %v2153 = vpop.f32.mrb[0].mxu0
        %v2154 = vadd.f32 0.0, %v2153
        %v2155 = vpop.f32.mrb[0].mxu0
        %2156 = vmatprep.mubr.bf16.mxu0 0
        %2157 = vmatmul.mubr.bf16.gmra.mrb[0].mxu0 %v1983
        %v2158 = vpop.f32.mrb[0].mxu0
        %v2159 = vadd.f32 0.0, %v2158
        %v2160 = vpop.f32.mrb[0].mxu0
        %v2161 = vpop.f32.mrb[0].mxu0
        %v2162 = vadd.f32 0.0, %v2161
        %v2163 = vpop.f32.mrb[0].mxu0
        %2164 = vdwg.mxu0
        %v2165 = vadd.f32 %v1726, %v2023
        %v2166 = vadd.f32 %v1727, %v2026
        %v2167 = vadd.f32 %v1728, %v2031
        %v2168 = vadd.f32 %v1729, %v2034
        %v2169 = vadd.f32 %v1730, %v2039
        %v2170 = vadd.f32 %v1731, %v2042
        %v2171 = vadd.f32 %v1732, %v2047
        %v2172 = vadd.f32 %v1733, %v2050
        %v2173 = vadd.f32 %v1734, %v2055
        %v2174 = vadd.f32 %v1735, %v2058
        %v2175 = vadd.f32 %v1736, %v2063
        %v2176 = vadd.f32 %v1737, %v2066
        %v2177 = vadd.f32 %v1738, %v2071
        %v2178 = vadd.f32 %v1739, %v2074
        %v2179 = vadd.f32 %v1740, %v2079
        %v2180 = vadd.f32 %v1741, %v2082
        %v2181 = vadd.f32 %v1742, %v2087
        %v2182 = vadd.f32 %v1743, %v2090
        %v2183 = vadd.f32 %v1744, %v2095
        %v2184 = vadd.f32 %v1745, %v2098
        %v2185 = vadd.f32 %v1746, %v2103
        %v2186 = vadd.f32 %v1747, %v2106
        %v2187 = vadd.f32 %v1748, %v2111
        %v2188 = vadd.f32 %v1749, %v2114
        %v2189 = vadd.f32 %v1750, %v2119
        %v2190 = vadd.f32 %v1751, %v2122
        %v2191 = vadd.f32 %v1752, %v2127
        %v2192 = vadd.f32 %v1753, %v2130
        %v2193 = vadd.f32 %v1754, %v2135
        %v2194 = vadd.f32 %v1755, %v2138
        %v2195 = vadd.f32 %v1756, %v2143
        %v2196 = vadd.f32 %v1757, %v2146
        %v2197 = vadd.f32 %v1758, %v2151
        %v2198 = vadd.f32 %v1759, %v2154
        %v2199 = vadd.f32 %v1760, %v2159
        %v2200 = vadd.f32 %v1761, %v2162
        %v2201 = vld [vmem:[#allocation2 + $0x98] sm:$0x3]
        %s2202 = scalar_lea.vmem %s1, 8
        %v2203 = vld [vmem:[%s2202] sm:$0x3]
        %v2205 = vunpack.c.l.b16 %v2201
        %v2206 = vpack.c.b16 %v2205, %v2205
        %vm2207 = vsmask.f32 6400
        %v2209 = vshrl.u32 %v1875, 16
        %v2211 = vrot.slane %v2209, 1
        %v2212 = vshll.u32 %v1875, 16
        %v2214 = vrot.slane %v2212, 2
        %v2215 = vor.u32 %v2211, %v2214
        %v2217 = vshrl.u32 %v1876, 16
        %v2219 = vrot.slane %v2217, 1
        %v2220 = vshll.u32 %v1876, 16
        %v2222 = vrot.slane %v2220, 2
        %v2223 = vor.u32 %v2219, %v2222
        %v2224 = vsel %vm2207, %v2215, %v2223
        %v2226 = vshrl.u32 %v1877, 16
        %v2228 = vrot.slane %v2226, 1
        %v2229 = vshll.u32 %v1877, 16
        %v2231 = vrot.slane %v2229, 2
        %v2232 = vor.u32 %v2228, %v2231
        %v2233 = vsel %vm2207, %v2223, %v2232
        %v2235 = vshrl.u32 %v1878, 16
        %v2237 = vrot.slane %v2235, 1
        %v2238 = vshll.u32 %v1878, 16
        %v2240 = vrot.slane %v2238, 2
        %v2241 = vor.u32 %v2237, %v2240
        %v2242 = vsel %vm2207, %v2232, %v2241
        %v2244 = vshrl.u32 %v1879, 16
        %v2246 = vrot.slane %v2244, 1
        %v2247 = vshll.u32 %v1879, 16
        %v2249 = vrot.slane %v2247, 2
        %v2250 = vor.u32 %v2246, %v2249
        %v2251 = vsel %vm2207, %v2241, %v2250
        %v2253 = vshrl.u32 %v1880, 16
        %v2255 = vrot.slane %v2253, 1
        %v2256 = vshll.u32 %v1880, 16
        %v2258 = vrot.slane %v2256, 2
        %v2259 = vor.u32 %v2255, %v2258
        %v2260 = vsel %vm2207, %v2250, %v2259
        %v2262 = vshrl.u32 %v1881, 16
        %v2264 = vrot.slane %v2262, 1
        %v2265 = vshll.u32 %v1881, 16
        %v2267 = vrot.slane %v2265, 2
        %v2268 = vor.u32 %v2264, %v2267
        %v2269 = vsel %vm2207, %v2259, %v2268
        %v2271 = vshrl.u32 %v1882, 16
        %v2273 = vrot.slane %v2271, 1
        %v2274 = vshll.u32 %v1882, 16
        %v2276 = vrot.slane %v2274, 2
        %v2277 = vor.u32 %v2273, %v2276
        %v2278 = vsel %vm2207, %v2268, %v2277
        %v2280 = vshrl.u32 %v1883, 16
        %v2282 = vrot.slane %v2280, 1
        %v2283 = vshll.u32 %v1883, 16
        %v2285 = vrot.slane %v2283, 2
        %v2286 = vor.u32 %v2282, %v2285
        %v2287 = vsel %vm2207, %v2277, %v2286
        %v2289 = vshrl.u32 %v1884, 16
        %v2291 = vrot.slane %v2289, 1
        %v2292 = vshll.u32 %v1884, 16
        %v2294 = vrot.slane %v2292, 2
        %v2295 = vor.u32 %v2291, %v2294
        %v2296 = vsel %vm2207, %v2286, %v2295
        %v2298 = vshrl.u32 %v1885, 16
        %v2300 = vrot.slane %v2298, 1
        %v2301 = vshll.u32 %v1885, 16
        %v2303 = vrot.slane %v2301, 2
        %v2304 = vor.u32 %v2300, %v2303
        %v2305 = vsel %vm2207, %v2295, %v2304
        %v2307 = vshrl.u32 %v1886, 16
        %v2309 = vrot.slane %v2307, 1
        %v2310 = vshll.u32 %v1886, 16
        %v2312 = vrot.slane %v2310, 2
        %v2313 = vor.u32 %v2309, %v2312
        %v2314 = vsel %vm2207, %v2304, %v2313
        %v2316 = vshrl.u32 %v1887, 16
        %v2318 = vrot.slane %v2316, 1
        %v2319 = vshll.u32 %v1887, 16
        %v2321 = vrot.slane %v2319, 2
        %v2322 = vor.u32 %v2318, %v2321
        %v2323 = vsel %vm2207, %v2313, %v2322
        %v2325 = vshrl.u32 %v1888, 16
        %v2327 = vrot.slane %v2325, 1
        %v2328 = vshll.u32 %v1888, 16
        %v2330 = vrot.slane %v2328, 2
        %v2331 = vor.u32 %v2327, %v2330
        %v2332 = vsel %vm2207, %v2322, %v2331
        %v2334 = vshrl.u32 %v1889, 16
        %v2336 = vrot.slane %v2334, 1
        %v2337 = vshll.u32 %v1889, 16
        %v2339 = vrot.slane %v2337, 2
        %v2340 = vor.u32 %v2336, %v2339
        %v2341 = vsel %vm2207, %v2331, %v2340
        %v2343 = vshrl.u32 %v1890, 16
        %v2345 = vrot.slane %v2343, 1
        %v2346 = vshll.u32 %v1890, 16
        %v2348 = vrot.slane %v2346, 2
        %v2349 = vor.u32 %v2345, %v2348
        %v2350 = vsel %vm2207, %v2340, %v2349
        %v2352 = vshrl.u32 %v1891, 16
        %v2354 = vrot.slane %v2352, 1
        %v2355 = vshll.u32 %v1891, 16
        %v2357 = vrot.slane %v2355, 2
        %v2358 = vor.u32 %v2354, %v2357
        %v2359 = vsel %vm2207, %v2349, %v2358
        %v2361 = vshrl.u32 %v1892, 16
        %v2363 = vrot.slane %v2361, 1
        %v2364 = vshll.u32 %v1892, 16
        %v2366 = vrot.slane %v2364, 2
        %v2367 = vor.u32 %v2363, %v2366
        %v2368 = vsel %vm2207, %v2358, %v2367
        %v2370 = vshrl.u32 %v2206, 16
        %v2372 = vrot.slane %v2370, 1
        %v2373 = vshll.u32 %v2206, 16
        %v2375 = vrot.slane %v2373, 2
        %v2376 = vor.u32 %v2372, %v2375
        %v2377 = vsel %vm2207, %v2367, %v2376
        %v2379 = vsel %vm996, %v2224, 0
        %v2382 = vsel %vm996, %v2233, 0
        %v2385 = vsel %vm996, %v2242, 0
        %v2388 = vsel %vm996, %v2251, 0
        %v2391 = vsel %vm996, %v2260, 0
        %v2394 = vsel %vm996, %v2269, 0
        %v2397 = vsel %vm996, %v2278, 0
        %v2400 = vsel %vm996, %v2287, 0
        %v2403 = vsel %vm996, %v2296, 0
        %v2406 = vsel %vm996, %v2305, 0
        %v2409 = vsel %vm996, %v2314, 0
        %v2412 = vsel %vm996, %v2323, 0
        %v2415 = vsel %vm996, %v2332, 0
        %v2418 = vsel %vm996, %v2341, 0
        %v2421 = vsel %vm996, %v2350, 0
        %v2424 = vsel %vm996, %v2359, 0
        %v2427 = vsel %vm996, %v2368, 0
        %v2430 = vsel %vm996, %v2377, 0
        %v2433 = vsel %vm1051, %v2203, 0
        %2435 = vmatprep.subr.bf16.mxu0 0
        %2436 = vmatpush1.bf16.msra.mxu0 %v2433
        %2437 = vmatprep.subr.bf16.mxu0 0
        %2438 = vmatpush1.bf16.msra.mxu0 0
        %2439 = vmatprep.subr.bf16.mxu0 0
        %2440 = vmatpush1.bf16.msra.mxu0 0
        %2441 = vmatprep.subr.bf16.mxu0 0
        %2442 = vmatpush1.bf16.msra.mxu0 0
        %2443 = vmatprep.subr.bf16.mxu0 0
        %2444 = vmatpush1.bf16.msra.mxu0 0
        %2445 = vmatprep.subr.bf16.mxu0 0
        %2446 = vmatpush1.bf16.msra.mxu0 0
        %2447 = vmatprep.subr.bf16.mxu0 0
        %2448 = vmatpush1.bf16.msra.mxu0 0
        %2449 = vmatprep.subr.bf16.mxu0 0
        %2450 = vmatpush1.bf16.msra.mxu0 0
        %2451 = vmatprep.subr.bf16.mxu0 0
        %2452 = vmatpush1.bf16.msra.mxu0 0
        %2453 = vmatprep.subr.bf16.mxu0 0
        %2454 = vmatpush1.bf16.msra.mxu0 0
        %2455 = vmatprep.subr.bf16.mxu0 0
        %2456 = vmatpush1.bf16.msra.mxu0 0
        %2457 = vmatprep.subr.bf16.mxu0 0
        %2458 = vmatpush1.bf16.msra.mxu0 0
        %2459 = vmatprep.subr.bf16.mxu0 0
        %2460 = vmatpush1.bf16.msra.mxu0 0
        %2461 = vmatprep.subr.bf16.mxu0 0
        %2462 = vmatpush1.bf16.msra.mxu0 0
        %2463 = vmatprep.subr.bf16.mxu0 0
        %2464 = vmatpush1.bf16.msra.mxu0 0
        %2465 = vmatprep.subr.bf16.mxu0 0
        %2466 = vmatpush1.bf16.msra.mxu0 0
        %2467 = vmatprep.mubr.bf16.mxu0 0
        %2468 = vmatmul.mubr.bf16.gmra.mrb[0].mxu0 %v2379
        %v2469 = vpop.f32.mrb[0].mxu0
        %v2470 = vadd.f32 0.0, %v2469
        %v2471 = vpop.f32.mrb[0].mxu0
        %v2472 = vpop.f32.mrb[0].mxu0
        %v2473 = vadd.f32 0.0, %v2472
        %v2474 = vpop.f32.mrb[0].mxu0
        %2475 = vmatprep.mubr.bf16.mxu0 0
        %2476 = vmatmul.mubr.bf16.gmra.mrb[0].mxu0 %v2382
        %v2477 = vpop.f32.mrb[0].mxu0
        %v2478 = vadd.f32 0.0, %v2477
        %v2479 = vpop.f32.mrb[0].mxu0
        %v2480 = vpop.f32.mrb[0].mxu0
        %v2481 = vadd.f32 0.0, %v2480
        %v2482 = vpop.f32.mrb[0].mxu0
        %2483 = vmatprep.mubr.bf16.mxu0 0
        %2484 = vmatmul.mubr.bf16.gmra.mrb[0].mxu0 %v2385
        %v2485 = vpop.f32.mrb[0].mxu0
        %v2486 = vadd.f32 0.0, %v2485
        %v2487 = vpop.f32.mrb[0].mxu0
        %v2488 = vpop.f32.mrb[0].mxu0
        %v2489 = vadd.f32 0.0, %v2488
        %v2490 = vpop.f32.mrb[0].mxu0
        %2491 = vmatprep.mubr.bf16.mxu0 0
        %2492 = vmatmul.mubr.bf16.gmra.mrb[0].mxu0 %v2388
        %v2493 = vpop.f32.mrb[0].mxu0
        %v2494 = vadd.f32 0.0, %v2493
        %v2495 = vpop.f32.mrb[0].mxu0
        %v2496 = vpop.f32.mrb[0].mxu0
        %v2497 = vadd.f32 0.0, %v2496
        %v2498 = vpop.f32.mrb[0].mxu0
        %2499 = vmatprep.mubr.bf16.mxu0 0
        %2500 = vmatmul.mubr.bf16.gmra.mrb[0].mxu0 %v2391
        %v2501 = vpop.f32.mrb[0].mxu0
        %v2502 = vadd.f32 0.0, %v2501
        %v2503 = vpop.f32.mrb[0].mxu0
        %v2504 = vpop.f32.mrb[0].mxu0
        %v2505 = vadd.f32 0.0, %v2504
        %v2506 = vpop.f32.mrb[0].mxu0
        %2507 = vmatprep.mubr.bf16.mxu0 0
        %2508 = vmatmul.mubr.bf16.gmra.mrb[0].mxu0 %v2394
        %v2509 = vpop.f32.mrb[0].mxu0
        %v2510 = vadd.f32 0.0, %v2509
        %v2511 = vpop.f32.mrb[0].mxu0
        %v2512 = vpop.f32.mrb[0].mxu0
        %v2513 = vadd.f32 0.0, %v2512
        %v2514 = vpop.f32.mrb[0].mxu0
        %2515 = vmatprep.mubr.bf16.mxu0 0
        %2516 = vmatmul.mubr.bf16.gmra.mrb[0].mxu0 %v2397
        %v2517 = vpop.f32.mrb[0].mxu0
        %v2518 = vadd.f32 0.0, %v2517
        %v2519 = vpop.f32.mrb[0].mxu0
        %v2520 = vpop.f32.mrb[0].mxu0
        %v2521 = vadd.f32 0.0, %v2520
        %v2522 = vpop.f32.mrb[0].mxu0
        %2523 = vmatprep.mubr.bf16.mxu0 0
        %2524 = vmatmul.mubr.bf16.gmra.mrb[0].mxu0 %v2400
        %v2525 = vpop.f32.mrb[0].mxu0
        %v2526 = vadd.f32 0.0, %v2525
        %v2527 = vpop.f32.mrb[0].mxu0
        %v2528 = vpop.f32.mrb[0].mxu0
        %v2529 = vadd.f32 0.0, %v2528
        %v2530 = vpop.f32.mrb[0].mxu0
        %2531 = vmatprep.mubr.bf16.mxu0 0
        %2532 = vmatmul.mubr.bf16.gmra.mrb[0].mxu0 %v2403
        %v2533 = vpop.f32.mrb[0].mxu0
        %v2534 = vadd.f32 0.0, %v2533
        %v2535 = vpop.f32.mrb[0].mxu0
        %v2536 = vpop.f32.mrb[0].mxu0
        %v2537 = vadd.f32 0.0, %v2536
        %v2538 = vpop.f32.mrb[0].mxu0
        %2539 = vmatprep.mubr.bf16.mxu0 0
        %2540 = vmatmul.mubr.bf16.gmra.mrb[0].mxu0 %v2406
        %v2541 = vpop.f32.mrb[0].mxu0
        %v2542 = vadd.f32 0.0, %v2541
        %v2543 = vpop.f32.mrb[0].mxu0
        %v2544 = vpop.f32.mrb[0].mxu0
        %v2545 = vadd.f32 0.0, %v2544
        %v2546 = vpop.f32.mrb[0].mxu0
        %2547 = vmatprep.mubr.bf16.mxu0 0
        %2548 = vmatmul.mubr.bf16.gmra.mrb[0].mxu0 %v2409
        %v2549 = vpop.f32.mrb[0].mxu0
        %v2550 = vadd.f32 0.0, %v2549
        %v2551 = vpop.f32.mrb[0].mxu0
        %v2552 = vpop.f32.mrb[0].mxu0
        %v2553 = vadd.f32 0.0, %v2552
        %v2554 = vpop.f32.mrb[0].mxu0
        %2555 = vmatprep.mubr.bf16.mxu0 0
        %2556 = vmatmul.mubr.bf16.gmra.mrb[0].mxu0 %v2412
        %v2557 = vpop.f32.mrb[0].mxu0
        %v2558 = vadd.f32 0.0, %v2557
        %v2559 = vpop.f32.mrb[0].mxu0
        %v2560 = vpop.f32.mrb[0].mxu0
        %v2561 = vadd.f32 0.0, %v2560
        %v2562 = vpop.f32.mrb[0].mxu0
        %2563 = vmatprep.mubr.bf16.mxu0 0
        %2564 = vmatmul.mubr.bf16.gmra.mrb[0].mxu0 %v2415
        %v2565 = vpop.f32.mrb[0].mxu0
        %v2566 = vadd.f32 0.0, %v2565
        %v2567 = vpop.f32.mrb[0].mxu0
        %v2568 = vpop.f32.mrb[0].mxu0
        %v2569 = vadd.f32 0.0, %v2568
        %v2570 = vpop.f32.mrb[0].mxu0
        %2571 = vmatprep.mubr.bf16.mxu0 0
        %2572 = vmatmul.mubr.bf16.gmra.mrb[0].mxu0 %v2418
        %v2573 = vpop.f32.mrb[0].mxu0
        %v2574 = vadd.f32 0.0, %v2573
        %v2575 = vpop.f32.mrb[0].mxu0
        %v2576 = vpop.f32.mrb[0].mxu0
        %v2577 = vadd.f32 0.0, %v2576
        %v2578 = vpop.f32.mrb[0].mxu0
        %2579 = vmatprep.mubr.bf16.mxu0 0
        %2580 = vmatmul.mubr.bf16.gmra.mrb[0].mxu0 %v2421
        %v2581 = vpop.f32.mrb[0].mxu0
        %v2582 = vadd.f32 0.0, %v2581
        %v2583 = vpop.f32.mrb[0].mxu0
        %v2584 = vpop.f32.mrb[0].mxu0
        %v2585 = vadd.f32 0.0, %v2584
        %v2586 = vpop.f32.mrb[0].mxu0
        %2587 = vmatprep.mubr.bf16.mxu0 0
        %2588 = vmatmul.mubr.bf16.gmra.mrb[0].mxu0 %v2424
        %v2589 = vpop.f32.mrb[0].mxu0
        %v2590 = vadd.f32 0.0, %v2589
        %v2591 = vpop.f32.mrb[0].mxu0
        %v2592 = vpop.f32.mrb[0].mxu0
        %v2593 = vadd.f32 0.0, %v2592
        %v2594 = vpop.f32.mrb[0].mxu0
        %2595 = vmatprep.mubr.bf16.mxu0 0
        %2596 = vmatmul.mubr.bf16.gmra.mrb[0].mxu0 %v2427
        %v2597 = vpop.f32.mrb[0].mxu0
        %v2598 = vadd.f32 0.0, %v2597
        %v2599 = vpop.f32.mrb[0].mxu0
        %v2600 = vpop.f32.mrb[0].mxu0
        %v2601 = vadd.f32 0.0, %v2600
        %v2602 = vpop.f32.mrb[0].mxu0
        %2603 = vmatprep.mubr.bf16.mxu0 0
        %2604 = vmatmul.mubr.bf16.gmra.mrb[0].mxu0 %v2430
        %v2605 = vpop.f32.mrb[0].mxu0
        %v2606 = vadd.f32 0.0, %v2605
        %v2607 = vpop.f32.mrb[0].mxu0
        %v2608 = vpop.f32.mrb[0].mxu0
        %v2609 = vadd.f32 0.0, %v2608
        %v2610 = vpop.f32.mrb[0].mxu0
        %2611 = vdwg.mxu0
        %v2612 = vadd.f32 %v2165, %v2470
        %v2613 = vadd.f32 %v2166, %v2473
        %v2614 = vadd.f32 %v2167, %v2478
        %v2615 = vadd.f32 %v2168, %v2481
        %v2616 = vadd.f32 %v2169, %v2486
        %v2617 = vadd.f32 %v2170, %v2489
        %v2618 = vadd.f32 %v2171, %v2494
        %v2619 = vadd.f32 %v2172, %v2497
        %v2620 = vadd.f32 %v2173, %v2502
        %v2621 = vadd.f32 %v2174, %v2505
        %v2622 = vadd.f32 %v2175, %v2510
        %v2623 = vadd.f32 %v2176, %v2513
        %v2624 = vadd.f32 %v2177, %v2518
        %v2625 = vadd.f32 %v2178, %v2521
        %v2626 = vadd.f32 %v2179, %v2526
        %v2627 = vadd.f32 %v2180, %v2529
        %v2628 = vadd.f32 %v2181, %v2534
        %v2629 = vadd.f32 %v2182, %v2537
        %v2630 = vadd.f32 %v2183, %v2542
        %v2631 = vadd.f32 %v2184, %v2545
        %v2632 = vadd.f32 %v2185, %v2550
        %v2633 = vadd.f32 %v2186, %v2553
        %v2634 = vadd.f32 %v2187, %v2558
        %v2635 = vadd.f32 %v2188, %v2561
        %v2636 = vadd.f32 %v2189, %v2566
        %v2637 = vadd.f32 %v2190, %v2569
        %v2638 = vadd.f32 %v2191, %v2574
        %v2639 = vadd.f32 %v2192, %v2577
        %v2640 = vadd.f32 %v2193, %v2582
        %v2641 = vadd.f32 %v2194, %v2585
        %v2642 = vadd.f32 %v2195, %v2590
        %v2643 = vadd.f32 %v2196, %v2593
        %v2644 = vadd.f32 %v2197, %v2598
        %v2645 = vadd.f32 %v2198, %v2601
        %v2646 = vadd.f32 %v2199, %v2606
        %v2647 = vadd.f32 %v2200, %v2609
        %v2648 = vld [vmem:[#allocation2 + $0x8] sm:$0xc]
        %s2649 = scalar_lea.vmem %s1, 10
        %v2650 = vld [vmem:[%s2649] sm:$0x3]
        %v2652 = vunpack.c.l.b16 %v2648
        %v2653 = vpack.c.b16 %v1839, %v2652
        %vm2654 = vcmask 1045504
        %v2655 = vrot.slane %v2653, 2
        %v2656 = vrot.slane %v1876, 2
        %v2657 = vsel %vm2654, %v2655, %v2656
        %v2658 = vrot.slane %v1877, 2
        %v2659 = vsel %vm2654, %v2656, %v2658
        %v2660 = vrot.slane %v1878, 2
        %v2661 = vsel %vm2654, %v2658, %v2660
        %v2662 = vrot.slane %v1879, 2
        %v2663 = vsel %vm2654, %v2660, %v2662
        %v2664 = vrot.slane %v1880, 2
        %v2665 = vsel %vm2654, %v2662, %v2664
        %v2666 = vrot.slane %v1881, 2
        %v2667 = vsel %vm2654, %v2664, %v2666
        %v2668 = vrot.slane %v1882, 2
        %v2669 = vsel %vm2654, %v2666, %v2668
        %v2670 = vrot.slane %v1883, 2
        %v2671 = vsel %vm2654, %v2668, %v2670
        %v2672 = vrot.slane %v1884, 2
        %v2673 = vsel %vm2654, %v2670, %v2672
        %v2674 = vrot.slane %v1885, 2
        %v2675 = vsel %vm2654, %v2672, %v2674
        %v2676 = vrot.slane %v1886, 2
        %v2677 = vsel %vm2654, %v2674, %v2676
        %v2678 = vrot.slane %v1887, 2
        %v2679 = vsel %vm2654, %v2676, %v2678
        %v2680 = vrot.slane %v1888, 2
        %v2681 = vsel %vm2654, %v2678, %v2680
        %v2682 = vrot.slane %v1889, 2
        %v2683 = vsel %vm2654, %v2680, %v2682
        %v2684 = vrot.slane %v1890, 2
        %v2685 = vsel %vm2654, %v2682, %v2684
        %v2686 = vrot.slane %v1891, 2
        %v2687 = vsel %vm2654, %v2684, %v2686
        %v2688 = vrot.slane %v1892, 2
        %v2689 = vsel %vm2654, %v2686, %v2688
        %v2690 = vrot.slane %v2206, 2
        %v2691 = vsel %vm2654, %v2688, %v2690
        %v2693 = vsel %vm996, %v2657, 0
        %v2696 = vsel %vm996, %v2659, 0
        %v2699 = vsel %vm996, %v2661, 0
        %v2702 = vsel %vm996, %v2663, 0
        %v2705 = vsel %vm996, %v2665, 0
        %v2708 = vsel %vm996, %v2667, 0
        %v2711 = vsel %vm996, %v2669, 0
        %v2714 = vsel %vm996, %v2671, 0
        %v2717 = vsel %vm996, %v2673, 0
        %v2720 = vsel %vm996, %v2675, 0
        %v2723 = vsel %vm996, %v2677, 0
        %v2726 = vsel %vm996, %v2679, 0
        %v2729 = vsel %vm996, %v2681, 0
        %v2732 = vsel %vm996, %v2683, 0
        %v2735 = vsel %vm996, %v2685, 0
        %v2738 = vsel %vm996, %v2687, 0
        %v2741 = vsel %vm996, %v2689, 0
        %v2744 = vsel %vm996, %v2691, 0
        %v2747 = vsel %vm1051, %v2650, 0
        %2749 = vmatprep.subr.bf16.mxu0 0
        %2750 = vmatpush1.bf16.msra.mxu0 %v2747
        %2751 = vmatprep.subr.bf16.mxu0 0
        %2752 = vmatpush1.bf16.msra.mxu0 0
        %2753 = vmatprep.subr.bf16.mxu0 0
        %2754 = vmatpush1.bf16.msra.mxu0 0
        %2755 = vmatprep.subr.bf16.mxu0 0
        %2756 = vmatpush1.bf16.msra.mxu0 0
        %2757 = vmatprep.subr.bf16.mxu0 0
        %2758 = vmatpush1.bf16.msra.mxu0 0
        %2759 = vmatprep.subr.bf16.mxu0 0
        %2760 = vmatpush1.bf16.msra.mxu0 0
        %2761 = vmatprep.subr.bf16.mxu0 0
        %2762 = vmatpush1.bf16.msra.mxu0 0
        %2763 = vmatprep.subr.bf16.mxu0 0
        %2764 = vmatpush1.bf16.msra.mxu0 0
        %2765 = vmatprep.subr.bf16.mxu0 0
        %2766 = vmatpush1.bf16.msra.mxu0 0
        %2767 = vmatprep.subr.bf16.mxu0 0
        %2768 = vmatpush1.bf16.msra.mxu0 0
        %2769 = vmatprep.subr.bf16.mxu0 0
        %2770 = vmatpush1.bf16.msra.mxu0 0
        %2771 = vmatprep.subr.bf16.mxu0 0
        %2772 = vmatpush1.bf16.msra.mxu0 0
        %2773 = vmatprep.subr.bf16.mxu0 0
        %2774 = vmatpush1.bf16.msra.mxu0 0
        %2775 = vmatprep.subr.bf16.mxu0 0
        %2776 = vmatpush1.bf16.msra.mxu0 0
        %2777 = vmatprep.subr.bf16.mxu0 0
        %2778 = vmatpush1.bf16.msra.mxu0 0
        %2779 = vmatprep.subr.bf16.mxu0 0
        %2780 = vmatpush1.bf16.msra.mxu0 0
        %2781 = vmatprep.mubr.bf16.mxu0 0
        %2782 = vmatmul.mubr.bf16.gmra.mrb[0].mxu0 %v2693
        %v2783 = vpop.f32.mrb[0].mxu0
        %v2784 = vadd.f32 0.0, %v2783
        %v2785 = vpop.f32.mrb[0].mxu0
        %v2786 = vpop.f32.mrb[0].mxu0
        %v2787 = vadd.f32 0.0, %v2786
        %v2788 = vpop.f32.mrb[0].mxu0
        %2789 = vmatprep.mubr.bf16.mxu0 0
        %2790 = vmatmul.mubr.bf16.gmra.mrb[0].mxu0 %v2696
        %v2791 = vpop.f32.mrb[0].mxu0
        %v2792 = vadd.f32 0.0, %v2791
        %v2793 = vpop.f32.mrb[0].mxu0
        %v2794 = vpop.f32.mrb[0].mxu0
        %v2795 = vadd.f32 0.0, %v2794
        %v2796 = vpop.f32.mrb[0].mxu0
        %2797 = vmatprep.mubr.bf16.mxu0 0
        %2798 = vmatmul.mubr.bf16.gmra.mrb[0].mxu0 %v2699
        %v2799 = vpop.f32.mrb[0].mxu0
        %v2800 = vadd.f32 0.0, %v2799
        %v2801 = vpop.f32.mrb[0].mxu0
        %v2802 = vpop.f32.mrb[0].mxu0
        %v2803 = vadd.f32 0.0, %v2802
        %v2804 = vpop.f32.mrb[0].mxu0
        %2805 = vmatprep.mubr.bf16.mxu0 0
        %2806 = vmatmul.mubr.bf16.gmra.mrb[0].mxu0 %v2702
        %v2807 = vpop.f32.mrb[0].mxu0
        %v2808 = vadd.f32 0.0, %v2807
        %v2809 = vpop.f32.mrb[0].mxu0
        %v2810 = vpop.f32.mrb[0].mxu0
        %v2811 = vadd.f32 0.0, %v2810
        %v2812 = vpop.f32.mrb[0].mxu0
        %2813 = vmatprep.mubr.bf16.mxu0 0
        %2814 = vmatmul.mubr.bf16.gmra.mrb[0].mxu0 %v2705
        %v2815 = vpop.f32.mrb[0].mxu0
        %v2816 = vadd.f32 0.0, %v2815
        %v2817 = vpop.f32.mrb[0].mxu0
        %v2818 = vpop.f32.mrb[0].mxu0
        %v2819 = vadd.f32 0.0, %v2818
        %v2820 = vpop.f32.mrb[0].mxu0
        %2821 = vmatprep.mubr.bf16.mxu0 0
        %2822 = vmatmul.mubr.bf16.gmra.mrb[0].mxu0 %v2708
        %v2823 = vpop.f32.mrb[0].mxu0
        %v2824 = vadd.f32 0.0, %v2823
        %v2825 = vpop.f32.mrb[0].mxu0
        %v2826 = vpop.f32.mrb[0].mxu0
        %v2827 = vadd.f32 0.0, %v2826
        %v2828 = vpop.f32.mrb[0].mxu0
        %2829 = vmatprep.mubr.bf16.mxu0 0
        %2830 = vmatmul.mubr.bf16.gmra.mrb[0].mxu0 %v2711
        %v2831 = vpop.f32.mrb[0].mxu0
        %v2832 = vadd.f32 0.0, %v2831
        %v2833 = vpop.f32.mrb[0].mxu0
        %v2834 = vpop.f32.mrb[0].mxu0
        %v2835 = vadd.f32 0.0, %v2834
        %v2836 = vpop.f32.mrb[0].mxu0
        %2837 = vmatprep.mubr.bf16.mxu0 0
        %2838 = vmatmul.mubr.bf16.gmra.mrb[0].mxu0 %v2714
        %v2839 = vpop.f32.mrb[0].mxu0
        %v2840 = vadd.f32 0.0, %v2839
        %v2841 = vpop.f32.mrb[0].mxu0
        %v2842 = vpop.f32.mrb[0].mxu0
        %v2843 = vadd.f32 0.0, %v2842
        %v2844 = vpop.f32.mrb[0].mxu0
        %2845 = vmatprep.mubr.bf16.mxu0 0
        %2846 = vmatmul.mubr.bf16.gmra.mrb[0].mxu0 %v2717
        %v2847 = vpop.f32.mrb[0].mxu0
        %v2848 = vadd.f32 0.0, %v2847
        %v2849 = vpop.f32.mrb[0].mxu0
        %v2850 = vpop.f32.mrb[0].mxu0
        %v2851 = vadd.f32 0.0, %v2850
        %v2852 = vpop.f32.mrb[0].mxu0
        %2853 = vmatprep.mubr.bf16.mxu0 0
        %2854 = vmatmul.mubr.bf16.gmra.mrb[0].mxu0 %v2720
        %v2855 = vpop.f32.mrb[0].mxu0
        %v2856 = vadd.f32 0.0, %v2855
        %v2857 = vpop.f32.mrb[0].mxu0
        %v2858 = vpop.f32.mrb[0].mxu0
        %v2859 = vadd.f32 0.0, %v2858
        %v2860 = vpop.f32.mrb[0].mxu0
        %2861 = vmatprep.mubr.bf16.mxu0 0
        %2862 = vmatmul.mubr.bf16.gmra.mrb[0].mxu0 %v2723
        %v2863 = vpop.f32.mrb[0].mxu0
        %v2864 = vadd.f32 0.0, %v2863
        %v2865 = vpop.f32.mrb[0].mxu0
        %v2866 = vpop.f32.mrb[0].mxu0
        %v2867 = vadd.f32 0.0, %v2866
        %v2868 = vpop.f32.mrb[0].mxu0
        %2869 = vmatprep.mubr.bf16.mxu0 0
        %2870 = vmatmul.mubr.bf16.gmra.mrb[0].mxu0 %v2726
        %v2871 = vpop.f32.mrb[0].mxu0
        %v2872 = vadd.f32 0.0, %v2871
        %v2873 = vpop.f32.mrb[0].mxu0
        %v2874 = vpop.f32.mrb[0].mxu0
        %v2875 = vadd.f32 0.0, %v2874
        %v2876 = vpop.f32.mrb[0].mxu0
        %2877 = vmatprep.mubr.bf16.mxu0 0
        %2878 = vmatmul.mubr.bf16.gmra.mrb[0].mxu0 %v2729
        %v2879 = vpop.f32.mrb[0].mxu0
        %v2880 = vadd.f32 0.0, %v2879
        %v2881 = vpop.f32.mrb[0].mxu0
        %v2882 = vpop.f32.mrb[0].mxu0
        %v2883 = vadd.f32 0.0, %v2882
        %v2884 = vpop.f32.mrb[0].mxu0
        %2885 = vmatprep.mubr.bf16.mxu0 0
        %2886 = vmatmul.mubr.bf16.gmra.mrb[0].mxu0 %v2732
        %v2887 = vpop.f32.mrb[0].mxu0
        %v2888 = vadd.f32 0.0, %v2887
        %v2889 = vpop.f32.mrb[0].mxu0
        %v2890 = vpop.f32.mrb[0].mxu0
        %v2891 = vadd.f32 0.0, %v2890
        %v2892 = vpop.f32.mrb[0].mxu0
        %2893 = vmatprep.mubr.bf16.mxu0 0
        %2894 = vmatmul.mubr.bf16.gmra.mrb[0].mxu0 %v2735
        %v2895 = vpop.f32.mrb[0].mxu0
        %v2896 = vadd.f32 0.0, %v2895
        %v2897 = vpop.f32.mrb[0].mxu0
        %v2898 = vpop.f32.mrb[0].mxu0
        %v2899 = vadd.f32 0.0, %v2898
        %v2900 = vpop.f32.mrb[0].mxu0
        %2901 = vmatprep.mubr.bf16.mxu0 0
        %2902 = vmatmul.mubr.bf16.gmra.mrb[0].mxu0 %v2738
        %v2903 = vpop.f32.mrb[0].mxu0
        %v2904 = vadd.f32 0.0, %v2903
        %v2905 = vpop.f32.mrb[0].mxu0
        %v2906 = vpop.f32.mrb[0].mxu0
        %v2907 = vadd.f32 0.0, %v2906
        %v2908 = vpop.f32.mrb[0].mxu0
        %2909 = vmatprep.mubr.bf16.mxu0 0
        %2910 = vmatmul.mubr.bf16.gmra.mrb[0].mxu0 %v2741
        %v2911 = vpop.f32.mrb[0].mxu0
        %v2912 = vadd.f32 0.0, %v2911
        %v2913 = vpop.f32.mrb[0].mxu0
        %v2914 = vpop.f32.mrb[0].mxu0
        %v2915 = vadd.f32 0.0, %v2914
        %v2916 = vpop.f32.mrb[0].mxu0
        %2917 = vmatprep.mubr.bf16.mxu0 0
        %2918 = vmatmul.mubr.bf16.gmra.mrb[0].mxu0 %v2744
        %v2919 = vpop.f32.mrb[0].mxu0
        %v2920 = vadd.f32 0.0, %v2919
        %v2921 = vpop.f32.mrb[0].mxu0
        %v2922 = vpop.f32.mrb[0].mxu0
        %v2923 = vadd.f32 0.0, %v2922
        %v2924 = vpop.f32.mrb[0].mxu0
        %2925 = vdwg.mxu0
        %v2926 = vadd.f32 %v2612, %v2784
        %v2927 = vadd.f32 %v2613, %v2787
        %v2928 = vadd.f32 %v2614, %v2792
        %v2929 = vadd.f32 %v2615, %v2795
        %v2930 = vadd.f32 %v2616, %v2800
        %v2931 = vadd.f32 %v2617, %v2803
        %v2932 = vadd.f32 %v2618, %v2808
        %v2933 = vadd.f32 %v2619, %v2811
        %v2934 = vadd.f32 %v2620, %v2816
        %v2935 = vadd.f32 %v2621, %v2819
        %v2936 = vadd.f32 %v2622, %v2824
        %v2937 = vadd.f32 %v2623, %v2827
        %v2938 = vadd.f32 %v2624, %v2832
        %v2939 = vadd.f32 %v2625, %v2835
        %v2940 = vadd.f32 %v2626, %v2840
        %v2941 = vadd.f32 %v2627, %v2843
        %v2942 = vadd.f32 %v2628, %v2848
        %v2943 = vadd.f32 %v2629, %v2851
        %v2944 = vadd.f32 %v2630, %v2856
        %v2945 = vadd.f32 %v2631, %v2859
        %v2946 = vadd.f32 %v2632, %v2864
        %v2947 = vadd.f32 %v2633, %v2867
        %v2948 = vadd.f32 %v2634, %v2872
        %v2949 = vadd.f32 %v2635, %v2875
        %v2950 = vadd.f32 %v2636, %v2880
        %v2951 = vadd.f32 %v2637, %v2883
        %v2952 = vadd.f32 %v2638, %v2888
        %v2953 = vadd.f32 %v2639, %v2891
        %v2954 = vadd.f32 %v2640, %v2896
        %v2955 = vadd.f32 %v2641, %v2899
        %v2956 = vadd.f32 %v2642, %v2904
        %v2957 = vadd.f32 %v2643, %v2907
        %v2958 = vadd.f32 %v2644, %v2912
        %v2959 = vadd.f32 %v2645, %v2915
        %v2960 = vadd.f32 %v2646, %v2920
        %v2961 = vadd.f32 %v2647, %v2923
        %v2962 = vld [vmem:[#allocation2 + $0x10] sm:$0xc]
        %v2963 = vld [vmem:[#allocation2 + $0x14] sm:$0xf]
        %v2964 = vld [vmem:[#allocation2 + $0x18] sm:$0xf]
        %v2965 = vld [vmem:[#allocation2 + $0x1c] sm:$0xf]
        %v2966 = vld [vmem:[#allocation2 + $0x20] sm:$0xf]
        %v2967 = vld [vmem:[#allocation2 + $0x24] sm:$0xf]
        %v2968 = vld [vmem:[#allocation2 + $0x28] sm:$0xf]
        %v2969 = vld [vmem:[#allocation2 + $0x2c] sm:$0xf]
        %v2970 = vld [vmem:[#allocation2 + $0x30] sm:$0xf]
        %v2971 = vld [vmem:[#allocation2 + $0x34] sm:$0xf]
        %v2972 = vld [vmem:[#allocation2 + $0x38] sm:$0xf]
        %v2973 = vld [vmem:[#allocation2 + $0x3c] sm:$0xf]
        %v2974 = vld [vmem:[#allocation2 + $0x40] sm:$0xf]
        %v2975 = vld [vmem:[#allocation2 + $0x44] sm:$0xf]
        %v2976 = vld [vmem:[#allocation2 + $0x48] sm:$0xf]
        %v2977 = vld [vmem:[#allocation2 + $0x4c] sm:$0xf]
        %v2978 = vld [vmem:[#allocation2 + $0x50] sm:$0xf]
        %v2979 = vld [vmem:[#allocation2 + $0x54] sm:$0xf]
        %v2980 = vld [vmem:[#allocation2 + $0x58] sm:$0xf]
        %v2981 = vld [vmem:[#allocation2 + $0x5c] sm:$0xf]
        %v2982 = vld [vmem:[#allocation2 + $0x60] sm:$0xf]
        %v2983 = vld [vmem:[#allocation2 + $0x64] sm:$0xf]
        %v2984 = vld [vmem:[#allocation2 + $0x68] sm:$0xf]
        %v2985 = vld [vmem:[#allocation2 + $0x6c] sm:$0xf]
        %v2986 = vld [vmem:[#allocation2 + $0x70] sm:$0xf]
        %v2987 = vld [vmem:[#allocation2 + $0x74] sm:$0xf]
        %v2988 = vld [vmem:[#allocation2 + $0x78] sm:$0xf]
        %v2989 = vld [vmem:[#allocation2 + $0x7c] sm:$0xf]
        %v2990 = vld [vmem:[#allocation2 + $0x80] sm:$0xf]
        %v2991 = vld [vmem:[#allocation2 + $0x84] sm:$0xf]
        %v2992 = vld [vmem:[#allocation2 + $0x88] sm:$0xf]
        %v2993 = vld [vmem:[#allocation2 + $0x8c] sm:$0xf]
        %v2994 = vld [vmem:[#allocation2 + $0x90] sm:$0xf]
        %v2995 = vld [vmem:[#allocation2 + $0x94] sm:$0xf]
        %v2996 = vld [vmem:[#allocation2 + $0x98] sm:$0xf]
        %v2997 = vld [vmem:[#allocation2 + $0x9c] sm:$0xf]
        %v2998 = vld [vmem:[#allocation2 + $0xa0] sm:$0x3]
        %s2999 = scalar_lea.vmem %s1, 12
        %v3000 = vld [vmem:[%s2999] sm:$0x3]
        %v3038 = vunpack.c.l.b16 %v2962
        %v3039 = vunpack.c.l.b16 %v2963
        %v3040 = vunpack.c.l.b16 %v2964
        %v3041 = vunpack.c.l.b16 %v2965
        %v3042 = vunpack.c.l.b16 %v2966
        %v3043 = vunpack.c.l.b16 %v2967
        %v3044 = vunpack.c.l.b16 %v2968
        %v3045 = vunpack.c.l.b16 %v2969
        %v3046 = vunpack.c.l.b16 %v2970
        %v3047 = vunpack.c.l.b16 %v2971
        %v3048 = vunpack.c.l.b16 %v2972
        %v3049 = vunpack.c.l.b16 %v2973
        %v3050 = vunpack.c.l.b16 %v2974
        %v3051 = vunpack.c.l.b16 %v2975
        %v3052 = vunpack.c.l.b16 %v2976
        %v3053 = vunpack.c.l.b16 %v2977
        %v3054 = vunpack.c.l.b16 %v2978
        %v3055 = vunpack.c.l.b16 %v2979
        %v3056 = vunpack.c.l.b16 %v2980
        %v3057 = vunpack.c.l.b16 %v2981
        %v3058 = vunpack.c.l.b16 %v2982
        %v3059 = vunpack.c.l.b16 %v2983
        %v3060 = vunpack.c.l.b16 %v2984
        %v3061 = vunpack.c.l.b16 %v2985
        %v3062 = vunpack.c.l.b16 %v2986
        %v3063 = vunpack.c.l.b16 %v2987
        %v3064 = vunpack.c.l.b16 %v2988
        %v3065 = vunpack.c.l.b16 %v2989
        %v3066 = vunpack.c.l.b16 %v2990
        %v3067 = vunpack.c.l.b16 %v2991
        %v3068 = vunpack.c.l.b16 %v2992
        %v3069 = vunpack.c.l.b16 %v2993
        %v3070 = vunpack.c.l.b16 %v2994
        %v3071 = vunpack.c.l.b16 %v2995
        %v3072 = vunpack.c.l.b16 %v2996
        %v3073 = vunpack.c.l.b16 %v2997
        %v3074 = vunpack.c.l.b16 %v2998
        %v3075 = vpack.c.b16 %v3039, %v3038
        %v3076 = vpack.c.b16 %v3041, %v3040
        %v3077 = vpack.c.b16 %v3043, %v3042
        %v3078 = vpack.c.b16 %v3045, %v3044
        %v3079 = vpack.c.b16 %v3047, %v3046
        %v3080 = vpack.c.b16 %v3049, %v3048
        %v3081 = vpack.c.b16 %v3051, %v3050
        %v3082 = vpack.c.b16 %v3053, %v3052
        %v3083 = vpack.c.b16 %v3055, %v3054
        %v3084 = vpack.c.b16 %v3057, %v3056
        %v3085 = vpack.c.b16 %v3059, %v3058
        %v3086 = vpack.c.b16 %v3061, %v3060
        %v3087 = vpack.c.b16 %v3063, %v3062
        %v3088 = vpack.c.b16 %v3065, %v3064
        %v3089 = vpack.c.b16 %v3067, %v3066
        %v3090 = vpack.c.b16 %v3069, %v3068
        %v3091 = vpack.c.b16 %v3071, %v3070
        %v3092 = vpack.c.b16 %v3073, %v3072
        %v3093 = vpack.c.b16 %v3074, %v3074
        %v3094 = vrot.slane %v3075, 2
        %v3095 = vrot.slane %v3076, 2
        %v3096 = vsel %vm2654, %v3094, %v3095
        %v3097 = vrot.slane %v3077, 2
        %v3098 = vsel %vm2654, %v3095, %v3097
        %v3099 = vrot.slane %v3078, 2
        %v3100 = vsel %vm2654, %v3097, %v3099
        %v3101 = vrot.slane %v3079, 2
        %v3102 = vsel %vm2654, %v3099, %v3101
        %v3103 = vrot.slane %v3080, 2
        %v3104 = vsel %vm2654, %v3101, %v3103
        %v3105 = vrot.slane %v3081, 2
        %v3106 = vsel %vm2654, %v3103, %v3105
        %v3107 = vrot.slane %v3082, 2
        %v3108 = vsel %vm2654, %v3105, %v3107
        %v3109 = vrot.slane %v3083, 2
        %v3110 = vsel %vm2654, %v3107, %v3109
        %v3111 = vrot.slane %v3084, 2
        %v3112 = vsel %vm2654, %v3109, %v3111
        %v3113 = vrot.slane %v3085, 2
        %v3114 = vsel %vm2654, %v3111, %v3113
        %v3115 = vrot.slane %v3086, 2
        %v3116 = vsel %vm2654, %v3113, %v3115
        %v3117 = vrot.slane %v3087, 2
        %v3118 = vsel %vm2654, %v3115, %v3117
        %v3119 = vrot.slane %v3088, 2
        %v3120 = vsel %vm2654, %v3117, %v3119
        %v3121 = vrot.slane %v3089, 2
        %v3122 = vsel %vm2654, %v3119, %v3121
        %v3123 = vrot.slane %v3090, 2
        %v3124 = vsel %vm2654, %v3121, %v3123
        %v3125 = vrot.slane %v3091, 2
        %v3126 = vsel %vm2654, %v3123, %v3125
        %v3127 = vrot.slane %v3092, 2
        %v3128 = vsel %vm2654, %v3125, %v3127
        %v3129 = vrot.slane %v3093, 2
        %v3130 = vsel %vm2654, %v3127, %v3129
        %v3132 = vsel %vm996, %v3096, 0
        %v3135 = vsel %vm996, %v3098, 0
        %v3138 = vsel %vm996, %v3100, 0
        %v3141 = vsel %vm996, %v3102, 0
        %v3144 = vsel %vm996, %v3104, 0
        %v3147 = vsel %vm996, %v3106, 0
        %v3150 = vsel %vm996, %v3108, 0
        %v3153 = vsel %vm996, %v3110, 0
        %v3156 = vsel %vm996, %v3112, 0
        %v3159 = vsel %vm996, %v3114, 0
        %v3162 = vsel %vm996, %v3116, 0
        %v3165 = vsel %vm996, %v3118, 0
        %v3168 = vsel %vm996, %v3120, 0
        %v3171 = vsel %vm996, %v3122, 0
        %v3174 = vsel %vm996, %v3124, 0
        %v3177 = vsel %vm996, %v3126, 0
        %v3180 = vsel %vm996, %v3128, 0
        %v3183 = vsel %vm996, %v3130, 0
        %v3186 = vsel %vm1051, %v3000, 0
        %3188 = vmatprep.subr.bf16.mxu0 0
        %3189 = vmatpush1.bf16.msra.mxu0 %v3186
        %3190 = vmatprep.subr.bf16.mxu0 0
        %3191 = vmatpush1.bf16.msra.mxu0 0
        %3192 = vmatprep.subr.bf16.mxu0 0
        %3193 = vmatpush1.bf16.msra.mxu0 0
        %3194 = vmatprep.subr.bf16.mxu0 0
        %3195 = vmatpush1.bf16.msra.mxu0 0
        %3196 = vmatprep.subr.bf16.mxu0 0
        %3197 = vmatpush1.bf16.msra.mxu0 0
        %3198 = vmatprep.subr.bf16.mxu0 0
        %3199 = vmatpush1.bf16.msra.mxu0 0
        %3200 = vmatprep.subr.bf16.mxu0 0
        %3201 = vmatpush1.bf16.msra.mxu0 0
        %3202 = vmatprep.subr.bf16.mxu0 0
        %3203 = vmatpush1.bf16.msra.mxu0 0
        %3204 = vmatprep.subr.bf16.mxu0 0
        %3205 = vmatpush1.bf16.msra.mxu0 0
        %3206 = vmatprep.subr.bf16.mxu0 0
        %3207 = vmatpush1.bf16.msra.mxu0 0
        %3208 = vmatprep.subr.bf16.mxu0 0
        %3209 = vmatpush1.bf16.msra.mxu0 0
        %3210 = vmatprep.subr.bf16.mxu0 0
        %3211 = vmatpush1.bf16.msra.mxu0 0
        %3212 = vmatprep.subr.bf16.mxu0 0
        %3213 = vmatpush1.bf16.msra.mxu0 0
        %3214 = vmatprep.subr.bf16.mxu0 0
        %3215 = vmatpush1.bf16.msra.mxu0 0
        %3216 = vmatprep.subr.bf16.mxu0 0
        %3217 = vmatpush1.bf16.msra.mxu0 0
        %3218 = vmatprep.subr.bf16.mxu0 0
        %3219 = vmatpush1.bf16.msra.mxu0 0
        %3220 = vmatprep.mubr.bf16.mxu0 0
        %3221 = vmatmul.mubr.bf16.gmra.mrb[0].mxu0 %v3132
        %v3222 = vpop.f32.mrb[0].mxu0
        %v3223 = vadd.f32 0.0, %v3222
        %v3224 = vpop.f32.mrb[0].mxu0
        %v3225 = vpop.f32.mrb[0].mxu0
        %v3226 = vadd.f32 0.0, %v3225
        %v3227 = vpop.f32.mrb[0].mxu0
        %3228 = vmatprep.mubr.bf16.mxu0 0
        %3229 = vmatmul.mubr.bf16.gmra.mrb[0].mxu0 %v3135
        %v3230 = vpop.f32.mrb[0].mxu0
        %v3231 = vadd.f32 0.0, %v3230
        %v3232 = vpop.f32.mrb[0].mxu0
        %v3233 = vpop.f32.mrb[0].mxu0
        %v3234 = vadd.f32 0.0, %v3233
        %v3235 = vpop.f32.mrb[0].mxu0
        %3236 = vmatprep.mubr.bf16.mxu0 0
        %3237 = vmatmul.mubr.bf16.gmra.mrb[0].mxu0 %v3138
        %v3238 = vpop.f32.mrb[0].mxu0
        %v3239 = vadd.f32 0.0, %v3238
        %v3240 = vpop.f32.mrb[0].mxu0
        %v3241 = vpop.f32.mrb[0].mxu0
        %v3242 = vadd.f32 0.0, %v3241
        %v3243 = vpop.f32.mrb[0].mxu0
        %3244 = vmatprep.mubr.bf16.mxu0 0
        %3245 = vmatmul.mubr.bf16.gmra.mrb[0].mxu0 %v3141
        %v3246 = vpop.f32.mrb[0].mxu0
        %v3247 = vadd.f32 0.0, %v3246
        %v3248 = vpop.f32.mrb[0].mxu0
        %v3249 = vpop.f32.mrb[0].mxu0
        %v3250 = vadd.f32 0.0, %v3249
        %v3251 = vpop.f32.mrb[0].mxu0
        %3252 = vmatprep.mubr.bf16.mxu0 0
        %3253 = vmatmul.mubr.bf16.gmra.mrb[0].mxu0 %v3144
        %v3254 = vpop.f32.mrb[0].mxu0
        %v3255 = vadd.f32 0.0, %v3254
        %v3256 = vpop.f32.mrb[0].mxu0
        %v3257 = vpop.f32.mrb[0].mxu0
        %v3258 = vadd.f32 0.0, %v3257
        %v3259 = vpop.f32.mrb[0].mxu0
        %3260 = vmatprep.mubr.bf16.mxu0 0
        %3261 = vmatmul.mubr.bf16.gmra.mrb[0].mxu0 %v3147
        %v3262 = vpop.f32.mrb[0].mxu0
        %v3263 = vadd.f32 0.0, %v3262
        %v3264 = vpop.f32.mrb[0].mxu0
        %v3265 = vpop.f32.mrb[0].mxu0
        %v3266 = vadd.f32 0.0, %v3265
        %v3267 = vpop.f32.mrb[0].mxu0
        %3268 = vmatprep.mubr.bf16.mxu0 0
        %3269 = vmatmul.mubr.bf16.gmra.mrb[0].mxu0 %v3150
        %v3270 = vpop.f32.mrb[0].mxu0
        %v3271 = vadd.f32 0.0, %v3270
        %v3272 = vpop.f32.mrb[0].mxu0
        %v3273 = vpop.f32.mrb[0].mxu0
        %v3274 = vadd.f32 0.0, %v3273
        %v3275 = vpop.f32.mrb[0].mxu0
        %3276 = vmatprep.mubr.bf16.mxu0 0
        %3277 = vmatmul.mubr.bf16.gmra.mrb[0].mxu0 %v3153
        %v3278 = vpop.f32.mrb[0].mxu0
        %v3279 = vadd.f32 0.0, %v3278
        %v3280 = vpop.f32.mrb[0].mxu0
        %v3281 = vpop.f32.mrb[0].mxu0
        %v3282 = vadd.f32 0.0, %v3281
        %v3283 = vpop.f32.mrb[0].mxu0
        %3284 = vmatprep.mubr.bf16.mxu0 0
        %3285 = vmatmul.mubr.bf16.gmra.mrb[0].mxu0 %v3156
        %v3286 = vpop.f32.mrb[0].mxu0
        %v3287 = vadd.f32 0.0, %v3286
        %v3288 = vpop.f32.mrb[0].mxu0
        %v3289 = vpop.f32.mrb[0].mxu0
        %v3290 = vadd.f32 0.0, %v3289
        %v3291 = vpop.f32.mrb[0].mxu0
        %3292 = vmatprep.mubr.bf16.mxu0 0
        %3293 = vmatmul.mubr.bf16.gmra.mrb[0].mxu0 %v3159
        %v3294 = vpop.f32.mrb[0].mxu0
        %v3295 = vadd.f32 0.0, %v3294
        %v3296 = vpop.f32.mrb[0].mxu0
        %v3297 = vpop.f32.mrb[0].mxu0
        %v3298 = vadd.f32 0.0, %v3297
        %v3299 = vpop.f32.mrb[0].mxu0
        %3300 = vmatprep.mubr.bf16.mxu0 0
        %3301 = vmatmul.mubr.bf16.gmra.mrb[0].mxu0 %v3162
        %v3302 = vpop.f32.mrb[0].mxu0
        %v3303 = vadd.f32 0.0, %v3302
        %v3304 = vpop.f32.mrb[0].mxu0
        %v3305 = vpop.f32.mrb[0].mxu0
        %v3306 = vadd.f32 0.0, %v3305
        %v3307 = vpop.f32.mrb[0].mxu0
        %3308 = vmatprep.mubr.bf16.mxu0 0
        %3309 = vmatmul.mubr.bf16.gmra.mrb[0].mxu0 %v3165
        %v3310 = vpop.f32.mrb[0].mxu0
        %v3311 = vadd.f32 0.0, %v3310
        %v3312 = vpop.f32.mrb[0].mxu0
        %v3313 = vpop.f32.mrb[0].mxu0
        %v3314 = vadd.f32 0.0, %v3313
        %v3315 = vpop.f32.mrb[0].mxu0
        %3316 = vmatprep.mubr.bf16.mxu0 0
        %3317 = vmatmul.mubr.bf16.gmra.mrb[0].mxu0 %v3168
        %v3318 = vpop.f32.mrb[0].mxu0
        %v3319 = vadd.f32 0.0, %v3318
        %v3320 = vpop.f32.mrb[0].mxu0
        %v3321 = vpop.f32.mrb[0].mxu0
        %v3322 = vadd.f32 0.0, %v3321
        %v3323 = vpop.f32.mrb[0].mxu0
        %3324 = vmatprep.mubr.bf16.mxu0 0
        %3325 = vmatmul.mubr.bf16.gmra.mrb[0].mxu0 %v3171
        %v3326 = vpop.f32.mrb[0].mxu0
        %v3327 = vadd.f32 0.0, %v3326
        %v3328 = vpop.f32.mrb[0].mxu0
        %v3329 = vpop.f32.mrb[0].mxu0
        %v3330 = vadd.f32 0.0, %v3329
        %v3331 = vpop.f32.mrb[0].mxu0
        %3332 = vmatprep.mubr.bf16.mxu0 0
        %3333 = vmatmul.mubr.bf16.gmra.mrb[0].mxu0 %v3174
        %v3334 = vpop.f32.mrb[0].mxu0
        %v3335 = vadd.f32 0.0, %v3334
        %v3336 = vpop.f32.mrb[0].mxu0
        %v3337 = vpop.f32.mrb[0].mxu0
        %v3338 = vadd.f32 0.0, %v3337
        %v3339 = vpop.f32.mrb[0].mxu0
        %3340 = vmatprep.mubr.bf16.mxu0 0
        %3341 = vmatmul.mubr.bf16.gmra.mrb[0].mxu0 %v3177
        %v3342 = vpop.f32.mrb[0].mxu0
        %v3343 = vadd.f32 0.0, %v3342
        %v3344 = vpop.f32.mrb[0].mxu0
        %v3345 = vpop.f32.mrb[0].mxu0
        %v3346 = vadd.f32 0.0, %v3345
        %v3347 = vpop.f32.mrb[0].mxu0
        %3348 = vmatprep.mubr.bf16.mxu0 0
        %3349 = vmatmul.mubr.bf16.gmra.mrb[0].mxu0 %v3180
        %v3350 = vpop.f32.mrb[0].mxu0
        %v3351 = vadd.f32 0.0, %v3350
        %v3352 = vpop.f32.mrb[0].mxu0
        %v3353 = vpop.f32.mrb[0].mxu0
        %v3354 = vadd.f32 0.0, %v3353
        %v3355 = vpop.f32.mrb[0].mxu0
        %3356 = vmatprep.mubr.bf16.mxu0 0
        %3357 = vmatmul.mubr.bf16.gmra.mrb[0].mxu0 %v3183
        %v3358 = vpop.f32.mrb[0].mxu0
        %v3359 = vadd.f32 0.0, %v3358
        %v3360 = vpop.f32.mrb[0].mxu0
        %v3361 = vpop.f32.mrb[0].mxu0
        %v3362 = vadd.f32 0.0, %v3361
        %v3363 = vpop.f32.mrb[0].mxu0
        %3364 = vdwg.mxu0
        %v3365 = vadd.f32 %v2926, %v3223
        %v3366 = vadd.f32 %v2927, %v3226
        %v3367 = vadd.f32 %v2928, %v3231
        %v3368 = vadd.f32 %v2929, %v3234
        %v3369 = vadd.f32 %v2930, %v3239
        %v3370 = vadd.f32 %v2931, %v3242
        %v3371 = vadd.f32 %v2932, %v3247
        %v3372 = vadd.f32 %v2933, %v3250
        %v3373 = vadd.f32 %v2934, %v3255
        %v3374 = vadd.f32 %v2935, %v3258
        %v3375 = vadd.f32 %v2936, %v3263
        %v3376 = vadd.f32 %v2937, %v3266
        %v3377 = vadd.f32 %v2938, %v3271
        %v3378 = vadd.f32 %v2939, %v3274
        %v3379 = vadd.f32 %v2940, %v3279
        %v3380 = vadd.f32 %v2941, %v3282
        %v3381 = vadd.f32 %v2942, %v3287
        %v3382 = vadd.f32 %v2943, %v3290
        %v3383 = vadd.f32 %v2944, %v3295
        %v3384 = vadd.f32 %v2945, %v3298
        %v3385 = vadd.f32 %v2946, %v3303
        %v3386 = vadd.f32 %v2947, %v3306
        %v3387 = vadd.f32 %v2948, %v3311
        %v3388 = vadd.f32 %v2949, %v3314
        %v3389 = vadd.f32 %v2950, %v3319
        %v3390 = vadd.f32 %v2951, %v3322
        %v3391 = vadd.f32 %v2952, %v3327
        %v3392 = vadd.f32 %v2953, %v3330
        %v3393 = vadd.f32 %v2954, %v3335
        %v3394 = vadd.f32 %v2955, %v3338
        %v3395 = vadd.f32 %v2956, %v3343
        %v3396 = vadd.f32 %v2957, %v3346
        %v3397 = vadd.f32 %v2958, %v3351
        %v3398 = vadd.f32 %v2959, %v3354
        %v3399 = vadd.f32 %v2960, %v3359
        %v3400 = vadd.f32 %v2961, %v3362
        %v3401 = vld [vmem:[#allocation2 + $0xa0] sm:$0x7]
        %s3402 = scalar_lea.vmem %s1, 14
        %v3403 = vld [vmem:[%s3402] sm:$0x3]
        %v3405 = vunpack.c.l.b16 %v3401
        %v3406 = vpack.c.b16 %v3405, %v3405
        %vm3407 = vsmask.f32 5376
        %v3409 = vshrl.u32 %v3075, 16
        %v3411 = vrot.slane %v3409, 2
        %v3412 = vshll.u32 %v3075, 16
        %v3414 = vrot.slane %v3412, 3
        %v3415 = vor.u32 %v3411, %v3414
        %v3417 = vshrl.u32 %v3076, 16
        %v3419 = vrot.slane %v3417, 2
        %v3420 = vshll.u32 %v3076, 16
        %v3422 = vrot.slane %v3420, 3
        %v3423 = vor.u32 %v3419, %v3422
        %v3424 = vsel %vm3407, %v3415, %v3423
        %v3426 = vshrl.u32 %v3077, 16
        %v3428 = vrot.slane %v3426, 2
        %v3429 = vshll.u32 %v3077, 16
        %v3431 = vrot.slane %v3429, 3
        %v3432 = vor.u32 %v3428, %v3431
        %v3433 = vsel %vm3407, %v3423, %v3432
        %v3435 = vshrl.u32 %v3078, 16
        %v3437 = vrot.slane %v3435, 2
        %v3438 = vshll.u32 %v3078, 16
        %v3440 = vrot.slane %v3438, 3
        %v3441 = vor.u32 %v3437, %v3440
        %v3442 = vsel %vm3407, %v3432, %v3441
        %v3444 = vshrl.u32 %v3079, 16
        %v3446 = vrot.slane %v3444, 2
        %v3447 = vshll.u32 %v3079, 16
        %v3449 = vrot.slane %v3447, 3
        %v3450 = vor.u32 %v3446, %v3449
        %v3451 = vsel %vm3407, %v3441, %v3450
        %v3453 = vshrl.u32 %v3080, 16
        %v3455 = vrot.slane %v3453, 2
        %v3456 = vshll.u32 %v3080, 16
        %v3458 = vrot.slane %v3456, 3
        %v3459 = vor.u32 %v3455, %v3458
        %v3460 = vsel %vm3407, %v3450, %v3459
        %v3462 = vshrl.u32 %v3081, 16
        %v3464 = vrot.slane %v3462, 2
        %v3465 = vshll.u32 %v3081, 16
        %v3467 = vrot.slane %v3465, 3
        %v3468 = vor.u32 %v3464, %v3467
        %v3469 = vsel %vm3407, %v3459, %v3468
        %v3471 = vshrl.u32 %v3082, 16
        %v3473 = vrot.slane %v3471, 2
        %v3474 = vshll.u32 %v3082, 16
        %v3476 = vrot.slane %v3474, 3
        %v3477 = vor.u32 %v3473, %v3476
        %v3478 = vsel %vm3407, %v3468, %v3477
        %v3480 = vshrl.u32 %v3083, 16
        %v3482 = vrot.slane %v3480, 2
        %v3483 = vshll.u32 %v3083, 16
        %v3485 = vrot.slane %v3483, 3
        %v3486 = vor.u32 %v3482, %v3485
        %v3487 = vsel %vm3407, %v3477, %v3486
        %v3489 = vshrl.u32 %v3084, 16
        %v3491 = vrot.slane %v3489, 2
        %v3492 = vshll.u32 %v3084, 16
        %v3494 = vrot.slane %v3492, 3
        %v3495 = vor.u32 %v3491, %v3494
        %v3496 = vsel %vm3407, %v3486, %v3495
        %v3498 = vshrl.u32 %v3085, 16
        %v3500 = vrot.slane %v3498, 2
        %v3501 = vshll.u32 %v3085, 16
        %v3503 = vrot.slane %v3501, 3
        %v3504 = vor.u32 %v3500, %v3503
        %v3505 = vsel %vm3407, %v3495, %v3504
        %v3507 = vshrl.u32 %v3086, 16
        %v3509 = vrot.slane %v3507, 2
        %v3510 = vshll.u32 %v3086, 16
        %v3512 = vrot.slane %v3510, 3
        %v3513 = vor.u32 %v3509, %v3512
        %v3514 = vsel %vm3407, %v3504, %v3513
        %v3516 = vshrl.u32 %v3087, 16
        %v3518 = vrot.slane %v3516, 2
        %v3519 = vshll.u32 %v3087, 16
        %v3521 = vrot.slane %v3519, 3
        %v3522 = vor.u32 %v3518, %v3521
        %v3523 = vsel %vm3407, %v3513, %v3522
        %v3525 = vshrl.u32 %v3088, 16
        %v3527 = vrot.slane %v3525, 2
        %v3528 = vshll.u32 %v3088, 16
        %v3530 = vrot.slane %v3528, 3
        %v3531 = vor.u32 %v3527, %v3530
        %v3532 = vsel %vm3407, %v3522, %v3531
        %v3534 = vshrl.u32 %v3089, 16
        %v3536 = vrot.slane %v3534, 2
        %v3537 = vshll.u32 %v3089, 16
        %v3539 = vrot.slane %v3537, 3
        %v3540 = vor.u32 %v3536, %v3539
        %v3541 = vsel %vm3407, %v3531, %v3540
        %v3543 = vshrl.u32 %v3090, 16
        %v3545 = vrot.slane %v3543, 2
        %v3546 = vshll.u32 %v3090, 16
        %v3548 = vrot.slane %v3546, 3
        %v3549 = vor.u32 %v3545, %v3548
        %v3550 = vsel %vm3407, %v3540, %v3549
        %v3552 = vshrl.u32 %v3091, 16
        %v3554 = vrot.slane %v3552, 2
        %v3555 = vshll.u32 %v3091, 16
        %v3557 = vrot.slane %v3555, 3
        %v3558 = vor.u32 %v3554, %v3557
        %v3559 = vsel %vm3407, %v3549, %v3558
        %v3561 = vshrl.u32 %v3092, 16
        %v3563 = vrot.slane %v3561, 2
        %v3564 = vshll.u32 %v3092, 16
        %v3566 = vrot.slane %v3564, 3
        %v3567 = vor.u32 %v3563, %v3566
        %v3568 = vsel %vm3407, %v3558, %v3567
        %v3570 = vshrl.u32 %v3406, 16
        %v3572 = vrot.slane %v3570, 2
        %v3573 = vshll.u32 %v3406, 16
        %v3575 = vrot.slane %v3573, 3
        %v3576 = vor.u32 %v3572, %v3575
        %v3577 = vsel %vm3407, %v3567, %v3576
        %v3579 = vsel %vm996, %v3424, 0
        %v3582 = vsel %vm996, %v3433, 0
        %v3585 = vsel %vm996, %v3442, 0
        %v3588 = vsel %vm996, %v3451, 0
        %v3591 = vsel %vm996, %v3460, 0
        %v3594 = vsel %vm996, %v3469, 0
        %v3597 = vsel %vm996, %v3478, 0
        %v3600 = vsel %vm996, %v3487, 0
        %v3603 = vsel %vm996, %v3496, 0
        %v3606 = vsel %vm996, %v3505, 0
        %v3609 = vsel %vm996, %v3514, 0
        %v3612 = vsel %vm996, %v3523, 0
        %v3615 = vsel %vm996, %v3532, 0
        %v3618 = vsel %vm996, %v3541, 0
        %v3621 = vsel %vm996, %v3550, 0
        %v3624 = vsel %vm996, %v3559, 0
        %v3627 = vsel %vm996, %v3568, 0
        %v3630 = vsel %vm996, %v3577, 0
        %v3633 = vsel %vm1051, %v3403, 0
        %3635 = vmatprep.subr.bf16.mxu0 0
        %3636 = vmatpush1.bf16.msra.mxu0 %v3633
        %3637 = vmatprep.subr.bf16.mxu0 0
        %3638 = vmatpush1.bf16.msra.mxu0 0
        %3639 = vmatprep.subr.bf16.mxu0 0
        %3640 = vmatpush1.bf16.msra.mxu0 0
        %3641 = vmatprep.subr.bf16.mxu0 0
        %3642 = vmatpush1.bf16.msra.mxu0 0
        %3643 = vmatprep.subr.bf16.mxu0 0
        %3644 = vmatpush1.bf16.msra.mxu0 0
        %3645 = vmatprep.subr.bf16.mxu0 0
        %3646 = vmatpush1.bf16.msra.mxu0 0
        %3647 = vmatprep.subr.bf16.mxu0 0
        %3648 = vmatpush1.bf16.msra.mxu0 0
        %3649 = vmatprep.subr.bf16.mxu0 0
        %3650 = vmatpush1.bf16.msra.mxu0 0
        %3651 = vmatprep.subr.bf16.mxu0 0
        %3652 = vmatpush1.bf16.msra.mxu0 0
        %3653 = vmatprep.subr.bf16.mxu0 0
        %3654 = vmatpush1.bf16.msra.mxu0 0
        %3655 = vmatprep.subr.bf16.mxu0 0
        %3656 = vmatpush1.bf16.msra.mxu0 0
        %3657 = vmatprep.subr.bf16.mxu0 0
        %3658 = vmatpush1.bf16.msra.mxu0 0
        %3659 = vmatprep.subr.bf16.mxu0 0
        %3660 = vmatpush1.bf16.msra.mxu0 0
        %3661 = vmatprep.subr.bf16.mxu0 0
        %3662 = vmatpush1.bf16.msra.mxu0 0
        %3663 = vmatprep.subr.bf16.mxu0 0
        %3664 = vmatpush1.bf16.msra.mxu0 0
        %3665 = vmatprep.subr.bf16.mxu0 0
        %3666 = vmatpush1.bf16.msra.mxu0 0
        %3667 = vmatprep.mubr.bf16.mxu0 0
        %3668 = vmatmul.mubr.bf16.gmra.mrb[0].mxu0 %v3579
        %v3669 = vpop.f32.mrb[0].mxu0
        %v3670 = vadd.f32 0.0, %v3669
        %v3671 = vpop.f32.mrb[0].mxu0
        %v3672 = vpop.f32.mrb[0].mxu0
        %v3673 = vadd.f32 0.0, %v3672
        %v3674 = vpop.f32.mrb[0].mxu0
        %3675 = vmatprep.mubr.bf16.mxu0 0
        %3676 = vmatmul.mubr.bf16.gmra.mrb[0].mxu0 %v3582
        %v3677 = vpop.f32.mrb[0].mxu0
        %v3678 = vadd.f32 0.0, %v3677
        %v3679 = vpop.f32.mrb[0].mxu0
        %v3680 = vpop.f32.mrb[0].mxu0
        %v3681 = vadd.f32 0.0, %v3680
        %v3682 = vpop.f32.mrb[0].mxu0
        %3683 = vmatprep.mubr.bf16.mxu0 0
        %3684 = vmatmul.mubr.bf16.gmra.mrb[0].mxu0 %v3585
        %v3685 = vpop.f32.mrb[0].mxu0
        %v3686 = vadd.f32 0.0, %v3685
        %v3687 = vpop.f32.mrb[0].mxu0
        %v3688 = vpop.f32.mrb[0].mxu0
        %v3689 = vadd.f32 0.0, %v3688
        %v3690 = vpop.f32.mrb[0].mxu0
        %3691 = vmatprep.mubr.bf16.mxu0 0
        %3692 = vmatmul.mubr.bf16.gmra.mrb[0].mxu0 %v3588
        %v3693 = vpop.f32.mrb[0].mxu0
        %v3694 = vadd.f32 0.0, %v3693
        %v3695 = vpop.f32.mrb[0].mxu0
        %v3696 = vpop.f32.mrb[0].mxu0
        %v3697 = vadd.f32 0.0, %v3696
        %v3698 = vpop.f32.mrb[0].mxu0
        %3699 = vmatprep.mubr.bf16.mxu0 0
        %3700 = vmatmul.mubr.bf16.gmra.mrb[0].mxu0 %v3591
        %v3701 = vpop.f32.mrb[0].mxu0
        %v3702 = vadd.f32 0.0, %v3701
        %v3703 = vpop.f32.mrb[0].mxu0
        %v3704 = vpop.f32.mrb[0].mxu0
        %v3705 = vadd.f32 0.0, %v3704
        %v3706 = vpop.f32.mrb[0].mxu0
        %3707 = vmatprep.mubr.bf16.mxu0 0
        %3708 = vmatmul.mubr.bf16.gmra.mrb[0].mxu0 %v3594
        %v3709 = vpop.f32.mrb[0].mxu0
        %v3710 = vadd.f32 0.0, %v3709
        %v3711 = vpop.f32.mrb[0].mxu0
        %v3712 = vpop.f32.mrb[0].mxu0
        %v3713 = vadd.f32 0.0, %v3712
        %v3714 = vpop.f32.mrb[0].mxu0
        %3715 = vmatprep.mubr.bf16.mxu0 0
        %3716 = vmatmul.mubr.bf16.gmra.mrb[0].mxu0 %v3597
        %v3717 = vpop.f32.mrb[0].mxu0
        %v3718 = vadd.f32 0.0, %v3717
        %v3719 = vpop.f32.mrb[0].mxu0
        %v3720 = vpop.f32.mrb[0].mxu0
        %v3721 = vadd.f32 0.0, %v3720
        %v3722 = vpop.f32.mrb[0].mxu0
        %3723 = vmatprep.mubr.bf16.mxu0 0
        %3724 = vmatmul.mubr.bf16.gmra.mrb[0].mxu0 %v3600
        %v3725 = vpop.f32.mrb[0].mxu0
        %v3726 = vadd.f32 0.0, %v3725
        %v3727 = vpop.f32.mrb[0].mxu0
        %v3728 = vpop.f32.mrb[0].mxu0
        %v3729 = vadd.f32 0.0, %v3728
        %v3730 = vpop.f32.mrb[0].mxu0
        %3731 = vmatprep.mubr.bf16.mxu0 0
        %3732 = vmatmul.mubr.bf16.gmra.mrb[0].mxu0 %v3603
        %v3733 = vpop.f32.mrb[0].mxu0
        %v3734 = vadd.f32 0.0, %v3733
        %v3735 = vpop.f32.mrb[0].mxu0
        %v3736 = vpop.f32.mrb[0].mxu0
        %v3737 = vadd.f32 0.0, %v3736
        %v3738 = vpop.f32.mrb[0].mxu0
        %3739 = vmatprep.mubr.bf16.mxu0 0
        %3740 = vmatmul.mubr.bf16.gmra.mrb[0].mxu0 %v3606
        %v3741 = vpop.f32.mrb[0].mxu0
        %v3742 = vadd.f32 0.0, %v3741
        %v3743 = vpop.f32.mrb[0].mxu0
        %v3744 = vpop.f32.mrb[0].mxu0
        %v3745 = vadd.f32 0.0, %v3744
        %v3746 = vpop.f32.mrb[0].mxu0
        %3747 = vmatprep.mubr.bf16.mxu0 0
        %3748 = vmatmul.mubr.bf16.gmra.mrb[0].mxu0 %v3609
        %v3749 = vpop.f32.mrb[0].mxu0
        %v3750 = vadd.f32 0.0, %v3749
        %v3751 = vpop.f32.mrb[0].mxu0
        %v3752 = vpop.f32.mrb[0].mxu0
        %v3753 = vadd.f32 0.0, %v3752
        %v3754 = vpop.f32.mrb[0].mxu0
        %3755 = vmatprep.mubr.bf16.mxu0 0
        %3756 = vmatmul.mubr.bf16.gmra.mrb[0].mxu0 %v3612
        %v3757 = vpop.f32.mrb[0].mxu0
        %v3758 = vadd.f32 0.0, %v3757
        %v3759 = vpop.f32.mrb[0].mxu0
        %v3760 = vpop.f32.mrb[0].mxu0
        %v3761 = vadd.f32 0.0, %v3760
        %v3762 = vpop.f32.mrb[0].mxu0
        %3763 = vmatprep.mubr.bf16.mxu0 0
        %3764 = vmatmul.mubr.bf16.gmra.mrb[0].mxu0 %v3615
        %v3765 = vpop.f32.mrb[0].mxu0
        %v3766 = vadd.f32 0.0, %v3765
        %v3767 = vpop.f32.mrb[0].mxu0
        %v3768 = vpop.f32.mrb[0].mxu0
        %v3769 = vadd.f32 0.0, %v3768
        %v3770 = vpop.f32.mrb[0].mxu0
        %3771 = vmatprep.mubr.bf16.mxu0 0
        %3772 = vmatmul.mubr.bf16.gmra.mrb[0].mxu0 %v3618
        %v3773 = vpop.f32.mrb[0].mxu0
        %v3774 = vadd.f32 0.0, %v3773
        %v3775 = vpop.f32.mrb[0].mxu0
        %v3776 = vpop.f32.mrb[0].mxu0
        %v3777 = vadd.f32 0.0, %v3776
        %v3778 = vpop.f32.mrb[0].mxu0
        %3779 = vmatprep.mubr.bf16.mxu0 0
        %3780 = vmatmul.mubr.bf16.gmra.mrb[0].mxu0 %v3621
        %v3781 = vpop.f32.mrb[0].mxu0
        %v3782 = vadd.f32 0.0, %v3781
        %v3783 = vpop.f32.mrb[0].mxu0
        %v3784 = vpop.f32.mrb[0].mxu0
        %v3785 = vadd.f32 0.0, %v3784
        %v3786 = vpop.f32.mrb[0].mxu0
        %3787 = vmatprep.mubr.bf16.mxu0 0
        %3788 = vmatmul.mubr.bf16.gmra.mrb[0].mxu0 %v3624
        %v3789 = vpop.f32.mrb[0].mxu0
        %v3790 = vadd.f32 0.0, %v3789
        %v3791 = vpop.f32.mrb[0].mxu0
        %v3792 = vpop.f32.mrb[0].mxu0
        %v3793 = vadd.f32 0.0, %v3792
        %v3794 = vpop.f32.mrb[0].mxu0
        %3795 = vmatprep.mubr.bf16.mxu0 0
        %3796 = vmatmul.mubr.bf16.gmra.mrb[0].mxu0 %v3627
        %v3797 = vpop.f32.mrb[0].mxu0
        %v3798 = vadd.f32 0.0, %v3797
        %v3799 = vpop.f32.mrb[0].mxu0
        %v3800 = vpop.f32.mrb[0].mxu0
        %v3801 = vadd.f32 0.0, %v3800
        %v3802 = vpop.f32.mrb[0].mxu0
        %3803 = vmatprep.mubr.bf16.mxu0 0
        %3804 = vmatmul.mubr.bf16.gmra.mrb[0].mxu0 %v3630
        %v3805 = vpop.f32.mrb[0].mxu0
        %v3806 = vadd.f32 0.0, %v3805
        %v3807 = vpop.f32.mrb[0].mxu0
        %v3808 = vpop.f32.mrb[0].mxu0
        %v3809 = vadd.f32 0.0, %v3808
        %v3810 = vpop.f32.mrb[0].mxu0
        %3811 = vdwg.mxu0
        %v3812 = vadd.f32 %v3365, %v3670
        %v3813 = vadd.f32 %v3366, %v3673
        %v3814 = vadd.f32 %v3367, %v3678
        %v3815 = vadd.f32 %v3368, %v3681
        %v3816 = vadd.f32 %v3369, %v3686
        %v3817 = vadd.f32 %v3370, %v3689
        %v3818 = vadd.f32 %v3371, %v3694
        %v3819 = vadd.f32 %v3372, %v3697
        %v3820 = vadd.f32 %v3373, %v3702
        %v3821 = vadd.f32 %v3374, %v3705
        %v3822 = vadd.f32 %v3375, %v3710
        %v3823 = vadd.f32 %v3376, %v3713
        %v3824 = vadd.f32 %v3377, %v3718
        %v3825 = vadd.f32 %v3378, %v3721
        %v3826 = vadd.f32 %v3379, %v3726
        %v3827 = vadd.f32 %v3380, %v3729
        %v3828 = vadd.f32 %v3381, %v3734
        %v3829 = vadd.f32 %v3382, %v3737
        %v3830 = vadd.f32 %v3383, %v3742
        %v3831 = vadd.f32 %v3384, %v3745
        %v3832 = vadd.f32 %v3385, %v3750
        %v3833 = vadd.f32 %v3386, %v3753
        %v3834 = vadd.f32 %v3387, %v3758
        %v3835 = vadd.f32 %v3388, %v3761
        %v3836 = vadd.f32 %v3389, %v3766
        %v3837 = vadd.f32 %v3390, %v3769
        %v3838 = vadd.f32 %v3391, %v3774
        %v3839 = vadd.f32 %v3392, %v3777
        %v3840 = vadd.f32 %v3393, %v3782
        %v3841 = vadd.f32 %v3394, %v3785
        %v3842 = vadd.f32 %v3395, %v3790
        %v3843 = vadd.f32 %v3396, %v3793
        %v3844 = vadd.f32 %v3397, %v3798
        %v3845 = vadd.f32 %v3398, %v3801
        %v3846 = vadd.f32 %v3399, %v3806
        %v3847 = vadd.f32 %v3400, %v3809
        %v3848 = vld [vmem:[#allocation2 + $0x10] sm:$0x8]
        %s3849 = scalar_lea.vmem %s1, 16
        %v3850 = vld [vmem:[%s3849] sm:$0x3]
        %v3852 = vunpack.c.l.b16 %v3848
        %v3853 = vpack.c.b16 %v3039, %v3852
        %vm3854 = vcmask 1044480
        %v3855 = vrot.slane %v3853, 3
        %v3856 = vrot.slane %v3076, 3
        %v3857 = vsel %vm3854, %v3855, %v3856
        %v3858 = vrot.slane %v3077, 3
        %v3859 = vsel %vm3854, %v3856, %v3858
        %v3860 = vrot.slane %v3078, 3
        %v3861 = vsel %vm3854, %v3858, %v3860
        %v3862 = vrot.slane %v3079, 3
        %v3863 = vsel %vm3854, %v3860, %v3862
        %v3864 = vrot.slane %v3080, 3
        %v3865 = vsel %vm3854, %v3862, %v3864
        %v3866 = vrot.slane %v3081, 3
        %v3867 = vsel %vm3854, %v3864, %v3866
        %v3868 = vrot.slane %v3082, 3
        %v3869 = vsel %vm3854, %v3866, %v3868
        %v3870 = vrot.slane %v3083, 3
        %v3871 = vsel %vm3854, %v3868, %v3870
        %v3872 = vrot.slane %v3084, 3
        %v3873 = vsel %vm3854, %v3870, %v3872
        %v3874 = vrot.slane %v3085, 3
        %v3875 = vsel %vm3854, %v3872, %v3874
        %v3876 = vrot.slane %v3086, 3
        %v3877 = vsel %vm3854, %v3874, %v3876
        %v3878 = vrot.slane %v3087, 3
        %v3879 = vsel %vm3854, %v3876, %v3878
        %v3880 = vrot.slane %v3088, 3
        %v3881 = vsel %vm3854, %v3878, %v3880
        %v3882 = vrot.slane %v3089, 3
        %v3883 = vsel %vm3854, %v3880, %v3882
        %v3884 = vrot.slane %v3090, 3
        %v3885 = vsel %vm3854, %v3882, %v3884
        %v3886 = vrot.slane %v3091, 3
        %v3887 = vsel %vm3854, %v3884, %v3886
        %v3888 = vrot.slane %v3092, 3
        %v3889 = vsel %vm3854, %v3886, %v3888
        %v3890 = vrot.slane %v3406, 3
        %v3891 = vsel %vm3854, %v3888, %v3890
        %v3893 = vsel %vm996, %v3857, 0
        %v3896 = vsel %vm996, %v3859, 0
        %v3899 = vsel %vm996, %v3861, 0
        %v3902 = vsel %vm996, %v3863, 0
        %v3905 = vsel %vm996, %v3865, 0
        %v3908 = vsel %vm996, %v3867, 0
        %v3911 = vsel %vm996, %v3869, 0
        %v3914 = vsel %vm996, %v3871, 0
        %v3917 = vsel %vm996, %v3873, 0
        %v3920 = vsel %vm996, %v3875, 0
        %v3923 = vsel %vm996, %v3877, 0
        %v3926 = vsel %vm996, %v3879, 0
        %v3929 = vsel %vm996, %v3881, 0
        %v3932 = vsel %vm996, %v3883, 0
        %v3935 = vsel %vm996, %v3885, 0
        %v3938 = vsel %vm996, %v3887, 0
        %v3941 = vsel %vm996, %v3889, 0
        %v3944 = vsel %vm996, %v3891, 0
        %v3947 = vsel %vm1051, %v3850, 0
        %3949 = vmatprep.subr.bf16.mxu0 0
        %3950 = vmatpush1.bf16.msra.mxu0 %v3947
        %3951 = vmatprep.subr.bf16.mxu0 0
        %3952 = vmatpush1.bf16.msra.mxu0 0
        %3953 = vmatprep.subr.bf16.mxu0 0
        %3954 = vmatpush1.bf16.msra.mxu0 0
        %3955 = vmatprep.subr.bf16.mxu0 0
        %3956 = vmatpush1.bf16.msra.mxu0 0
        %3957 = vmatprep.subr.bf16.mxu0 0
        %3958 = vmatpush1.bf16.msra.mxu0 0
        %3959 = vmatprep.subr.bf16.mxu0 0
        %3960 = vmatpush1.bf16.msra.mxu0 0
        %3961 = vmatprep.subr.bf16.mxu0 0
        %3962 = vmatpush1.bf16.msra.mxu0 0
        %3963 = vmatprep.subr.bf16.mxu0 0
        %3964 = vmatpush1.bf16.msra.mxu0 0
        %3965 = vmatprep.subr.bf16.mxu0 0
        %3966 = vmatpush1.bf16.msra.mxu0 0
        %3967 = vmatprep.subr.bf16.mxu0 0
        %3968 = vmatpush1.bf16.msra.mxu0 0
        %3969 = vmatprep.subr.bf16.mxu0 0
        %3970 = vmatpush1.bf16.msra.mxu0 0
        %3971 = vmatprep.subr.bf16.mxu0 0
        %3972 = vmatpush1.bf16.msra.mxu0 0
        %3973 = vmatprep.subr.bf16.mxu0 0
        %3974 = vmatpush1.bf16.msra.mxu0 0
        %3975 = vmatprep.subr.bf16.mxu0 0
        %3976 = vmatpush1.bf16.msra.mxu0 0
        %3977 = vmatprep.subr.bf16.mxu0 0
        %3978 = vmatpush1.bf16.msra.mxu0 0
        %3979 = vmatprep.subr.bf16.mxu0 0
        %3980 = vmatpush1.bf16.msra.mxu0 0
        %3981 = vmatprep.mubr.bf16.mxu0 0
        %3982 = vmatmul.mubr.bf16.gmra.mrb[0].mxu0 %v3893
        %v3983 = vpop.f32.mrb[0].mxu0
        %v3984 = vadd.f32 0.0, %v3983
        %v3985 = vpop.f32.mrb[0].mxu0
        %v3986 = vpop.f32.mrb[0].mxu0
        %v3987 = vadd.f32 0.0, %v3986
        %v3988 = vpop.f32.mrb[0].mxu0
        %3989 = vmatprep.mubr.bf16.mxu0 0
        %3990 = vmatmul.mubr.bf16.gmra.mrb[0].mxu0 %v3896
        %v3991 = vpop.f32.mrb[0].mxu0
        %v3992 = vadd.f32 0.0, %v3991
        %v3993 = vpop.f32.mrb[0].mxu0
        %v3994 = vpop.f32.mrb[0].mxu0
        %v3995 = vadd.f32 0.0, %v3994
        %v3996 = vpop.f32.mrb[0].mxu0
        %3997 = vmatprep.mubr.bf16.mxu0 0
        %3998 = vmatmul.mubr.bf16.gmra.mrb[0].mxu0 %v3899
        %v3999 = vpop.f32.mrb[0].mxu0
        %v4000 = vadd.f32 0.0, %v3999
        %v4001 = vpop.f32.mrb[0].mxu0
        %v4002 = vpop.f32.mrb[0].mxu0
        %v4003 = vadd.f32 0.0, %v4002
        %v4004 = vpop.f32.mrb[0].mxu0
        %4005 = vmatprep.mubr.bf16.mxu0 0
        %4006 = vmatmul.mubr.bf16.gmra.mrb[0].mxu0 %v3902
        %v4007 = vpop.f32.mrb[0].mxu0
        %v4008 = vadd.f32 0.0, %v4007
        %v4009 = vpop.f32.mrb[0].mxu0
        %v4010 = vpop.f32.mrb[0].mxu0
        %v4011 = vadd.f32 0.0, %v4010
        %v4012 = vpop.f32.mrb[0].mxu0
        %4013 = vmatprep.mubr.bf16.mxu0 0
        %4014 = vmatmul.mubr.bf16.gmra.mrb[0].mxu0 %v3905
        %v4015 = vpop.f32.mrb[0].mxu0
        %v4016 = vadd.f32 0.0, %v4015
        %v4017 = vpop.f32.mrb[0].mxu0
        %v4018 = vpop.f32.mrb[0].mxu0
        %v4019 = vadd.f32 0.0, %v4018
        %v4020 = vpop.f32.mrb[0].mxu0
        %4021 = vmatprep.mubr.bf16.mxu0 0
        %4022 = vmatmul.mubr.bf16.gmra.mrb[0].mxu0 %v3908
        %v4023 = vpop.f32.mrb[0].mxu0
        %v4024 = vadd.f32 0.0, %v4023
        %v4025 = vpop.f32.mrb[0].mxu0
        %v4026 = vpop.f32.mrb[0].mxu0
        %v4027 = vadd.f32 0.0, %v4026
        %v4028 = vpop.f32.mrb[0].mxu0
        %4029 = vmatprep.mubr.bf16.mxu0 0
        %4030 = vmatmul.mubr.bf16.gmra.mrb[0].mxu0 %v3911
        %v4031 = vpop.f32.mrb[0].mxu0
        %v4032 = vadd.f32 0.0, %v4031
        %v4033 = vpop.f32.mrb[0].mxu0
        %v4034 = vpop.f32.mrb[0].mxu0
        %v4035 = vadd.f32 0.0, %v4034
        %v4036 = vpop.f32.mrb[0].mxu0
        %4037 = vmatprep.mubr.bf16.mxu0 0
        %4038 = vmatmul.mubr.bf16.gmra.mrb[0].mxu0 %v3914
        %v4039 = vpop.f32.mrb[0].mxu0
        %v4040 = vadd.f32 0.0, %v4039
        %v4041 = vpop.f32.mrb[0].mxu0
        %v4042 = vpop.f32.mrb[0].mxu0
        %v4043 = vadd.f32 0.0, %v4042
        %v4044 = vpop.f32.mrb[0].mxu0
        %4045 = vmatprep.mubr.bf16.mxu0 0
        %4046 = vmatmul.mubr.bf16.gmra.mrb[0].mxu0 %v3917
        %v4047 = vpop.f32.mrb[0].mxu0
        %v4048 = vadd.f32 0.0, %v4047
        %v4049 = vpop.f32.mrb[0].mxu0
        %v4050 = vpop.f32.mrb[0].mxu0
        %v4051 = vadd.f32 0.0, %v4050
        %v4052 = vpop.f32.mrb[0].mxu0
        %4053 = vmatprep.mubr.bf16.mxu0 0
        %4054 = vmatmul.mubr.bf16.gmra.mrb[0].mxu0 %v3920
        %v4055 = vpop.f32.mrb[0].mxu0
        %v4056 = vadd.f32 0.0, %v4055
        %v4057 = vpop.f32.mrb[0].mxu0
        %v4058 = vpop.f32.mrb[0].mxu0
        %v4059 = vadd.f32 0.0, %v4058
        %v4060 = vpop.f32.mrb[0].mxu0
        %4061 = vmatprep.mubr.bf16.mxu0 0
        %4062 = vmatmul.mubr.bf16.gmra.mrb[0].mxu0 %v3923
        %v4063 = vpop.f32.mrb[0].mxu0
        %v4064 = vadd.f32 0.0, %v4063
        %v4065 = vpop.f32.mrb[0].mxu0
        %v4066 = vpop.f32.mrb[0].mxu0
        %v4067 = vadd.f32 0.0, %v4066
        %v4068 = vpop.f32.mrb[0].mxu0
        %4069 = vmatprep.mubr.bf16.mxu0 0
        %4070 = vmatmul.mubr.bf16.gmra.mrb[0].mxu0 %v3926
        %v4071 = vpop.f32.mrb[0].mxu0
        %v4072 = vadd.f32 0.0, %v4071
        %v4073 = vpop.f32.mrb[0].mxu0
        %v4074 = vpop.f32.mrb[0].mxu0
        %v4075 = vadd.f32 0.0, %v4074
        %v4076 = vpop.f32.mrb[0].mxu0
        %4077 = vmatprep.mubr.bf16.mxu0 0
        %4078 = vmatmul.mubr.bf16.gmra.mrb[0].mxu0 %v3929
        %v4079 = vpop.f32.mrb[0].mxu0
        %v4080 = vadd.f32 0.0, %v4079
        %v4081 = vpop.f32.mrb[0].mxu0
        %v4082 = vpop.f32.mrb[0].mxu0
        %v4083 = vadd.f32 0.0, %v4082
        %v4084 = vpop.f32.mrb[0].mxu0
        %4085 = vmatprep.mubr.bf16.mxu0 0
        %4086 = vmatmul.mubr.bf16.gmra.mrb[0].mxu0 %v3932
        %v4087 = vpop.f32.mrb[0].mxu0
        %v4088 = vadd.f32 0.0, %v4087
        %v4089 = vpop.f32.mrb[0].mxu0
        %v4090 = vpop.f32.mrb[0].mxu0
        %v4091 = vadd.f32 0.0, %v4090
        %v4092 = vpop.f32.mrb[0].mxu0
        %4093 = vmatprep.mubr.bf16.mxu0 0
        %4094 = vmatmul.mubr.bf16.gmra.mrb[0].mxu0 %v3935
        %v4095 = vpop.f32.mrb[0].mxu0
        %v4096 = vadd.f32 0.0, %v4095
        %v4097 = vpop.f32.mrb[0].mxu0
        %v4098 = vpop.f32.mrb[0].mxu0
        %v4099 = vadd.f32 0.0, %v4098
        %v4100 = vpop.f32.mrb[0].mxu0
        %4101 = vmatprep.mubr.bf16.mxu0 0
        %4102 = vmatmul.mubr.bf16.gmra.mrb[0].mxu0 %v3938
        %v4103 = vpop.f32.mrb[0].mxu0
        %v4104 = vadd.f32 0.0, %v4103
        %v4105 = vpop.f32.mrb[0].mxu0
        %v4106 = vpop.f32.mrb[0].mxu0
        %v4107 = vadd.f32 0.0, %v4106
        %v4108 = vpop.f32.mrb[0].mxu0
        %4109 = vmatprep.mubr.bf16.mxu0 0
        %4110 = vmatmul.mubr.bf16.gmra.mrb[0].mxu0 %v3941
        %v4111 = vpop.f32.mrb[0].mxu0
        %v4112 = vadd.f32 0.0, %v4111
        %v4113 = vpop.f32.mrb[0].mxu0
        %v4114 = vpop.f32.mrb[0].mxu0
        %v4115 = vadd.f32 0.0, %v4114
        %v4116 = vpop.f32.mrb[0].mxu0
        %4117 = vmatprep.mubr.bf16.mxu0 0
        %4118 = vmatmul.mubr.bf16.gmra.mrb[0].mxu0 %v3944
        %v4119 = vpop.f32.mrb[0].mxu0
        %v4120 = vadd.f32 0.0, %v4119
        %v4121 = vpop.f32.mrb[0].mxu0
        %v4122 = vpop.f32.mrb[0].mxu0
        %v4123 = vadd.f32 0.0, %v4122
        %v4124 = vpop.f32.mrb[0].mxu0
        %4125 = vdwg.mxu0
        %v4126 = vadd.f32 %v3812, %v3984
        %v4127 = vadd.f32 %v3813, %v3987
        %v4128 = vadd.f32 %v3814, %v3992
        %v4129 = vadd.f32 %v3815, %v3995
        %v4130 = vadd.f32 %v3816, %v4000
        %v4131 = vadd.f32 %v3817, %v4003
        %v4132 = vadd.f32 %v3818, %v4008
        %v4133 = vadd.f32 %v3819, %v4011
        %v4134 = vadd.f32 %v3820, %v4016
        %v4135 = vadd.f32 %v3821, %v4019
        %v4136 = vadd.f32 %v3822, %v4024
        %v4137 = vadd.f32 %v3823, %v4027
        %v4138 = vadd.f32 %v3824, %v4032
        %v4139 = vadd.f32 %v3825, %v4035
        %v4140 = vadd.f32 %v3826, %v4040
        %v4141 = vadd.f32 %v3827, %v4043
        %v4142 = vadd.f32 %v3828, %v4048
        %v4143 = vadd.f32 %v3829, %v4051
        %v4144 = vadd.f32 %v3830, %v4056
        %v4145 = vadd.f32 %v3831, %v4059
        %v4146 = vadd.f32 %v3832, %v4064
        %v4147 = vadd.f32 %v3833, %v4067
        %v4148 = vadd.f32 %v3834, %v4072
        %v4149 = vadd.f32 %v3835, %v4075
        %v4150 = vadd.f32 %v3836, %v4080
        %v4151 = vadd.f32 %v3837, %v4083
        %v4152 = vadd.f32 %v3838, %v4088
        %v4153 = vadd.f32 %v3839, %v4091
        %v4154 = vadd.f32 %v3840, %v4096
        %v4155 = vadd.f32 %v3841, %v4099
        %v4156 = vadd.f32 %v3842, %v4104
        %v4157 = vadd.f32 %v3843, %v4107
        %v4158 = vadd.f32 %v3844, %v4112
        %v4159 = vadd.f32 %v3845, %v4115
        %v4160 = vadd.f32 %v3846, %v4120
        %v4161 = vadd.f32 %v3847, %v4123
        %v4162 = vld [vmem:[%s5] sm:$0x1]
        %v4164 = vlaneseq
        %v4165 = vshrl.u32 %v4164, 7
        %v4166 = vsub.s32 0, %v4165
        %v4167 = vrot.slane %v4162, %v4166
        %v4169 = vadd.f32 %v4126, %v4167
        %v4170 = vadd.f32 %v4127, %v4167
        %v4171 = vadd.f32 %v4128, %v4167
        %v4172 = vadd.f32 %v4129, %v4167
        %v4173 = vadd.f32 %v4130, %v4167
        %v4174 = vadd.f32 %v4131, %v4167
        %v4175 = vadd.f32 %v4132, %v4167
        %v4176 = vadd.f32 %v4133, %v4167
        %v4177 = vadd.f32 %v4134, %v4167
        %v4178 = vadd.f32 %v4135, %v4167
        %v4179 = vadd.f32 %v4136, %v4167
        %v4180 = vadd.f32 %v4137, %v4167
        %v4181 = vadd.f32 %v4138, %v4167
        %v4182 = vadd.f32 %v4139, %v4167
        %v4183 = vadd.f32 %v4140, %v4167
        %v4184 = vadd.f32 %v4141, %v4167
        %v4185 = vadd.f32 %v4142, %v4167
        %v4186 = vadd.f32 %v4143, %v4167
        %v4187 = vadd.f32 %v4144, %v4167
        %v4188 = vadd.f32 %v4145, %v4167
        %v4189 = vadd.f32 %v4146, %v4167
        %v4190 = vadd.f32 %v4147, %v4167
        %v4191 = vadd.f32 %v4148, %v4167
        %v4192 = vadd.f32 %v4149, %v4167
        %v4193 = vadd.f32 %v4150, %v4167
        %v4194 = vadd.f32 %v4151, %v4167
        %v4195 = vadd.f32 %v4152, %v4167
        %v4196 = vadd.f32 %v4153, %v4167
        %v4197 = vadd.f32 %v4154, %v4167
        %v4198 = vadd.f32 %v4155, %v4167
        %v4199 = vadd.f32 %v4156, %v4167
        %v4200 = vadd.f32 %v4157, %v4167
        %v4201 = vadd.f32 %v4158, %v4167
        %v4202 = vadd.f32 %v4159, %v4167
        %v4203 = vadd.f32 %v4160, %v4167
        %v4204 = vadd.f32 %v4161, %v4167
        %v4205 = vmax.f32 %v4169, 0.0
        %v4206 = vmax.f32 %v4170, 0.0
        %v4207 = vmax.f32 %v4171, 0.0
        %v4208 = vmax.f32 %v4172, 0.0
        %v4209 = vmax.f32 %v4173, 0.0
        %v4210 = vmax.f32 %v4174, 0.0
        %v4211 = vmax.f32 %v4175, 0.0
        %v4212 = vmax.f32 %v4176, 0.0
        %v4213 = vmax.f32 %v4177, 0.0
        %v4214 = vmax.f32 %v4178, 0.0
        %v4215 = vmax.f32 %v4179, 0.0
        %v4216 = vmax.f32 %v4180, 0.0
        %v4217 = vmax.f32 %v4181, 0.0
        %v4218 = vmax.f32 %v4182, 0.0
        %v4219 = vmax.f32 %v4183, 0.0
        %v4220 = vmax.f32 %v4184, 0.0
        %v4221 = vmax.f32 %v4185, 0.0
        %v4222 = vmax.f32 %v4186, 0.0
        %v4223 = vmax.f32 %v4187, 0.0
        %v4224 = vmax.f32 %v4188, 0.0
        %v4225 = vmax.f32 %v4189, 0.0
        %v4226 = vmax.f32 %v4190, 0.0
        %v4227 = vmax.f32 %v4191, 0.0
        %v4228 = vmax.f32 %v4192, 0.0
        %v4229 = vmax.f32 %v4193, 0.0
        %v4230 = vmax.f32 %v4194, 0.0
        %v4231 = vmax.f32 %v4195, 0.0
        %v4232 = vmax.f32 %v4196, 0.0
        %v4233 = vmax.f32 %v4197, 0.0
        %v4234 = vmax.f32 %v4198, 0.0
        %v4235 = vmax.f32 %v4199, 0.0
        %v4236 = vmax.f32 %v4200, 0.0
        %v4237 = vmax.f32 %v4201, 0.0
        %v4238 = vmax.f32 %v4202, 0.0
        %v4239 = vmax.f32 %v4203, 0.0
        %v4240 = vmax.f32 %v4204, 0.0
        %vm4241 = vcmask 261120
        %4242 = vst.msk [vmem:[#allocation6] sm:$0xff] %vm4241, %v4205
        %4243 = vst.msk [vmem:[#allocation6 + $0x8] sm:$0xff] %vm4241, %v4206
        %4244 = vst.msk [vmem:[#allocation6 + $0x10] sm:$0xff] %vm4241, %v4207
        %4245 = vst.msk [vmem:[#allocation6 + $0x18] sm:$0xff] %vm4241, %v4208
        %4246 = vst.msk [vmem:[#allocation6 + $0x20] sm:$0xff] %vm4241, %v4209
        %4247 = vst.msk [vmem:[#allocation6 + $0x28] sm:$0xff] %vm4241, %v4210
        %4248 = vst.msk [vmem:[#allocation6 + $0x30] sm:$0xff] %vm4241, %v4211
        %4249 = vst.msk [vmem:[#allocation6 + $0x38] sm:$0xff] %vm4241, %v4212
        %4250 = vst.msk [vmem:[#allocation6 + $0x40] sm:$0xff] %vm4241, %v4213
        %4251 = vst.msk [vmem:[#allocation6 + $0x48] sm:$0xff] %vm4241, %v4214
        %4252 = vst.msk [vmem:[#allocation6 + $0x50] sm:$0xff] %vm4241, %v4215
        %4253 = vst.msk [vmem:[#allocation6 + $0x58] sm:$0xff] %vm4241, %v4216
        %4254 = vst.msk [vmem:[#allocation6 + $0x60] sm:$0xff] %vm4241, %v4217
        %4255 = vst.msk [vmem:[#allocation6 + $0x68] sm:$0xff] %vm4241, %v4218
        %4256 = vst.msk [vmem:[#allocation6 + $0x70] sm:$0xff] %vm4241, %v4219
        %4257 = vst.msk [vmem:[#allocation6 + $0x78] sm:$0xff] %vm4241, %v4220
        %4258 = vst.msk [vmem:[#allocation6 + $0x80] sm:$0xff] %vm4241, %v4221
        %4259 = vst.msk [vmem:[#allocation6 + $0x88] sm:$0xff] %vm4241, %v4222
        %4260 = vst.msk [vmem:[#allocation6 + $0x90] sm:$0xff] %vm4241, %v4223
        %4261 = vst.msk [vmem:[#allocation6 + $0x98] sm:$0xff] %vm4241, %v4224
        %4262 = vst.msk [vmem:[#allocation6 + $0xa0] sm:$0xff] %vm4241, %v4225
        %4263 = vst.msk [vmem:[#allocation6 + $0xa8] sm:$0xff] %vm4241, %v4226
        %4264 = vst.msk [vmem:[#allocation6 + $0xb0] sm:$0xff] %vm4241, %v4227
        %4265 = vst.msk [vmem:[#allocation6 + $0xb8] sm:$0xff] %vm4241, %v4228
        %4266 = vst.msk [vmem:[#allocation6 + $0xc0] sm:$0xff] %vm4241, %v4229
        %4267 = vst.msk [vmem:[#allocation6 + $0xc8] sm:$0xff] %vm4241, %v4230
        %4268 = vst.msk [vmem:[#allocation6 + $0xd0] sm:$0xff] %vm4241, %v4231
        %4269 = vst.msk [vmem:[#allocation6 + $0xd8] sm:$0xff] %vm4241, %v4232
        %4270 = vst.msk [vmem:[#allocation6 + $0xe0] sm:$0xff] %vm4241, %v4233
        %4271 = vst.msk [vmem:[#allocation6 + $0xe8] sm:$0xff] %vm4241, %v4234
        %4272 = vst.msk [vmem:[#allocation6 + $0xf0] sm:$0xff] %vm4241, %v4235
        %4273 = vst.msk [vmem:[#allocation6 + $0xf8] sm:$0xff] %vm4241, %v4236
        %4274 = vst.msk [vmem:[#allocation6 + $0x100] sm:$0xff] %vm4241, %v4237
        %4275 = vst.msk [vmem:[#allocation6 + $0x108] sm:$0xff] %vm4241, %v4238
        %4276 = vst.msk [vmem:[#allocation6 + $0x110] sm:$0xff] %vm4241, %v4239
        %4277 = vst.msk [vmem:[#allocation6 + $0x118] sm:$0xff] %vm4241, %v4240
        %s4278 = scalar_lea.vmem [#allocation6], 1
        %v4279 = vld [vmem:[%s4278] ss:$2 sm:$0xff]
        %s4280 = scalar_lea.vmem [#allocation6], 2
        %v4281 = vld [vmem:[%s4280] ss:$2 sm:$0xff]
        %v4282 = vmax.f32 %v4279, %v4281
        %s4283 = scalar_lea.vmem [#allocation6], 19
        %v4284 = vld [vmem:[%s4283] ss:$2 sm:$0xff]
        %s4285 = scalar_lea.vmem [#allocation6], 20
        %v4286 = vld [vmem:[%s4285] ss:$2 sm:$0xff]
        %v4287 = vmax.f32 %v4284, %v4286
        %v4288 = vmax.f32 %v4282, %v4287
        %v4289 = vpack.c.bf16 %v4288, %v4288
        %v4291 = vunpack.c.l.b16 %v4289
        %v4292 = vpack.c.b16 %v4291, %v4291
        %v4293 = vrot.slane %v4292, 6
        %v4294 = vrot.slane %v4293, 4
        %vm4297 = vcmask 257026
        %4298 = vst.msk [vmem:[#allocation3 + $0x4] sm:$0xc] %vm4297, %v4293
        %vm4299 = vcmask 254976
        %4300 = vst.msk [vmem:[#allocation3 + $0x8] sm:$0x3] %vm4299, %v4294
        %s4301 = scalar_lea.vmem [#allocation6], 37
        %v4302 = vld [vmem:[%s4301] ss:$2 sm:$0xff]
        %s4303 = scalar_lea.vmem [#allocation6], 38
        %v4304 = vld [vmem:[%s4303] ss:$2 sm:$0xff]
        %v4305 = vmax.f32 %v4302, %v4304
        %s4306 = scalar_lea.vmem [#allocation6], 55
        %v4307 = vld [vmem:[%s4306] ss:$2 sm:$0xff]
        %s4308 = scalar_lea.vmem [#allocation6], 56
        %v4309 = vld [vmem:[%s4308] ss:$2 sm:$0xff]
        %v4310 = vmax.f32 %v4307, %v4309
        %v4311 = vmax.f32 %v4305, %v4310
        %v4312 = vpack.c.bf16 %v4311, %v4311
        %v4314 = vunpack.c.l.b16 %v4312
        %v4315 = vpack.c.b16 %v4314, %v4314
        %v4316 = vrot.slane %v4315, 5
        %v4317 = vrot.slane %v4316, 4
        %vm4320 = vcmask 257027
        %4321 = vst.msk [vmem:[#allocation3 + $0x8] sm:$0x8] %vm4320, %v4316
        %vm4322 = vcmask 256000
        %4323 = vst.msk [vmem:[#allocation3 + $0xc] sm:$0x7] %vm4322, %v4317
        %s4324 = scalar_lea.vmem [#allocation6], 73
        %v4325 = vld [vmem:[%s4324] ss:$2 sm:$0xff]
        %s4326 = scalar_lea.vmem [#allocation6], 74
        %v4327 = vld [vmem:[%s4326] ss:$2 sm:$0xff]
        %v4328 = vmax.f32 %v4325, %v4327
        %s4329 = scalar_lea.vmem [#allocation6], 91
        %v4330 = vld [vmem:[%s4329] ss:$2 sm:$0xff]
        %s4331 = scalar_lea.vmem [#allocation6], 92
        %v4332 = vld [vmem:[%s4331] ss:$2 sm:$0xff]
        %v4333 = vmax.f32 %v4330, %v4332
        %v4334 = vmax.f32 %v4328, %v4333
        %v4335 = vpack.c.bf16 %v4334, %v4334
        %vm4336 = vcmask 257024
        %4337 = vst.msk [vmem:[#allocation3 + $0x10] sm:$0xf] %vm4336, %v4335
        %s4338 = scalar_lea.vmem [#allocation6], 109
        %v4339 = vld [vmem:[%s4338] ss:$2 sm:$0xff]
        %s4340 = scalar_lea.vmem [#allocation6], 110
        %v4341 = vld [vmem:[%s4340] ss:$2 sm:$0xff]
        %v4342 = vmax.f32 %v4339, %v4341
        %s4343 = scalar_lea.vmem [#allocation6], 127
        %v4344 = vld [vmem:[%s4343] ss:$2 sm:$0xff]
        %s4345 = scalar_lea.vmem [#allocation6], 128
        %v4346 = vld [vmem:[%s4345] ss:$2 sm:$0xff]
        %v4347 = vmax.f32 %v4344, %v4346
        %v4348 = vmax.f32 %v4342, %v4347
        %v4349 = vpack.c.bf16 %v4348, %v4348
        %v4351 = vunpack.c.l.b16 %v4349
        %v4352 = vpack.c.b16 %v4351, %v4351
        %v4353 = vrot.slane %v4352, 7
        %v4354 = vrot.slane %v4353, 4
        %vm4357 = vcmask 257025
        %4358 = vst.msk [vmem:[#allocation3 + $0x14] sm:$0xe] %vm4357, %v4353
        %vm4359 = vcmask 253952
        %4360 = vst.msk [vmem:[#allocation3 + $0x18] sm:$0x1] %vm4359, %v4354
        %s4361 = scalar_lea.vmem [#allocation6], 145
        %v4362 = vld [vmem:[%s4361] ss:$2 sm:$0xff]
        %s4363 = scalar_lea.vmem [#allocation6], 146
        %v4364 = vld [vmem:[%s4363] ss:$2 sm:$0xff]
        %v4365 = vmax.f32 %v4362, %v4364
        %s4366 = scalar_lea.vmem [#allocation6], 163
        %v4367 = vld [vmem:[%s4366] ss:$2 sm:$0xff]
        %s4368 = scalar_lea.vmem [#allocation6], 164
        %v4369 = vld [vmem:[%s4368] ss:$2 sm:$0xff]
        %v4370 = vmax.f32 %v4367, %v4369
        %v4371 = vmax.f32 %v4365, %v4370
        %v4372 = vpack.c.bf16 %v4371, %v4371
        %v4374 = vunpack.c.l.b16 %v4372
        %v4375 = vpack.c.b16 %v4374, %v4374
        %v4376 = vrot.slane %v4375, 6
        %v4377 = vrot.slane %v4376, 4
        %4380 = vst.msk [vmem:[#allocation3 + $0x18] sm:$0xc] %vm4297, %v4376
        %4381 = vst.msk [vmem:[#allocation3 + $0x1c] sm:$0x3] %vm4299, %v4377
        %s4382 = scalar_lea.vmem [#allocation6], 181
        %v4383 = vld [vmem:[%s4382] ss:$2 sm:$0xff]
        %s4384 = scalar_lea.vmem [#allocation6], 182
        %v4385 = vld [vmem:[%s4384] ss:$2 sm:$0xff]
        %v4386 = vmax.f32 %v4383, %v4385
        %s4387 = scalar_lea.vmem [#allocation6], 199
        %v4388 = vld [vmem:[%s4387] ss:$2 sm:$0xff]
        %s4389 = scalar_lea.vmem [#allocation6], 200
        %v4390 = vld [vmem:[%s4389] ss:$2 sm:$0xff]
        %v4391 = vmax.f32 %v4388, %v4390
        %v4392 = vmax.f32 %v4386, %v4391
        %v4393 = vpack.c.bf16 %v4392, %v4392
        %v4395 = vunpack.c.l.b16 %v4393
        %v4396 = vpack.c.b16 %v4395, %v4395
        %v4397 = vrot.slane %v4396, 5
        %v4398 = vrot.slane %v4397, 4
        %4401 = vst.msk [vmem:[#allocation3 + $0x1c] sm:$0x8] %vm4320, %v4397
        %4402 = vst.msk [vmem:[#allocation3 + $0x20] sm:$0x7] %vm4322, %v4398
        %s4403 = scalar_lea.vmem [#allocation6], 217
        %v4404 = vld [vmem:[%s4403] ss:$2 sm:$0xff]
        %s4405 = scalar_lea.vmem [#allocation6], 218
        %v4406 = vld [vmem:[%s4405] ss:$2 sm:$0xff]
        %v4407 = vmax.f32 %v4404, %v4406
        %s4408 = scalar_lea.vmem [#allocation6], 235
        %v4409 = vld [vmem:[%s4408] ss:$2 sm:$0xff]
        %s4410 = scalar_lea.vmem [#allocation6], 236
        %v4411 = vld [vmem:[%s4410] ss:$2 sm:$0xff]
        %v4412 = vmax.f32 %v4409, %v4411
        %v4413 = vmax.f32 %v4407, %v4412
        %v4414 = vpack.c.bf16 %v4413, %v4413
        %4415 = vst.msk [vmem:[#allocation3 + $0x24] sm:$0xf] %vm4336, %v4414
        %s4416 = scalar_lea.vmem [#allocation6], 253
        %v4417 = vld [vmem:[%s4416] ss:$2 sm:$0xff]
        %s4418 = scalar_lea.vmem [#allocation6], 254
        %v4419 = vld [vmem:[%s4418] ss:$2 sm:$0xff]
        %v4420 = vmax.f32 %v4417, %v4419
        %s4421 = scalar_lea.vmem [#allocation6], 271
        %v4422 = vld [vmem:[%s4421] ss:$2 sm:$0xff]
        %s4423 = scalar_lea.vmem [#allocation6], 272
        %v4424 = vld [vmem:[%s4423] ss:$2 sm:$0xff]
        %v4425 = vmax.f32 %v4422, %v4424
        %v4426 = vmax.f32 %v4420, %v4425
        %v4427 = vpack.c.bf16 %v4426, %v4426
        %v4429 = vunpack.c.l.b16 %v4427
        %v4430 = vpack.c.b16 %v4429, %v4429
        %v4431 = vrot.slane %v4430, 7
        %v4432 = vrot.slane %v4431, 4
        %4435 = vst.msk [vmem:[#allocation3 + $0x28] sm:$0xe] %vm4357, %v4431
        %4436 = vst.msk [vmem:[#allocation3 + $0x2c] sm:$0x1] %vm4359, %v4432
        %v4437 = vld [vmem:[#allocation3] sm:$0xf]
        %v4438 = vld [vmem:[#allocation3 + $0x4] sm:$0xf]
        %v4439 = vld [vmem:[#allocation3 + $0x8] sm:$0xf]
        %v4440 = vld [vmem:[#allocation3 + $0xc] sm:$0xf]
        %v4441 = vld [vmem:[#allocation3 + $0x10] sm:$0xf]
        %v4442 = vld [vmem:[#allocation3 + $0x14] sm:$0xf]
        %v4443 = vld [vmem:[#allocation3 + $0x18] sm:$0xf]
        %v4444 = vld [vmem:[#allocation3 + $0x1c] sm:$0xf]
        %v4445 = vld [vmem:[#allocation3 + $0x20] sm:$0xf]
        %v4446 = vld [vmem:[#allocation3 + $0x24] sm:$0xf]
        %v4447 = vld [vmem:[%s2] sm:$0xf]
        %v4448 = vld [vmem:[%s2 + $0x4] sm:$0xf]
        %v4449 = vld [vmem:[%s2 + $0x8] sm:$0xf]
        %v4450 = vld [vmem:[%s2 + $0xc] sm:$0xf]
        %v4451 = vld [vmem:[#allocation3 + $0x28] sm:$0x1]
        %s4452 = scalar_lea.vmem %s2, 16
        %v4453 = vld [vmem:[%s4452] sm:$0xf]
        %v4454 = vld [vmem:[%s4452 + $0x4] sm:$0xf]
        %v4455 = vld [vmem:[%s4452 + $0x8] sm:$0xf]
        %v4456 = vld [vmem:[%s4452 + $0xc] sm:$0xf]
        %v4468 = vunpack.c.l.b16 %v4437
        %v4469 = vunpack.c.l.b16 %v4438
        %v4470 = vunpack.c.l.b16 %v4439
        %v4471 = vunpack.c.l.b16 %v4440
        %v4472 = vunpack.c.l.b16 %v4441
        %v4473 = vunpack.c.l.b16 %v4442
        %v4474 = vunpack.c.l.b16 %v4443
        %v4475 = vunpack.c.l.b16 %v4444
        %v4476 = vunpack.c.l.b16 %v4445
        %v4477 = vunpack.c.l.b16 %v4446
        %v4478 = vunpack.c.l.b16 %v4451
        %v4479 = vpack.c.b16 %v4469, %v4468
        %v4480 = vpack.c.b16 %v4471, %v4470
        %v4481 = vpack.c.b16 %v4473, %v4472
        %v4482 = vpack.c.b16 %v4475, %v4474
        %v4483 = vpack.c.b16 %v4477, %v4476
        %v4484 = vpack.c.b16 %v4478, %v4478
        %v4486 = vshrl.u32 %v4479, 16
        %v4488 = vshll.u32 %v4479, 16
        %v4490 = vrot.slane %v4488, 1
        %v4491 = vor.u32 %v4486, %v4490
        %v4493 = vshll.u32 %v4480, 16
        %v4495 = vrot.slane %v4493, 1
        %v4496 = vsel %vm847, %v4491, %v4495
        %v4497 = vshrl.u32 %v4480, 16
        %v4499 = vor.u32 %v4497, %v4495
        %v4501 = vshll.u32 %v4481, 16
        %v4503 = vrot.slane %v4501, 1
        %v4504 = vsel %vm847, %v4499, %v4503
        %v4505 = vshrl.u32 %v4481, 16
        %v4507 = vor.u32 %v4505, %v4503
        %v4509 = vshll.u32 %v4482, 16
        %v4511 = vrot.slane %v4509, 1
        %v4512 = vsel %vm847, %v4507, %v4511
        %v4513 = vshrl.u32 %v4482, 16
        %v4515 = vor.u32 %v4513, %v4511
        %v4517 = vshll.u32 %v4483, 16
        %v4519 = vrot.slane %v4517, 1
        %v4520 = vsel %vm847, %v4515, %v4519
        %v4521 = vshrl.u32 %v4483, 16
        %v4523 = vor.u32 %v4521, %v4519
        %v4525 = vshll.u32 %v4484, 16
        %v4527 = vrot.slane %v4525, 1
        %v4528 = vsel %vm847, %v4523, %v4527
        %v4533 = vunpack.c.l.b16 %v4453
        %v4534 = vunpack.c.l.b16 %v4454
        %v4535 = vunpack.c.l.b16 %v4455
        %v4536 = vunpack.c.l.b16 %v4456
        %v4537 = vpack.c.b16 %v4534, %v4533
        %v4538 = vpack.c.b16 %v4536, %v4535
        %v4542 = vsel %vm4241, %v4496, 0
        %v4545 = vsel %vm4241, %v4504, 0
        %v4548 = vsel %vm4241, %v4512, 0
        %v4551 = vsel %vm4241, %v4520, 0
        %v4554 = vsel %vm4241, %v4528, 0
        %4556 = vmatprep.subr.bf16.mxu0 0
        %4557 = vmatpush1.bf16.msra.mxu0 %v4537
        %4558 = vmatprep.subr.bf16.mxu0 0
        %4559 = vmatpush1.bf16.msra.mxu0 %v4538
        %4560 = vmatprep.subr.bf16.mxu0 0
        %4561 = vmatpush1.bf16.msra.mxu0 0
        %4562 = vmatprep.subr.bf16.mxu0 0
        %4563 = vmatpush1.bf16.msra.mxu0 0
        %4564 = vmatprep.subr.bf16.mxu0 0
        %4565 = vmatpush1.bf16.msra.mxu0 0
        %4566 = vmatprep.subr.bf16.mxu0 0
        %4567 = vmatpush1.bf16.msra.mxu0 0
        %4568 = vmatprep.subr.bf16.mxu0 0
        %4569 = vmatpush1.bf16.msra.mxu0 0
        %4570 = vmatprep.subr.bf16.mxu0 0
        %4571 = vmatpush1.bf16.msra.mxu0 0
        %4572 = vmatprep.subr.bf16.mxu0 0
        %4573 = vmatpush1.bf16.msra.mxu0 0
        %4574 = vmatprep.subr.bf16.mxu0 0
        %4575 = vmatpush1.bf16.msra.mxu0 0
        %4576 = vmatprep.subr.bf16.mxu0 0
        %4577 = vmatpush1.bf16.msra.mxu0 0
        %4578 = vmatprep.subr.bf16.mxu0 0
        %4579 = vmatpush1.bf16.msra.mxu0 0
        %4580 = vmatprep.subr.bf16.mxu0 0
        %4581 = vmatpush1.bf16.msra.mxu0 0
        %4582 = vmatprep.subr.bf16.mxu0 0
        %4583 = vmatpush1.bf16.msra.mxu0 0
        %4584 = vmatprep.subr.bf16.mxu0 0
        %4585 = vmatpush1.bf16.msra.mxu0 0
        %4586 = vmatprep.subr.bf16.mxu0 0
        %4587 = vmatpush1.bf16.msra.mxu0 0
        %4588 = vmatprep.mubr.bf16.mxu0 0
        %4589 = vmatmul.mubr.bf16.gmra.mrb[0].mxu0 %v4542
        %v4590 = vpop.f32.mrb[0].mxu0
        %v4591 = vadd.f32 0.0, %v4590
        %v4592 = vpop.f32.mrb[0].mxu0
        %v4593 = vpop.f32.mrb[0].mxu0
        %v4594 = vadd.f32 0.0, %v4593
        %v4595 = vpop.f32.mrb[0].mxu0
        %4596 = vmatprep.mubr.bf16.mxu0 0
        %4597 = vmatmul.mubr.bf16.gmra.mrb[0].mxu0 %v4545
        %v4598 = vpop.f32.mrb[0].mxu0
        %v4599 = vadd.f32 0.0, %v4598
        %v4600 = vpop.f32.mrb[0].mxu0
        %v4601 = vpop.f32.mrb[0].mxu0
        %v4602 = vadd.f32 0.0, %v4601
        %v4603 = vpop.f32.mrb[0].mxu0
        %4604 = vmatprep.mubr.bf16.mxu0 0
        %4605 = vmatmul.mubr.bf16.gmra.mrb[0].mxu0 %v4548
        %v4606 = vpop.f32.mrb[0].mxu0
        %v4607 = vadd.f32 0.0, %v4606
        %v4608 = vpop.f32.mrb[0].mxu0
        %v4609 = vpop.f32.mrb[0].mxu0
        %v4610 = vadd.f32 0.0, %v4609
        %v4611 = vpop.f32.mrb[0].mxu0
        %4612 = vmatprep.mubr.bf16.mxu0 0
        %4613 = vmatmul.mubr.bf16.gmra.mrb[0].mxu0 %v4551
        %v4614 = vpop.f32.mrb[0].mxu0
        %v4615 = vadd.f32 0.0, %v4614
        %v4616 = vpop.f32.mrb[0].mxu0
        %v4617 = vpop.f32.mrb[0].mxu0
        %v4618 = vadd.f32 0.0, %v4617
        %v4619 = vpop.f32.mrb[0].mxu0
        %4620 = vmatprep.mubr.bf16.mxu0 0
        %4621 = vmatmul.mubr.bf16.gmra.mrb[0].mxu0 %v4554
        %v4622 = vpop.f32.mrb[0].mxu0
        %v4623 = vadd.f32 0.0, %v4622
        %v4624 = vpop.f32.mrb[0].mxu0
        %v4625 = vpop.f32.mrb[0].mxu0
        %v4626 = vadd.f32 0.0, %v4625
        %v4627 = vpop.f32.mrb[0].mxu0
        %4628 = vdwg.mxu0
        %v4633 = vunpack.c.l.b16 %v4447
        %v4634 = vunpack.c.l.b16 %v4448
        %v4635 = vunpack.c.l.b16 %v4449
        %v4636 = vunpack.c.l.b16 %v4450
        %v4637 = vpack.c.b16 %v4634, %v4633
        %v4638 = vpack.c.b16 %v4636, %v4635
        %v4641 = vsel %vm4241, %v4479, 0
        %v4643 = vsel %vm4241, %v4480, 0
        %v4645 = vsel %vm4241, %v4481, 0
        %v4647 = vsel %vm4241, %v4482, 0
        %v4649 = vsel %vm4241, %v4483, 0
        %4651 = vmatprep.subr.bf16.mxu0 0
        %4652 = vmatpush1.bf16.msra.mxu0 %v4637
        %4653 = vmatprep.subr.bf16.mxu0 0
        %4654 = vmatpush1.bf16.msra.mxu0 %v4638
        %4655 = vmatprep.subr.bf16.mxu0 0
        %4656 = vmatpush1.bf16.msra.mxu0 0
        %4657 = vmatprep.subr.bf16.mxu0 0
        %4658 = vmatpush1.bf16.msra.mxu0 0
        %4659 = vmatprep.subr.bf16.mxu0 0
        %4660 = vmatpush1.bf16.msra.mxu0 0
        %4661 = vmatprep.subr.bf16.mxu0 0
        %4662 = vmatpush1.bf16.msra.mxu0 0
        %4663 = vmatprep.subr.bf16.mxu0 0
        %4664 = vmatpush1.bf16.msra.mxu0 0
        %4665 = vmatprep.subr.bf16.mxu0 0
        %4666 = vmatpush1.bf16.msra.mxu0 0
        %4667 = vmatprep.subr.bf16.mxu0 0
        %4668 = vmatpush1.bf16.msra.mxu0 0
        %4669 = vmatprep.subr.bf16.mxu0 0
        %4670 = vmatpush1.bf16.msra.mxu0 0
        %4671 = vmatprep.subr.bf16.mxu0 0
        %4672 = vmatpush1.bf16.msra.mxu0 0
        %4673 = vmatprep.subr.bf16.mxu0 0
        %4674 = vmatpush1.bf16.msra.mxu0 0
        %4675 = vmatprep.subr.bf16.mxu0 0
        %4676 = vmatpush1.bf16.msra.mxu0 0
        %4677 = vmatprep.subr.bf16.mxu0 0
        %4678 = vmatpush1.bf16.msra.mxu0 0
        %4679 = vmatprep.subr.bf16.mxu0 0
        %4680 = vmatpush1.bf16.msra.mxu0 0
        %4681 = vmatprep.subr.bf16.mxu0 0
        %4682 = vmatpush1.bf16.msra.mxu0 0
        %4683 = vmatprep.mubr.bf16.mxu0 0
        %4684 = vmatmul.mubr.bf16.gmra.mrb[0].mxu0 %v4641
        %v4685 = vpop.f32.mrb[0].mxu0
        %v4686 = vadd.f32 %v4591, %v4685
        %v4687 = vpop.f32.mrb[0].mxu0
        %v4688 = vpop.f32.mrb[0].mxu0
        %v4689 = vadd.f32 %v4594, %v4688
        %v4690 = vpop.f32.mrb[0].mxu0
        %4691 = vmatprep.mubr.bf16.mxu0 0
        %4692 = vmatmul.mubr.bf16.gmra.mrb[0].mxu0 %v4643
        %v4693 = vpop.f32.mrb[0].mxu0
        %v4694 = vadd.f32 %v4599, %v4693
        %v4695 = vpop.f32.mrb[0].mxu0
        %v4696 = vpop.f32.mrb[0].mxu0
        %v4697 = vadd.f32 %v4602, %v4696
        %v4698 = vpop.f32.mrb[0].mxu0
        %4699 = vmatprep.mubr.bf16.mxu0 0
        %4700 = vmatmul.mubr.bf16.gmra.mrb[0].mxu0 %v4645
        %v4701 = vpop.f32.mrb[0].mxu0
        %v4702 = vadd.f32 %v4607, %v4701
        %v4703 = vpop.f32.mrb[0].mxu0
        %v4704 = vpop.f32.mrb[0].mxu0
        %v4705 = vadd.f32 %v4610, %v4704
        %v4706 = vpop.f32.mrb[0].mxu0
        %4707 = vmatprep.mubr.bf16.mxu0 0
        %4708 = vmatmul.mubr.bf16.gmra.mrb[0].mxu0 %v4647
        %v4709 = vpop.f32.mrb[0].mxu0
        %v4710 = vadd.f32 %v4615, %v4709
        %v4711 = vpop.f32.mrb[0].mxu0
        %v4712 = vpop.f32.mrb[0].mxu0
        %v4713 = vadd.f32 %v4618, %v4712
        %v4714 = vpop.f32.mrb[0].mxu0
        %4715 = vmatprep.mubr.bf16.mxu0 0
        %4716 = vmatmul.mubr.bf16.gmra.mrb[0].mxu0 %v4649
        %v4717 = vpop.f32.mrb[0].mxu0
        %v4718 = vadd.f32 %v4623, %v4717
        %v4719 = vpop.f32.mrb[0].mxu0
        %v4720 = vpop.f32.mrb[0].mxu0
        %v4721 = vadd.f32 %v4626, %v4720
        %v4722 = vpop.f32.mrb[0].mxu0
        %4723 = vdwg.mxu0
        %v4724 = vld [vmem:[#allocation3] sm:$0xe]
        %s4725 = scalar_lea.vmem %s2, 32
        %v4726 = vld [vmem:[%s4725] sm:$0xf]
        %v4727 = vld [vmem:[%s4725 + $0x4] sm:$0xf]
        %v4728 = vld [vmem:[%s4725 + $0x8] sm:$0xf]
        %v4729 = vld [vmem:[%s4725 + $0xc] sm:$0xf]
        %v4731 = vunpack.c.l.b16 %v4724
        %v4732 = vpack.c.b16 %v4469, %v4731
        %v4733 = vrot.slane %v4732, 1
        %v4734 = vrot.slane %v4480, 1
        %v4735 = vsel %vm1454, %v4733, %v4734
        %v4736 = vrot.slane %v4481, 1
        %v4737 = vsel %vm1454, %v4734, %v4736
        %v4738 = vrot.slane %v4482, 1
        %v4739 = vsel %vm1454, %v4736, %v4738
        %v4740 = vrot.slane %v4483, 1
        %v4741 = vsel %vm1454, %v4738, %v4740
        %v4742 = vrot.slane %v4484, 1
        %v4743 = vsel %vm1454, %v4740, %v4742
        %v4748 = vunpack.c.l.b16 %v4726
        %v4749 = vunpack.c.l.b16 %v4727
        %v4750 = vunpack.c.l.b16 %v4728
        %v4751 = vunpack.c.l.b16 %v4729
        %v4752 = vpack.c.b16 %v4749, %v4748
        %v4753 = vpack.c.b16 %v4751, %v4750
        %v4757 = vsel %vm4241, %v4735, 0
        %v4760 = vsel %vm4241, %v4737, 0
        %v4763 = vsel %vm4241, %v4739, 0
        %v4766 = vsel %vm4241, %v4741, 0
        %v4769 = vsel %vm4241, %v4743, 0
        %4771 = vmatprep.subr.bf16.mxu0 0
        %4772 = vmatpush1.bf16.msra.mxu0 %v4752
        %4773 = vmatprep.subr.bf16.mxu0 0
        %4774 = vmatpush1.bf16.msra.mxu0 %v4753
        %4775 = vmatprep.subr.bf16.mxu0 0
        %4776 = vmatpush1.bf16.msra.mxu0 0
        %4777 = vmatprep.subr.bf16.mxu0 0
        %4778 = vmatpush1.bf16.msra.mxu0 0
        %4779 = vmatprep.subr.bf16.mxu0 0
        %4780 = vmatpush1.bf16.msra.mxu0 0
        %4781 = vmatprep.subr.bf16.mxu0 0
        %4782 = vmatpush1.bf16.msra.mxu0 0
        %4783 = vmatprep.subr.bf16.mxu0 0
        %4784 = vmatpush1.bf16.msra.mxu0 0
        %4785 = vmatprep.subr.bf16.mxu0 0
        %4786 = vmatpush1.bf16.msra.mxu0 0
        %4787 = vmatprep.subr.bf16.mxu0 0
        %4788 = vmatpush1.bf16.msra.mxu0 0
        %4789 = vmatprep.subr.bf16.mxu0 0
        %4790 = vmatpush1.bf16.msra.mxu0 0
        %4791 = vmatprep.subr.bf16.mxu0 0
        %4792 = vmatpush1.bf16.msra.mxu0 0
        %4793 = vmatprep.subr.bf16.mxu0 0
        %4794 = vmatpush1.bf16.msra.mxu0 0
        %4795 = vmatprep.subr.bf16.mxu0 0
        %4796 = vmatpush1.bf16.msra.mxu0 0
        %4797 = vmatprep.subr.bf16.mxu0 0
        %4798 = vmatpush1.bf16.msra.mxu0 0
        %4799 = vmatprep.subr.bf16.mxu0 0
        %4800 = vmatpush1.bf16.msra.mxu0 0
        %4801 = vmatprep.subr.bf16.mxu0 0
        %4802 = vmatpush1.bf16.msra.mxu0 0
        %4803 = vmatprep.mubr.bf16.mxu0 0
        %4804 = vmatmul.mubr.bf16.gmra.mrb[0].mxu0 %v4757
        %v4805 = vpop.f32.mrb[0].mxu0
        %v4806 = vadd.f32 0.0, %v4805
        %v4807 = vpop.f32.mrb[0].mxu0
        %v4808 = vpop.f32.mrb[0].mxu0
        %v4809 = vadd.f32 0.0, %v4808
        %v4810 = vpop.f32.mrb[0].mxu0
        %4811 = vmatprep.mubr.bf16.mxu0 0
        %4812 = vmatmul.mubr.bf16.gmra.mrb[0].mxu0 %v4760
        %v4813 = vpop.f32.mrb[0].mxu0
        %v4814 = vadd.f32 0.0, %v4813
        %v4815 = vpop.f32.mrb[0].mxu0
        %v4816 = vpop.f32.mrb[0].mxu0
        %v4817 = vadd.f32 0.0, %v4816
        %v4818 = vpop.f32.mrb[0].mxu0
        %4819 = vmatprep.mubr.bf16.mxu0 0
        %4820 = vmatmul.mubr.bf16.gmra.mrb[0].mxu0 %v4763
        %v4821 = vpop.f32.mrb[0].mxu0
        %v4822 = vadd.f32 0.0, %v4821
        %v4823 = vpop.f32.mrb[0].mxu0
        %v4824 = vpop.f32.mrb[0].mxu0
        %v4825 = vadd.f32 0.0, %v4824
        %v4826 = vpop.f32.mrb[0].mxu0
        %4827 = vmatprep.mubr.bf16.mxu0 0
        %4828 = vmatmul.mubr.bf16.gmra.mrb[0].mxu0 %v4766
        %v4829 = vpop.f32.mrb[0].mxu0
        %v4830 = vadd.f32 0.0, %v4829
        %v4831 = vpop.f32.mrb[0].mxu0
        %v4832 = vpop.f32.mrb[0].mxu0
        %v4833 = vadd.f32 0.0, %v4832
        %v4834 = vpop.f32.mrb[0].mxu0
        %4835 = vmatprep.mubr.bf16.mxu0 0
        %4836 = vmatmul.mubr.bf16.gmra.mrb[0].mxu0 %v4769
        %v4837 = vpop.f32.mrb[0].mxu0
        %v4838 = vadd.f32 0.0, %v4837
        %v4839 = vpop.f32.mrb[0].mxu0
        %v4840 = vpop.f32.mrb[0].mxu0
        %v4841 = vadd.f32 0.0, %v4840
        %v4842 = vpop.f32.mrb[0].mxu0
        %4843 = vdwg.mxu0
        %v4844 = vadd.f32 %v4686, %v4806
        %v4845 = vadd.f32 %v4689, %v4809
        %v4846 = vadd.f32 %v4694, %v4814
        %v4847 = vadd.f32 %v4697, %v4817
        %v4848 = vadd.f32 %v4702, %v4822
        %v4849 = vadd.f32 %v4705, %v4825
        %v4850 = vadd.f32 %v4710, %v4830
        %v4851 = vadd.f32 %v4713, %v4833
        %v4852 = vadd.f32 %v4718, %v4838
        %v4853 = vadd.f32 %v4721, %v4841
        %v4854 = vld [vmem:[#allocation3 + $0x4] sm:$0xe]
        %v4855 = vld [vmem:[#allocation3 + $0x8] sm:$0xf]
        %v4856 = vld [vmem:[#allocation3 + $0xc] sm:$0xf]
        %v4857 = vld [vmem:[#allocation3 + $0x10] sm:$0xf]
        %v4858 = vld [vmem:[#allocation3 + $0x14] sm:$0xf]
        %v4859 = vld [vmem:[#allocation3 + $0x18] sm:$0xf]
        %v4860 = vld [vmem:[#allocation3 + $0x1c] sm:$0xf]
        %v4861 = vld [vmem:[#allocation3 + $0x20] sm:$0xf]
        %v4862 = vld [vmem:[#allocation3 + $0x24] sm:$0xf]
        %v4863 = vld [vmem:[#allocation3 + $0x28] sm:$0xf]
        %v4864 = vld [vmem:[#allocation3 + $0x2c] sm:$0x1]
        %s4865 = scalar_lea.vmem %s2, 48
        %v4866 = vld [vmem:[%s4865] sm:$0xf]
        %v4867 = vld [vmem:[%s4865 + $0x4] sm:$0xf]
        %v4868 = vld [vmem:[%s4865 + $0x8] sm:$0xf]
        %v4869 = vld [vmem:[%s4865 + $0xc] sm:$0xf]
        %v4881 = vunpack.c.l.b16 %v4854
        %v4882 = vunpack.c.l.b16 %v4855
        %v4883 = vunpack.c.l.b16 %v4856
        %v4884 = vunpack.c.l.b16 %v4857
        %v4885 = vunpack.c.l.b16 %v4858
        %v4886 = vunpack.c.l.b16 %v4859
        %v4887 = vunpack.c.l.b16 %v4860
        %v4888 = vunpack.c.l.b16 %v4861
        %v4889 = vunpack.c.l.b16 %v4862
        %v4890 = vunpack.c.l.b16 %v4863
        %v4891 = vunpack.c.l.b16 %v4864
        %v4892 = vpack.c.b16 %v4882, %v4881
        %v4893 = vpack.c.b16 %v4884, %v4883
        %v4894 = vpack.c.b16 %v4886, %v4885
        %v4895 = vpack.c.b16 %v4888, %v4887
        %v4896 = vpack.c.b16 %v4890, %v4889
        %v4897 = vpack.c.b16 %v4891, %v4891
        %v4898 = vrot.slane %v4892, 1
        %v4899 = vrot.slane %v4893, 1
        %v4900 = vsel %vm1454, %v4898, %v4899
        %v4901 = vrot.slane %v4894, 1
        %v4902 = vsel %vm1454, %v4899, %v4901
        %v4903 = vrot.slane %v4895, 1
        %v4904 = vsel %vm1454, %v4901, %v4903
        %v4905 = vrot.slane %v4896, 1
        %v4906 = vsel %vm1454, %v4903, %v4905
        %v4907 = vrot.slane %v4897, 1
        %v4908 = vsel %vm1454, %v4905, %v4907
        %v4913 = vunpack.c.l.b16 %v4866
        %v4914 = vunpack.c.l.b16 %v4867
        %v4915 = vunpack.c.l.b16 %v4868
        %v4916 = vunpack.c.l.b16 %v4869
        %v4917 = vpack.c.b16 %v4914, %v4913
        %v4918 = vpack.c.b16 %v4916, %v4915
        %v4922 = vsel %vm4241, %v4900, 0
        %v4925 = vsel %vm4241, %v4902, 0
        %v4928 = vsel %vm4241, %v4904, 0
        %v4931 = vsel %vm4241, %v4906, 0
        %v4934 = vsel %vm4241, %v4908, 0
        %4936 = vmatprep.subr.bf16.mxu0 0
        %4937 = vmatpush1.bf16.msra.mxu0 %v4917
        %4938 = vmatprep.subr.bf16.mxu0 0
        %4939 = vmatpush1.bf16.msra.mxu0 %v4918
        %4940 = vmatprep.subr.bf16.mxu0 0
        %4941 = vmatpush1.bf16.msra.mxu0 0
        %4942 = vmatprep.subr.bf16.mxu0 0
        %4943 = vmatpush1.bf16.msra.mxu0 0
        %4944 = vmatprep.subr.bf16.mxu0 0
        %4945 = vmatpush1.bf16.msra.mxu0 0
        %4946 = vmatprep.subr.bf16.mxu0 0
        %4947 = vmatpush1.bf16.msra.mxu0 0
        %4948 = vmatprep.subr.bf16.mxu0 0
        %4949 = vmatpush1.bf16.msra.mxu0 0
        %4950 = vmatprep.subr.bf16.mxu0 0
        %4951 = vmatpush1.bf16.msra.mxu0 0
        %4952 = vmatprep.subr.bf16.mxu0 0
        %4953 = vmatpush1.bf16.msra.mxu0 0
        %4954 = vmatprep.subr.bf16.mxu0 0
        %4955 = vmatpush1.bf16.msra.mxu0 0
        %4956 = vmatprep.subr.bf16.mxu0 0
        %4957 = vmatpush1.bf16.msra.mxu0 0
        %4958 = vmatprep.subr.bf16.mxu0 0
        %4959 = vmatpush1.bf16.msra.mxu0 0
        %4960 = vmatprep.subr.bf16.mxu0 0
        %4961 = vmatpush1.bf16.msra.mxu0 0
        %4962 = vmatprep.subr.bf16.mxu0 0
        %4963 = vmatpush1.bf16.msra.mxu0 0
        %4964 = vmatprep.subr.bf16.mxu0 0
        %4965 = vmatpush1.bf16.msra.mxu0 0
        %4966 = vmatprep.subr.bf16.mxu0 0
        %4967 = vmatpush1.bf16.msra.mxu0 0
        %4968 = vmatprep.mubr.bf16.mxu0 0
        %4969 = vmatmul.mubr.bf16.gmra.mrb[0].mxu0 %v4922
        %v4970 = vpop.f32.mrb[0].mxu0
        %v4971 = vadd.f32 0.0, %v4970
        %v4972 = vpop.f32.mrb[0].mxu0
        %v4973 = vpop.f32.mrb[0].mxu0
        %v4974 = vadd.f32 0.0, %v4973
        %v4975 = vpop.f32.mrb[0].mxu0
        %4976 = vmatprep.mubr.bf16.mxu0 0
        %4977 = vmatmul.mubr.bf16.gmra.mrb[0].mxu0 %v4925
        %v4978 = vpop.f32.mrb[0].mxu0
        %v4979 = vadd.f32 0.0, %v4978
        %v4980 = vpop.f32.mrb[0].mxu0
        %v4981 = vpop.f32.mrb[0].mxu0
        %v4982 = vadd.f32 0.0, %v4981
        %v4983 = vpop.f32.mrb[0].mxu0
        %4984 = vmatprep.mubr.bf16.mxu0 0
        %4985 = vmatmul.mubr.bf16.gmra.mrb[0].mxu0 %v4928
        %v4986 = vpop.f32.mrb[0].mxu0
        %v4987 = vadd.f32 0.0, %v4986
        %v4988 = vpop.f32.mrb[0].mxu0
        %v4989 = vpop.f32.mrb[0].mxu0
        %v4990 = vadd.f32 0.0, %v4989
        %v4991 = vpop.f32.mrb[0].mxu0
        %4992 = vmatprep.mubr.bf16.mxu0 0
        %4993 = vmatmul.mubr.bf16.gmra.mrb[0].mxu0 %v4931
        %v4994 = vpop.f32.mrb[0].mxu0
        %v4995 = vadd.f32 0.0, %v4994
        %v4996 = vpop.f32.mrb[0].mxu0
        %v4997 = vpop.f32.mrb[0].mxu0
        %v4998 = vadd.f32 0.0, %v4997
        %v4999 = vpop.f32.mrb[0].mxu0
        %5000 = vmatprep.mubr.bf16.mxu0 0
        %5001 = vmatmul.mubr.bf16.gmra.mrb[0].mxu0 %v4934
        %v5002 = vpop.f32.mrb[0].mxu0
        %v5003 = vadd.f32 0.0, %v5002
        %v5004 = vpop.f32.mrb[0].mxu0
        %v5005 = vpop.f32.mrb[0].mxu0
        %v5006 = vadd.f32 0.0, %v5005
        %v5007 = vpop.f32.mrb[0].mxu0
        %5008 = vdwg.mxu0
        %v5009 = vadd.f32 %v4844, %v4971
        %v5010 = vadd.f32 %v4845, %v4974
        %v5011 = vadd.f32 %v4846, %v4979
        %v5012 = vadd.f32 %v4847, %v4982
        %v5013 = vadd.f32 %v4848, %v4987
        %v5014 = vadd.f32 %v4849, %v4990
        %v5015 = vadd.f32 %v4850, %v4995
        %v5016 = vadd.f32 %v4851, %v4998
        %v5017 = vadd.f32 %v4852, %v5003
        %v5018 = vadd.f32 %v4853, %v5006
        %v5019 = vld [vmem:[#allocation3 + $0x2c] sm:$0x3]
        %s5020 = scalar_lea.vmem %s2, 64
        %v5021 = vld [vmem:[%s5020] sm:$0xf]
        %v5022 = vld [vmem:[%s5020 + $0x4] sm:$0xf]
        %v5023 = vld [vmem:[%s5020 + $0x8] sm:$0xf]
        %v5024 = vld [vmem:[%s5020 + $0xc] sm:$0xf]
        %v5026 = vunpack.c.l.b16 %v5019
        %v5027 = vpack.c.b16 %v5026, %v5026
        %v5029 = vshrl.u32 %v4892, 16
        %v5031 = vrot.slane %v5029, 1
        %v5032 = vshll.u32 %v4892, 16
        %v5034 = vrot.slane %v5032, 2
        %v5035 = vor.u32 %v5031, %v5034
        %v5037 = vshrl.u32 %v4893, 16
        %v5039 = vrot.slane %v5037, 1
        %v5040 = vshll.u32 %v4893, 16
        %v5042 = vrot.slane %v5040, 2
        %v5043 = vor.u32 %v5039, %v5042
        %v5044 = vsel %vm2207, %v5035, %v5043
        %v5046 = vshrl.u32 %v4894, 16
        %v5048 = vrot.slane %v5046, 1
        %v5049 = vshll.u32 %v4894, 16
        %v5051 = vrot.slane %v5049, 2
        %v5052 = vor.u32 %v5048, %v5051
        %v5053 = vsel %vm2207, %v5043, %v5052
        %v5055 = vshrl.u32 %v4895, 16
        %v5057 = vrot.slane %v5055, 1
        %v5058 = vshll.u32 %v4895, 16
        %v5060 = vrot.slane %v5058, 2
        %v5061 = vor.u32 %v5057, %v5060
        %v5062 = vsel %vm2207, %v5052, %v5061
        %v5064 = vshrl.u32 %v4896, 16
        %v5066 = vrot.slane %v5064, 1
        %v5067 = vshll.u32 %v4896, 16
        %v5069 = vrot.slane %v5067, 2
        %v5070 = vor.u32 %v5066, %v5069
        %v5071 = vsel %vm2207, %v5061, %v5070
        %v5073 = vshrl.u32 %v5027, 16
        %v5075 = vrot.slane %v5073, 1
        %v5076 = vshll.u32 %v5027, 16
        %v5078 = vrot.slane %v5076, 2
        %v5079 = vor.u32 %v5075, %v5078
        %v5080 = vsel %vm2207, %v5070, %v5079
        %v5085 = vunpack.c.l.b16 %v5021
        %v5086 = vunpack.c.l.b16 %v5022
        %v5087 = vunpack.c.l.b16 %v5023
        %v5088 = vunpack.c.l.b16 %v5024
        %v5089 = vpack.c.b16 %v5086, %v5085
        %v5090 = vpack.c.b16 %v5088, %v5087
        %v5094 = vsel %vm4241, %v5044, 0
        %v5097 = vsel %vm4241, %v5053, 0
        %v5100 = vsel %vm4241, %v5062, 0
        %v5103 = vsel %vm4241, %v5071, 0
        %v5106 = vsel %vm4241, %v5080, 0
        %5108 = vmatprep.subr.bf16.mxu0 0
        %5109 = vmatpush1.bf16.msra.mxu0 %v5089
        %5110 = vmatprep.subr.bf16.mxu0 0
        %5111 = vmatpush1.bf16.msra.mxu0 %v5090
        %5112 = vmatprep.subr.bf16.mxu0 0
        %5113 = vmatpush1.bf16.msra.mxu0 0
        %5114 = vmatprep.subr.bf16.mxu0 0
        %5115 = vmatpush1.bf16.msra.mxu0 0
        %5116 = vmatprep.subr.bf16.mxu0 0
        %5117 = vmatpush1.bf16.msra.mxu0 0
        %5118 = vmatprep.subr.bf16.mxu0 0
        %5119 = vmatpush1.bf16.msra.mxu0 0
        %5120 = vmatprep.subr.bf16.mxu0 0
        %5121 = vmatpush1.bf16.msra.mxu0 0
        %5122 = vmatprep.subr.bf16.mxu0 0
        %5123 = vmatpush1.bf16.msra.mxu0 0
        %5124 = vmatprep.subr.bf16.mxu0 0
        %5125 = vmatpush1.bf16.msra.mxu0 0
        %5126 = vmatprep.subr.bf16.mxu0 0
        %5127 = vmatpush1.bf16.msra.mxu0 0
        %5128 = vmatprep.subr.bf16.mxu0 0
        %5129 = vmatpush1.bf16.msra.mxu0 0
        %5130 = vmatprep.subr.bf16.mxu0 0
        %5131 = vmatpush1.bf16.msra.mxu0 0
        %5132 = vmatprep.subr.bf16.mxu0 0
        %5133 = vmatpush1.bf16.msra.mxu0 0
        %5134 = vmatprep.subr.bf16.mxu0 0
        %5135 = vmatpush1.bf16.msra.mxu0 0
        %5136 = vmatprep.subr.bf16.mxu0 0
        %5137 = vmatpush1.bf16.msra.mxu0 0
        %5138 = vmatprep.subr.bf16.mxu0 0
        %5139 = vmatpush1.bf16.msra.mxu0 0
        %5140 = vmatprep.mubr.bf16.mxu0 0
        %5141 = vmatmul.mubr.bf16.gmra.mrb[0].mxu0 %v5094
        %v5142 = vpop.f32.mrb[0].mxu0
        %v5143 = vadd.f32 0.0, %v5142
        %v5144 = vpop.f32.mrb[0].mxu0
        %v5145 = vpop.f32.mrb[0].mxu0
        %v5146 = vadd.f32 0.0, %v5145
        %v5147 = vpop.f32.mrb[0].mxu0
        %5148 = vmatprep.mubr.bf16.mxu0 0
        %5149 = vmatmul.mubr.bf16.gmra.mrb[0].mxu0 %v5097
        %v5150 = vpop.f32.mrb[0].mxu0
        %v5151 = vadd.f32 0.0, %v5150
        %v5152 = vpop.f32.mrb[0].mxu0
        %v5153 = vpop.f32.mrb[0].mxu0
        %v5154 = vadd.f32 0.0, %v5153
        %v5155 = vpop.f32.mrb[0].mxu0
        %5156 = vmatprep.mubr.bf16.mxu0 0
        %5157 = vmatmul.mubr.bf16.gmra.mrb[0].mxu0 %v5100
        %v5158 = vpop.f32.mrb[0].mxu0
        %v5159 = vadd.f32 0.0, %v5158
        %v5160 = vpop.f32.mrb[0].mxu0
        %v5161 = vpop.f32.mrb[0].mxu0
        %v5162 = vadd.f32 0.0, %v5161
        %v5163 = vpop.f32.mrb[0].mxu0
        %5164 = vmatprep.mubr.bf16.mxu0 0
        %5165 = vmatmul.mubr.bf16.gmra.mrb[0].mxu0 %v5103
        %v5166 = vpop.f32.mrb[0].mxu0
        %v5167 = vadd.f32 0.0, %v5166
        %v5168 = vpop.f32.mrb[0].mxu0
        %v5169 = vpop.f32.mrb[0].mxu0
        %v5170 = vadd.f32 0.0, %v5169
        %v5171 = vpop.f32.mrb[0].mxu0
        %5172 = vmatprep.mubr.bf16.mxu0 0
        %5173 = vmatmul.mubr.bf16.gmra.mrb[0].mxu0 %v5106
        %v5174 = vpop.f32.mrb[0].mxu0
        %v5175 = vadd.f32 0.0, %v5174
        %v5176 = vpop.f32.mrb[0].mxu0
        %v5177 = vpop.f32.mrb[0].mxu0
        %v5178 = vadd.f32 0.0, %v5177
        %v5179 = vpop.f32.mrb[0].mxu0
        %5180 = vdwg.mxu0
        %v5181 = vadd.f32 %v5009, %v5143
        %v5182 = vadd.f32 %v5010, %v5146
        %v5183 = vadd.f32 %v5011, %v5151
        %v5184 = vadd.f32 %v5012, %v5154
        %v5185 = vadd.f32 %v5013, %v5159
        %v5186 = vadd.f32 %v5014, %v5162
        %v5187 = vadd.f32 %v5015, %v5167
        %v5188 = vadd.f32 %v5016, %v5170
        %v5189 = vadd.f32 %v5017, %v5175
        %v5190 = vadd.f32 %v5018, %v5178
        %v5191 = vld [vmem:[#allocation3 + $0x4] sm:$0xc]
        %s5192 = scalar_lea.vmem %s2, 80
        %v5193 = vld [vmem:[%s5192] sm:$0xf]
        %v5194 = vld [vmem:[%s5192 + $0x4] sm:$0xf]
        %v5195 = vld [vmem:[%s5192 + $0x8] sm:$0xf]
        %v5196 = vld [vmem:[%s5192 + $0xc] sm:$0xf]
        %v5198 = vunpack.c.l.b16 %v5191
        %v5199 = vpack.c.b16 %v4882, %v5198
        %v5200 = vrot.slane %v5199, 2
        %v5201 = vrot.slane %v4893, 2
        %v5202 = vsel %vm2654, %v5200, %v5201
        %v5203 = vrot.slane %v4894, 2
        %v5204 = vsel %vm2654, %v5201, %v5203
        %v5205 = vrot.slane %v4895, 2
        %v5206 = vsel %vm2654, %v5203, %v5205
        %v5207 = vrot.slane %v4896, 2
        %v5208 = vsel %vm2654, %v5205, %v5207
        %v5209 = vrot.slane %v5027, 2
        %v5210 = vsel %vm2654, %v5207, %v5209
        %v5215 = vunpack.c.l.b16 %v5193
        %v5216 = vunpack.c.l.b16 %v5194
        %v5217 = vunpack.c.l.b16 %v5195
        %v5218 = vunpack.c.l.b16 %v5196
        %v5219 = vpack.c.b16 %v5216, %v5215
        %v5220 = vpack.c.b16 %v5218, %v5217
        %v5224 = vsel %vm4241, %v5202, 0
        %v5227 = vsel %vm4241, %v5204, 0
        %v5230 = vsel %vm4241, %v5206, 0
        %v5233 = vsel %vm4241, %v5208, 0
        %v5236 = vsel %vm4241, %v5210, 0
        %5238 = vmatprep.subr.bf16.mxu0 0
        %5239 = vmatpush1.bf16.msra.mxu0 %v5219
        %5240 = vmatprep.subr.bf16.mxu0 0
        %5241 = vmatpush1.bf16.msra.mxu0 %v5220
        %5242 = vmatprep.subr.bf16.mxu0 0
        %5243 = vmatpush1.bf16.msra.mxu0 0
        %5244 = vmatprep.subr.bf16.mxu0 0
        %5245 = vmatpush1.bf16.msra.mxu0 0
        %5246 = vmatprep.subr.bf16.mxu0 0
        %5247 = vmatpush1.bf16.msra.mxu0 0
        %5248 = vmatprep.subr.bf16.mxu0 0
        %5249 = vmatpush1.bf16.msra.mxu0 0
        %5250 = vmatprep.subr.bf16.mxu0 0
        %5251 = vmatpush1.bf16.msra.mxu0 0
        %5252 = vmatprep.subr.bf16.mxu0 0
        %5253 = vmatpush1.bf16.msra.mxu0 0
        %5254 = vmatprep.subr.bf16.mxu0 0
        %5255 = vmatpush1.bf16.msra.mxu0 0
        %5256 = vmatprep.subr.bf16.mxu0 0
        %5257 = vmatpush1.bf16.msra.mxu0 0
        %5258 = vmatprep.subr.bf16.mxu0 0
        %5259 = vmatpush1.bf16.msra.mxu0 0
        %5260 = vmatprep.subr.bf16.mxu0 0
        %5261 = vmatpush1.bf16.msra.mxu0 0
        %5262 = vmatprep.subr.bf16.mxu0 0
        %5263 = vmatpush1.bf16.msra.mxu0 0
        %5264 = vmatprep.subr.bf16.mxu0 0
        %5265 = vmatpush1.bf16.msra.mxu0 0
        %5266 = vmatprep.subr.bf16.mxu0 0
        %5267 = vmatpush1.bf16.msra.mxu0 0
        %5268 = vmatprep.subr.bf16.mxu0 0
        %5269 = vmatpush1.bf16.msra.mxu0 0
        %5270 = vmatprep.mubr.bf16.mxu0 0
        %5271 = vmatmul.mubr.bf16.gmra.mrb[0].mxu0 %v5224
        %v5272 = vpop.f32.mrb[0].mxu0
        %v5273 = vadd.f32 0.0, %v5272
        %v5274 = vpop.f32.mrb[0].mxu0
        %v5275 = vpop.f32.mrb[0].mxu0
        %v5276 = vadd.f32 0.0, %v5275
        %v5277 = vpop.f32.mrb[0].mxu0
        %5278 = vmatprep.mubr.bf16.mxu0 0
        %5279 = vmatmul.mubr.bf16.gmra.mrb[0].mxu0 %v5227
        %v5280 = vpop.f32.mrb[0].mxu0
        %v5281 = vadd.f32 0.0, %v5280
        %v5282 = vpop.f32.mrb[0].mxu0
        %v5283 = vpop.f32.mrb[0].mxu0
        %v5284 = vadd.f32 0.0, %v5283
        %v5285 = vpop.f32.mrb[0].mxu0
        %5286 = vmatprep.mubr.bf16.mxu0 0
        %5287 = vmatmul.mubr.bf16.gmra.mrb[0].mxu0 %v5230
        %v5288 = vpop.f32.mrb[0].mxu0
        %v5289 = vadd.f32 0.0, %v5288
        %v5290 = vpop.f32.mrb[0].mxu0
        %v5291 = vpop.f32.mrb[0].mxu0
        %v5292 = vadd.f32 0.0, %v5291
        %v5293 = vpop.f32.mrb[0].mxu0
        %5294 = vmatprep.mubr.bf16.mxu0 0
        %5295 = vmatmul.mubr.bf16.gmra.mrb[0].mxu0 %v5233
        %v5296 = vpop.f32.mrb[0].mxu0
        %v5297 = vadd.f32 0.0, %v5296
        %v5298 = vpop.f32.mrb[0].mxu0
        %v5299 = vpop.f32.mrb[0].mxu0
        %v5300 = vadd.f32 0.0, %v5299
        %v5301 = vpop.f32.mrb[0].mxu0
        %5302 = vmatprep.mubr.bf16.mxu0 0
        %5303 = vmatmul.mubr.bf16.gmra.mrb[0].mxu0 %v5236
        %v5304 = vpop.f32.mrb[0].mxu0
        %v5305 = vadd.f32 0.0, %v5304
        %v5306 = vpop.f32.mrb[0].mxu0
        %v5307 = vpop.f32.mrb[0].mxu0
        %v5308 = vadd.f32 0.0, %v5307
        %v5309 = vpop.f32.mrb[0].mxu0
        %5310 = vdwg.mxu0
        %v5311 = vadd.f32 %v5181, %v5273
        %v5312 = vadd.f32 %v5182, %v5276
        %v5313 = vadd.f32 %v5183, %v5281
        %v5314 = vadd.f32 %v5184, %v5284
        %v5315 = vadd.f32 %v5185, %v5289
        %v5316 = vadd.f32 %v5186, %v5292
        %v5317 = vadd.f32 %v5187, %v5297
        %v5318 = vadd.f32 %v5188, %v5300
        %v5319 = vadd.f32 %v5189, %v5305
        %v5320 = vadd.f32 %v5190, %v5308
        %v5321 = vld [vmem:[#allocation3 + $0x8] sm:$0xc]
        %v5322 = vld [vmem:[#allocation3 + $0xc] sm:$0xf]
        %v5323 = vld [vmem:[#allocation3 + $0x10] sm:$0xf]
        %v5324 = vld [vmem:[#allocation3 + $0x14] sm:$0xf]
        %v5325 = vld [vmem:[#allocation3 + $0x18] sm:$0xf]
        %v5326 = vld [vmem:[#allocation3 + $0x1c] sm:$0xf]
        %v5327 = vld [vmem:[#allocation3 + $0x20] sm:$0xf]
        %v5328 = vld [vmem:[#allocation3 + $0x24] sm:$0xf]
        %v5329 = vld [vmem:[#allocation3 + $0x28] sm:$0xf]
        %v5330 = vld [vmem:[#allocation3 + $0x2c] sm:$0xf]
        %v5331 = vld [vmem:[#allocation3 + $0x30] sm:$0x3]
        %s5332 = scalar_lea.vmem %s2, 96
        %v5333 = vld [vmem:[%s5332] sm:$0xf]
        %v5334 = vld [vmem:[%s5332 + $0x4] sm:$0xf]
        %v5335 = vld [vmem:[%s5332 + $0x8] sm:$0xf]
        %v5336 = vld [vmem:[%s5332 + $0xc] sm:$0xf]
        %v5348 = vunpack.c.l.b16 %v5321
        %v5349 = vunpack.c.l.b16 %v5322
        %v5350 = vunpack.c.l.b16 %v5323
        %v5351 = vunpack.c.l.b16 %v5324
        %v5352 = vunpack.c.l.b16 %v5325
        %v5353 = vunpack.c.l.b16 %v5326
        %v5354 = vunpack.c.l.b16 %v5327
        %v5355 = vunpack.c.l.b16 %v5328
        %v5356 = vunpack.c.l.b16 %v5329
        %v5357 = vunpack.c.l.b16 %v5330
        %v5358 = vunpack.c.l.b16 %v5331
        %v5359 = vpack.c.b16 %v5349, %v5348
        %v5360 = vpack.c.b16 %v5351, %v5350
        %v5361 = vpack.c.b16 %v5353, %v5352
        %v5362 = vpack.c.b16 %v5355, %v5354
        %v5363 = vpack.c.b16 %v5357, %v5356
        %v5364 = vpack.c.b16 %v5358, %v5358
        %v5365 = vrot.slane %v5359, 2
        %v5366 = vrot.slane %v5360, 2
        %v5367 = vsel %vm2654, %v5365, %v5366
        %v5368 = vrot.slane %v5361, 2
        %v5369 = vsel %vm2654, %v5366, %v5368
        %v5370 = vrot.slane %v5362, 2
        %v5371 = vsel %vm2654, %v5368, %v5370
        %v5372 = vrot.slane %v5363, 2
        %v5373 = vsel %vm2654, %v5370, %v5372
        %v5374 = vrot.slane %v5364, 2
        %v5375 = vsel %vm2654, %v5372, %v5374
        %v5380 = vunpack.c.l.b16 %v5333
        %v5381 = vunpack.c.l.b16 %v5334
        %v5382 = vunpack.c.l.b16 %v5335
        %v5383 = vunpack.c.l.b16 %v5336
        %v5384 = vpack.c.b16 %v5381, %v5380
        %v5385 = vpack.c.b16 %v5383, %v5382
        %v5389 = vsel %vm4241, %v5367, 0
        %v5392 = vsel %vm4241, %v5369, 0
        %v5395 = vsel %vm4241, %v5371, 0
        %v5398 = vsel %vm4241, %v5373, 0
        %v5401 = vsel %vm4241, %v5375, 0
        %5403 = vmatprep.subr.bf16.mxu0 0
        %5404 = vmatpush1.bf16.msra.mxu0 %v5384
        %5405 = vmatprep.subr.bf16.mxu0 0
        %5406 = vmatpush1.bf16.msra.mxu0 %v5385
        %5407 = vmatprep.subr.bf16.mxu0 0
        %5408 = vmatpush1.bf16.msra.mxu0 0
        %5409 = vmatprep.subr.bf16.mxu0 0
        %5410 = vmatpush1.bf16.msra.mxu0 0
        %5411 = vmatprep.subr.bf16.mxu0 0
        %5412 = vmatpush1.bf16.msra.mxu0 0
        %5413 = vmatprep.subr.bf16.mxu0 0
        %5414 = vmatpush1.bf16.msra.mxu0 0
        %5415 = vmatprep.subr.bf16.mxu0 0
        %5416 = vmatpush1.bf16.msra.mxu0 0
        %5417 = vmatprep.subr.bf16.mxu0 0
        %5418 = vmatpush1.bf16.msra.mxu0 0
        %5419 = vmatprep.subr.bf16.mxu0 0
        %5420 = vmatpush1.bf16.msra.mxu0 0
        %5421 = vmatprep.subr.bf16.mxu0 0
        %5422 = vmatpush1.bf16.msra.mxu0 0
        %5423 = vmatprep.subr.bf16.mxu0 0
        %5424 = vmatpush1.bf16.msra.mxu0 0
        %5425 = vmatprep.subr.bf16.mxu0 0
        %5426 = vmatpush1.bf16.msra.mxu0 0
        %5427 = vmatprep.subr.bf16.mxu0 0
        %5428 = vmatpush1.bf16.msra.mxu0 0
        %5429 = vmatprep.subr.bf16.mxu0 0
        %5430 = vmatpush1.bf16.msra.mxu0 0
        %5431 = vmatprep.subr.bf16.mxu0 0
        %5432 = vmatpush1.bf16.msra.mxu0 0
        %5433 = vmatprep.subr.bf16.mxu0 0
        %5434 = vmatpush1.bf16.msra.mxu0 0
        %5435 = vmatprep.mubr.bf16.mxu0 0
        %5436 = vmatmul.mubr.bf16.gmra.mrb[0].mxu0 %v5389
        %v5437 = vpop.f32.mrb[0].mxu0
        %v5438 = vadd.f32 0.0, %v5437
        %v5439 = vpop.f32.mrb[0].mxu0
        %v5440 = vpop.f32.mrb[0].mxu0
        %v5441 = vadd.f32 0.0, %v5440
        %v5442 = vpop.f32.mrb[0].mxu0
        %5443 = vmatprep.mubr.bf16.mxu0 0
        %5444 = vmatmul.mubr.bf16.gmra.mrb[0].mxu0 %v5392
        %v5445 = vpop.f32.mrb[0].mxu0
        %v5446 = vadd.f32 0.0, %v5445
        %v5447 = vpop.f32.mrb[0].mxu0
        %v5448 = vpop.f32.mrb[0].mxu0
        %v5449 = vadd.f32 0.0, %v5448
        %v5450 = vpop.f32.mrb[0].mxu0
        %5451 = vmatprep.mubr.bf16.mxu0 0
        %5452 = vmatmul.mubr.bf16.gmra.mrb[0].mxu0 %v5395
        %v5453 = vpop.f32.mrb[0].mxu0
        %v5454 = vadd.f32 0.0, %v5453
        %v5455 = vpop.f32.mrb[0].mxu0
        %v5456 = vpop.f32.mrb[0].mxu0
        %v5457 = vadd.f32 0.0, %v5456
        %v5458 = vpop.f32.mrb[0].mxu0
        %5459 = vmatprep.mubr.bf16.mxu0 0
        %5460 = vmatmul.mubr.bf16.gmra.mrb[0].mxu0 %v5398
        %v5461 = vpop.f32.mrb[0].mxu0
        %v5462 = vadd.f32 0.0, %v5461
        %v5463 = vpop.f32.mrb[0].mxu0
        %v5464 = vpop.f32.mrb[0].mxu0
        %v5465 = vadd.f32 0.0, %v5464
        %v5466 = vpop.f32.mrb[0].mxu0
        %5467 = vmatprep.mubr.bf16.mxu0 0
        %5468 = vmatmul.mubr.bf16.gmra.mrb[0].mxu0 %v5401
        %v5469 = vpop.f32.mrb[0].mxu0
        %v5470 = vadd.f32 0.0, %v5469
        %v5471 = vpop.f32.mrb[0].mxu0
        %v5472 = vpop.f32.mrb[0].mxu0
        %v5473 = vadd.f32 0.0, %v5472
        %v5474 = vpop.f32.mrb[0].mxu0
        %5475 = vdwg.mxu0
        %v5476 = vadd.f32 %v5311, %v5438
        %v5477 = vadd.f32 %v5312, %v5441
        %v5478 = vadd.f32 %v5313, %v5446
        %v5479 = vadd.f32 %v5314, %v5449
        %v5480 = vadd.f32 %v5315, %v5454
        %v5481 = vadd.f32 %v5316, %v5457
        %v5482 = vadd.f32 %v5317, %v5462
        %v5483 = vadd.f32 %v5318, %v5465
        %v5484 = vadd.f32 %v5319, %v5470
        %v5485 = vadd.f32 %v5320, %v5473
        %v5486 = vld [vmem:[#allocation3 + $0x30] sm:$0x7]
        %s5487 = scalar_lea.vmem %s2, 112
        %v5488 = vld [vmem:[%s5487] sm:$0xf]
        %v5489 = vld [vmem:[%s5487 + $0x4] sm:$0xf]
        %v5490 = vld [vmem:[%s5487 + $0x8] sm:$0xf]
        %v5491 = vld [vmem:[%s5487 + $0xc] sm:$0xf]
        %v5493 = vunpack.c.l.b16 %v5486
        %v5494 = vpack.c.b16 %v5493, %v5493
        %v5496 = vshrl.u32 %v5359, 16
        %v5498 = vrot.slane %v5496, 2
        %v5499 = vshll.u32 %v5359, 16
        %v5501 = vrot.slane %v5499, 3
        %v5502 = vor.u32 %v5498, %v5501
        %v5504 = vshrl.u32 %v5360, 16
        %v5506 = vrot.slane %v5504, 2
        %v5507 = vshll.u32 %v5360, 16
        %v5509 = vrot.slane %v5507, 3
        %v5510 = vor.u32 %v5506, %v5509
        %v5511 = vsel %vm3407, %v5502, %v5510
        %v5513 = vshrl.u32 %v5361, 16
        %v5515 = vrot.slane %v5513, 2
        %v5516 = vshll.u32 %v5361, 16
        %v5518 = vrot.slane %v5516, 3
        %v5519 = vor.u32 %v5515, %v5518
        %v5520 = vsel %vm3407, %v5510, %v5519
        %v5522 = vshrl.u32 %v5362, 16
        %v5524 = vrot.slane %v5522, 2
        %v5525 = vshll.u32 %v5362, 16
        %v5527 = vrot.slane %v5525, 3
        %v5528 = vor.u32 %v5524, %v5527
        %v5529 = vsel %vm3407, %v5519, %v5528
        %v5531 = vshrl.u32 %v5363, 16
        %v5533 = vrot.slane %v5531, 2
        %v5534 = vshll.u32 %v5363, 16
        %v5536 = vrot.slane %v5534, 3
        %v5537 = vor.u32 %v5533, %v5536
        %v5538 = vsel %vm3407, %v5528, %v5537
        %v5540 = vshrl.u32 %v5494, 16
        %v5542 = vrot.slane %v5540, 2
        %v5543 = vshll.u32 %v5494, 16
        %v5545 = vrot.slane %v5543, 3
        %v5546 = vor.u32 %v5542, %v5545
        %v5547 = vsel %vm3407, %v5537, %v5546
        %v5552 = vunpack.c.l.b16 %v5488
        %v5553 = vunpack.c.l.b16 %v5489
        %v5554 = vunpack.c.l.b16 %v5490
        %v5555 = vunpack.c.l.b16 %v5491
        %v5556 = vpack.c.b16 %v5553, %v5552
        %v5557 = vpack.c.b16 %v5555, %v5554
        %v5561 = vsel %vm4241, %v5511, 0
        %v5564 = vsel %vm4241, %v5520, 0
        %v5567 = vsel %vm4241, %v5529, 0
        %v5570 = vsel %vm4241, %v5538, 0
        %v5573 = vsel %vm4241, %v5547, 0
        %5575 = vmatprep.subr.bf16.mxu0 0
        %5576 = vmatpush1.bf16.msra.mxu0 %v5556
        %5577 = vmatprep.subr.bf16.mxu0 0
        %5578 = vmatpush1.bf16.msra.mxu0 %v5557
        %5579 = vmatprep.subr.bf16.mxu0 0
        %5580 = vmatpush1.bf16.msra.mxu0 0
        %5581 = vmatprep.subr.bf16.mxu0 0
        %5582 = vmatpush1.bf16.msra.mxu0 0
        %5583 = vmatprep.subr.bf16.mxu0 0
        %5584 = vmatpush1.bf16.msra.mxu0 0
        %5585 = vmatprep.subr.bf16.mxu0 0
        %5586 = vmatpush1.bf16.msra.mxu0 0
        %5587 = vmatprep.subr.bf16.mxu0 0
        %5588 = vmatpush1.bf16.msra.mxu0 0
        %5589 = vmatprep.subr.bf16.mxu0 0
        %5590 = vmatpush1.bf16.msra.mxu0 0
        %5591 = vmatprep.subr.bf16.mxu0 0
        %5592 = vmatpush1.bf16.msra.mxu0 0
        %5593 = vmatprep.subr.bf16.mxu0 0
        %5594 = vmatpush1.bf16.msra.mxu0 0
        %5595 = vmatprep.subr.bf16.mxu0 0
        %5596 = vmatpush1.bf16.msra.mxu0 0
        %5597 = vmatprep.subr.bf16.mxu0 0
        %5598 = vmatpush1.bf16.msra.mxu0 0
        %5599 = vmatprep.subr.bf16.mxu0 0
        %5600 = vmatpush1.bf16.msra.mxu0 0
        %5601 = vmatprep.subr.bf16.mxu0 0
        %5602 = vmatpush1.bf16.msra.mxu0 0
        %5603 = vmatprep.subr.bf16.mxu0 0
        %5604 = vmatpush1.bf16.msra.mxu0 0
        %5605 = vmatprep.subr.bf16.mxu0 0
        %5606 = vmatpush1.bf16.msra.mxu0 0
        %5607 = vmatprep.mubr.bf16.mxu0 0
        %5608 = vmatmul.mubr.bf16.gmra.mrb[0].mxu0 %v5561
        %v5609 = vpop.f32.mrb[0].mxu0
        %v5610 = vadd.f32 0.0, %v5609
        %v5611 = vpop.f32.mrb[0].mxu0
        %v5612 = vpop.f32.mrb[0].mxu0
        %v5613 = vadd.f32 0.0, %v5612
        %v5614 = vpop.f32.mrb[0].mxu0
        %5615 = vmatprep.mubr.bf16.mxu0 0
        %5616 = vmatmul.mubr.bf16.gmra.mrb[0].mxu0 %v5564
        %v5617 = vpop.f32.mrb[0].mxu0
        %v5618 = vadd.f32 0.0, %v5617
        %v5619 = vpop.f32.mrb[0].mxu0
        %v5620 = vpop.f32.mrb[0].mxu0
        %v5621 = vadd.f32 0.0, %v5620
        %v5622 = vpop.f32.mrb[0].mxu0
        %5623 = vmatprep.mubr.bf16.mxu0 0
        %5624 = vmatmul.mubr.bf16.gmra.mrb[0].mxu0 %v5567
        %v5625 = vpop.f32.mrb[0].mxu0
        %v5626 = vadd.f32 0.0, %v5625
        %v5627 = vpop.f32.mrb[0].mxu0
        %v5628 = vpop.f32.mrb[0].mxu0
        %v5629 = vadd.f32 0.0, %v5628
        %v5630 = vpop.f32.mrb[0].mxu0
        %5631 = vmatprep.mubr.bf16.mxu0 0
        %5632 = vmatmul.mubr.bf16.gmra.mrb[0].mxu0 %v5570
        %v5633 = vpop.f32.mrb[0].mxu0
        %v5634 = vadd.f32 0.0, %v5633
        %v5635 = vpop.f32.mrb[0].mxu0
        %v5636 = vpop.f32.mrb[0].mxu0
        %v5637 = vadd.f32 0.0, %v5636
        %v5638 = vpop.f32.mrb[0].mxu0
        %5639 = vmatprep.mubr.bf16.mxu0 0
        %5640 = vmatmul.mubr.bf16.gmra.mrb[0].mxu0 %v5573
        %v5641 = vpop.f32.mrb[0].mxu0
        %v5642 = vadd.f32 0.0, %v5641
        %v5643 = vpop.f32.mrb[0].mxu0
        %v5644 = vpop.f32.mrb[0].mxu0
        %v5645 = vadd.f32 0.0, %v5644
        %v5646 = vpop.f32.mrb[0].mxu0
        %5647 = vdwg.mxu0
        %v5648 = vadd.f32 %v5476, %v5610
        %v5649 = vadd.f32 %v5477, %v5613
        %v5650 = vadd.f32 %v5478, %v5618
        %v5651 = vadd.f32 %v5479, %v5621
        %v5652 = vadd.f32 %v5480, %v5626
        %v5653 = vadd.f32 %v5481, %v5629
        %v5654 = vadd.f32 %v5482, %v5634
        %v5655 = vadd.f32 %v5483, %v5637
        %v5656 = vadd.f32 %v5484, %v5642
        %v5657 = vadd.f32 %v5485, %v5645
        %v5658 = vld [vmem:[#allocation3 + $0x8] sm:$0x8]
        %s5659 = scalar_lea.vmem %s2, 128
        %v5660 = vld [vmem:[%s5659] sm:$0xf]
        %v5661 = vld [vmem:[%s5659 + $0x4] sm:$0xf]
        %v5662 = vld [vmem:[%s5659 + $0x8] sm:$0xf]
        %v5663 = vld [vmem:[%s5659 + $0xc] sm:$0xf]
        %v5665 = vunpack.c.l.b16 %v5658
        %v5666 = vpack.c.b16 %v5349, %v5665
        %v5667 = vrot.slane %v5666, 3
        %v5668 = vrot.slane %v5360, 3
        %v5669 = vsel %vm3854, %v5667, %v5668
        %v5670 = vrot.slane %v5361, 3
        %v5671 = vsel %vm3854, %v5668, %v5670
        %v5672 = vrot.slane %v5362, 3
        %v5673 = vsel %vm3854, %v5670, %v5672
        %v5674 = vrot.slane %v5363, 3
        %v5675 = vsel %vm3854, %v5672, %v5674
        %v5676 = vrot.slane %v5494, 3
        %v5677 = vsel %vm3854, %v5674, %v5676
        %v5682 = vunpack.c.l.b16 %v5660
        %v5683 = vunpack.c.l.b16 %v5661
        %v5684 = vunpack.c.l.b16 %v5662
        %v5685 = vunpack.c.l.b16 %v5663
        %v5686 = vpack.c.b16 %v5683, %v5682
        %v5687 = vpack.c.b16 %v5685, %v5684
        %v5691 = vsel %vm4241, %v5669, 0
        %v5694 = vsel %vm4241, %v5671, 0
        %v5697 = vsel %vm4241, %v5673, 0
        %v5700 = vsel %vm4241, %v5675, 0
        %v5703 = vsel %vm4241, %v5677, 0
        %5705 = vmatprep.subr.bf16.mxu0 0
        %5706 = vmatpush1.bf16.msra.mxu0 %v5686
        %5707 = vmatprep.subr.bf16.mxu0 0
        %5708 = vmatpush1.bf16.msra.mxu0 %v5687
        %5709 = vmatprep.subr.bf16.mxu0 0
        %5710 = vmatpush1.bf16.msra.mxu0 0
        %5711 = vmatprep.subr.bf16.mxu0 0
        %5712 = vmatpush1.bf16.msra.mxu0 0
        %5713 = vmatprep.subr.bf16.mxu0 0
        %5714 = vmatpush1.bf16.msra.mxu0 0
        %5715 = vmatprep.subr.bf16.mxu0 0
        %5716 = vmatpush1.bf16.msra.mxu0 0
        %5717 = vmatprep.subr.bf16.mxu0 0
        %5718 = vmatpush1.bf16.msra.mxu0 0
        %5719 = vmatprep.subr.bf16.mxu0 0
        %5720 = vmatpush1.bf16.msra.mxu0 0
        %5721 = vmatprep.subr.bf16.mxu0 0
        %5722 = vmatpush1.bf16.msra.mxu0 0
        %5723 = vmatprep.subr.bf16.mxu0 0
        %5724 = vmatpush1.bf16.msra.mxu0 0
        %5725 = vmatprep.subr.bf16.mxu0 0
        %5726 = vmatpush1.bf16.msra.mxu0 0
        %5727 = vmatprep.subr.bf16.mxu0 0
        %5728 = vmatpush1.bf16.msra.mxu0 0
        %5729 = vmatprep.subr.bf16.mxu0 0
        %5730 = vmatpush1.bf16.msra.mxu0 0
        %5731 = vmatprep.subr.bf16.mxu0 0
        %5732 = vmatpush1.bf16.msra.mxu0 0
        %5733 = vmatprep.subr.bf16.mxu0 0
        %5734 = vmatpush1.bf16.msra.mxu0 0
        %5735 = vmatprep.subr.bf16.mxu0 0
        %5736 = vmatpush1.bf16.msra.mxu0 0
        %5737 = vmatprep.mubr.bf16.mxu0 0
        %5738 = vmatmul.mubr.bf16.gmra.mrb[0].mxu0 %v5691
        %v5739 = vpop.f32.mrb[0].mxu0
        %v5740 = vadd.f32 0.0, %v5739
        %v5741 = vpop.f32.mrb[0].mxu0
        %v5742 = vpop.f32.mrb[0].mxu0
        %v5743 = vadd.f32 0.0, %v5742
        %v5744 = vpop.f32.mrb[0].mxu0
        %5745 = vmatprep.mubr.bf16.mxu0 0
        %5746 = vmatmul.mubr.bf16.gmra.mrb[0].mxu0 %v5694
        %v5747 = vpop.f32.mrb[0].mxu0
        %v5748 = vadd.f32 0.0, %v5747
        %v5749 = vpop.f32.mrb[0].mxu0
        %v5750 = vpop.f32.mrb[0].mxu0
        %v5751 = vadd.f32 0.0, %v5750
        %v5752 = vpop.f32.mrb[0].mxu0
        %5753 = vmatprep.mubr.bf16.mxu0 0
        %5754 = vmatmul.mubr.bf16.gmra.mrb[0].mxu0 %v5697
        %v5755 = vpop.f32.mrb[0].mxu0
        %v5756 = vadd.f32 0.0, %v5755
        %v5757 = vpop.f32.mrb[0].mxu0
        %v5758 = vpop.f32.mrb[0].mxu0
        %v5759 = vadd.f32 0.0, %v5758
        %v5760 = vpop.f32.mrb[0].mxu0
        %5761 = vmatprep.mubr.bf16.mxu0 0
        %5762 = vmatmul.mubr.bf16.gmra.mrb[0].mxu0 %v5700
        %v5763 = vpop.f32.mrb[0].mxu0
        %v5764 = vadd.f32 0.0, %v5763
        %v5765 = vpop.f32.mrb[0].mxu0
        %v5766 = vpop.f32.mrb[0].mxu0
        %v5767 = vadd.f32 0.0, %v5766
        %v5768 = vpop.f32.mrb[0].mxu0
        %5769 = vmatprep.mubr.bf16.mxu0 0
        %5770 = vmatmul.mubr.bf16.gmra.mrb[0].mxu0 %v5703
        %v5771 = vpop.f32.mrb[0].mxu0
        %v5772 = vadd.f32 0.0, %v5771
        %v5773 = vpop.f32.mrb[0].mxu0
        %v5774 = vpop.f32.mrb[0].mxu0
        %v5775 = vadd.f32 0.0, %v5774
        %v5776 = vpop.f32.mrb[0].mxu0
        %5777 = vdwg.mxu0
        %v5778 = vadd.f32 %v5648, %v5740
        %v5779 = vadd.f32 %v5649, %v5743
        %v5780 = vadd.f32 %v5650, %v5748
        %v5781 = vadd.f32 %v5651, %v5751
        %v5782 = vadd.f32 %v5652, %v5756
        %v5783 = vadd.f32 %v5653, %v5759
        %v5784 = vadd.f32 %v5654, %v5764
        %v5785 = vadd.f32 %v5655, %v5767
        %v5786 = vadd.f32 %v5656, %v5772
        %v5787 = vadd.f32 %v5657, %v5775
        %v5788 = vld [vmem:[%s6] sm:$0x1]
        %v5790 = vlaneseq
        %v5791 = vshrl.u32 %v5790, 7
        %v5792 = vsub.s32 0, %v5791
        %v5793 = vrot.slane %v5788, %v5792
        %v5795 = vadd.f32 %v5778, %v5793
        %v5796 = vadd.f32 %v5779, %v5793
        %v5797 = vadd.f32 %v5780, %v5793
        %v5798 = vadd.f32 %v5781, %v5793
        %v5799 = vadd.f32 %v5782, %v5793
        %v5800 = vadd.f32 %v5783, %v5793
        %v5801 = vadd.f32 %v5784, %v5793
        %v5802 = vadd.f32 %v5785, %v5793
        %v5803 = vadd.f32 %v5786, %v5793
        %v5804 = vadd.f32 %v5787, %v5793
        %v5805 = vmax.f32 %v5795, 0.0
        %v5806 = vmax.f32 %v5796, 0.0
        %v5807 = vmax.f32 %v5797, 0.0
        %v5808 = vmax.f32 %v5798, 0.0
        %v5809 = vmax.f32 %v5799, 0.0
        %v5810 = vmax.f32 %v5800, 0.0
        %v5811 = vmax.f32 %v5801, 0.0
        %v5812 = vmax.f32 %v5802, 0.0
        %v5813 = vmax.f32 %v5803, 0.0
        %v5814 = vmax.f32 %v5804, 0.0
        %5815 = vst.msk [vmem:[#allocation7] sm:$0xff] %vm4241, %v5805
        %5816 = vst.msk [vmem:[#allocation7 + $0x8] sm:$0xff] %vm4241, %v5806
        %5817 = vst.msk [vmem:[#allocation7 + $0x10] sm:$0xff] %vm4241, %v5807
        %5818 = vst.msk [vmem:[#allocation7 + $0x18] sm:$0xff] %vm4241, %v5808
        %5819 = vst.msk [vmem:[#allocation7 + $0x20] sm:$0xff] %vm4241, %v5809
        %5820 = vst.msk [vmem:[#allocation7 + $0x28] sm:$0xff] %vm4241, %v5810
        %5821 = vst.msk [vmem:[#allocation7 + $0x30] sm:$0xff] %vm4241, %v5811
        %5822 = vst.msk [vmem:[#allocation7 + $0x38] sm:$0xff] %vm4241, %v5812
        %5823 = vst.msk [vmem:[#allocation7 + $0x40] sm:$0xff] %vm4241, %v5813
        %5824 = vst.msk [vmem:[#allocation7 + $0x48] sm:$0xff] %vm4241, %v5814
        %s5825 = scalar_lea.vmem [#allocation7], 1
        %v5826 = vld [vmem:[%s5825] ss:$2 sm:$0xf]
        %s5827 = scalar_lea.vmem [#allocation7], 2
        %v5828 = vld [vmem:[%s5827] ss:$2 sm:$0xf]
        %v5829 = vmax.f32 %v5826, %v5828
        %s5830 = scalar_lea.vmem [#allocation7], 11
        %v5831 = vld [vmem:[%s5830] ss:$2 sm:$0xf]
        %s5832 = scalar_lea.vmem [#allocation7], 12
        %v5833 = vld [vmem:[%s5832] ss:$2 sm:$0xf]
        %v5834 = vmax.f32 %v5831, %v5833
        %v5835 = vmax.f32 %v5829, %v5834
        %v5836 = vpack.c.bf16 %v5835, %v5835
        %5837 = vst.msk [vmem:[#allocation4 + $0x4] sm:$0x3] %vm4299, %v5836
        %s5838 = scalar_lea.vmem [#allocation7], 21
        %v5839 = vld [vmem:[%s5838] ss:$2 sm:$0xf]
        %s5840 = scalar_lea.vmem [#allocation7], 22
        %v5841 = vld [vmem:[%s5840] ss:$2 sm:$0xf]
        %v5842 = vmax.f32 %v5839, %v5841
        %s5843 = scalar_lea.vmem [#allocation7], 31
        %v5844 = vld [vmem:[%s5843] ss:$2 sm:$0xf]
        %s5845 = scalar_lea.vmem [#allocation7], 32
        %v5846 = vld [vmem:[%s5845] ss:$2 sm:$0xf]
        %v5847 = vmax.f32 %v5844, %v5846
        %v5848 = vmax.f32 %v5842, %v5847
        %v5849 = vpack.c.bf16 %v5848, %v5848
        %v5851 = vunpack.c.l.b16 %v5849
        %v5852 = vpack.c.b16 %v5851, %v5851
        %v5853 = vrot.slane %v5852, 5
        %v5854 = vrot.slane %v5853, 4
        %5857 = vst.msk [vmem:[#allocation4 + $0x4] sm:$0x8] %vm4320, %v5853
        %5858 = vst.msk [vmem:[#allocation4 + $0x8] sm:$0x1] %vm4359, %v5854
        %s5859 = scalar_lea.vmem [#allocation7], 41
        %v5860 = vld [vmem:[%s5859] ss:$2 sm:$0xf]
        %s5861 = scalar_lea.vmem [#allocation7], 42
        %v5862 = vld [vmem:[%s5861] ss:$2 sm:$0xf]
        %v5863 = vmax.f32 %v5860, %v5862
        %s5864 = scalar_lea.vmem [#allocation7], 51
        %v5865 = vld [vmem:[%s5864] ss:$2 sm:$0xf]
        %s5866 = scalar_lea.vmem [#allocation7], 52
        %v5867 = vld [vmem:[%s5866] ss:$2 sm:$0xf]
        %v5868 = vmax.f32 %v5865, %v5867
        %v5869 = vmax.f32 %v5863, %v5868
        %v5870 = vpack.c.bf16 %v5869, %v5869
        %v5872 = vunpack.c.l.b16 %v5870
        %v5873 = vpack.c.b16 %v5872, %v5872
        %v5874 = vrot.slane %v5873, 6
        %5876 = vst.msk [vmem:[#allocation4 + $0x8] sm:$0xc] %vm4297, %v5874
        %s5877 = scalar_lea.vmem [#allocation7], 61
        %v5878 = vld [vmem:[%s5877] ss:$2 sm:$0xf]
        %s5879 = scalar_lea.vmem [#allocation7], 62
        %v5880 = vld [vmem:[%s5879] ss:$2 sm:$0xf]
        %v5881 = vmax.f32 %v5878, %v5880
        %s5882 = scalar_lea.vmem [#allocation7], 71
        %v5883 = vld [vmem:[%s5882] ss:$2 sm:$0xf]
        %s5884 = scalar_lea.vmem [#allocation7], 72
        %v5885 = vld [vmem:[%s5884] ss:$2 sm:$0xf]
        %v5886 = vmax.f32 %v5883, %v5885
        %v5887 = vmax.f32 %v5881, %v5886
        %v5888 = vpack.c.bf16 %v5887, %v5887
        %v5890 = vunpack.c.l.b16 %v5888
        %v5891 = vpack.c.b16 %v5890, %v5890
        %v5892 = vrot.slane %v5891, 7
        %vm5894 = vcmask 256001
        %5895 = vst.msk [vmem:[#allocation4 + $0xc] sm:$0x6] %vm5894, %v5892
        %v5896 = vld [vmem:[#allocation4] sm:$0xf]
        %v5897 = vld [vmem:[#allocation4 + $0x4] sm:$0xf]
        %v5898 = vld [vmem:[#allocation4 + $0x8] sm:$0xf]
        %v5899 = vld [vmem:[%s3] sm:$0xf]
        %v5900 = vld [vmem:[%s3 + $0x4] sm:$0xf]
        %v5901 = vld [vmem:[%s3 + $0x8] sm:$0xf]
        %v5902 = vld [vmem:[%s3 + $0xc] sm:$0xf]
        %v5903 = vld [vmem:[#allocation4 + $0xc] sm:$0x1]
        %s5904 = scalar_lea.vmem %s3, 16
        %v5905 = vld [vmem:[%s5904] sm:$0xf]
        %v5906 = vld [vmem:[%s5904 + $0x4] sm:$0xf]
        %v5907 = vld [vmem:[%s5904 + $0x8] sm:$0xf]
        %v5908 = vld [vmem:[%s5904 + $0xc] sm:$0xf]
        %v5913 = vunpack.c.l.b16 %v5896
        %v5914 = vunpack.c.l.b16 %v5897
        %v5915 = vunpack.c.l.b16 %v5898
        %v5916 = vunpack.c.l.b16 %v5903
        %v5917 = vpack.c.b16 %v5914, %v5913
        %v5918 = vpack.c.b16 %v5916, %v5915
        %v5920 = vshrl.u32 %v5917, 16
        %v5922 = vshll.u32 %v5917, 16
        %v5924 = vrot.slane %v5922, 1
        %v5925 = vor.u32 %v5920, %v5924
        %v5927 = vshll.u32 %v5918, 16
        %v5929 = vrot.slane %v5927, 1
        %v5930 = vsel %vm847, %v5925, %v5929
        %v5931 = vshrl.u32 %v5918, 16
        %v5933 = vor.u32 %v5931, %v5929
        %v5938 = vunpack.c.l.b16 %v5905
        %v5939 = vunpack.c.l.b16 %v5906
        %v5940 = vunpack.c.l.b16 %v5907
        %v5941 = vunpack.c.l.b16 %v5908
        %v5942 = vpack.c.b16 %v5939, %v5938
        %v5943 = vpack.c.b16 %v5941, %v5940
        %v5947 = vsel %vm4241, %v5930, 0
        %v5950 = vsel %vm4241, %v5933, 0
        %5952 = vmatprep.subr.bf16.mxu0 0
        %5953 = vmatpush1.bf16.msra.mxu0 %v5942
        %5954 = vmatprep.subr.bf16.mxu0 0
        %5955 = vmatpush1.bf16.msra.mxu0 %v5943
        %5956 = vmatprep.subr.bf16.mxu0 0
        %5957 = vmatpush1.bf16.msra.mxu0 0
        %5958 = vmatprep.subr.bf16.mxu0 0
        %5959 = vmatpush1.bf16.msra.mxu0 0
        %5960 = vmatprep.subr.bf16.mxu0 0
        %5961 = vmatpush1.bf16.msra.mxu0 0
        %5962 = vmatprep.subr.bf16.mxu0 0
        %5963 = vmatpush1.bf16.msra.mxu0 0
        %5964 = vmatprep.subr.bf16.mxu0 0
        %5965 = vmatpush1.bf16.msra.mxu0 0
        %5966 = vmatprep.subr.bf16.mxu0 0
        %5967 = vmatpush1.bf16.msra.mxu0 0
        %5968 = vmatprep.subr.bf16.mxu0 0
        %5969 = vmatpush1.bf16.msra.mxu0 0
        %5970 = vmatprep.subr.bf16.mxu0 0
        %5971 = vmatpush1.bf16.msra.mxu0 0
        %5972 = vmatprep.subr.bf16.mxu0 0
        %5973 = vmatpush1.bf16.msra.mxu0 0
        %5974 = vmatprep.subr.bf16.mxu0 0
        %5975 = vmatpush1.bf16.msra.mxu0 0
        %5976 = vmatprep.subr.bf16.mxu0 0
        %5977 = vmatpush1.bf16.msra.mxu0 0
        %5978 = vmatprep.subr.bf16.mxu0 0
        %5979 = vmatpush1.bf16.msra.mxu0 0
        %5980 = vmatprep.subr.bf16.mxu0 0
        %5981 = vmatpush1.bf16.msra.mxu0 0
        %5982 = vmatprep.subr.bf16.mxu0 0
        %5983 = vmatpush1.bf16.msra.mxu0 0
        %5984 = vmatprep.mubr.bf16.mxu0 0
        %5985 = vmatmul.mubr.bf16.gmra.mrb[0].mxu0 %v5947
        %v5986 = vpop.f32.mrb[0].mxu0
        %v5987 = vadd.f32 0.0, %v5986
        %v5988 = vpop.f32.mrb[0].mxu0
        %v5989 = vpop.f32.mrb[0].mxu0
        %v5990 = vadd.f32 0.0, %v5989
        %v5991 = vpop.f32.mrb[0].mxu0
        %5992 = vmatprep.mubr.bf16.mxu0 0
        %5993 = vmatmul.mubr.bf16.gmra.mrb[0].mxu0 %v5950
        %v5994 = vpop.f32.mrb[0].mxu0
        %v5995 = vadd.f32 0.0, %v5994
        %v5996 = vpop.f32.mrb[0].mxu0
        %v5997 = vpop.f32.mrb[0].mxu0
        %v5998 = vpop.f32.mrb[0].mxu0
        %5999 = vdwg.mxu0
        %v6000 = vpack.c.b16 %v5915, %v5915
        %v6005 = vunpack.c.l.b16 %v5899
        %v6006 = vunpack.c.l.b16 %v5900
        %v6007 = vunpack.c.l.b16 %v5901
        %v6008 = vunpack.c.l.b16 %v5902
        %v6009 = vpack.c.b16 %v6006, %v6005
        %v6010 = vpack.c.b16 %v6008, %v6007
        %v6013 = vsel %vm4241, %v5917, 0
        %v6016 = vsel %vm4241, %v6000, 0
        %6018 = vmatprep.subr.bf16.mxu0 0
        %6019 = vmatpush1.bf16.msra.mxu0 %v6009
        %6020 = vmatprep.subr.bf16.mxu0 0
        %6021 = vmatpush1.bf16.msra.mxu0 %v6010
        %6022 = vmatprep.subr.bf16.mxu0 0
        %6023 = vmatpush1.bf16.msra.mxu0 0
        %6024 = vmatprep.subr.bf16.mxu0 0
        %6025 = vmatpush1.bf16.msra.mxu0 0
        %6026 = vmatprep.subr.bf16.mxu0 0
        %6027 = vmatpush1.bf16.msra.mxu0 0
        %6028 = vmatprep.subr.bf16.mxu0 0
        %6029 = vmatpush1.bf16.msra.mxu0 0
        %6030 = vmatprep.subr.bf16.mxu0 0
        %6031 = vmatpush1.bf16.msra.mxu0 0
        %6032 = vmatprep.subr.bf16.mxu0 0
        %6033 = vmatpush1.bf16.msra.mxu0 0
        %6034 = vmatprep.subr.bf16.mxu0 0
        %6035 = vmatpush1.bf16.msra.mxu0 0
        %6036 = vmatprep.subr.bf16.mxu0 0
        %6037 = vmatpush1.bf16.msra.mxu0 0
        %6038 = vmatprep.subr.bf16.mxu0 0
        %6039 = vmatpush1.bf16.msra.mxu0 0
        %6040 = vmatprep.subr.bf16.mxu0 0
        %6041 = vmatpush1.bf16.msra.mxu0 0
        %6042 = vmatprep.subr.bf16.mxu0 0
        %6043 = vmatpush1.bf16.msra.mxu0 0
        %6044 = vmatprep.subr.bf16.mxu0 0
        %6045 = vmatpush1.bf16.msra.mxu0 0
        %6046 = vmatprep.subr.bf16.mxu0 0
        %6047 = vmatpush1.bf16.msra.mxu0 0
        %6048 = vmatprep.subr.bf16.mxu0 0
        %6049 = vmatpush1.bf16.msra.mxu0 0
        %6050 = vmatprep.mubr.bf16.mxu0 0
        %6051 = vmatmul.mubr.bf16.gmra.mrb[0].mxu0 %v6013
        %v6052 = vpop.f32.mrb[0].mxu0
        %v6053 = vadd.f32 %v5987, %v6052
        %v6054 = vpop.f32.mrb[0].mxu0
        %v6055 = vpop.f32.mrb[0].mxu0
        %v6056 = vadd.f32 %v5990, %v6055
        %v6057 = vpop.f32.mrb[0].mxu0
        %6058 = vmatprep.mubr.bf16.mxu0 0
        %6059 = vmatmul.mubr.bf16.gmra.mrb[0].mxu0 %v6016
        %v6060 = vpop.f32.mrb[0].mxu0
        %v6061 = vadd.f32 %v5995, %v6060
        %v6062 = vpop.f32.mrb[0].mxu0
        %v6063 = vpop.f32.mrb[0].mxu0
        %v6064 = vpop.f32.mrb[0].mxu0
        %6065 = vdwg.mxu0
        %v6066 = vld [vmem:[#allocation4] sm:$0xe]
        %s6067 = scalar_lea.vmem %s3, 32
        %v6068 = vld [vmem:[%s6067] sm:$0xf]
        %v6069 = vld [vmem:[%s6067 + $0x4] sm:$0xf]
        %v6070 = vld [vmem:[%s6067 + $0x8] sm:$0xf]
        %v6071 = vld [vmem:[%s6067 + $0xc] sm:$0xf]
        %v6073 = vunpack.c.l.b16 %v6066
        %v6074 = vpack.c.b16 %v5914, %v6073
        %v6075 = vrot.slane %v6074, 1
        %v6076 = vrot.slane %v5918, 1
        %v6077 = vsel %vm1454, %v6075, %v6076
        %v6082 = vunpack.c.l.b16 %v6068
        %v6083 = vunpack.c.l.b16 %v6069
        %v6084 = vunpack.c.l.b16 %v6070
        %v6085 = vunpack.c.l.b16 %v6071
        %v6086 = vpack.c.b16 %v6083, %v6082
        %v6087 = vpack.c.b16 %v6085, %v6084
        %v6091 = vsel %vm4241, %v6077, 0
        %v6094 = vsel %vm4241, %v6076, 0
        %6096 = vmatprep.subr.bf16.mxu0 0
        %6097 = vmatpush1.bf16.msra.mxu0 %v6086
        %6098 = vmatprep.subr.bf16.mxu0 0
        %6099 = vmatpush1.bf16.msra.mxu0 %v6087
        %6100 = vmatprep.subr.bf16.mxu0 0
        %6101 = vmatpush1.bf16.msra.mxu0 0
        %6102 = vmatprep.subr.bf16.mxu0 0
        %6103 = vmatpush1.bf16.msra.mxu0 0
        %6104 = vmatprep.subr.bf16.mxu0 0
        %6105 = vmatpush1.bf16.msra.mxu0 0
        %6106 = vmatprep.subr.bf16.mxu0 0
        %6107 = vmatpush1.bf16.msra.mxu0 0
        %6108 = vmatprep.subr.bf16.mxu0 0
        %6109 = vmatpush1.bf16.msra.mxu0 0
        %6110 = vmatprep.subr.bf16.mxu0 0
        %6111 = vmatpush1.bf16.msra.mxu0 0
        %6112 = vmatprep.subr.bf16.mxu0 0
        %6113 = vmatpush1.bf16.msra.mxu0 0
        %6114 = vmatprep.subr.bf16.mxu0 0
        %6115 = vmatpush1.bf16.msra.mxu0 0
        %6116 = vmatprep.subr.bf16.mxu0 0
        %6117 = vmatpush1.bf16.msra.mxu0 0
        %6118 = vmatprep.subr.bf16.mxu0 0
        %6119 = vmatpush1.bf16.msra.mxu0 0
        %6120 = vmatprep.subr.bf16.mxu0 0
        %6121 = vmatpush1.bf16.msra.mxu0 0
        %6122 = vmatprep.subr.bf16.mxu0 0
        %6123 = vmatpush1.bf16.msra.mxu0 0
        %6124 = vmatprep.subr.bf16.mxu0 0
        %6125 = vmatpush1.bf16.msra.mxu0 0
        %6126 = vmatprep.subr.bf16.mxu0 0
        %6127 = vmatpush1.bf16.msra.mxu0 0
        %6128 = vmatprep.mubr.bf16.mxu0 0
        %6129 = vmatmul.mubr.bf16.gmra.mrb[0].mxu0 %v6091
        %v6130 = vpop.f32.mrb[0].mxu0
        %v6131 = vadd.f32 0.0, %v6130
        %v6132 = vpop.f32.mrb[0].mxu0
        %v6133 = vpop.f32.mrb[0].mxu0
        %v6134 = vadd.f32 0.0, %v6133
        %v6135 = vpop.f32.mrb[0].mxu0
        %6136 = vmatprep.mubr.bf16.mxu0 0
        %6137 = vmatmul.mubr.bf16.gmra.mrb[0].mxu0 %v6094
        %v6138 = vpop.f32.mrb[0].mxu0
        %v6139 = vadd.f32 0.0, %v6138
        %v6140 = vpop.f32.mrb[0].mxu0
        %v6141 = vpop.f32.mrb[0].mxu0
        %v6142 = vpop.f32.mrb[0].mxu0
        %6143 = vdwg.mxu0
        %v6144 = vadd.f32 %v6053, %v6131
        %v6145 = vadd.f32 %v6056, %v6134
        %v6146 = vadd.f32 %v6061, %v6139
        %v6147 = vld [vmem:[#allocation4] sm:$0x8]
        %v6148 = vld [vmem:[#allocation4 + $0xc] sm:$0x7]
        %s6149 = scalar_lea.vmem %s3, 48
        %v6150 = vld [vmem:[%s6149] sm:$0xf]
        %v6151 = vld [vmem:[%s6149 + $0x4] sm:$0xf]
        %v6152 = vld [vmem:[%s6149 + $0x8] sm:$0xf]
        %v6153 = vld [vmem:[%s6149 + $0xc] sm:$0xf]
        %v6156 = vunpack.c.l.b16 %v6147
        %v6157 = vunpack.c.l.b16 %v6148
        %v6158 = vpack.c.b16 %v5914, %v6156
        %v6159 = vpack.c.b16 %v6157, %v5915
        %v6160 = vrot.slane %v6158, 3
        %v6161 = vrot.slane %v6159, 3
        %v6162 = vsel %vm3854, %v6160, %v6161
        %v6167 = vunpack.c.l.b16 %v6150
        %v6168 = vunpack.c.l.b16 %v6151
        %v6169 = vunpack.c.l.b16 %v6152
        %v6170 = vunpack.c.l.b16 %v6153
        %v6171 = vpack.c.b16 %v6168, %v6167
        %v6172 = vpack.c.b16 %v6170, %v6169
        %v6176 = vsel %vm4241, %v6162, 0
        %v6179 = vsel %vm4241, %v6161, 0
        %6181 = vmatprep.subr.bf16.mxu0 0
        %6182 = vmatpush1.bf16.msra.mxu0 %v6171
        %6183 = vmatprep.subr.bf16.mxu0 0
        %6184 = vmatpush1.bf16.msra.mxu0 %v6172
        %6185 = vmatprep.subr.bf16.mxu0 0
        %6186 = vmatpush1.bf16.msra.mxu0 0
        %6187 = vmatprep.subr.bf16.mxu0 0
        %6188 = vmatpush1.bf16.msra.mxu0 0
        %6189 = vmatprep.subr.bf16.mxu0 0
        %6190 = vmatpush1.bf16.msra.mxu0 0
        %6191 = vmatprep.subr.bf16.mxu0 0
        %6192 = vmatpush1.bf16.msra.mxu0 0
        %6193 = vmatprep.subr.bf16.mxu0 0
        %6194 = vmatpush1.bf16.msra.mxu0 0
        %6195 = vmatprep.subr.bf16.mxu0 0
        %6196 = vmatpush1.bf16.msra.mxu0 0
        %6197 = vmatprep.subr.bf16.mxu0 0
        %6198 = vmatpush1.bf16.msra.mxu0 0
        %6199 = vmatprep.subr.bf16.mxu0 0
        %6200 = vmatpush1.bf16.msra.mxu0 0
        %6201 = vmatprep.subr.bf16.mxu0 0
        %6202 = vmatpush1.bf16.msra.mxu0 0
        %6203 = vmatprep.subr.bf16.mxu0 0
        %6204 = vmatpush1.bf16.msra.mxu0 0
        %6205 = vmatprep.subr.bf16.mxu0 0
        %6206 = vmatpush1.bf16.msra.mxu0 0
        %6207 = vmatprep.subr.bf16.mxu0 0
        %6208 = vmatpush1.bf16.msra.mxu0 0
        %6209 = vmatprep.subr.bf16.mxu0 0
        %6210 = vmatpush1.bf16.msra.mxu0 0
        %6211 = vmatprep.subr.bf16.mxu0 0
        %6212 = vmatpush1.bf16.msra.mxu0 0
        %6213 = vmatprep.mubr.bf16.mxu0 0
        %6214 = vmatmul.mubr.bf16.gmra.mrb[0].mxu0 %v6176
        %v6215 = vpop.f32.mrb[0].mxu0
        %v6216 = vadd.f32 0.0, %v6215
        %v6217 = vpop.f32.mrb[0].mxu0
        %v6218 = vpop.f32.mrb[0].mxu0
        %v6219 = vadd.f32 0.0, %v6218
        %v6220 = vpop.f32.mrb[0].mxu0
        %6221 = vmatprep.mubr.bf16.mxu0 0
        %6222 = vmatmul.mubr.bf16.gmra.mrb[0].mxu0 %v6179
        %v6223 = vpop.f32.mrb[0].mxu0
        %v6224 = vadd.f32 0.0, %v6223
        %v6225 = vpop.f32.mrb[0].mxu0
        %v6226 = vpop.f32.mrb[0].mxu0
        %v6227 = vpop.f32.mrb[0].mxu0
        %6228 = vdwg.mxu0
        %v6229 = vadd.f32 %v6144, %v6216
        %v6230 = vadd.f32 %v6145, %v6219
        %v6231 = vadd.f32 %v6146, %v6224
        %v6232 = vld [vmem:[#allocation4 + $0xc] sm:$0xf]
        %s6233 = scalar_lea.vmem %s3, 64
        %v6234 = vld [vmem:[%s6233] sm:$0xf]
        %v6235 = vld [vmem:[%s6233 + $0x4] sm:$0xf]
        %v6236 = vld [vmem:[%s6233 + $0x8] sm:$0xf]
        %v6237 = vld [vmem:[%s6233 + $0xc] sm:$0xf]
        %v6239 = vunpack.c.l.b16 %v6232
        %v6240 = vpack.c.b16 %v6239, %v5915
        %vm6241 = vsmask.f32 4352
        %v6243 = vshrl.u32 %v6158, 16
        %v6245 = vrot.slane %v6243, 3
        %v6246 = vshll.u32 %v6158, 16
        %v6248 = vrot.slane %v6246, 4
        %v6249 = vor.u32 %v6245, %v6248
        %v6251 = vshrl.u32 %v6240, 16
        %v6253 = vrot.slane %v6251, 3
        %v6254 = vshll.u32 %v6240, 16
        %v6256 = vrot.slane %v6254, 4
        %v6257 = vor.u32 %v6253, %v6256
        %v6258 = vsel %vm6241, %v6249, %v6257
        %v6263 = vunpack.c.l.b16 %v6234
        %v6264 = vunpack.c.l.b16 %v6235
        %v6265 = vunpack.c.l.b16 %v6236
        %v6266 = vunpack.c.l.b16 %v6237
        %v6267 = vpack.c.b16 %v6264, %v6263
        %v6268 = vpack.c.b16 %v6266, %v6265
        %v6272 = vsel %vm4241, %v6258, 0
        %v6275 = vsel %vm4241, %v6257, 0
        %6277 = vmatprep.subr.bf16.mxu0 0
        %6278 = vmatpush1.bf16.msra.mxu0 %v6267
        %6279 = vmatprep.subr.bf16.mxu0 0
        %6280 = vmatpush1.bf16.msra.mxu0 %v6268
        %6281 = vmatprep.subr.bf16.mxu0 0
        %6282 = vmatpush1.bf16.msra.mxu0 0
        %6283 = vmatprep.subr.bf16.mxu0 0
        %6284 = vmatpush1.bf16.msra.mxu0 0
        %6285 = vmatprep.subr.bf16.mxu0 0
        %6286 = vmatpush1.bf16.msra.mxu0 0
        %6287 = vmatprep.subr.bf16.mxu0 0
        %6288 = vmatpush1.bf16.msra.mxu0 0
        %6289 = vmatprep.subr.bf16.mxu0 0
        %6290 = vmatpush1.bf16.msra.mxu0 0
        %6291 = vmatprep.subr.bf16.mxu0 0
        %6292 = vmatpush1.bf16.msra.mxu0 0
        %6293 = vmatprep.subr.bf16.mxu0 0
        %6294 = vmatpush1.bf16.msra.mxu0 0
        %6295 = vmatprep.subr.bf16.mxu0 0
        %6296 = vmatpush1.bf16.msra.mxu0 0
        %6297 = vmatprep.subr.bf16.mxu0 0
        %6298 = vmatpush1.bf16.msra.mxu0 0
        %6299 = vmatprep.subr.bf16.mxu0 0
        %6300 = vmatpush1.bf16.msra.mxu0 0
        %6301 = vmatprep.subr.bf16.mxu0 0
        %6302 = vmatpush1.bf16.msra.mxu0 0
        %6303 = vmatprep.subr.bf16.mxu0 0
        %6304 = vmatpush1.bf16.msra.mxu0 0
        %6305 = vmatprep.subr.bf16.mxu0 0
        %6306 = vmatpush1.bf16.msra.mxu0 0
        %6307 = vmatprep.subr.bf16.mxu0 0
        %6308 = vmatpush1.bf16.msra.mxu0 0
        %6309 = vmatprep.mubr.bf16.mxu0 0
        %6310 = vmatmul.mubr.bf16.gmra.mrb[0].mxu0 %v6272
        %v6311 = vpop.f32.mrb[0].mxu0
        %v6312 = vadd.f32 0.0, %v6311
        %v6313 = vpop.f32.mrb[0].mxu0
        %v6314 = vpop.f32.mrb[0].mxu0
        %v6315 = vadd.f32 0.0, %v6314
        %v6316 = vpop.f32.mrb[0].mxu0
        %6317 = vmatprep.mubr.bf16.mxu0 0
        %6318 = vmatmul.mubr.bf16.gmra.mrb[0].mxu0 %v6275
        %v6319 = vpop.f32.mrb[0].mxu0
        %v6320 = vadd.f32 0.0, %v6319
        %v6321 = vpop.f32.mrb[0].mxu0
        %v6322 = vpop.f32.mrb[0].mxu0
        %v6323 = vpop.f32.mrb[0].mxu0
        %6324 = vdwg.mxu0
        %v6325 = vadd.f32 %v6229, %v6312
        %v6326 = vadd.f32 %v6230, %v6315
        %v6327 = vadd.f32 %v6231, %v6320
        %s6328 = scalar_lea.vmem %s3, 80
        %v6329 = vld [vmem:[%s6328] sm:$0xf]
        %v6330 = vld [vmem:[%s6328 + $0x4] sm:$0xf]
        %v6331 = vld [vmem:[%s6328 + $0x8] sm:$0xf]
        %v6332 = vld [vmem:[%s6328 + $0xc] sm:$0xf]
        %v6333 = vpack.c.b16 %v5915, %v5914
        %v6334 = vpack.c.b16 %v6239, %v6239
        %v6339 = vunpack.c.l.b16 %v6329
        %v6340 = vunpack.c.l.b16 %v6330
        %v6341 = vunpack.c.l.b16 %v6331
        %v6342 = vunpack.c.l.b16 %v6332
        %v6343 = vpack.c.b16 %v6340, %v6339
        %v6344 = vpack.c.b16 %v6342, %v6341
        %v6348 = vsel %vm4241, %v6333, 0
        %v6351 = vsel %vm4241, %v6334, 0
        %6353 = vmatprep.subr.bf16.mxu0 0
        %6354 = vmatpush1.bf16.msra.mxu0 %v6343
        %6355 = vmatprep.subr.bf16.mxu0 0
        %6356 = vmatpush1.bf16.msra.mxu0 %v6344
        %6357 = vmatprep.subr.bf16.mxu0 0
        %6358 = vmatpush1.bf16.msra.mxu0 0
        %6359 = vmatprep.subr.bf16.mxu0 0
        %6360 = vmatpush1.bf16.msra.mxu0 0
        %6361 = vmatprep.subr.bf16.mxu0 0
        %6362 = vmatpush1.bf16.msra.mxu0 0
        %6363 = vmatprep.subr.bf16.mxu0 0
        %6364 = vmatpush1.bf16.msra.mxu0 0
        %6365 = vmatprep.subr.bf16.mxu0 0
        %6366 = vmatpush1.bf16.msra.mxu0 0
        %6367 = vmatprep.subr.bf16.mxu0 0
        %6368 = vmatpush1.bf16.msra.mxu0 0
        %6369 = vmatprep.subr.bf16.mxu0 0
        %6370 = vmatpush1.bf16.msra.mxu0 0
        %6371 = vmatprep.subr.bf16.mxu0 0
        %6372 = vmatpush1.bf16.msra.mxu0 0
        %6373 = vmatprep.subr.bf16.mxu0 0
        %6374 = vmatpush1.bf16.msra.mxu0 0
        %6375 = vmatprep.subr.bf16.mxu0 0
        %6376 = vmatpush1.bf16.msra.mxu0 0
        %6377 = vmatprep.subr.bf16.mxu0 0
        %6378 = vmatpush1.bf16.msra.mxu0 0
        %6379 = vmatprep.subr.bf16.mxu0 0
        %6380 = vmatpush1.bf16.msra.mxu0 0
        %6381 = vmatprep.subr.bf16.mxu0 0
        %6382 = vmatpush1.bf16.msra.mxu0 0
        %6383 = vmatprep.subr.bf16.mxu0 0
        %6384 = vmatpush1.bf16.msra.mxu0 0
        %6385 = vmatprep.mubr.bf16.mxu0 0
        %6386 = vmatmul.mubr.bf16.gmra.mrb[0].mxu0 %v6348
        %v6387 = vpop.f32.mrb[0].mxu0
        %v6388 = vadd.f32 0.0, %v6387
        %v6389 = vpop.f32.mrb[0].mxu0
        %v6390 = vpop.f32.mrb[0].mxu0
        %v6391 = vadd.f32 0.0, %v6390
        %v6392 = vpop.f32.mrb[0].mxu0
        %6393 = vmatprep.mubr.bf16.mxu0 0
        %6394 = vmatmul.mubr.bf16.gmra.mrb[0].mxu0 %v6351
        %v6395 = vpop.f32.mrb[0].mxu0
        %v6396 = vadd.f32 0.0, %v6395
        %v6397 = vpop.f32.mrb[0].mxu0
        %v6398 = vpop.f32.mrb[0].mxu0
        %v6399 = vpop.f32.mrb[0].mxu0
        %6400 = vdwg.mxu0
        %v6401 = vadd.f32 %v6325, %v6388
        %v6402 = vadd.f32 %v6326, %v6391
        %v6403 = vadd.f32 %v6327, %v6396
        %v6404 = vld [vmem:[#allocation4 + $0x4] sm:$0xc]
        %v6405 = vld [vmem:[#allocation4 + $0x8] sm:$0xf]
        %v6406 = vld [vmem:[#allocation4 + $0xc] sm:$0xf]
        %v6407 = vld [vmem:[#allocation4 + $0x10] sm:$0x3]
        %s6408 = scalar_lea.vmem %s3, 96
        %v6409 = vld [vmem:[%s6408] sm:$0xf]
        %v6410 = vld [vmem:[%s6408 + $0x4] sm:$0xf]
        %v6411 = vld [vmem:[%s6408 + $0x8] sm:$0xf]
        %v6412 = vld [vmem:[%s6408 + $0xc] sm:$0xf]
        %v6417 = vunpack.c.l.b16 %v6404
        %v6418 = vunpack.c.l.b16 %v6405
        %v6419 = vunpack.c.l.b16 %v6406
        %v6420 = vunpack.c.l.b16 %v6407
        %v6421 = vpack.c.b16 %v6418, %v6417
        %v6422 = vpack.c.b16 %v6420, %v6419
        %v6423 = vrot.slane %v6421, 2
        %v6424 = vrot.slane %v6422, 2
        %v6425 = vsel %vm2654, %v6423, %v6424
        %v6430 = vunpack.c.l.b16 %v6409
        %v6431 = vunpack.c.l.b16 %v6410
        %v6432 = vunpack.c.l.b16 %v6411
        %v6433 = vunpack.c.l.b16 %v6412
        %v6434 = vpack.c.b16 %v6431, %v6430
        %v6435 = vpack.c.b16 %v6433, %v6432
        %v6439 = vsel %vm4241, %v6425, 0
        %v6442 = vsel %vm4241, %v6424, 0
        %6444 = vmatprep.subr.bf16.mxu0 0
        %6445 = vmatpush1.bf16.msra.mxu0 %v6434
        %6446 = vmatprep.subr.bf16.mxu0 0
        %6447 = vmatpush1.bf16.msra.mxu0 %v6435
        %6448 = vmatprep.subr.bf16.mxu0 0
        %6449 = vmatpush1.bf16.msra.mxu0 0
        %6450 = vmatprep.subr.bf16.mxu0 0
        %6451 = vmatpush1.bf16.msra.mxu0 0
        %6452 = vmatprep.subr.bf16.mxu0 0
        %6453 = vmatpush1.bf16.msra.mxu0 0
        %6454 = vmatprep.subr.bf16.mxu0 0
        %6455 = vmatpush1.bf16.msra.mxu0 0
        %6456 = vmatprep.subr.bf16.mxu0 0
        %6457 = vmatpush1.bf16.msra.mxu0 0
        %6458 = vmatprep.subr.bf16.mxu0 0
        %6459 = vmatpush1.bf16.msra.mxu0 0
        %6460 = vmatprep.subr.bf16.mxu0 0
        %6461 = vmatpush1.bf16.msra.mxu0 0
        %6462 = vmatprep.subr.bf16.mxu0 0
        %6463 = vmatpush1.bf16.msra.mxu0 0
        %6464 = vmatprep.subr.bf16.mxu0 0
        %6465 = vmatpush1.bf16.msra.mxu0 0
        %6466 = vmatprep.subr.bf16.mxu0 0
        %6467 = vmatpush1.bf16.msra.mxu0 0
        %6468 = vmatprep.subr.bf16.mxu0 0
        %6469 = vmatpush1.bf16.msra.mxu0 0
        %6470 = vmatprep.subr.bf16.mxu0 0
        %6471 = vmatpush1.bf16.msra.mxu0 0
        %6472 = vmatprep.subr.bf16.mxu0 0
        %6473 = vmatpush1.bf16.msra.mxu0 0
        %6474 = vmatprep.subr.bf16.mxu0 0
        %6475 = vmatpush1.bf16.msra.mxu0 0
        %6476 = vmatprep.mubr.bf16.mxu0 0
        %6477 = vmatmul.mubr.bf16.gmra.mrb[0].mxu0 %v6439
        %v6478 = vpop.f32.mrb[0].mxu0
        %v6479 = vadd.f32 0.0, %v6478
        %v6480 = vpop.f32.mrb[0].mxu0
        %v6481 = vpop.f32.mrb[0].mxu0
        %v6482 = vadd.f32 0.0, %v6481
        %v6483 = vpop.f32.mrb[0].mxu0
        %6484 = vmatprep.mubr.bf16.mxu0 0
        %6485 = vmatmul.mubr.bf16.gmra.mrb[0].mxu0 %v6442
        %v6486 = vpop.f32.mrb[0].mxu0
        %v6487 = vadd.f32 0.0, %v6486
        %v6488 = vpop.f32.mrb[0].mxu0
        %v6489 = vpop.f32.mrb[0].mxu0
        %v6490 = vpop.f32.mrb[0].mxu0
        %6491 = vdwg.mxu0
        %v6492 = vadd.f32 %v6401, %v6479
        %v6493 = vadd.f32 %v6402, %v6482
        %v6494 = vadd.f32 %v6403, %v6487
        %v6495 = vld [vmem:[#allocation4 + $0x10] sm:$0x7]
        %s6496 = scalar_lea.vmem %s3, 112
        %v6497 = vld [vmem:[%s6496] sm:$0xf]
        %v6498 = vld [vmem:[%s6496 + $0x4] sm:$0xf]
        %v6499 = vld [vmem:[%s6496 + $0x8] sm:$0xf]
        %v6500 = vld [vmem:[%s6496 + $0xc] sm:$0xf]
        %v6502 = vunpack.c.l.b16 %v6495
        %v6503 = vpack.c.b16 %v6502, %v6419
        %v6505 = vshrl.u32 %v6421, 16
        %v6507 = vrot.slane %v6505, 2
        %v6508 = vshll.u32 %v6421, 16
        %v6510 = vrot.slane %v6508, 3
        %v6511 = vor.u32 %v6507, %v6510
        %v6513 = vshrl.u32 %v6503, 16
        %v6515 = vrot.slane %v6513, 2
        %v6516 = vshll.u32 %v6503, 16
        %v6518 = vrot.slane %v6516, 3
        %v6519 = vor.u32 %v6515, %v6518
        %v6520 = vsel %vm3407, %v6511, %v6519
        %v6525 = vunpack.c.l.b16 %v6497
        %v6526 = vunpack.c.l.b16 %v6498
        %v6527 = vunpack.c.l.b16 %v6499
        %v6528 = vunpack.c.l.b16 %v6500
        %v6529 = vpack.c.b16 %v6526, %v6525
        %v6530 = vpack.c.b16 %v6528, %v6527
        %v6534 = vsel %vm4241, %v6520, 0
        %v6537 = vsel %vm4241, %v6519, 0
        %6539 = vmatprep.subr.bf16.mxu0 0
        %6540 = vmatpush1.bf16.msra.mxu0 %v6529
        %6541 = vmatprep.subr.bf16.mxu0 0
        %6542 = vmatpush1.bf16.msra.mxu0 %v6530
        %6543 = vmatprep.subr.bf16.mxu0 0
        %6544 = vmatpush1.bf16.msra.mxu0 0
        %6545 = vmatprep.subr.bf16.mxu0 0
        %6546 = vmatpush1.bf16.msra.mxu0 0
        %6547 = vmatprep.subr.bf16.mxu0 0
        %6548 = vmatpush1.bf16.msra.mxu0 0
        %6549 = vmatprep.subr.bf16.mxu0 0
        %6550 = vmatpush1.bf16.msra.mxu0 0
        %6551 = vmatprep.subr.bf16.mxu0 0
        %6552 = vmatpush1.bf16.msra.mxu0 0
        %6553 = vmatprep.subr.bf16.mxu0 0
        %6554 = vmatpush1.bf16.msra.mxu0 0
        %6555 = vmatprep.subr.bf16.mxu0 0
        %6556 = vmatpush1.bf16.msra.mxu0 0
        %6557 = vmatprep.subr.bf16.mxu0 0
        %6558 = vmatpush1.bf16.msra.mxu0 0
        %6559 = vmatprep.subr.bf16.mxu0 0
        %6560 = vmatpush1.bf16.msra.mxu0 0
        %6561 = vmatprep.subr.bf16.mxu0 0
        %6562 = vmatpush1.bf16.msra.mxu0 0
        %6563 = vmatprep.subr.bf16.mxu0 0
        %6564 = vmatpush1.bf16.msra.mxu0 0
        %6565 = vmatprep.subr.bf16.mxu0 0
        %6566 = vmatpush1.bf16.msra.mxu0 0
        %6567 = vmatprep.subr.bf16.mxu0 0
        %6568 = vmatpush1.bf16.msra.mxu0 0
        %6569 = vmatprep.subr.bf16.mxu0 0
        %6570 = vmatpush1.bf16.msra.mxu0 0
        %6571 = vmatprep.mubr.bf16.mxu0 0
        %6572 = vmatmul.mubr.bf16.gmra.mrb[0].mxu0 %v6534
        %v6573 = vpop.f32.mrb[0].mxu0
        %v6574 = vadd.f32 0.0, %v6573
        %v6575 = vpop.f32.mrb[0].mxu0
        %v6576 = vpop.f32.mrb[0].mxu0
        %v6577 = vadd.f32 0.0, %v6576
        %v6578 = vpop.f32.mrb[0].mxu0
        %6579 = vmatprep.mubr.bf16.mxu0 0
        %6580 = vmatmul.mubr.bf16.gmra.mrb[0].mxu0 %v6537
        %v6581 = vpop.f32.mrb[0].mxu0
        %v6582 = vadd.f32 0.0, %v6581
        %v6583 = vpop.f32.mrb[0].mxu0
        %v6584 = vpop.f32.mrb[0].mxu0
        %v6585 = vpop.f32.mrb[0].mxu0
        %6586 = vdwg.mxu0
        %v6587 = vadd.f32 %v6492, %v6574
        %v6588 = vadd.f32 %v6493, %v6577
        %v6589 = vadd.f32 %v6494, %v6582
        %v6590 = vld [vmem:[#allocation4 + $0x4] sm:$0x8]
        %s6591 = scalar_lea.vmem %s3, 128
        %v6592 = vld [vmem:[%s6591] sm:$0xf]
        %v6593 = vld [vmem:[%s6591 + $0x4] sm:$0xf]
        %v6594 = vld [vmem:[%s6591 + $0x8] sm:$0xf]
        %v6595 = vld [vmem:[%s6591 + $0xc] sm:$0xf]
        %v6597 = vunpack.c.l.b16 %v6590
        %v6598 = vpack.c.b16 %v6418, %v6597
        %v6599 = vrot.slane %v6598, 3
        %v6600 = vrot.slane %v6503, 3
        %v6601 = vsel %vm3854, %v6599, %v6600
        %v6606 = vunpack.c.l.b16 %v6592
        %v6607 = vunpack.c.l.b16 %v6593
        %v6608 = vunpack.c.l.b16 %v6594
        %v6609 = vunpack.c.l.b16 %v6595
        %v6610 = vpack.c.b16 %v6607, %v6606
        %v6611 = vpack.c.b16 %v6609, %v6608
        %v6615 = vsel %vm4241, %v6601, 0
        %v6618 = vsel %vm4241, %v6600, 0
        %6620 = vmatprep.subr.bf16.mxu0 0
        %6621 = vmatpush1.bf16.msra.mxu0 %v6610
        %6622 = vmatprep.subr.bf16.mxu0 0
        %6623 = vmatpush1.bf16.msra.mxu0 %v6611
        %6624 = vmatprep.subr.bf16.mxu0 0
        %6625 = vmatpush1.bf16.msra.mxu0 0
        %6626 = vmatprep.subr.bf16.mxu0 0
        %6627 = vmatpush1.bf16.msra.mxu0 0
        %6628 = vmatprep.subr.bf16.mxu0 0
        %6629 = vmatpush1.bf16.msra.mxu0 0
        %6630 = vmatprep.subr.bf16.mxu0 0
        %6631 = vmatpush1.bf16.msra.mxu0 0
        %6632 = vmatprep.subr.bf16.mxu0 0
        %6633 = vmatpush1.bf16.msra.mxu0 0
        %6634 = vmatprep.subr.bf16.mxu0 0
        %6635 = vmatpush1.bf16.msra.mxu0 0
        %6636 = vmatprep.subr.bf16.mxu0 0
        %6637 = vmatpush1.bf16.msra.mxu0 0
        %6638 = vmatprep.subr.bf16.mxu0 0
        %6639 = vmatpush1.bf16.msra.mxu0 0
        %6640 = vmatprep.subr.bf16.mxu0 0
        %6641 = vmatpush1.bf16.msra.mxu0 0
        %6642 = vmatprep.subr.bf16.mxu0 0
        %6643 = vmatpush1.bf16.msra.mxu0 0
        %6644 = vmatprep.subr.bf16.mxu0 0
        %6645 = vmatpush1.bf16.msra.mxu0 0
        %6646 = vmatprep.subr.bf16.mxu0 0
        %6647 = vmatpush1.bf16.msra.mxu0 0
        %6648 = vmatprep.subr.bf16.mxu0 0
        %6649 = vmatpush1.bf16.msra.mxu0 0
        %6650 = vmatprep.subr.bf16.mxu0 0
        %6651 = vmatpush1.bf16.msra.mxu0 0
        %6652 = vmatprep.mubr.bf16.mxu0 0
        %6653 = vmatmul.mubr.bf16.gmra.mrb[0].mxu0 %v6615
        %v6654 = vpop.f32.mrb[0].mxu0
        %v6655 = vadd.f32 0.0, %v6654
        %v6656 = vpop.f32.mrb[0].mxu0
        %v6657 = vpop.f32.mrb[0].mxu0
        %v6658 = vadd.f32 0.0, %v6657
        %v6659 = vpop.f32.mrb[0].mxu0
        %6660 = vmatprep.mubr.bf16.mxu0 0
        %6661 = vmatmul.mubr.bf16.gmra.mrb[0].mxu0 %v6618
        %v6662 = vpop.f32.mrb[0].mxu0
        %v6663 = vadd.f32 0.0, %v6662
        %v6664 = vpop.f32.mrb[0].mxu0
        %v6665 = vpop.f32.mrb[0].mxu0
        %v6666 = vpop.f32.mrb[0].mxu0
        %6667 = vdwg.mxu0
        %v6668 = vadd.f32 %v6587, %v6655
        %v6669 = vadd.f32 %v6588, %v6658
        %v6670 = vadd.f32 %v6589, %v6663
        %v6671 = vld [vmem:[%s7] sm:$0x1]
        %v6673 = vlaneseq
        %v6674 = vshrl.u32 %v6673, 7
        %v6675 = vsub.s32 0, %v6674
        %v6676 = vrot.slane %v6671, %v6675
        %v6678 = vadd.f32 %v6668, %v6676
        %v6679 = vadd.f32 %v6669, %v6676
        %v6680 = vadd.f32 %v6670, %v6676
        %v6681 = vmax.f32 %v6678, 0.0
        %v6682 = vmax.f32 %v6679, 0.0
        %v6683 = vmax.f32 %v6680, 0.0
        %vm6684 = vcmask 523264
        %6685 = vst.msk [vmem:[#allocation8] sm:$0xff] %vm6684, %v6681
        %6686 = vst.msk [vmem:[#allocation8 + $0x8] sm:$0xff] %vm6684, %v6682
        %6687 = vst.msk [vmem:[#allocation8 + $0x10] sm:$0xff] %vm6684, %v6683
        %s6688 = scalar_lea.vmem [#allocation8], 1
        %v6689 = vld [vmem:[%s6688] ss:$2 sm:$0x3]
        %s6690 = scalar_lea.vmem [#allocation8], 2
        %v6691 = vld [vmem:[%s6690] ss:$2 sm:$0x3]
        %v6692 = vmax.f32 %v6689, %v6691
        %s6693 = scalar_lea.vmem [#allocation8], 7
        %v6694 = vld [vmem:[%s6693] ss:$2 sm:$0x3]
        %s6695 = scalar_lea.vmem [#allocation8], 8
        %v6696 = vld [vmem:[%s6695] ss:$2 sm:$0x3]
        %v6697 = vmax.f32 %v6694, %v6696
        %v6698 = vmax.f32 %v6692, %v6697
        %v6699 = vpack.c.bf16 %v6698, %v6698
        %v6701 = vunpack.c.l.b16 %v6699
        %v6702 = vpack.c.b16 %v6701, %v6701
        %v6703 = vrot.slane %v6702, 5
        %vm6705 = vcmask 519171
        %6706 = vst.msk [vmem:[#allocation5] sm:$0x8] %vm6705, %v6703
        %s6707 = scalar_lea.vmem [#allocation8], 13
        %v6708 = vld [vmem:[%s6707] ss:$2 sm:$0x3]
        %s6709 = scalar_lea.vmem [#allocation8], 14
        %v6710 = vld [vmem:[%s6709] ss:$2 sm:$0x3]
        %v6711 = vmax.f32 %v6708, %v6710
        %s6712 = scalar_lea.vmem [#allocation8], 19
        %v6713 = vld [vmem:[%s6712] ss:$2 sm:$0x3]
        %s6714 = scalar_lea.vmem [#allocation8], 20
        %v6715 = vld [vmem:[%s6714] ss:$2 sm:$0x3]
        %v6716 = vmax.f32 %v6713, %v6715
        %v6717 = vmax.f32 %v6711, %v6716
        %v6718 = vpack.c.bf16 %v6717, %v6717
        %v6720 = vunpack.c.l.b16 %v6718
        %v6721 = vpack.c.b16 %v6720, %v6720
        %v6722 = vrot.slane %v6721, 7
        %vm6724 = vcmask 517121
        %6725 = vst.msk [vmem:[#allocation5 + $0x4] sm:$0x2] %vm6724, %v6722
        %v6726 = vld [vmem:[#allocation5] sm:$0xf]
        %v6727 = vld [vmem:[%s4] sm:$0xf]
        %v6728 = vld [vmem:[%s4 + $0x4] sm:$0xf]
        %v6729 = vld [vmem:[%s4 + $0x8] sm:$0xf]
        %v6730 = vld [vmem:[%s4 + $0xc] sm:$0xf]
        %v6731 = vld [vmem:[%s4 + $0x10] sm:$0xf]
        %v6732 = vld [vmem:[%s4 + $0x14] sm:$0xf]
        %v6733 = vld [vmem:[%s4 + $0x18] sm:$0xf]
        %v6734 = vld [vmem:[%s4 + $0x1c] sm:$0xf]
        %v6735 = vld [vmem:[#allocation5 + $0x4] sm:$0x1]
        %s6736 = scalar_lea.vmem %s4, 32
        %v6737 = vld [vmem:[%s6736] sm:$0xf]
        %v6738 = vld [vmem:[%s6736 + $0x4] sm:$0xf]
        %v6739 = vld [vmem:[%s6736 + $0x8] sm:$0xf]
        %v6740 = vld [vmem:[%s6736 + $0xc] sm:$0xf]
        %v6741 = vld [vmem:[%s6736 + $0x10] sm:$0xf]
        %v6742 = vld [vmem:[%s6736 + $0x14] sm:$0xf]
        %v6743 = vld [vmem:[%s6736 + $0x18] sm:$0xf]
        %v6744 = vld [vmem:[%s6736 + $0x1c] sm:$0xf]
        %v6747 = vunpack.c.l.b16 %v6726
        %v6748 = vunpack.c.l.b16 %v6735
        %v6749 = vpack.c.b16 %v6748, %v6747
        %v6751 = vshrl.u32 %v6749, 16
        %v6753 = vshll.u32 %v6749, 16
        %v6755 = vrot.slane %v6753, 1
        %v6756 = vor.u32 %v6751, %v6755
        %v6765 = vunpack.c.l.b16 %v6737
        %v6766 = vunpack.c.l.b16 %v6738
        %v6767 = vunpack.c.l.b16 %v6739
        %v6768 = vunpack.c.l.b16 %v6740
        %v6769 = vunpack.c.l.b16 %v6741
        %v6770 = vunpack.c.l.b16 %v6742
        %v6771 = vunpack.c.l.b16 %v6743
        %v6772 = vunpack.c.l.b16 %v6744
        %v6773 = vpack.c.b16 %v6766, %v6765
        %v6774 = vpack.c.b16 %v6768, %v6767
        %v6775 = vpack.c.b16 %v6770, %v6769
        %v6776 = vpack.c.b16 %v6772, %v6771
        %v6782 = vsel %vm6684, %v6756, 0
        %6784 = vmatprep.subr.bf16.mxu0 0
        %6785 = vmatpush1.bf16.msra.mxu0 %v6773
        %6786 = vmatprep.subr.bf16.mxu0 0
        %6787 = vmatpush1.bf16.msra.mxu0 %v6774
        %6788 = vmatprep.subr.bf16.mxu0 0
        %6789 = vmatpush1.bf16.msra.mxu0 %v6775
        %6790 = vmatprep.subr.bf16.mxu0 0
        %6791 = vmatpush1.bf16.msra.mxu0 %v6776
        %6792 = vmatprep.subr.bf16.mxu0 0
        %6793 = vmatpush1.bf16.msra.mxu0 0
        %6794 = vmatprep.subr.bf16.mxu0 0
        %6795 = vmatpush1.bf16.msra.mxu0 0
        %6796 = vmatprep.subr.bf16.mxu0 0
        %6797 = vmatpush1.bf16.msra.mxu0 0
        %6798 = vmatprep.subr.bf16.mxu0 0
        %6799 = vmatpush1.bf16.msra.mxu0 0
        %6800 = vmatprep.subr.bf16.mxu0 0
        %6801 = vmatpush1.bf16.msra.mxu0 0
        %6802 = vmatprep.subr.bf16.mxu0 0
        %6803 = vmatpush1.bf16.msra.mxu0 0
        %6804 = vmatprep.subr.bf16.mxu0 0
        %6805 = vmatpush1.bf16.msra.mxu0 0
        %6806 = vmatprep.subr.bf16.mxu0 0
        %6807 = vmatpush1.bf16.msra.mxu0 0
        %6808 = vmatprep.subr.bf16.mxu0 0
        %6809 = vmatpush1.bf16.msra.mxu0 0
        %6810 = vmatprep.subr.bf16.mxu0 0
        %6811 = vmatpush1.bf16.msra.mxu0 0
        %6812 = vmatprep.subr.bf16.mxu0 0
        %6813 = vmatpush1.bf16.msra.mxu0 0
        %6814 = vmatprep.subr.bf16.mxu0 0
        %6815 = vmatpush1.bf16.msra.mxu0 0
        %6816 = vmatprep.mubr.bf16.mxu0 0
        %6817 = vmatmul.mubr.bf16.gmra.mrb[0].mxu0 %v6782
        %v6818 = vpop.f32.mrb[0].mxu0
        %v6819 = vadd.f32 0.0, %v6818
        %v6820 = vpop.f32.mrb[0].mxu0
        %v6821 = vpop.f32.mrb[0].mxu0
        %v6822 = vpop.f32.mrb[0].mxu0
        %6823 = vdwg.mxu0
        %v6832 = vunpack.c.l.b16 %v6727
        %v6833 = vunpack.c.l.b16 %v6728
        %v6834 = vunpack.c.l.b16 %v6729
        %v6835 = vunpack.c.l.b16 %v6730
        %v6836 = vunpack.c.l.b16 %v6731
        %v6837 = vunpack.c.l.b16 %v6732
        %v6838 = vunpack.c.l.b16 %v6733
        %v6839 = vunpack.c.l.b16 %v6734
        %v6840 = vpack.c.b16 %v6833, %v6832
        %v6841 = vpack.c.b16 %v6835, %v6834
        %v6842 = vpack.c.b16 %v6837, %v6836
        %v6843 = vpack.c.b16 %v6839, %v6838
        %v6849 = vsel %vm6684, %v6726, 0
        %6851 = vmatprep.subr.bf16.mxu0 0
        %6852 = vmatpush1.bf16.msra.mxu0 %v6840
        %6853 = vmatprep.subr.bf16.mxu0 0
        %6854 = vmatpush1.bf16.msra.mxu0 %v6841
        %6855 = vmatprep.subr.bf16.mxu0 0
        %6856 = vmatpush1.bf16.msra.mxu0 %v6842
        %6857 = vmatprep.subr.bf16.mxu0 0
        %6858 = vmatpush1.bf16.msra.mxu0 %v6843
        %6859 = vmatprep.subr.bf16.mxu0 0
        %6860 = vmatpush1.bf16.msra.mxu0 0
        %6861 = vmatprep.subr.bf16.mxu0 0
        %6862 = vmatpush1.bf16.msra.mxu0 0
        %6863 = vmatprep.subr.bf16.mxu0 0
        %6864 = vmatpush1.bf16.msra.mxu0 0
        %6865 = vmatprep.subr.bf16.mxu0 0
        %6866 = vmatpush1.bf16.msra.mxu0 0
        %6867 = vmatprep.subr.bf16.mxu0 0
        %6868 = vmatpush1.bf16.msra.mxu0 0
        %6869 = vmatprep.subr.bf16.mxu0 0
        %6870 = vmatpush1.bf16.msra.mxu0 0
        %6871 = vmatprep.subr.bf16.mxu0 0
        %6872 = vmatpush1.bf16.msra.mxu0 0
        %6873 = vmatprep.subr.bf16.mxu0 0
        %6874 = vmatpush1.bf16.msra.mxu0 0
        %6875 = vmatprep.subr.bf16.mxu0 0
        %6876 = vmatpush1.bf16.msra.mxu0 0
        %6877 = vmatprep.subr.bf16.mxu0 0
        %6878 = vmatpush1.bf16.msra.mxu0 0
        %6879 = vmatprep.subr.bf16.mxu0 0
        %6880 = vmatpush1.bf16.msra.mxu0 0
        %6881 = vmatprep.subr.bf16.mxu0 0
        %6882 = vmatpush1.bf16.msra.mxu0 0
        %6883 = vmatprep.mubr.bf16.mxu0 0
        %6884 = vmatmul.mubr.bf16.gmra.mrb[0].mxu0 %v6849
        %v6885 = vpop.f32.mrb[0].mxu0
        %v6886 = vadd.f32 %v6819, %v6885
        %v6887 = vpop.f32.mrb[0].mxu0
        %v6888 = vpop.f32.mrb[0].mxu0
        %v6889 = vpop.f32.mrb[0].mxu0
        %6890 = vdwg.mxu0
        %v6891 = vld [vmem:[#allocation5] sm:$0xe]
        %s6892 = scalar_lea.vmem %s4, 64
        %v6893 = vld [vmem:[%s6892] sm:$0xf]
        %v6894 = vld [vmem:[%s6892 + $0x4] sm:$0xf]
        %v6895 = vld [vmem:[%s6892 + $0x8] sm:$0xf]
        %v6896 = vld [vmem:[%s6892 + $0xc] sm:$0xf]
        %v6897 = vld [vmem:[%s6892 + $0x10] sm:$0xf]
        %v6898 = vld [vmem:[%s6892 + $0x14] sm:$0xf]
        %v6899 = vld [vmem:[%s6892 + $0x18] sm:$0xf]
        %v6900 = vld [vmem:[%s6892 + $0x1c] sm:$0xf]
        %v6902 = vunpack.c.l.b16 %v6891
        %v6903 = vpack.c.b16 %v6748, %v6902
        %v6904 = vrot.slane %v6903, 1
        %v6913 = vunpack.c.l.b16 %v6893
        %v6914 = vunpack.c.l.b16 %v6894
        %v6915 = vunpack.c.l.b16 %v6895
        %v6916 = vunpack.c.l.b16 %v6896
        %v6917 = vunpack.c.l.b16 %v6897
        %v6918 = vunpack.c.l.b16 %v6898
        %v6919 = vunpack.c.l.b16 %v6899
        %v6920 = vunpack.c.l.b16 %v6900
        %v6921 = vpack.c.b16 %v6914, %v6913
        %v6922 = vpack.c.b16 %v6916, %v6915
        %v6923 = vpack.c.b16 %v6918, %v6917
        %v6924 = vpack.c.b16 %v6920, %v6919
        %v6930 = vsel %vm6684, %v6904, 0
        %6932 = vmatprep.subr.bf16.mxu0 0
        %6933 = vmatpush1.bf16.msra.mxu0 %v6921
        %6934 = vmatprep.subr.bf16.mxu0 0
        %6935 = vmatpush1.bf16.msra.mxu0 %v6922
        %6936 = vmatprep.subr.bf16.mxu0 0
        %6937 = vmatpush1.bf16.msra.mxu0 %v6923
        %6938 = vmatprep.subr.bf16.mxu0 0
        %6939 = vmatpush1.bf16.msra.mxu0 %v6924
        %6940 = vmatprep.subr.bf16.mxu0 0
        %6941 = vmatpush1.bf16.msra.mxu0 0
        %6942 = vmatprep.subr.bf16.mxu0 0
        %6943 = vmatpush1.bf16.msra.mxu0 0
        %6944 = vmatprep.subr.bf16.mxu0 0
        %6945 = vmatpush1.bf16.msra.mxu0 0
        %6946 = vmatprep.subr.bf16.mxu0 0
        %6947 = vmatpush1.bf16.msra.mxu0 0
        %6948 = vmatprep.subr.bf16.mxu0 0
        %6949 = vmatpush1.bf16.msra.mxu0 0
        %6950 = vmatprep.subr.bf16.mxu0 0
        %6951 = vmatpush1.bf16.msra.mxu0 0
        %6952 = vmatprep.subr.bf16.mxu0 0
        %6953 = vmatpush1.bf16.msra.mxu0 0
        %6954 = vmatprep.subr.bf16.mxu0 0
        %6955 = vmatpush1.bf16.msra.mxu0 0
        %6956 = vmatprep.subr.bf16.mxu0 0
        %6957 = vmatpush1.bf16.msra.mxu0 0
        %6958 = vmatprep.subr.bf16.mxu0 0
        %6959 = vmatpush1.bf16.msra.mxu0 0
        %6960 = vmatprep.subr.bf16.mxu0 0
        %6961 = vmatpush1.bf16.msra.mxu0 0
        %6962 = vmatprep.subr.bf16.mxu0 0
        %6963 = vmatpush1.bf16.msra.mxu0 0
        %6964 = vmatprep.mubr.bf16.mxu0 0
        %6965 = vmatmul.mubr.bf16.gmra.mrb[0].mxu0 %v6930
        %v6966 = vpop.f32.mrb[0].mxu0
        %v6967 = vadd.f32 0.0, %v6966
        %v6968 = vpop.f32.mrb[0].mxu0
        %v6969 = vpop.f32.mrb[0].mxu0
        %v6970 = vpop.f32.mrb[0].mxu0
        %6971 = vdwg.mxu0
        %v6972 = vadd.f32 %v6886, %v6967
        %v6973 = vld [vmem:[#allocation5] sm:$0xc]
        %v6974 = vld [vmem:[#allocation5 + $0x4] sm:$0x3]
        %s6975 = scalar_lea.vmem %s4, 96
        %v6976 = vld [vmem:[%s6975] sm:$0xf]
        %v6977 = vld [vmem:[%s6975 + $0x4] sm:$0xf]
        %v6978 = vld [vmem:[%s6975 + $0x8] sm:$0xf]
        %v6979 = vld [vmem:[%s6975 + $0xc] sm:$0xf]
        %v6980 = vld [vmem:[%s6975 + $0x10] sm:$0xf]
        %v6981 = vld [vmem:[%s6975 + $0x14] sm:$0xf]
        %v6982 = vld [vmem:[%s6975 + $0x18] sm:$0xf]
        %v6983 = vld [vmem:[%s6975 + $0x1c] sm:$0xf]
        %v6986 = vunpack.c.l.b16 %v6973
        %v6987 = vunpack.c.l.b16 %v6974
        %v6988 = vpack.c.b16 %v6987, %v6986
        %v6989 = vrot.slane %v6988, 2
        %v6998 = vunpack.c.l.b16 %v6976
        %v6999 = vunpack.c.l.b16 %v6977
        %v7000 = vunpack.c.l.b16 %v6978
        %v7001 = vunpack.c.l.b16 %v6979
        %v7002 = vunpack.c.l.b16 %v6980
        %v7003 = vunpack.c.l.b16 %v6981
        %v7004 = vunpack.c.l.b16 %v6982
        %v7005 = vunpack.c.l.b16 %v6983
        %v7006 = vpack.c.b16 %v6999, %v6998
        %v7007 = vpack.c.b16 %v7001, %v7000
        %v7008 = vpack.c.b16 %v7003, %v7002
        %v7009 = vpack.c.b16 %v7005, %v7004
        %v7015 = vsel %vm6684, %v6989, 0
        %7017 = vmatprep.subr.bf16.mxu0 0
        %7018 = vmatpush1.bf16.msra.mxu0 %v7006
        %7019 = vmatprep.subr.bf16.mxu0 0
        %7020 = vmatpush1.bf16.msra.mxu0 %v7007
        %7021 = vmatprep.subr.bf16.mxu0 0
        %7022 = vmatpush1.bf16.msra.mxu0 %v7008
        %7023 = vmatprep.subr.bf16.mxu0 0
        %7024 = vmatpush1.bf16.msra.mxu0 %v7009
        %7025 = vmatprep.subr.bf16.mxu0 0
        %7026 = vmatpush1.bf16.msra.mxu0 0
        %7027 = vmatprep.subr.bf16.mxu0 0
        %7028 = vmatpush1.bf16.msra.mxu0 0
        %7029 = vmatprep.subr.bf16.mxu0 0
        %7030 = vmatpush1.bf16.msra.mxu0 0
        %7031 = vmatprep.subr.bf16.mxu0 0
        %7032 = vmatpush1.bf16.msra.mxu0 0
        %7033 = vmatprep.subr.bf16.mxu0 0
        %7034 = vmatpush1.bf16.msra.mxu0 0
        %7035 = vmatprep.subr.bf16.mxu0 0
        %7036 = vmatpush1.bf16.msra.mxu0 0
        %7037 = vmatprep.subr.bf16.mxu0 0
        %7038 = vmatpush1.bf16.msra.mxu0 0
        %7039 = vmatprep.subr.bf16.mxu0 0
        %7040 = vmatpush1.bf16.msra.mxu0 0
        %7041 = vmatprep.subr.bf16.mxu0 0
        %7042 = vmatpush1.bf16.msra.mxu0 0
        %7043 = vmatprep.subr.bf16.mxu0 0
        %7044 = vmatpush1.bf16.msra.mxu0 0
        %7045 = vmatprep.subr.bf16.mxu0 0
        %7046 = vmatpush1.bf16.msra.mxu0 0
        %7047 = vmatprep.subr.bf16.mxu0 0
        %7048 = vmatpush1.bf16.msra.mxu0 0
        %7049 = vmatprep.mubr.bf16.mxu0 0
        %7050 = vmatmul.mubr.bf16.gmra.mrb[0].mxu0 %v7015
        %v7051 = vpop.f32.mrb[0].mxu0
        %v7052 = vadd.f32 0.0, %v7051
        %v7053 = vpop.f32.mrb[0].mxu0
        %v7054 = vpop.f32.mrb[0].mxu0
        %v7055 = vpop.f32.mrb[0].mxu0
        %7056 = vdwg.mxu0
        %v7057 = vadd.f32 %v6972, %v7052
        %v7058 = vld [vmem:[#allocation5 + $0x4] sm:$0x7]
        %s7059 = scalar_lea.vmem %s4, 128
        %v7060 = vld [vmem:[%s7059] sm:$0xf]
        %v7061 = vld [vmem:[%s7059 + $0x4] sm:$0xf]
        %v7062 = vld [vmem:[%s7059 + $0x8] sm:$0xf]
        %v7063 = vld [vmem:[%s7059 + $0xc] sm:$0xf]
        %v7064 = vld [vmem:[%s7059 + $0x10] sm:$0xf]
        %v7065 = vld [vmem:[%s7059 + $0x14] sm:$0xf]
        %v7066 = vld [vmem:[%s7059 + $0x18] sm:$0xf]
        %v7067 = vld [vmem:[%s7059 + $0x1c] sm:$0xf]
        %v7069 = vunpack.c.l.b16 %v7058
        %v7070 = vpack.c.b16 %v7069, %v6986
        %v7072 = vshrl.u32 %v7070, 16
        %v7074 = vrot.slane %v7072, 2
        %v7075 = vshll.u32 %v7070, 16
        %v7077 = vrot.slane %v7075, 3
        %v7078 = vor.u32 %v7074, %v7077
        %v7087 = vunpack.c.l.b16 %v7060
        %v7088 = vunpack.c.l.b16 %v7061
        %v7089 = vunpack.c.l.b16 %v7062
        %v7090 = vunpack.c.l.b16 %v7063
        %v7091 = vunpack.c.l.b16 %v7064
        %v7092 = vunpack.c.l.b16 %v7065
        %v7093 = vunpack.c.l.b16 %v7066
        %v7094 = vunpack.c.l.b16 %v7067
        %v7095 = vpack.c.b16 %v7088, %v7087
        %v7096 = vpack.c.b16 %v7090, %v7089
        %v7097 = vpack.c.b16 %v7092, %v7091
        %v7098 = vpack.c.b16 %v7094, %v7093
        %v7104 = vsel %vm6684, %v7078, 0
        %7106 = vmatprep.subr.bf16.mxu0 0
        %7107 = vmatpush1.bf16.msra.mxu0 %v7095
        %7108 = vmatprep.subr.bf16.mxu0 0
        %7109 = vmatpush1.bf16.msra.mxu0 %v7096
        %7110 = vmatprep.subr.bf16.mxu0 0
        %7111 = vmatpush1.bf16.msra.mxu0 %v7097
        %7112 = vmatprep.subr.bf16.mxu0 0
        %7113 = vmatpush1.bf16.msra.mxu0 %v7098
        %7114 = vmatprep.subr.bf16.mxu0 0
        %7115 = vmatpush1.bf16.msra.mxu0 0
        %7116 = vmatprep.subr.bf16.mxu0 0
        %7117 = vmatpush1.bf16.msra.mxu0 0
        %7118 = vmatprep.subr.bf16.mxu0 0
        %7119 = vmatpush1.bf16.msra.mxu0 0
        %7120 = vmatprep.subr.bf16.mxu0 0
        %7121 = vmatpush1.bf16.msra.mxu0 0
        %7122 = vmatprep.subr.bf16.mxu0 0
        %7123 = vmatpush1.bf16.msra.mxu0 0
        %7124 = vmatprep.subr.bf16.mxu0 0
        %7125 = vmatpush1.bf16.msra.mxu0 0
        %7126 = vmatprep.subr.bf16.mxu0 0
        %7127 = vmatpush1.bf16.msra.mxu0 0
        %7128 = vmatprep.subr.bf16.mxu0 0
        %7129 = vmatpush1.bf16.msra.mxu0 0
        %7130 = vmatprep.subr.bf16.mxu0 0
        %7131 = vmatpush1.bf16.msra.mxu0 0
        %7132 = vmatprep.subr.bf16.mxu0 0
        %7133 = vmatpush1.bf16.msra.mxu0 0
        %7134 = vmatprep.subr.bf16.mxu0 0
        %7135 = vmatpush1.bf16.msra.mxu0 0
        %7136 = vmatprep.subr.bf16.mxu0 0
        %7137 = vmatpush1.bf16.msra.mxu0 0
        %7138 = vmatprep.mubr.bf16.mxu0 0
        %7139 = vmatmul.mubr.bf16.gmra.mrb[0].mxu0 %v7104
        %v7140 = vpop.f32.mrb[0].mxu0
        %v7141 = vadd.f32 0.0, %v7140
        %v7142 = vpop.f32.mrb[0].mxu0
        %v7143 = vpop.f32.mrb[0].mxu0
        %v7144 = vpop.f32.mrb[0].mxu0
        %7145 = vdwg.mxu0
        %v7146 = vadd.f32 %v7057, %v7141
        %v7147 = vld [vmem:[#allocation5] sm:$0x8]
        %s7148 = scalar_lea.vmem %s4, 160
        %v7149 = vld [vmem:[%s7148] sm:$0xf]
        %v7150 = vld [vmem:[%s7148 + $0x4] sm:$0xf]
        %v7151 = vld [vmem:[%s7148 + $0x8] sm:$0xf]
        %v7152 = vld [vmem:[%s7148 + $0xc] sm:$0xf]
        %v7153 = vld [vmem:[%s7148 + $0x10] sm:$0xf]
        %v7154 = vld [vmem:[%s7148 + $0x14] sm:$0xf]
        %v7155 = vld [vmem:[%s7148 + $0x18] sm:$0xf]
        %v7156 = vld [vmem:[%s7148 + $0x1c] sm:$0xf]
        %v7158 = vunpack.c.l.b16 %v7147
        %v7159 = vpack.c.b16 %v7069, %v7158
        %v7160 = vrot.slane %v7159, 3
        %v7169 = vunpack.c.l.b16 %v7149
        %v7170 = vunpack.c.l.b16 %v7150
        %v7171 = vunpack.c.l.b16 %v7151
        %v7172 = vunpack.c.l.b16 %v7152
        %v7173 = vunpack.c.l.b16 %v7153
        %v7174 = vunpack.c.l.b16 %v7154
        %v7175 = vunpack.c.l.b16 %v7155
        %v7176 = vunpack.c.l.b16 %v7156
        %v7177 = vpack.c.b16 %v7170, %v7169
        %v7178 = vpack.c.b16 %v7172, %v7171
        %v7179 = vpack.c.b16 %v7174, %v7173
        %v7180 = vpack.c.b16 %v7176, %v7175
        %v7186 = vsel %vm6684, %v7160, 0
        %7188 = vmatprep.subr.bf16.mxu0 0
        %7189 = vmatpush1.bf16.msra.mxu0 %v7177
        %7190 = vmatprep.subr.bf16.mxu0 0
        %7191 = vmatpush1.bf16.msra.mxu0 %v7178
        %7192 = vmatprep.subr.bf16.mxu0 0
        %7193 = vmatpush1.bf16.msra.mxu0 %v7179
        %7194 = vmatprep.subr.bf16.mxu0 0
        %7195 = vmatpush1.bf16.msra.mxu0 %v7180
        %7196 = vmatprep.subr.bf16.mxu0 0
        %7197 = vmatpush1.bf16.msra.mxu0 0
        %7198 = vmatprep.subr.bf16.mxu0 0
        %7199 = vmatpush1.bf16.msra.mxu0 0
        %7200 = vmatprep.subr.bf16.mxu0 0
        %7201 = vmatpush1.bf16.msra.mxu0 0
        %7202 = vmatprep.subr.bf16.mxu0 0
        %7203 = vmatpush1.bf16.msra.mxu0 0
        %7204 = vmatprep.subr.bf16.mxu0 0
        %7205 = vmatpush1.bf16.msra.mxu0 0
        %7206 = vmatprep.subr.bf16.mxu0 0
        %7207 = vmatpush1.bf16.msra.mxu0 0
        %7208 = vmatprep.subr.bf16.mxu0 0
        %7209 = vmatpush1.bf16.msra.mxu0 0
        %7210 = vmatprep.subr.bf16.mxu0 0
        %7211 = vmatpush1.bf16.msra.mxu0 0
        %7212 = vmatprep.subr.bf16.mxu0 0
        %7213 = vmatpush1.bf16.msra.mxu0 0
        %7214 = vmatprep.subr.bf16.mxu0 0
        %7215 = vmatpush1.bf16.msra.mxu0 0
        %7216 = vmatprep.subr.bf16.mxu0 0
        %7217 = vmatpush1.bf16.msra.mxu0 0
        %7218 = vmatprep.subr.bf16.mxu0 0
        %7219 = vmatpush1.bf16.msra.mxu0 0
        %7220 = vmatprep.mubr.bf16.mxu0 0
        %7221 = vmatmul.mubr.bf16.gmra.mrb[0].mxu0 %v7186
        %v7222 = vpop.f32.mrb[0].mxu0
        %v7223 = vadd.f32 0.0, %v7222
        %v7224 = vpop.f32.mrb[0].mxu0
        %v7225 = vpop.f32.mrb[0].mxu0
        %v7226 = vpop.f32.mrb[0].mxu0
        %7227 = vdwg.mxu0
        %v7228 = vadd.f32 %v7146, %v7223
        %v7229 = vld [vmem:[#allocation5 + $0x4] sm:$0xf]
        %s7230 = scalar_lea.vmem %s4, 192
        %v7231 = vld [vmem:[%s7230] sm:$0xf]
        %v7232 = vld [vmem:[%s7230 + $0x4] sm:$0xf]
        %v7233 = vld [vmem:[%s7230 + $0x8] sm:$0xf]
        %v7234 = vld [vmem:[%s7230 + $0xc] sm:$0xf]
        %v7235 = vld [vmem:[%s7230 + $0x10] sm:$0xf]
        %v7236 = vld [vmem:[%s7230 + $0x14] sm:$0xf]
        %v7237 = vld [vmem:[%s7230 + $0x18] sm:$0xf]
        %v7238 = vld [vmem:[%s7230 + $0x1c] sm:$0xf]
        %v7247 = vunpack.c.l.b16 %v7231
        %v7248 = vunpack.c.l.b16 %v7232
        %v7249 = vunpack.c.l.b16 %v7233
        %v7250 = vunpack.c.l.b16 %v7234
        %v7251 = vunpack.c.l.b16 %v7235
        %v7252 = vunpack.c.l.b16 %v7236
        %v7253 = vunpack.c.l.b16 %v7237
        %v7254 = vunpack.c.l.b16 %v7238
        %v7255 = vpack.c.b16 %v7248, %v7247
        %v7256 = vpack.c.b16 %v7250, %v7249
        %v7257 = vpack.c.b16 %v7252, %v7251
        %v7258 = vpack.c.b16 %v7254, %v7253
        %v7264 = vsel %vm6684, %v7229, 0
        %7266 = vmatprep.subr.bf16.mxu0 0
        %7267 = vmatpush1.bf16.msra.mxu0 %v7255
        %7268 = vmatprep.subr.bf16.mxu0 0
        %7269 = vmatpush1.bf16.msra.mxu0 %v7256
        %7270 = vmatprep.subr.bf16.mxu0 0
        %7271 = vmatpush1.bf16.msra.mxu0 %v7257
        %7272 = vmatprep.subr.bf16.mxu0 0
        %7273 = vmatpush1.bf16.msra.mxu0 %v7258
        %7274 = vmatprep.subr.bf16.mxu0 0
        %7275 = vmatpush1.bf16.msra.mxu0 0
        %7276 = vmatprep.subr.bf16.mxu0 0
        %7277 = vmatpush1.bf16.msra.mxu0 0
        %7278 = vmatprep.subr.bf16.mxu0 0
        %7279 = vmatpush1.bf16.msra.mxu0 0
        %7280 = vmatprep.subr.bf16.mxu0 0
        %7281 = vmatpush1.bf16.msra.mxu0 0
        %7282 = vmatprep.subr.bf16.mxu0 0
        %7283 = vmatpush1.bf16.msra.mxu0 0
        %7284 = vmatprep.subr.bf16.mxu0 0
        %7285 = vmatpush1.bf16.msra.mxu0 0
        %7286 = vmatprep.subr.bf16.mxu0 0
        %7287 = vmatpush1.bf16.msra.mxu0 0
        %7288 = vmatprep.subr.bf16.mxu0 0
        %7289 = vmatpush1.bf16.msra.mxu0 0
        %7290 = vmatprep.subr.bf16.mxu0 0
        %7291 = vmatpush1.bf16.msra.mxu0 0
        %7292 = vmatprep.subr.bf16.mxu0 0
        %7293 = vmatpush1.bf16.msra.mxu0 0
        %7294 = vmatprep.subr.bf16.mxu0 0
        %7295 = vmatpush1.bf16.msra.mxu0 0
        %7296 = vmatprep.subr.bf16.mxu0 0
        %7297 = vmatpush1.bf16.msra.mxu0 0
        %7298 = vmatprep.mubr.bf16.mxu0 0
        %7299 = vmatmul.mubr.bf16.gmra.mrb[0].mxu0 %v7264
        %v7300 = vpop.f32.mrb[0].mxu0
        %v7301 = vadd.f32 0.0, %v7300
        %v7302 = vpop.f32.mrb[0].mxu0
        %v7303 = vpop.f32.mrb[0].mxu0
        %v7304 = vpop.f32.mrb[0].mxu0
        %7305 = vdwg.mxu0
        %v7306 = vadd.f32 %v7228, %v7301
        %v7307 = vld [vmem:[#allocation5 + $0x4] sm:$0xf]
        %v7308 = vld [vmem:[#allocation5 + $0x8] sm:$0x1]
        %s7309 = scalar_lea.vmem %s4, 224
        %v7310 = vld [vmem:[%s7309] sm:$0xf]
        %v7311 = vld [vmem:[%s7309 + $0x4] sm:$0xf]
        %v7312 = vld [vmem:[%s7309 + $0x8] sm:$0xf]
        %v7313 = vld [vmem:[%s7309 + $0xc] sm:$0xf]
        %v7314 = vld [vmem:[%s7309 + $0x10] sm:$0xf]
        %v7315 = vld [vmem:[%s7309 + $0x14] sm:$0xf]
        %v7316 = vld [vmem:[%s7309 + $0x18] sm:$0xf]
        %v7317 = vld [vmem:[%s7309 + $0x1c] sm:$0xf]
        %v7320 = vunpack.c.l.b16 %v7307
        %v7321 = vunpack.c.l.b16 %v7308
        %v7322 = vpack.c.b16 %v7321, %v7320
        %v7324 = vshrl.u32 %v7322, 16
        %v7326 = vshll.u32 %v7322, 16
        %v7328 = vrot.slane %v7326, 1
        %v7329 = vor.u32 %v7324, %v7328
        %v7338 = vunpack.c.l.b16 %v7310
        %v7339 = vunpack.c.l.b16 %v7311
        %v7340 = vunpack.c.l.b16 %v7312
        %v7341 = vunpack.c.l.b16 %v7313
        %v7342 = vunpack.c.l.b16 %v7314
        %v7343 = vunpack.c.l.b16 %v7315
        %v7344 = vunpack.c.l.b16 %v7316
        %v7345 = vunpack.c.l.b16 %v7317
        %v7346 = vpack.c.b16 %v7339, %v7338
        %v7347 = vpack.c.b16 %v7341, %v7340
        %v7348 = vpack.c.b16 %v7343, %v7342
        %v7349 = vpack.c.b16 %v7345, %v7344
        %v7355 = vsel %vm6684, %v7329, 0
        %7357 = vmatprep.subr.bf16.mxu0 0
        %7358 = vmatpush1.bf16.msra.mxu0 %v7346
        %7359 = vmatprep.subr.bf16.mxu0 0
        %7360 = vmatpush1.bf16.msra.mxu0 %v7347
        %7361 = vmatprep.subr.bf16.mxu0 0
        %7362 = vmatpush1.bf16.msra.mxu0 %v7348
        %7363 = vmatprep.subr.bf16.mxu0 0
        %7364 = vmatpush1.bf16.msra.mxu0 %v7349
        %7365 = vmatprep.subr.bf16.mxu0 0
        %7366 = vmatpush1.bf16.msra.mxu0 0
        %7367 = vmatprep.subr.bf16.mxu0 0
        %7368 = vmatpush1.bf16.msra.mxu0 0
        %7369 = vmatprep.subr.bf16.mxu0 0
        %7370 = vmatpush1.bf16.msra.mxu0 0
        %7371 = vmatprep.subr.bf16.mxu0 0
        %7372 = vmatpush1.bf16.msra.mxu0 0
        %7373 = vmatprep.subr.bf16.mxu0 0
        %7374 = vmatpush1.bf16.msra.mxu0 0
        %7375 = vmatprep.subr.bf16.mxu0 0
        %7376 = vmatpush1.bf16.msra.mxu0 0
        %7377 = vmatprep.subr.bf16.mxu0 0
        %7378 = vmatpush1.bf16.msra.mxu0 0
        %7379 = vmatprep.subr.bf16.mxu0 0
        %7380 = vmatpush1.bf16.msra.mxu0 0
        %7381 = vmatprep.subr.bf16.mxu0 0
        %7382 = vmatpush1.bf16.msra.mxu0 0
        %7383 = vmatprep.subr.bf16.mxu0 0
        %7384 = vmatpush1.bf16.msra.mxu0 0
        %7385 = vmatprep.subr.bf16.mxu0 0
        %7386 = vmatpush1.bf16.msra.mxu0 0
        %7387 = vmatprep.subr.bf16.mxu0 0
        %7388 = vmatpush1.bf16.msra.mxu0 0
        %7389 = vmatprep.mubr.bf16.mxu0 0
        %7390 = vmatmul.mubr.bf16.gmra.mrb[0].mxu0 %v7355
        %v7391 = vpop.f32.mrb[0].mxu0
        %v7392 = vadd.f32 0.0, %v7391
        %v7393 = vpop.f32.mrb[0].mxu0
        %v7394 = vpop.f32.mrb[0].mxu0
        %v7395 = vpop.f32.mrb[0].mxu0
        %7396 = vdwg.mxu0
        %v7397 = vadd.f32 %v7306, %v7392
        %v7398 = vld [vmem:[#allocation5 + $0x4] sm:$0xe]
        %s7399 = scalar_lea.vmem %s4, 256
        %v7400 = vld [vmem:[%s7399] sm:$0xf]
        %v7401 = vld [vmem:[%s7399 + $0x4] sm:$0xf]
        %v7402 = vld [vmem:[%s7399 + $0x8] sm:$0xf]
        %v7403 = vld [vmem:[%s7399 + $0xc] sm:$0xf]
        %v7404 = vld [vmem:[%s7399 + $0x10] sm:$0xf]
        %v7405 = vld [vmem:[%s7399 + $0x14] sm:$0xf]
        %v7406 = vld [vmem:[%s7399 + $0x18] sm:$0xf]
        %v7407 = vld [vmem:[%s7399 + $0x1c] sm:$0xf]
        %v7409 = vunpack.c.l.b16 %v7398
        %v7410 = vpack.c.b16 %v7321, %v7409
        %v7411 = vrot.slane %v7410, 1
        %v7420 = vunpack.c.l.b16 %v7400
        %v7421 = vunpack.c.l.b16 %v7401
        %v7422 = vunpack.c.l.b16 %v7402
        %v7423 = vunpack.c.l.b16 %v7403
        %v7424 = vunpack.c.l.b16 %v7404
        %v7425 = vunpack.c.l.b16 %v7405
        %v7426 = vunpack.c.l.b16 %v7406
        %v7427 = vunpack.c.l.b16 %v7407
        %v7428 = vpack.c.b16 %v7421, %v7420
        %v7429 = vpack.c.b16 %v7423, %v7422
        %v7430 = vpack.c.b16 %v7425, %v7424
        %v7431 = vpack.c.b16 %v7427, %v7426
        %v7437 = vsel %vm6684, %v7411, 0
        %7439 = vmatprep.subr.bf16.mxu0 0
        %7440 = vmatpush1.bf16.msra.mxu0 %v7428
        %7441 = vmatprep.subr.bf16.mxu0 0
        %7442 = vmatpush1.bf16.msra.mxu0 %v7429
        %7443 = vmatprep.subr.bf16.mxu0 0
        %7444 = vmatpush1.bf16.msra.mxu0 %v7430
        %7445 = vmatprep.subr.bf16.mxu0 0
        %7446 = vmatpush1.bf16.msra.mxu0 %v7431
        %7447 = vmatprep.subr.bf16.mxu0 0
        %7448 = vmatpush1.bf16.msra.mxu0 0
        %7449 = vmatprep.subr.bf16.mxu0 0
        %7450 = vmatpush1.bf16.msra.mxu0 0
        %7451 = vmatprep.subr.bf16.mxu0 0
        %7452 = vmatpush1.bf16.msra.mxu0 0
        %7453 = vmatprep.subr.bf16.mxu0 0
        %7454 = vmatpush1.bf16.msra.mxu0 0
        %7455 = vmatprep.subr.bf16.mxu0 0
        %7456 = vmatpush1.bf16.msra.mxu0 0
        %7457 = vmatprep.subr.bf16.mxu0 0
        %7458 = vmatpush1.bf16.msra.mxu0 0
        %7459 = vmatprep.subr.bf16.mxu0 0
        %7460 = vmatpush1.bf16.msra.mxu0 0
        %7461 = vmatprep.subr.bf16.mxu0 0
        %7462 = vmatpush1.bf16.msra.mxu0 0
        %7463 = vmatprep.subr.bf16.mxu0 0
        %7464 = vmatpush1.bf16.msra.mxu0 0
        %7465 = vmatprep.subr.bf16.mxu0 0
        %7466 = vmatpush1.bf16.msra.mxu0 0
        %7467 = vmatprep.subr.bf16.mxu0 0
        %7468 = vmatpush1.bf16.msra.mxu0 0
        %7469 = vmatprep.subr.bf16.mxu0 0
        %7470 = vmatpush1.bf16.msra.mxu0 0
        %7471 = vmatprep.mubr.bf16.mxu0 0
        %7472 = vmatmul.mubr.bf16.gmra.mrb[0].mxu0 %v7437
        %v7473 = vpop.f32.mrb[0].mxu0
        %v7474 = vadd.f32 0.0, %v7473
        %v7475 = vpop.f32.mrb[0].mxu0
        %v7476 = vpop.f32.mrb[0].mxu0
        %v7477 = vpop.f32.mrb[0].mxu0
        %7478 = vdwg.mxu0
        %v7479 = vadd.f32 %v7397, %v7474
        %v7480 = vld [vmem:[%s8] sm:$0x1]
        %v7482 = vlaneseq
        %v7483 = vshrl.u32 %v7482, 7
        %v7484 = vsub.s32 0, %v7483
        %v7485 = vrot.slane %v7480, %v7484
        %v7487 = vadd.f32 %v7479, %v7485
        %v7488 = vmax.f32 %v7487, 0.0
        %7489 = vst.msk [vmem:[#allocation9] sm:$0xff] %vm6684, %v7488
        %s7490 = scalar_lea.vmem [#allocation9], 1
        %v7491 = vld [vmem:[%s7490] ss:$2 sm:$0x1]
        %s7492 = scalar_lea.vmem [#allocation9], 2
        %v7493 = vld [vmem:[%s7492] ss:$2 sm:$0x1]
        %v7494 = vmax.f32 %v7491, %v7493
        %s7495 = scalar_lea.vmem [#allocation9], 5
        %v7496 = vld [vmem:[%s7495] ss:$2 sm:$0x1]
        %s7497 = scalar_lea.vmem [#allocation9], 6
        %v7498 = vld [vmem:[%s7497] ss:$2 sm:$0x1]
        %v7499 = vmax.f32 %v7496, %v7498
        %v7500 = vmax.f32 %v7494, %v7499
        %s7501 = scalar_lea.vmem [#allocation10], %s25
        %vm7502 = vcmask 516096
        %7503 = vst.msk [vmem:[%s7501] sm:$0x1] %vm7502, %v7500
        %p7504 = scmp.eq.s32.totalorder %s25, 1
        // Predicated region
        $region77: #{model_forward.1} parent=71 // pred_check
          %p7505 = pneg %p7504
        $region78: #{model_forward.1} parent=71 // pred_check_branch
          %7507 = sbr.rel (%p7505) target = $region80
        $region79: #{model_forward.1} parent=71 // pred_region
          %v7508 = vld [vmem:[#allocation10] sm:$0x3]
          %v7509 = vpack.c.bf16 %v7508, %v7508
          %v7510 = vld [vmem:[%s9] sm:$0xff]
          %v7511 = vld [vmem:[%s9 + $0x8] sm:$0xff]
          %v7512 = vld [vmem:[%s9 + $0x10] sm:$0xff]
          %v7513 = vld [vmem:[%s9 + $0x18] sm:$0xff]
          %v7514 = vld [vmem:[%s9 + $0x20] sm:$0xff]
          %v7515 = vld [vmem:[%s9 + $0x28] sm:$0xff]
          %v7516 = vld [vmem:[%s9 + $0x30] sm:$0xff]
          %v7517 = vld [vmem:[%s9 + $0x38] sm:$0xff]
          %v7518 = vld [vmem:[%s9 + $0x40] sm:$0xff]
          %v7519 = vld [vmem:[%s9 + $0x48] sm:$0xff]
          %v7520 = vld [vmem:[%s9 + $0x50] sm:$0xff]
          %v7521 = vld [vmem:[%s9 + $0x58] sm:$0xff]
          %v7522 = vld [vmem:[%s9 + $0x60] sm:$0xff]
          %v7523 = vld [vmem:[%s9 + $0x68] sm:$0xff]
          %v7524 = vld [vmem:[%s9 + $0x70] sm:$0xff]
          %v7525 = vld [vmem:[%s9 + $0x78] sm:$0xff]
          %v7526 = vld [vmem:[%s9 + $0x80] sm:$0xff]
          %v7527 = vld [vmem:[%s9 + $0x88] sm:$0xff]
          %v7528 = vld [vmem:[%s9 + $0x90] sm:$0xff]
          %v7529 = vld [vmem:[%s9 + $0x98] sm:$0xff]
          %v7530 = vld [vmem:[%s9 + $0xa0] sm:$0xff]
          %v7531 = vld [vmem:[%s9 + $0xa8] sm:$0xff]
          %v7532 = vld [vmem:[%s9 + $0xb0] sm:$0xff]
          %v7533 = vld [vmem:[%s9 + $0xb8] sm:$0xff]
          %v7534 = vld [vmem:[%s9 + $0xc0] sm:$0xff]
          %v7535 = vld [vmem:[%s9 + $0xc8] sm:$0xff]
          %v7536 = vld [vmem:[%s9 + $0xd0] sm:$0xff]
          %v7537 = vld [vmem:[%s9 + $0xd8] sm:$0xff]
          %v7538 = vld [vmem:[%s9 + $0xe0] sm:$0xff]
          %v7539 = vld [vmem:[%s9 + $0xe8] sm:$0xff]
          %v7540 = vld [vmem:[%s9 + $0xf0] sm:$0xff]
          %v7541 = vld [vmem:[%s9 + $0xf8] sm:$0xff]
          %v7542 = vld [vmem:[%s10] sm:$0xff]
          %v7544 = vlaneseq
          %v7545 = vshrl.u32 %v7544, 7
          %v7546 = vsub.s32 0, %v7545
          %v7547 = vrot.slane %v7542, %v7546
          %v7548 = vlaneseq
          %v7549 = vshrl.u32 %v7548, 7
          %v7550 = vsub.s32 1, %v7549
          %v7551 = vrot.slane %v7542, %v7550
          %v7552 = vlaneseq
          %v7553 = vshrl.u32 %v7552, 7
          %v7554 = vsub.s32 2, %v7553
          %v7555 = vrot.slane %v7542, %v7554
          %v7556 = vlaneseq
          %v7557 = vshrl.u32 %v7556, 7
          %v7558 = vsub.s32 3, %v7557
          %v7559 = vrot.slane %v7542, %v7558
          %v7560 = vlaneseq
          %v7561 = vshrl.u32 %v7560, 7
          %v7562 = vsub.s32 4, %v7561
          %v7563 = vrot.slane %v7542, %v7562
          %v7564 = vlaneseq
          %v7565 = vshrl.u32 %v7564, 7
          %v7566 = vsub.s32 5, %v7565
          %v7567 = vrot.slane %v7542, %v7566
          %v7568 = vlaneseq
          %v7569 = vshrl.u32 %v7568, 7
          %v7570 = vsub.s32 6, %v7569
          %v7571 = vrot.slane %v7542, %v7570
          %v7572 = vlaneseq
          %v7573 = vshrl.u32 %v7572, 7
          %v7574 = vsub.s32 7, %v7573
          %v7575 = vrot.slane %v7542, %v7574
          %v7616 = vunpack.c.l.b16 %v7510
          %v7617 = vunpack.c.h.b16 %v7510
          %v7618 = vunpack.c.l.b16 %v7511
          %v7619 = vunpack.c.h.b16 %v7511
          %v7620 = vunpack.c.l.b16 %v7512
          %v7621 = vunpack.c.h.b16 %v7512
          %v7622 = vunpack.c.l.b16 %v7513
          %v7623 = vunpack.c.h.b16 %v7513
          %v7624 = vunpack.c.l.b16 %v7514
          %v7625 = vunpack.c.h.b16 %v7514
          %v7626 = vunpack.c.l.b16 %v7515
          %v7627 = vunpack.c.h.b16 %v7515
          %v7628 = vunpack.c.l.b16 %v7516
          %v7629 = vunpack.c.h.b16 %v7516
          %v7630 = vunpack.c.l.b16 %v7517
          %v7631 = vunpack.c.h.b16 %v7517
          %v7632 = vunpack.c.l.b16 %v7518
          %v7633 = vunpack.c.h.b16 %v7518
          %v7634 = vunpack.c.l.b16 %v7519
          %v7635 = vunpack.c.h.b16 %v7519
          %v7636 = vunpack.c.l.b16 %v7520
          %v7637 = vunpack.c.h.b16 %v7520
          %v7638 = vunpack.c.l.b16 %v7521
          %v7639 = vunpack.c.h.b16 %v7521
          %v7640 = vunpack.c.l.b16 %v7522
          %v7641 = vunpack.c.h.b16 %v7522
          %v7642 = vunpack.c.l.b16 %v7523
          %v7643 = vunpack.c.h.b16 %v7523
          %v7644 = vunpack.c.l.b16 %v7524
          %v7645 = vunpack.c.h.b16 %v7524
          %v7646 = vunpack.c.l.b16 %v7525
          %v7647 = vunpack.c.h.b16 %v7525
          %v7648 = vunpack.c.l.b16 %v7526
          %v7649 = vunpack.c.h.b16 %v7526
          %v7650 = vunpack.c.l.b16 %v7527
          %v7651 = vunpack.c.h.b16 %v7527
          %v7652 = vunpack.c.l.b16 %v7528
          %v7653 = vunpack.c.h.b16 %v7528
          %v7654 = vunpack.c.l.b16 %v7529
          %v7655 = vunpack.c.h.b16 %v7529
          %v7656 = vunpack.c.l.b16 %v7530
          %v7657 = vunpack.c.h.b16 %v7530
          %v7658 = vunpack.c.l.b16 %v7531
          %v7659 = vunpack.c.h.b16 %v7531
          %v7660 = vunpack.c.l.b16 %v7532
          %v7661 = vunpack.c.h.b16 %v7532
          %v7662 = vunpack.c.l.b16 %v7533
          %v7663 = vunpack.c.h.b16 %v7533
          %v7664 = vunpack.c.l.b16 %v7534
          %v7665 = vunpack.c.h.b16 %v7534
          %v7666 = vunpack.c.l.b16 %v7535
          %v7667 = vunpack.c.h.b16 %v7535
          %v7668 = vunpack.c.l.b16 %v7536
          %v7669 = vunpack.c.h.b16 %v7536
          %v7670 = vunpack.c.l.b16 %v7537
          %v7671 = vunpack.c.h.b16 %v7537
          %v7672 = vunpack.c.l.b16 %v7538
          %v7673 = vunpack.c.h.b16 %v7538
          %v7674 = vunpack.c.l.b16 %v7539
          %v7675 = vunpack.c.h.b16 %v7539
          %v7676 = vunpack.c.l.b16 %v7540
          %v7677 = vunpack.c.h.b16 %v7540
          %v7678 = vunpack.c.l.b16 %v7541
          %v7679 = vunpack.c.h.b16 %v7541
          %v7680 = vpack.c.b16 %v7624, %v7616
          %v7681 = vpack.c.b16 %v7625, %v7617
          %v7682 = vpack.c.b16 %v7626, %v7618
          %v7683 = vpack.c.b16 %v7627, %v7619
          %v7684 = vpack.c.b16 %v7628, %v7620
          %v7685 = vpack.c.b16 %v7629, %v7621
          %v7686 = vpack.c.b16 %v7630, %v7622
          %v7687 = vpack.c.b16 %v7631, %v7623
          %v7688 = vpack.c.b16 %v7640, %v7632
          %v7689 = vpack.c.b16 %v7641, %v7633
          %v7690 = vpack.c.b16 %v7642, %v7634
          %v7691 = vpack.c.b16 %v7643, %v7635
          %v7692 = vpack.c.b16 %v7644, %v7636
          %v7693 = vpack.c.b16 %v7645, %v7637
          %v7694 = vpack.c.b16 %v7646, %v7638
          %v7695 = vpack.c.b16 %v7647, %v7639
          %v7696 = vpack.c.b16 %v7656, %v7648
          %v7697 = vpack.c.b16 %v7657, %v7649
          %v7698 = vpack.c.b16 %v7658, %v7650
          %v7699 = vpack.c.b16 %v7659, %v7651
          %v7700 = vpack.c.b16 %v7660, %v7652
          %v7701 = vpack.c.b16 %v7661, %v7653
          %v7702 = vpack.c.b16 %v7662, %v7654
          %v7703 = vpack.c.b16 %v7663, %v7655
          %v7704 = vpack.c.b16 %v7672, %v7664
          %v7705 = vpack.c.b16 %v7673, %v7665
          %v7706 = vpack.c.b16 %v7674, %v7666
          %v7707 = vpack.c.b16 %v7675, %v7667
          %v7708 = vpack.c.b16 %v7676, %v7668
          %v7709 = vpack.c.b16 %v7677, %v7669
          %v7710 = vpack.c.b16 %v7678, %v7670
          %v7711 = vpack.c.b16 %v7679, %v7671
          %v7745 = vsel %vm6684, %v7509, 0
          %7747 = vmatprep.subr.bf16.mxu0 %v7681
          %7748 = vmatpush1.bf16.msra.mxu0 %v7680
          %7749 = vmatprep.subr.bf16.mxu0 %v7689
          %7750 = vmatpush1.bf16.msra.mxu0 %v7688
          %7751 = vmatprep.subr.bf16.mxu0 %v7697
          %7752 = vmatpush1.bf16.msra.mxu0 %v7696
          %7753 = vmatprep.subr.bf16.mxu0 %v7705
          %7754 = vmatpush1.bf16.msra.mxu0 %v7704
          %7755 = vmatprep.subr.bf16.mxu0 0
          %7756 = vmatpush1.bf16.msra.mxu0 0
          %7757 = vmatprep.subr.bf16.mxu0 0
          %7758 = vmatpush1.bf16.msra.mxu0 0
          %7759 = vmatprep.subr.bf16.mxu0 0
          %7760 = vmatpush1.bf16.msra.mxu0 0
          %7761 = vmatprep.subr.bf16.mxu0 0
          %7762 = vmatpush1.bf16.msra.mxu0 0
          %7763 = vmatprep.subr.bf16.mxu0 0
          %7764 = vmatpush1.bf16.msra.mxu0 0
          %7765 = vmatprep.subr.bf16.mxu0 0
          %7766 = vmatpush1.bf16.msra.mxu0 0
          %7767 = vmatprep.subr.bf16.mxu0 0
          %7768 = vmatpush1.bf16.msra.mxu0 0
          %7769 = vmatprep.subr.bf16.mxu0 0
          %7770 = vmatpush1.bf16.msra.mxu0 0
          %7771 = vmatprep.subr.bf16.mxu0 0
          %7772 = vmatpush1.bf16.msra.mxu0 0
          %7773 = vmatprep.subr.bf16.mxu0 0
          %7774 = vmatpush1.bf16.msra.mxu0 0
          %7775 = vmatprep.subr.bf16.mxu0 0
          %7776 = vmatpush1.bf16.msra.mxu0 0
          %7777 = vmatprep.subr.bf16.mxu0 0
          %7778 = vmatpush1.bf16.msra.mxu0 0
          %7779 = vmatprep.mubr.bf16.mxu0 0
          %7780 = vmatmul.mubr.bf16.gmra.mrb[0].mxu0 %v7745
          %v7781 = vpop.f32.mrb[0].mxu0
          %v7782 = vadd.f32 %v7547, %v7781
          %v7783 = vpop.f32.mrb[0].mxu0
          %v7784 = vadd.f32 %v7551, %v7783
          %v7785 = vpop.f32.mrb[0].mxu0
          %v7786 = vpop.f32.mrb[0].mxu0
          %7787 = vdwg.mxu0
          %7788 = vmatprep.subr.bf16.mxu0 %v7683
          %7789 = vmatpush1.bf16.msra.mxu0 %v7682
          %7790 = vmatprep.subr.bf16.mxu0 %v7691
          %7791 = vmatpush1.bf16.msra.mxu0 %v7690
          %7792 = vmatprep.subr.bf16.mxu0 %v7699
          %7793 = vmatpush1.bf16.msra.mxu0 %v7698
          %7794 = vmatprep.subr.bf16.mxu0 %v7707
          %7795 = vmatpush1.bf16.msra.mxu0 %v7706
          %7796 = vmatprep.subr.bf16.mxu0 0
          %7797 = vmatpush1.bf16.msra.mxu0 0
          %7798 = vmatprep.subr.bf16.mxu0 0
          %7799 = vmatpush1.bf16.msra.mxu0 0
          %7800 = vmatprep.subr.bf16.mxu0 0
          %7801 = vmatpush1.bf16.msra.mxu0 0
          %7802 = vmatprep.subr.bf16.mxu0 0
          %7803 = vmatpush1.bf16.msra.mxu0 0
          %7804 = vmatprep.subr.bf16.mxu0 0
          %7805 = vmatpush1.bf16.msra.mxu0 0
          %7806 = vmatprep.subr.bf16.mxu0 0
          %7807 = vmatpush1.bf16.msra.mxu0 0
          %7808 = vmatprep.subr.bf16.mxu0 0
          %7809 = vmatpush1.bf16.msra.mxu0 0
          %7810 = vmatprep.subr.bf16.mxu0 0
          %7811 = vmatpush1.bf16.msra.mxu0 0
          %7812 = vmatprep.subr.bf16.mxu0 0
          %7813 = vmatpush1.bf16.msra.mxu0 0
          %7814 = vmatprep.subr.bf16.mxu0 0
          %7815 = vmatpush1.bf16.msra.mxu0 0
          %7816 = vmatprep.subr.bf16.mxu0 0
          %7817 = vmatpush1.bf16.msra.mxu0 0
          %7818 = vmatprep.subr.bf16.mxu0 0
          %7819 = vmatpush1.bf16.msra.mxu0 0
          %7820 = vmatprep.mubr.bf16.mxu0 0
          %7821 = vmatmul.mubr.bf16.gmra.mrb[0].mxu0 %v7745
          %v7822 = vpop.f32.mrb[0].mxu0
          %v7823 = vadd.f32 %v7555, %v7822
          %v7824 = vpop.f32.mrb[0].mxu0
          %v7825 = vadd.f32 %v7559, %v7824
          %v7826 = vpop.f32.mrb[0].mxu0
          %v7827 = vpop.f32.mrb[0].mxu0
          %7828 = vdwg.mxu0
          %7829 = vmatprep.subr.bf16.mxu0 %v7685
          %7830 = vmatpush1.bf16.msra.mxu0 %v7684
          %7831 = vmatprep.subr.bf16.mxu0 %v7693
          %7832 = vmatpush1.bf16.msra.mxu0 %v7692
          %7833 = vmatprep.subr.bf16.mxu0 %v7701
          %7834 = vmatpush1.bf16.msra.mxu0 %v7700
          %7835 = vmatprep.subr.bf16.mxu0 %v7709
          %7836 = vmatpush1.bf16.msra.mxu0 %v7708
          %7837 = vmatprep.subr.bf16.mxu0 0
          %7838 = vmatpush1.bf16.msra.mxu0 0
          %7839 = vmatprep.subr.bf16.mxu0 0
          %7840 = vmatpush1.bf16.msra.mxu0 0
          %7841 = vmatprep.subr.bf16.mxu0 0
          %7842 = vmatpush1.bf16.msra.mxu0 0
          %7843 = vmatprep.subr.bf16.mxu0 0
          %7844 = vmatpush1.bf16.msra.mxu0 0
          %7845 = vmatprep.subr.bf16.mxu0 0
          %7846 = vmatpush1.bf16.msra.mxu0 0
          %7847 = vmatprep.subr.bf16.mxu0 0
          %7848 = vmatpush1.bf16.msra.mxu0 0
          %7849 = vmatprep.subr.bf16.mxu0 0
          %7850 = vmatpush1.bf16.msra.mxu0 0
          %7851 = vmatprep.subr.bf16.mxu0 0
          %7852 = vmatpush1.bf16.msra.mxu0 0
          %7853 = vmatprep.subr.bf16.mxu0 0
          %7854 = vmatpush1.bf16.msra.mxu0 0
          %7855 = vmatprep.subr.bf16.mxu0 0
          %7856 = vmatpush1.bf16.msra.mxu0 0
          %7857 = vmatprep.subr.bf16.mxu0 0
          %7858 = vmatpush1.bf16.msra.mxu0 0
          %7859 = vmatprep.subr.bf16.mxu0 0
          %7860 = vmatpush1.bf16.msra.mxu0 0
          %7861 = vmatprep.mubr.bf16.mxu0 0
          %7862 = vmatmul.mubr.bf16.gmra.mrb[0].mxu0 %v7745
          %v7863 = vpop.f32.mrb[0].mxu0
          %v7864 = vadd.f32 %v7563, %v7863
          %v7865 = vpop.f32.mrb[0].mxu0
          %v7866 = vadd.f32 %v7567, %v7865
          %v7867 = vpop.f32.mrb[0].mxu0
          %v7868 = vpop.f32.mrb[0].mxu0
          %7869 = vdwg.mxu0
          %7870 = vmatprep.subr.bf16.mxu0 %v7687
          %7871 = vmatpush1.bf16.msra.mxu0 %v7686
          %7872 = vmatprep.subr.bf16.mxu0 %v7695
          %7873 = vmatpush1.bf16.msra.mxu0 %v7694
          %7874 = vmatprep.subr.bf16.mxu0 %v7703
          %7875 = vmatpush1.bf16.msra.mxu0 %v7702
          %7876 = vmatprep.subr.bf16.mxu0 %v7711
          %7877 = vmatpush1.bf16.msra.mxu0 %v7710
          %7878 = vmatprep.subr.bf16.mxu0 0
          %7879 = vmatpush1.bf16.msra.mxu0 0
          %7880 = vmatprep.subr.bf16.mxu0 0
          %7881 = vmatpush1.bf16.msra.mxu0 0
          %7882 = vmatprep.subr.bf16.mxu0 0
          %7883 = vmatpush1.bf16.msra.mxu0 0
          %7884 = vmatprep.subr.bf16.mxu0 0
          %7885 = vmatpush1.bf16.msra.mxu0 0
          %7886 = vmatprep.subr.bf16.mxu0 0
          %7887 = vmatpush1.bf16.msra.mxu0 0
          %7888 = vmatprep.subr.bf16.mxu0 0
          %7889 = vmatpush1.bf16.msra.mxu0 0
          %7890 = vmatprep.subr.bf16.mxu0 0
          %7891 = vmatpush1.bf16.msra.mxu0 0
          %7892 = vmatprep.subr.bf16.mxu0 0
          %7893 = vmatpush1.bf16.msra.mxu0 0
          %7894 = vmatprep.subr.bf16.mxu0 0
          %7895 = vmatpush1.bf16.msra.mxu0 0
          %7896 = vmatprep.subr.bf16.mxu0 0
          %7897 = vmatpush1.bf16.msra.mxu0 0
          %7898 = vmatprep.subr.bf16.mxu0 0
          %7899 = vmatpush1.bf16.msra.mxu0 0
          %7900 = vmatprep.subr.bf16.mxu0 0
          %7901 = vmatpush1.bf16.msra.mxu0 0
          %7902 = vmatprep.mubr.bf16.mxu0 0
          %7903 = vmatmul.mubr.bf16.gmra.mrb[0].mxu0 %v7745
          %v7904 = vpop.f32.mrb[0].mxu0
          %v7905 = vadd.f32 %v7571, %v7904
          %v7906 = vpop.f32.mrb[0].mxu0
          %v7907 = vadd.f32 %v7575, %v7906
          %v7908 = vpop.f32.mrb[0].mxu0
          %v7909 = vpop.f32.mrb[0].mxu0
          %7910 = vdwg.mxu0
          %v7911 = vmax.f32 %v7782, 0.0
          %v7912 = vmax.f32 %v7784, 0.0
          %v7913 = vmax.f32 %v7823, 0.0
          %v7914 = vmax.f32 %v7825, 0.0
          %v7915 = vmax.f32 %v7864, 0.0
          %v7916 = vmax.f32 %v7866, 0.0
          %v7917 = vmax.f32 %v7905, 0.0
          %v7918 = vmax.f32 %v7907, 0.0
          %v7919 = vpack.c.bf16 %v7911, %v7911
          %v7920 = vpack.c.bf16 %v7912, %v7912
          %v7921 = vpack.c.bf16 %v7913, %v7913
          %v7922 = vpack.c.bf16 %v7914, %v7914
          %v7923 = vpack.c.bf16 %v7915, %v7915
          %v7924 = vpack.c.bf16 %v7916, %v7916
          %v7925 = vpack.c.bf16 %v7917, %v7917
          %v7926 = vpack.c.bf16 %v7918, %v7918
          %v7927 = vld [vmem:[%s11] sm:$0xf]
          %v7928 = vld [vmem:[%s11 + $0x4] sm:$0xf]
          %v7929 = vld [vmem:[%s11 + $0x8] sm:$0xf]
          %v7930 = vld [vmem:[%s11 + $0xc] sm:$0xf]
          %v7931 = vld [vmem:[%s11 + $0x10] sm:$0xf]
          %v7932 = vld [vmem:[%s11 + $0x14] sm:$0xf]
          %v7933 = vld [vmem:[%s11 + $0x18] sm:$0xf]
          %v7934 = vld [vmem:[%s11 + $0x1c] sm:$0xf]
          %v7935 = vld [vmem:[%s11 + $0x20] sm:$0xf]
          %v7936 = vld [vmem:[%s11 + $0x24] sm:$0xf]
          %v7937 = vld [vmem:[%s11 + $0x28] sm:$0xf]
          %v7938 = vld [vmem:[%s11 + $0x2c] sm:$0xf]
          %v7939 = vld [vmem:[%s11 + $0x30] sm:$0xf]
          %v7940 = vld [vmem:[%s11 + $0x34] sm:$0xf]
          %v7941 = vld [vmem:[%s11 + $0x38] sm:$0xf]
          %v7942 = vld [vmem:[%s11 + $0x3c] sm:$0xf]
          %v7943 = vld [vmem:[%s11 + $0x40] sm:$0xf]
          %v7944 = vld [vmem:[%s11 + $0x44] sm:$0xf]
          %v7945 = vld [vmem:[%s11 + $0x48] sm:$0xf]
          %v7946 = vld [vmem:[%s11 + $0x4c] sm:$0xf]
          %v7947 = vld [vmem:[%s11 + $0x50] sm:$0xf]
          %v7948 = vld [vmem:[%s11 + $0x54] sm:$0xf]
          %v7949 = vld [vmem:[%s11 + $0x58] sm:$0xf]
          %v7950 = vld [vmem:[%s11 + $0x5c] sm:$0xf]
          %v7951 = vld [vmem:[%s11 + $0x60] sm:$0xf]
          %v7952 = vld [vmem:[%s11 + $0x64] sm:$0xf]
          %v7953 = vld [vmem:[%s11 + $0x68] sm:$0xf]
          %v7954 = vld [vmem:[%s11 + $0x6c] sm:$0xf]
          %v7955 = vld [vmem:[%s11 + $0x70] sm:$0xf]
          %v7956 = vld [vmem:[%s11 + $0x74] sm:$0xf]
          %v7957 = vld [vmem:[%s11 + $0x78] sm:$0xf]
          %v7958 = vld [vmem:[%s11 + $0x7c] sm:$0xf]
          %v7959 = vld [vmem:[%s11 + $0x80] sm:$0xf]
          %v7960 = vld [vmem:[%s11 + $0x84] sm:$0xf]
          %v7961 = vld [vmem:[%s11 + $0x88] sm:$0xf]
          %v7962 = vld [vmem:[%s11 + $0x8c] sm:$0xf]
          %v7963 = vld [vmem:[%s11 + $0x90] sm:$0xf]
          %v7964 = vld [vmem:[%s11 + $0x94] sm:$0xf]
          %v7965 = vld [vmem:[%s11 + $0x98] sm:$0xf]
          %v7966 = vld [vmem:[%s11 + $0x9c] sm:$0xf]
          %v7967 = vld [vmem:[%s11 + $0xa0] sm:$0xf]
          %v7968 = vld [vmem:[%s11 + $0xa4] sm:$0xf]
          %v7969 = vld [vmem:[%s11 + $0xa8] sm:$0xf]
          %v7970 = vld [vmem:[%s11 + $0xac] sm:$0xf]
          %v7971 = vld [vmem:[%s11 + $0xb0] sm:$0xf]
          %v7972 = vld [vmem:[%s11 + $0xb4] sm:$0xf]
          %v7973 = vld [vmem:[%s11 + $0xb8] sm:$0xf]
          %v7974 = vld [vmem:[%s11 + $0xbc] sm:$0xf]
          %v7975 = vld [vmem:[%s11 + $0xc0] sm:$0xf]
          %v7976 = vld [vmem:[%s11 + $0xc4] sm:$0xf]
          %v7977 = vld [vmem:[%s11 + $0xc8] sm:$0xf]
          %v7978 = vld [vmem:[%s11 + $0xcc] sm:$0xf]
          %v7979 = vld [vmem:[%s11 + $0xd0] sm:$0xf]
          %v7980 = vld [vmem:[%s11 + $0xd4] sm:$0xf]
          %v7981 = vld [vmem:[%s11 + $0xd8] sm:$0xf]
          %v7982 = vld [vmem:[%s11 + $0xdc] sm:$0xf]
          %v7983 = vld [vmem:[%s11 + $0xe0] sm:$0xf]
          %v7984 = vld [vmem:[%s11 + $0xe4] sm:$0xf]
          %v7985 = vld [vmem:[%s11 + $0xe8] sm:$0xf]
          %v7986 = vld [vmem:[%s11 + $0xec] sm:$0xf]
          %v7987 = vld [vmem:[%s11 + $0xf0] sm:$0xf]
          %v7988 = vld [vmem:[%s11 + $0xf4] sm:$0xf]
          %v7989 = vld [vmem:[%s11 + $0xf8] sm:$0xf]
          %v7990 = vld [vmem:[%s11 + $0xfc] sm:$0xf]
          %v7991 = vld [vmem:[%s11 + $0x100] sm:$0xf]
          %v7992 = vld [vmem:[%s11 + $0x104] sm:$0xf]
          %v7993 = vld [vmem:[%s11 + $0x108] sm:$0xf]
          %v7994 = vld [vmem:[%s11 + $0x10c] sm:$0xf]
          %v7995 = vld [vmem:[%s11 + $0x110] sm:$0xf]
          %v7996 = vld [vmem:[%s11 + $0x114] sm:$0xf]
          %v7997 = vld [vmem:[%s11 + $0x118] sm:$0xf]
          %v7998 = vld [vmem:[%s11 + $0x11c] sm:$0xf]
          %v7999 = vld [vmem:[%s11 + $0x120] sm:$0xf]
          %v8000 = vld [vmem:[%s11 + $0x124] sm:$0xf]
          %v8001 = vld [vmem:[%s11 + $0x128] sm:$0xf]
          %v8002 = vld [vmem:[%s11 + $0x12c] sm:$0xf]
          %v8003 = vld [vmem:[%s11 + $0x130] sm:$0xf]
          %v8004 = vld [vmem:[%s11 + $0x134] sm:$0xf]
          %v8005 = vld [vmem:[%s11 + $0x138] sm:$0xf]
          %v8006 = vld [vmem:[%s11 + $0x13c] sm:$0xf]
          %v8007 = vld [vmem:[%s11 + $0x140] sm:$0xf]
          %v8008 = vld [vmem:[%s11 + $0x144] sm:$0xf]
          %v8009 = vld [vmem:[%s11 + $0x148] sm:$0xf]
          %v8010 = vld [vmem:[%s11 + $0x14c] sm:$0xf]
          %v8011 = vld [vmem:[%s11 + $0x150] sm:$0xf]
          %v8012 = vld [vmem:[%s11 + $0x154] sm:$0xf]
          %v8013 = vld [vmem:[%s11 + $0x158] sm:$0xf]
          %v8014 = vld [vmem:[%s11 + $0x15c] sm:$0xf]
          %v8015 = vld [vmem:[%s11 + $0x160] sm:$0xf]
          %v8016 = vld [vmem:[%s11 + $0x164] sm:$0xf]
          %v8017 = vld [vmem:[%s11 + $0x168] sm:$0xf]
          %v8018 = vld [vmem:[%s11 + $0x16c] sm:$0xf]
          %v8019 = vld [vmem:[%s11 + $0x170] sm:$0xf]
          %v8020 = vld [vmem:[%s11 + $0x174] sm:$0xf]
          %v8021 = vld [vmem:[%s11 + $0x178] sm:$0xf]
          %v8022 = vld [vmem:[%s11 + $0x17c] sm:$0xf]
          %v8023 = vld [vmem:[%s11 + $0x180] sm:$0xf]
          %v8024 = vld [vmem:[%s11 + $0x184] sm:$0xf]
          %v8025 = vld [vmem:[%s11 + $0x188] sm:$0xf]
          %v8026 = vld [vmem:[%s11 + $0x18c] sm:$0xf]
          %v8027 = vld [vmem:[%s11 + $0x190] sm:$0xf]
          %v8028 = vld [vmem:[%s11 + $0x194] sm:$0xf]
          %v8029 = vld [vmem:[%s11 + $0x198] sm:$0xf]
          %v8030 = vld [vmem:[%s11 + $0x19c] sm:$0xf]
          %v8031 = vld [vmem:[%s11 + $0x1a0] sm:$0xf]
          %v8032 = vld [vmem:[%s11 + $0x1a4] sm:$0xf]
          %v8033 = vld [vmem:[%s11 + $0x1a8] sm:$0xf]
          %v8034 = vld [vmem:[%s11 + $0x1ac] sm:$0xf]
          %v8035 = vld [vmem:[%s11 + $0x1b0] sm:$0xf]
          %v8036 = vld [vmem:[%s11 + $0x1b4] sm:$0xf]
          %v8037 = vld [vmem:[%s11 + $0x1b8] sm:$0xf]
          %v8038 = vld [vmem:[%s11 + $0x1bc] sm:$0xf]
          %v8039 = vld [vmem:[%s11 + $0x1c0] sm:$0xf]
          %v8040 = vld [vmem:[%s11 + $0x1c4] sm:$0xf]
          %v8041 = vld [vmem:[%s11 + $0x1c8] sm:$0xf]
          %v8042 = vld [vmem:[%s11 + $0x1cc] sm:$0xf]
          %v8043 = vld [vmem:[%s11 + $0x1d0] sm:$0xf]
          %v8044 = vld [vmem:[%s11 + $0x1d4] sm:$0xf]
          %v8045 = vld [vmem:[%s11 + $0x1d8] sm:$0xf]
          %v8046 = vld [vmem:[%s11 + $0x1dc] sm:$0xf]
          %v8047 = vld [vmem:[%s11 + $0x1e0] sm:$0xf]
          %v8048 = vld [vmem:[%s11 + $0x1e4] sm:$0xf]
          %v8049 = vld [vmem:[%s11 + $0x1e8] sm:$0xf]
          %v8050 = vld [vmem:[%s11 + $0x1ec] sm:$0xf]
          %v8051 = vld [vmem:[%s11 + $0x1f0] sm:$0xf]
          %v8052 = vld [vmem:[%s11 + $0x1f4] sm:$0xf]
          %v8053 = vld [vmem:[%s11 + $0x1f8] sm:$0xf]
          %v8054 = vld [vmem:[%s11 + $0x1fc] sm:$0xf]
          %v8055 = vld [vmem:[%s12] sm:$0x1]
          %v8057 = vlaneseq
          %v8058 = vshrl.u32 %v8057, 7
          %v8059 = vsub.s32 0, %v8058
          %v8060 = vrot.slane %v8055, %v8059
          %v8190 = vunpack.c.l.b16 %v7927
          %v8191 = vunpack.c.l.b16 %v7928
          %v8192 = vunpack.c.l.b16 %v7929
          %v8193 = vunpack.c.l.b16 %v7930
          %v8194 = vunpack.c.l.b16 %v7931
          %v8195 = vunpack.c.l.b16 %v7932
          %v8196 = vunpack.c.l.b16 %v7933
          %v8197 = vunpack.c.l.b16 %v7934
          %v8198 = vunpack.c.l.b16 %v7935
          %v8199 = vunpack.c.l.b16 %v7936
          %v8200 = vunpack.c.l.b16 %v7937
          %v8201 = vunpack.c.l.b16 %v7938
          %v8202 = vunpack.c.l.b16 %v7939
          %v8203 = vunpack.c.l.b16 %v7940
          %v8204 = vunpack.c.l.b16 %v7941
          %v8205 = vunpack.c.l.b16 %v7942
          %v8206 = vunpack.c.l.b16 %v7943
          %v8207 = vunpack.c.l.b16 %v7944
          %v8208 = vunpack.c.l.b16 %v7945
          %v8209 = vunpack.c.l.b16 %v7946
          %v8210 = vunpack.c.l.b16 %v7947
          %v8211 = vunpack.c.l.b16 %v7948
          %v8212 = vunpack.c.l.b16 %v7949
          %v8213 = vunpack.c.l.b16 %v7950
          %v8214 = vunpack.c.l.b16 %v7951
          %v8215 = vunpack.c.l.b16 %v7952
          %v8216 = vunpack.c.l.b16 %v7953
          %v8217 = vunpack.c.l.b16 %v7954
          %v8218 = vunpack.c.l.b16 %v7955
          %v8219 = vunpack.c.l.b16 %v7956
          %v8220 = vunpack.c.l.b16 %v7957
          %v8221 = vunpack.c.l.b16 %v7958
          %v8222 = vunpack.c.l.b16 %v7959
          %v8223 = vunpack.c.l.b16 %v7960
          %v8224 = vunpack.c.l.b16 %v7961
          %v8225 = vunpack.c.l.b16 %v7962
          %v8226 = vunpack.c.l.b16 %v7963
          %v8227 = vunpack.c.l.b16 %v7964
          %v8228 = vunpack.c.l.b16 %v7965
          %v8229 = vunpack.c.l.b16 %v7966
          %v8230 = vunpack.c.l.b16 %v7967
          %v8231 = vunpack.c.l.b16 %v7968
          %v8232 = vunpack.c.l.b16 %v7969
          %v8233 = vunpack.c.l.b16 %v7970
          %v8234 = vunpack.c.l.b16 %v7971
          %v8235 = vunpack.c.l.b16 %v7972
          %v8236 = vunpack.c.l.b16 %v7973
          %v8237 = vunpack.c.l.b16 %v7974
          %v8238 = vunpack.c.l.b16 %v7975
          %v8239 = vunpack.c.l.b16 %v7976
          %v8240 = vunpack.c.l.b16 %v7977
          %v8241 = vunpack.c.l.b16 %v7978
          %v8242 = vunpack.c.l.b16 %v7979
          %v8243 = vunpack.c.l.b16 %v7980
          %v8244 = vunpack.c.l.b16 %v7981
          %v8245 = vunpack.c.l.b16 %v7982
          %v8246 = vunpack.c.l.b16 %v7983
          %v8247 = vunpack.c.l.b16 %v7984
          %v8248 = vunpack.c.l.b16 %v7985
          %v8249 = vunpack.c.l.b16 %v7986
          %v8250 = vunpack.c.l.b16 %v7987
          %v8251 = vunpack.c.l.b16 %v7988
          %v8252 = vunpack.c.l.b16 %v7989
          %v8253 = vunpack.c.l.b16 %v7990
          %v8254 = vunpack.c.l.b16 %v7991
          %v8255 = vunpack.c.l.b16 %v7992
          %v8256 = vunpack.c.l.b16 %v7993
          %v8257 = vunpack.c.l.b16 %v7994
          %v8258 = vunpack.c.l.b16 %v7995
          %v8259 = vunpack.c.l.b16 %v7996
          %v8260 = vunpack.c.l.b16 %v7997
          %v8261 = vunpack.c.l.b16 %v7998
          %v8262 = vunpack.c.l.b16 %v7999
          %v8263 = vunpack.c.l.b16 %v8000
          %v8264 = vunpack.c.l.b16 %v8001
          %v8265 = vunpack.c.l.b16 %v8002
          %v8266 = vunpack.c.l.b16 %v8003
          %v8267 = vunpack.c.l.b16 %v8004
          %v8268 = vunpack.c.l.b16 %v8005
          %v8269 = vunpack.c.l.b16 %v8006
          %v8270 = vunpack.c.l.b16 %v8007
          %v8271 = vunpack.c.l.b16 %v8008
          %v8272 = vunpack.c.l.b16 %v8009
          %v8273 = vunpack.c.l.b16 %v8010
          %v8274 = vunpack.c.l.b16 %v8011
          %v8275 = vunpack.c.l.b16 %v8012
          %v8276 = vunpack.c.l.b16 %v8013
          %v8277 = vunpack.c.l.b16 %v8014
          %v8278 = vunpack.c.l.b16 %v8015
          %v8279 = vunpack.c.l.b16 %v8016
          %v8280 = vunpack.c.l.b16 %v8017
          %v8281 = vunpack.c.l.b16 %v8018
          %v8282 = vunpack.c.l.b16 %v8019
          %v8283 = vunpack.c.l.b16 %v8020
          %v8284 = vunpack.c.l.b16 %v8021
          %v8285 = vunpack.c.l.b16 %v8022
          %v8286 = vunpack.c.l.b16 %v8023
          %v8287 = vunpack.c.l.b16 %v8024
          %v8288 = vunpack.c.l.b16 %v8025
          %v8289 = vunpack.c.l.b16 %v8026
          %v8290 = vunpack.c.l.b16 %v8027
          %v8291 = vunpack.c.l.b16 %v8028
          %v8292 = vunpack.c.l.b16 %v8029
          %v8293 = vunpack.c.l.b16 %v8030
          %v8294 = vunpack.c.l.b16 %v8031
          %v8295 = vunpack.c.l.b16 %v8032
          %v8296 = vunpack.c.l.b16 %v8033
          %v8297 = vunpack.c.l.b16 %v8034
          %v8298 = vunpack.c.l.b16 %v8035
          %v8299 = vunpack.c.l.b16 %v8036
          %v8300 = vunpack.c.l.b16 %v8037
          %v8301 = vunpack.c.l.b16 %v8038
          %v8302 = vunpack.c.l.b16 %v8039
          %v8303 = vunpack.c.l.b16 %v8040
          %v8304 = vunpack.c.l.b16 %v8041
          %v8305 = vunpack.c.l.b16 %v8042
          %v8306 = vunpack.c.l.b16 %v8043
          %v8307 = vunpack.c.l.b16 %v8044
          %v8308 = vunpack.c.l.b16 %v8045
          %v8309 = vunpack.c.l.b16 %v8046
          %v8310 = vunpack.c.l.b16 %v8047
          %v8311 = vunpack.c.l.b16 %v8048
          %v8312 = vunpack.c.l.b16 %v8049
          %v8313 = vunpack.c.l.b16 %v8050
          %v8314 = vunpack.c.l.b16 %v8051
          %v8315 = vunpack.c.l.b16 %v8052
          %v8316 = vunpack.c.l.b16 %v8053
          %v8317 = vunpack.c.l.b16 %v8054
          %v8318 = vpack.c.b16 %v8191, %v8190
          %v8319 = vpack.c.b16 %v8193, %v8192
          %v8320 = vpack.c.b16 %v8195, %v8194
          %v8321 = vpack.c.b16 %v8197, %v8196
          %v8322 = vpack.c.b16 %v8199, %v8198
          %v8323 = vpack.c.b16 %v8201, %v8200
          %v8324 = vpack.c.b16 %v8203, %v8202
          %v8325 = vpack.c.b16 %v8205, %v8204
          %v8326 = vpack.c.b16 %v8207, %v8206
          %v8327 = vpack.c.b16 %v8209, %v8208
          %v8328 = vpack.c.b16 %v8211, %v8210
          %v8329 = vpack.c.b16 %v8213, %v8212
          %v8330 = vpack.c.b16 %v8215, %v8214
          %v8331 = vpack.c.b16 %v8217, %v8216
          %v8332 = vpack.c.b16 %v8219, %v8218
          %v8333 = vpack.c.b16 %v8221, %v8220
          %v8334 = vpack.c.b16 %v8223, %v8222
          %v8335 = vpack.c.b16 %v8225, %v8224
          %v8336 = vpack.c.b16 %v8227, %v8226
          %v8337 = vpack.c.b16 %v8229, %v8228
          %v8338 = vpack.c.b16 %v8231, %v8230
          %v8339 = vpack.c.b16 %v8233, %v8232
          %v8340 = vpack.c.b16 %v8235, %v8234
          %v8341 = vpack.c.b16 %v8237, %v8236
          %v8342 = vpack.c.b16 %v8239, %v8238
          %v8343 = vpack.c.b16 %v8241, %v8240
          %v8344 = vpack.c.b16 %v8243, %v8242
          %v8345 = vpack.c.b16 %v8245, %v8244
          %v8346 = vpack.c.b16 %v8247, %v8246
          %v8347 = vpack.c.b16 %v8249, %v8248
          %v8348 = vpack.c.b16 %v8251, %v8250
          %v8349 = vpack.c.b16 %v8253, %v8252
          %v8350 = vpack.c.b16 %v8255, %v8254
          %v8351 = vpack.c.b16 %v8257, %v8256
          %v8352 = vpack.c.b16 %v8259, %v8258
          %v8353 = vpack.c.b16 %v8261, %v8260
          %v8354 = vpack.c.b16 %v8263, %v8262
          %v8355 = vpack.c.b16 %v8265, %v8264
          %v8356 = vpack.c.b16 %v8267, %v8266
          %v8357 = vpack.c.b16 %v8269, %v8268
          %v8358 = vpack.c.b16 %v8271, %v8270
          %v8359 = vpack.c.b16 %v8273, %v8272
          %v8360 = vpack.c.b16 %v8275, %v8274
          %v8361 = vpack.c.b16 %v8277, %v8276
          %v8362 = vpack.c.b16 %v8279, %v8278
          %v8363 = vpack.c.b16 %v8281, %v8280
          %v8364 = vpack.c.b16 %v8283, %v8282
          %v8365 = vpack.c.b16 %v8285, %v8284
          %v8366 = vpack.c.b16 %v8287, %v8286
          %v8367 = vpack.c.b16 %v8289, %v8288
          %v8368 = vpack.c.b16 %v8291, %v8290
          %v8369 = vpack.c.b16 %v8293, %v8292
          %v8370 = vpack.c.b16 %v8295, %v8294
          %v8371 = vpack.c.b16 %v8297, %v8296
          %v8372 = vpack.c.b16 %v8299, %v8298
          %v8373 = vpack.c.b16 %v8301, %v8300
          %v8374 = vpack.c.b16 %v8303, %v8302
          %v8375 = vpack.c.b16 %v8305, %v8304
          %v8376 = vpack.c.b16 %v8307, %v8306
          %v8377 = vpack.c.b16 %v8309, %v8308
          %v8378 = vpack.c.b16 %v8311, %v8310
          %v8379 = vpack.c.b16 %v8313, %v8312
          %v8380 = vpack.c.b16 %v8315, %v8314
          %v8381 = vpack.c.b16 %v8317, %v8316
          %8446 = vmatprep.subr.bf16.mxu0 0
          %8447 = vmatpush1.bf16.msra.mxu0 %v8318
          %8448 = vmatprep.subr.bf16.mxu0 0
          %8449 = vmatpush1.bf16.msra.mxu0 %v8319
          %8450 = vmatprep.subr.bf16.mxu0 0
          %8451 = vmatpush1.bf16.msra.mxu0 %v8320
          %8452 = vmatprep.subr.bf16.mxu0 0
          %8453 = vmatpush1.bf16.msra.mxu0 %v8321
          %8454 = vmatprep.subr.bf16.mxu0 0
          %8455 = vmatpush1.bf16.msra.mxu0 %v8322
          %8456 = vmatprep.subr.bf16.mxu0 0
          %8457 = vmatpush1.bf16.msra.mxu0 %v8323
          %8458 = vmatprep.subr.bf16.mxu0 0
          %8459 = vmatpush1.bf16.msra.mxu0 %v8324
          %8460 = vmatprep.subr.bf16.mxu0 0
          %8461 = vmatpush1.bf16.msra.mxu0 %v8325
          %8462 = vmatprep.subr.bf16.mxu0 0
          %8463 = vmatpush1.bf16.msra.mxu0 %v8326
          %8464 = vmatprep.subr.bf16.mxu0 0
          %8465 = vmatpush1.bf16.msra.mxu0 %v8327
          %8466 = vmatprep.subr.bf16.mxu0 0
          %8467 = vmatpush1.bf16.msra.mxu0 %v8328
          %8468 = vmatprep.subr.bf16.mxu0 0
          %8469 = vmatpush1.bf16.msra.mxu0 %v8329
          %8470 = vmatprep.subr.bf16.mxu0 0
          %8471 = vmatpush1.bf16.msra.mxu0 %v8330
          %8472 = vmatprep.subr.bf16.mxu0 0
          %8473 = vmatpush1.bf16.msra.mxu0 %v8331
          %8474 = vmatprep.subr.bf16.mxu0 0
          %8475 = vmatpush1.bf16.msra.mxu0 %v8332
          %8476 = vmatprep.subr.bf16.mxu0 0
          %8477 = vmatpush1.bf16.msra.mxu0 %v8333
          %8478 = vmatprep.mubr.bf16.mxu0 %v7920
          %8479 = vmatmul.mubr.bf16.gmra.mrb[0].mxu0 %v7919
          %v8480 = vpop.f32.mrb[0].mxu0
          %v8481 = vadd.f32 %v8060, %v8480
          %v8482 = vpop.f32.mrb[0].mxu0
          %v8483 = vpop.f32.mrb[0].mxu0
          %v8484 = vpop.f32.mrb[0].mxu0
          %8485 = vdwg.mxu0
          %8486 = vmatprep.subr.bf16.mxu0 0
          %8487 = vmatpush1.bf16.msra.mxu0 %v8334
          %8488 = vmatprep.subr.bf16.mxu0 0
          %8489 = vmatpush1.bf16.msra.mxu0 %v8335
          %8490 = vmatprep.subr.bf16.mxu0 0
          %8491 = vmatpush1.bf16.msra.mxu0 %v8336
          %8492 = vmatprep.subr.bf16.mxu0 0
          %8493 = vmatpush1.bf16.msra.mxu0 %v8337
          %8494 = vmatprep.subr.bf16.mxu0 0
          %8495 = vmatpush1.bf16.msra.mxu0 %v8338
          %8496 = vmatprep.subr.bf16.mxu0 0
          %8497 = vmatpush1.bf16.msra.mxu0 %v8339
          %8498 = vmatprep.subr.bf16.mxu0 0
          %8499 = vmatpush1.bf16.msra.mxu0 %v8340
          %8500 = vmatprep.subr.bf16.mxu0 0
          %8501 = vmatpush1.bf16.msra.mxu0 %v8341
          %8502 = vmatprep.subr.bf16.mxu0 0
          %8503 = vmatpush1.bf16.msra.mxu0 %v8342
          %8504 = vmatprep.subr.bf16.mxu0 0
          %8505 = vmatpush1.bf16.msra.mxu0 %v8343
          %8506 = vmatprep.subr.bf16.mxu0 0
          %8507 = vmatpush1.bf16.msra.mxu0 %v8344
          %8508 = vmatprep.subr.bf16.mxu0 0
          %8509 = vmatpush1.bf16.msra.mxu0 %v8345
          %8510 = vmatprep.subr.bf16.mxu0 0
          %8511 = vmatpush1.bf16.msra.mxu0 %v8346
          %8512 = vmatprep.subr.bf16.mxu0 0
          %8513 = vmatpush1.bf16.msra.mxu0 %v8347
          %8514 = vmatprep.subr.bf16.mxu0 0
          %8515 = vmatpush1.bf16.msra.mxu0 %v8348
          %8516 = vmatprep.subr.bf16.mxu0 0
          %8517 = vmatpush1.bf16.msra.mxu0 %v8349
          %8518 = vmatprep.mubr.bf16.mxu0 %v7922
          %8519 = vmatmul.mubr.bf16.gmra.mrb[0].mxu0 %v7921
          %v8520 = vpop.f32.mrb[0].mxu0
          %v8521 = vadd.f32 %v8481, %v8520
          %v8522 = vpop.f32.mrb[0].mxu0
          %v8523 = vpop.f32.mrb[0].mxu0
          %v8524 = vpop.f32.mrb[0].mxu0
          %8525 = vdwg.mxu0
          %8526 = vmatprep.subr.bf16.mxu0 0
          %8527 = vmatpush1.bf16.msra.mxu0 %v8350
          %8528 = vmatprep.subr.bf16.mxu0 0
          %8529 = vmatpush1.bf16.msra.mxu0 %v8351
          %8530 = vmatprep.subr.bf16.mxu0 0
          %8531 = vmatpush1.bf16.msra.mxu0 %v8352
          %8532 = vmatprep.subr.bf16.mxu0 0
          %8533 = vmatpush1.bf16.msra.mxu0 %v8353
          %8534 = vmatprep.subr.bf16.mxu0 0
          %8535 = vmatpush1.bf16.msra.mxu0 %v8354
          %8536 = vmatprep.subr.bf16.mxu0 0
          %8537 = vmatpush1.bf16.msra.mxu0 %v8355
          %8538 = vmatprep.subr.bf16.mxu0 0
          %8539 = vmatpush1.bf16.msra.mxu0 %v8356
          %8540 = vmatprep.subr.bf16.mxu0 0
          %8541 = vmatpush1.bf16.msra.mxu0 %v8357
          %8542 = vmatprep.subr.bf16.mxu0 0
          %8543 = vmatpush1.bf16.msra.mxu0 %v8358
          %8544 = vmatprep.subr.bf16.mxu0 0
          %8545 = vmatpush1.bf16.msra.mxu0 %v8359
          %8546 = vmatprep.subr.bf16.mxu0 0
          %8547 = vmatpush1.bf16.msra.mxu0 %v8360
          %8548 = vmatprep.subr.bf16.mxu0 0
          %8549 = vmatpush1.bf16.msra.mxu0 %v8361
          %8550 = vmatprep.subr.bf16.mxu0 0
          %8551 = vmatpush1.bf16.msra.mxu0 %v8362
          %8552 = vmatprep.subr.bf16.mxu0 0
          %8553 = vmatpush1.bf16.msra.mxu0 %v8363
          %8554 = vmatprep.subr.bf16.mxu0 0
          %8555 = vmatpush1.bf16.msra.mxu0 %v8364
          %8556 = vmatprep.subr.bf16.mxu0 0
          %8557 = vmatpush1.bf16.msra.mxu0 %v8365
          %8558 = vmatprep.mubr.bf16.mxu0 %v7924
          %8559 = vmatmul.mubr.bf16.gmra.mrb[0].mxu0 %v7923
          %v8560 = vpop.f32.mrb[0].mxu0
          %v8561 = vadd.f32 %v8521, %v8560
          %v8562 = vpop.f32.mrb[0].mxu0
          %v8563 = vpop.f32.mrb[0].mxu0
          %v8564 = vpop.f32.mrb[0].mxu0
          %8565 = vdwg.mxu0
          %8566 = vmatprep.subr.bf16.mxu0 0
          %8567 = vmatpush1.bf16.msra.mxu0 %v8366
          %8568 = vmatprep.subr.bf16.mxu0 0
          %8569 = vmatpush1.bf16.msra.mxu0 %v8367
          %8570 = vmatprep.subr.bf16.mxu0 0
          %8571 = vmatpush1.bf16.msra.mxu0 %v8368
          %8572 = vmatprep.subr.bf16.mxu0 0
          %8573 = vmatpush1.bf16.msra.mxu0 %v8369
          %8574 = vmatprep.subr.bf16.mxu0 0
          %8575 = vmatpush1.bf16.msra.mxu0 %v8370
          %8576 = vmatprep.subr.bf16.mxu0 0
          %8577 = vmatpush1.bf16.msra.mxu0 %v8371
          %8578 = vmatprep.subr.bf16.mxu0 0
          %8579 = vmatpush1.bf16.msra.mxu0 %v8372
          %8580 = vmatprep.subr.bf16.mxu0 0
          %8581 = vmatpush1.bf16.msra.mxu0 %v8373
          %8582 = vmatprep.subr.bf16.mxu0 0
          %8583 = vmatpush1.bf16.msra.mxu0 %v8374
          %8584 = vmatprep.subr.bf16.mxu0 0
          %8585 = vmatpush1.bf16.msra.mxu0 %v8375
          %8586 = vmatprep.subr.bf16.mxu0 0
          %8587 = vmatpush1.bf16.msra.mxu0 %v8376
          %8588 = vmatprep.subr.bf16.mxu0 0
          %8589 = vmatpush1.bf16.msra.mxu0 %v8377
          %8590 = vmatprep.subr.bf16.mxu0 0
          %8591 = vmatpush1.bf16.msra.mxu0 %v8378
          %8592 = vmatprep.subr.bf16.mxu0 0
          %8593 = vmatpush1.bf16.msra.mxu0 %v8379
          %8594 = vmatprep.subr.bf16.mxu0 0
          %8595 = vmatpush1.bf16.msra.mxu0 %v8380
          %8596 = vmatprep.subr.bf16.mxu0 0
          %8597 = vmatpush1.bf16.msra.mxu0 %v8381
          %8598 = vmatprep.mubr.bf16.mxu0 %v7926
          %8599 = vmatmul.mubr.bf16.gmra.mrb[0].mxu0 %v7925
          %v8600 = vpop.f32.mrb[0].mxu0
          %v8601 = vadd.f32 %v8561, %v8600
          %v8602 = vpop.f32.mrb[0].mxu0
          %v8603 = vpop.f32.mrb[0].mxu0
          %v8604 = vpop.f32.mrb[0].mxu0
          %8605 = vdwg.mxu0
          %8607 = vrot.lane.b32.xlu0 %v8601, 127
          %v8608 = vpop.permute.xlu0 %8607
          %vm8610 = vcmask 66560
          %v8611 = vsel %vm8610, %v8608, 0.0
          %8612 = vadd.xlane.f32.xlu0 %v8611
          %v8613 = vpop.xlane.xlu0 %8612
          %v8614 = vsel %vm1051, %v8613, 0.0
          %v8615 = vrot.slane %v8614, 4
          %v8616 = vadd.f32 %v8614, %v8615
          %v8617 = vrot.slane %v8616, 2
          %v8618 = vadd.f32 %v8616, %v8617
          %v8619 = vrot.slane %v8618, 1
          %v8620 = vadd.f32 %v8618, %v8619
          %8621 = vset.pattern.permute.xlu0 0
          %8622 = vperm.xlu0 %8621, %v8601
          %v8623 = vpop.permute.xlu0 %8622
          %v8625 = vadd.f32 %v8623, %v8601
          %v8626 = vmul.f32 %v8620, 0.055555556
          %v8627 = vsub.f32 %v8625, %v8626
          %8629 = vrot.lane.b32.xlu0 %v8627, 127
          %v8630 = vpop.permute.xlu0 %8629
          %8632 = vst.msk [vmem:[#allocation11] sm:$0x3] %vm8610, %v8630
        $region80: #{model_forward.1} parent=71 // pred_fallthru
          _
        // Predicated region
        $region81: #{model_forward.1} parent=71 // pred_check
          %p8633 = pneg %p316
        $region82: #{model_forward.1} parent=71 // pred_check_branch
          %8635 = sbr.rel (%p8633) target = $region84
        $region83: #{model_forward.1} parent=71 // pred_region
          %s8637 = ssub.s32 32, 32
          %8638 = vsyncadd [#allocation12], %s8637
          %s8640 = sshll.u32 [#allocation11], 4
          %s8641 = int_to_ptr.vmem [resolvable:$true] %s8640
          %8643 = dma.vmem_to_hbm [thread:$0]  %s8641, 32, %s13, [#allocation12]
        $region84: #{model_forward.1} parent=71 // pred_fallthru
          _
        // Predicated region
        $region85: #{model_forward.1} parent=71 // pred_check
          %p8644 = pneg %p316
        $region86: #{model_forward.1} parent=71 // pred_check_branch
          %8646 = sbr.rel (%p8644) target = $region88
        $region87: #{model_forward.1} parent=71 // pred_region
          %8647 = dma.done [#allocation12], 32
        $region88: #{model_forward.1} parent=71 // pred_fallthru
          _
      $region72: #{model_forward.1} parent=5 // pred_fallthru
        _
      %p8648 = scmp.le.s32.totalorder 2, %s20
      // Predicated region
      $region89: #{model_forward.1} parent=5 // pred_check
        %p8649 = pneg %p8648
      $region90: #{model_forward.1} parent=5 // pred_check_branch
        %8651 = sbr.rel (%p8649) target = $region92
      $region91: #{model_forward.1} parent=5 // pred_region
        %s8652 = ssub.s32 %s20, 2
      $region92: #{model_forward.1} parent=5 // pred_fallthru
        _
    $region6: #{model_forward.1} parent=1 // loop_footer
      %s24 = sadd.s32 1, %s20
    $region7: #{model_forward.1} parent=1 // loop_footer_branch
      %19 = sbr.rel target = $region3
    $region8: #{model_forward.1} parent=1 // loop_exit
      _
    %8653 = vsyncpa [#allocation12], 1
    %s8654 = scalar_lea.sflag [#allocation12], 1
    %8655 = vsyncpa %s8654, 1

</llo_original>
